<compile_context>
chip_gen: v7x
topology: tpu7x:2x2x1
jax: 0.10.0
libtpu: 0.0.40
codegen_flags: <defaults>
</compile_context>

<pallas_src>
import numpy as np
import jax
import jax.numpy as jnp
from jax import lax
from jax.experimental import pallas as pl
from jax.experimental.pallas import tpu as pltpu


# ----------------------------------------------------------------------------
# Fused Pallas kernel (one grid step == one image)
# ----------------------------------------------------------------------------
def _make_fused_kernel(H, W, c0p, chans, num_classes):
    C1, C2, C3 = chans
    Cins = (c0p, C1, C2)
    Couts = (C1, C2, C3)
    Hs = (H, H // 2, H // 4)
    Ws = (W, W // 2, W // 4)
    Hps = tuple(h + 2 for h in Hs)
    Wps = tuple(w + 2 for w in Ws)
    Mps = tuple(Hps[i] * Wps[i] for i in range(3))     # padded, flattened rows / layer
    Ls = tuple(Hs[i] * Wps[i] - 2 for i in range(3))   # conv-output rows (incl. junk cols)
    L2s = tuple(Ls[i] - Wps[i] - 1 for i in range(3))  # rows of the 4-way pool max
    Ho, Wo = H // 8, W // 8
    Wp3 = Wps[2]

    def kernel(xp1_ref, w1_ref, sh1_ref, w2_ref, sh2_ref, w3_ref, sh3_ref,
               wf1_ref, bf1_ref, wf2_ref, bf2_ref, wf3_ref, bf3_ref,
               o_ref,
               st1_ref, z1_ref, m1_ref, xp2_ref,
               st2_ref, z2_ref, m2_ref, xp3_ref,
               st3_ref, z3_ref, m3_ref):

        def conv_bn_relu_poolmax(read_src, w_ref, sh_ref, st_ref, z_ref, m_ref, li):
            Cin, Wp, L, L2 = Cins[li], Wps[li], Ls[li], L2s[li]
            # im2col staging: 9 shifted bf16 copies of the zero-padded input.
            for k in range(9):
                kh, kw = divmod(k, 3)
                s0 = kh * Wp + kw
                st_ref[:, k * Cin:(k + 1) * Cin] = (
                    read_src(s0, L).astype(jnp.bfloat16))
            # conv3x3 == ONE K-fused MXU matmul; folded-BN shift + ReLU on the VPU.
            acc = jnp.dot(st_ref[...], w_ref[...],
                          preferred_element_type=jnp.float32)
            z_ref[...] = jnp.maximum(acc + sh_ref[...], 0.0)
            # 2x2 max-pool, step 1: bulk max over the four window offsets.
            m_ref[...] = jnp.maximum(
                jnp.maximum(z_ref[0:L2, :], z_ref[1:L2 + 1, :]),
                jnp.maximum(z_ref[Wp:Wp + L2, :], z_ref[Wp + 1:Wp + 1 + L2, :]))

        def pool_rows_into(m_ref, dst_ref, li):
            # 2x2 max-pool, step 2: stride-2 row gathers of the valid pooled rows,
            # written contiguously into the next layer's zero-padded input buffer.
            Wp = Wps[li]
            Hn, Wn, Wpn = Hs[li + 1], Ws[li + 1], Wps[li + 1]
            dst_ref[...] = jnp.zeros_like(dst_ref)      # zero border (and any stale data)
            for ho in range(Hn):
                row = m_ref[pl.ds(2 * ho * Wp, Wn, stride=2), :]
                d0 = (ho + 1) * Wpn + 1
                dst_ref[d0:d0 + Wn, :] = row

        # layer 1
        conv_bn_relu_poolmax(lambda s0, n: xp1_ref[0, s0:s0 + n, :],
                             w1_ref, sh1_ref, st1_ref, z1_ref, m1_ref, 0)
        pool_rows_into(m1_ref, xp2_ref, 0)
        # layer 2
        conv_bn_relu_poolmax(lambda s0, n: xp2_ref[s0:s0 + n, :],
                             w2_ref, sh2_ref, st2_ref, z2_ref, m2_ref, 1)
        pool_rows_into(m2_ref, xp3_ref, 1)
        # layer 3
        conv_bn_relu_poolmax(lambda s0, n: xp3_ref[s0:s0 + n, :],
                             w3_ref, sh3_ref, st3_ref, z3_ref, m3_ref, 2)

        # layer-3 pooled rows -> one (1, spatial3*C3) bf16 feature row
        # (spatial-major, channel-minor; fc1 weight rows were permuted in the wrapper).
        feats = jnp.concatenate(
            [m3_ref[2 * ho * Wp3 + 2 * wo: 2 * ho * Wp3 + 2 * wo + 1, :]
             for ho in range(Ho) for wo in range(Wo)], axis=1).astype(jnp.bfloat16)

        # MLP: fc1 -> ReLU -> fc2 -> ReLU -> fc3 (single MXU matmuls).
        h1 = jnp.dot(feats, wf1_ref[...], preferred_element_type=jnp.float32)
        h1 = jnp.maximum(h1 + bf1_ref[...], 0.0).astype(jnp.bfloat16)
        h2 = jnp.dot(h1, wf2_ref[...], preferred_element_type=jnp.float32)
        h2 = jnp.maximum(h2 + bf2_ref[...], 0.0).astype(jnp.bfloat16)
        logits = (jnp.dot(h2, wf3_ref[...], preferred_element_type=jnp.float32)
                  + bf3_ref[...])
        o_ref[0] = logits

    scratch_defs = [
        ((Ls[0], 9 * Cins[0]), jnp.bfloat16),   # st1: layer-1 im2col staging
        ((Ls[0], Couts[0]), jnp.float32),       # z1 : layer-1 conv+BN+ReLU
        ((L2s[0], Couts[0]), jnp.float32),      # m1 : layer-1 4-way pool max
        ((Mps[1], Cins[1]), jnp.float32),       # xp2: layer-2 padded input
        ((Ls[1], 9 * Cins[1]), jnp.bfloat16),   # st2
        ((Ls[1], Couts[1]), jnp.float32),       # z2
        ((L2s[1], Couts[1]), jnp.float32),      # m2
        ((Mps[2], Cins[2]), jnp.float32),       # xp3: layer-3 padded input
        ((Ls[2], 9 * Cins[2]), jnp.bfloat16),   # st3
        ((Ls[2], Couts[2]), jnp.float32),       # z3
        ((L2s[2], Couts[2]), jnp.float32),      # m3
    ]
    scratch_shapes = [pltpu.VMEM(s, d) for s, d in scratch_defs]
    scratch_bytes = sum(int(np.prod(s)) * jnp.dtype(d).itemsize for s, d in scratch_defs)
    return kernel, scratch_shapes, scratch_bytes


# ----------------------------------------------------------------------------
# Forward wrapper
# ----------------------------------------------------------------------------
def cnn_forward(x_nchw, p, eps=1e-5):
    N, C0, H, W = x_nchw.shape
    assert H % 8 == 0 and W % 8 == 0, "three exact 2x2 pools require H, W % 8 == 0"
    chans = (p["conv1_w"].shape[-1], p["conv2_w"].shape[-1], p["conv3_w"].shape[-1])
    num_classes = p["fc3_w"].shape[1]
    c0p = max(8, C0)                       # pad input channels to a full sublane tile

    # ---- one-time parameter folding (tiny XLA ops outside the kernel) ----------
    def fold_conv(li, cin_pad=None):
        w = p[f"conv{li}_w"]                              # (3,3,Cin,Cout) HWIO
        cin, cout = w.shape[2], w.shape[3]
        scale = p[f"bn{li}_gamma"] * lax.rsqrt(p[f"bn{li}_var"] + eps)
        wf = w * scale                                    # BN scale folded into weights
        if cin_pad is not None and cin_pad > cin:
            wf = jnp.pad(wf, ((0, 0), (0, 0), (0, cin_pad - cin), (0, 0)))
            cin = cin_pad
        wf = wf.reshape(9 * cin, cout).astype(jnp.bfloat16)   # (tap, cin)-major rows
        shift = scale * (p[f"conv{li}_b"] - p[f"bn{li}_mean"]) + p[f"bn{li}_beta"]
        return wf, shift.reshape(1, cout).astype(jnp.float32)

    w1, sh1 = fold_conv(1, cin_pad=c0p)
    w2, sh2 = fold_conv(2)
    w3, sh3 = fold_conv(3)

    # layer-1 input: NCHW -> NHWC, zero-pad spatially (+ channel pad), flatten per image.
    Hp, Wp = H + 2, W + 2
    x = jnp.transpose(x_nchw, (0, 2, 3, 1))
    xp1 = jnp.pad(x, ((0, 0), (1, 1), (1, 1), (0, c0p - C0)))
    xp1 = xp1.reshape(N, Hp * Wp, c0p).astype(jnp.float32)

    # fc1 rows: PyTorch flattens NCHW (feature = c*spatial + s); the kernel emits
    # features in (s, c) order, so permute fc1 weight rows to match.
    C3 = chans[2]
    spatial3 = (H // 8) * (W // 8)
    perm = np.array([c * spatial3 + s for s in range(spatial3) for c in range(C3)],
                    dtype=np.int32)
    wf1 = jnp.take(p["fc1_w"], perm, axis=0).astype(jnp.bfloat16)
    bf1 = p["fc1_b"].reshape(1, -1).astype(jnp.float32)
    wf2 = p["fc2_w"].astype(jnp.bfloat16)
    bf2 = p["fc2_b"].reshape(1, -1).astype(jnp.float32)
    wf3 = p["fc3_w"].astype(jnp.bfloat16)
    bf3 = p["fc3_b"].reshape(1, -1).astype(jnp.float32)

    kernel, scratch_shapes, scratch_bytes = _make_fused_kernel(
        H, W, c0p, chans, num_classes)

    inputs = (xp1, w1, sh1, w2, sh2, w3, sh3, wf1, bf1, wf2, bf2, wf3, bf3)

    def _const_spec(a):
        nd = a.ndim
        return pl.BlockSpec(a.shape, lambda b, nd=nd: (0,) * nd)

    in_specs = [pl.BlockSpec((1, Hp * Wp, c0p), lambda b: (b, 0, 0))]
    in_specs += [_const_spec(a) for a in inputs[1:]]

    # VMEM budget: double-buffered operands + scratch + headroom, clamped to fit v7x.
    operand_bytes = sum(int(np.prod(a.shape)) * a.dtype.itemsize for a in inputs)
    vmem_limit = int(min(48 << 20, 2 * operand_bytes + scratch_bytes + (8 << 20)))

    out3 = pl.pallas_call(
        kernel,
        out_shape=jax.ShapeDtypeStruct((N, 1, num_classes), jnp.float32),
        grid=(N,),
        in_specs=in_specs,
        out_specs=pl.BlockSpec((1, 1, num_classes), lambda b: (b, 0, 0)),
        scratch_shapes=scratch_shapes,
        compiler_params=pltpu.CompilerParams(
            dimension_semantics=("parallel",),
            vmem_limit_bytes=vmem_limit),
    )(*inputs)
    return out3.reshape(N, num_classes)


# ----------------------------------------------------------------------------
# Parameters + pure-JAX reference (f32) for a sanity check
# ----------------------------------------------------------------------------
def init_params(key, num_classes=2, input_width=16, input_height=16):
    ks = jax.random.split(key, 32)
    p = {}
    chans = [(3, 32), (32, 64), (64, 128)]
    for li, (cin, cout) in enumerate(chans, start=1):
        k0, k1, k2, k3, k4, k5 = ks[6 * (li - 1): 6 * li]
        p[f"conv{li}_w"] = 0.1 * jax.random.normal(k0, (3, 3, cin, cout), jnp.float32)  # HWIO
        p[f"conv{li}_b"] = 0.1 * jax.random.normal(k1, (cout,), jnp.float32)
        p[f"bn{li}_gamma"] = 1.0 + 0.1 * jax.random.normal(k2, (cout,), jnp.float32)
        p[f"bn{li}_beta"] = 0.1 * jax.random.normal(k3, (cout,), jnp.float32)
        p[f"bn{li}_mean"] = 0.1 * jax.random.normal(k4, (cout,), jnp.float32)
        p[f"bn{li}_var"] = jnp.abs(1.0 + 0.1 * jax.random.normal(k5, (cout,), jnp.float32))
    flat = input_width * input_height * 2  # = 128 * (W/8) * (H/8)
    dims = [(flat, 512), (512, 256), (256, num_classes)]
    for li, (din, dout) in enumerate(dims, start=1):
        kw, kb = ks[18 + 2 * (li - 1): 18 + 2 * li]
        p[f"fc{li}_w"] = 0.05 * jax.random.normal(kw, (din, dout), jnp.float32)
        p[f"fc{li}_b"] = 0.05 * jax.random.normal(kb, (dout,), jnp.float32)
    return p


def cnn_reference(x_nchw, p, eps=1e-5):
    x = jnp.transpose(x_nchw, (0, 2, 3, 1))
    for li in (1, 2, 3):
        y = lax.conv_general_dilated(
            x, p[f"conv{li}_w"], window_strides=(1, 1), padding="SAME",
            dimension_numbers=("NHWC", "HWIO", "NHWC")) + p[f"conv{li}_b"]
        scale = p[f"bn{li}_gamma"] / jnp.sqrt(p[f"bn{li}_var"] + eps)
        y = scale * (y - p[f"bn{li}_mean"]) + p[f"bn{li}_beta"]
        y = jnp.maximum(y, 0.0)
        x = lax.reduce_window(y, -jnp.inf, lax.max, (1, 2, 2, 1), (1, 2, 2, 1), "VALID")
    x = jnp.transpose(x, (0, 3, 1, 2)).reshape(x.shape[0], -1)  # NCHW flatten order
    x = jnp.maximum(x @ p["fc1_w"] + p["fc1_b"], 0.0)
    x = jnp.maximum(x @ p["fc2_w"] + p["fc2_b"], 0.0)
    return x @ p["fc3_w"] + p["fc3_b"]


if __name__ == "__main__":
    key = jax.random.PRNGKey(0)
    k_x, k_p = jax.random.split(key)
    N, C, H, W = 2, 3, 16, 16           # fc1 in-features = 16*16*2 = 512
    x = jax.random.normal(k_x, (N, C, H, W), jnp.float32)
    params = init_params(k_p, num_classes=2, input_width=W, input_height=H)

    out = jax.jit(cnn_forward)(x, params)
    jax.block_until_ready(out)
    assert out.shape == (N, 2) and out.dtype == jnp.float32

    # Loose numerical check vs. a pure-JAX f32 reference: kernel matmul operands are
    # bf16 (f32 accumulation), so a few 1e-2 of absolute error is expected.
    ref = cnn_reference(x, params)
    err = float(jnp.max(jnp.abs(out - ref)))
    assert err < 0.15, f"mismatch vs reference: max abs err = {err}"
    print("KERNEL_OK")
</pallas_src>

<mosaic_0001>
module attributes {stable_mosaic.version = 11 : i64} {
  func.func @kernel(%arg0: i32, %arg1: memref<1x324x8xf32, #tpu.memory_space<vmem>>, %arg2: memref<72x32xbf16, #tpu.memory_space<vmem>>, %arg3: memref<1x32xf32, #tpu.memory_space<vmem>>, %arg4: memref<288x64xbf16, #tpu.memory_space<vmem>>, %arg5: memref<1x64xf32, #tpu.memory_space<vmem>>, %arg6: memref<576x128xbf16, #tpu.memory_space<vmem>>, %arg7: memref<1x128xf32, #tpu.memory_space<vmem>>, %arg8: memref<512x512xbf16, #tpu.memory_space<vmem>>, %arg9: memref<1x512xf32, #tpu.memory_space<vmem>>, %arg10: memref<512x256xbf16, #tpu.memory_space<vmem>>, %arg11: memref<1x256xf32, #tpu.memory_space<vmem>>, %arg12: memref<256x2xbf16, #tpu.memory_space<vmem>>, %arg13: memref<1x2xf32, #tpu.memory_space<vmem>>, %arg14: memref<1x1x2xf32, #tpu.memory_space<vmem>>, %arg15: memref<286x72xbf16, #tpu.memory_space<vmem>>, %arg16: memref<286x32xf32, #tpu.memory_space<vmem>>, %arg17: memref<267x32xf32, #tpu.memory_space<vmem>>, %arg18: memref<100x32xf32, #tpu.memory_space<vmem>>, %arg19: memref<78x288xbf16, #tpu.memory_space<vmem>>, %arg20: memref<78x64xf32, #tpu.memory_space<vmem>>, %arg21: memref<67x64xf32, #tpu.memory_space<vmem>>, %arg22: memref<36x64xf32, #tpu.memory_space<vmem>>, %arg23: memref<22x576xbf16, #tpu.memory_space<vmem>>, %arg24: memref<22x128xf32, #tpu.memory_space<vmem>>, %arg25: memref<15x128xf32, #tpu.memory_space<vmem>>) attributes {dimension_semantics = [#tpu.dimension_semantics<parallel>], iteration_bounds = array<i64: 2>, scalar_prefetch = 0 : i64, scratch_operands = 11 : i64, tpu.core_type = #tpu.core_type<tc>, window_params = [{transform_indices = @transform_0, window_bounds = array<i64: 1, 324, 8>}, {pipeline_mode = #tpu.pipeline_mode<synchronous>, transform_indices = @transform_1, window_bounds = array<i64: 72, 32>}, {pipeline_mode = #tpu.pipeline_mode<synchronous>, transform_indices = @transform_2, window_bounds = array<i64: 1, 32>}, {pipeline_mode = #tpu.pipeline_mode<synchronous>, transform_indices = @transform_3, window_bounds = array<i64: 288, 64>}, {pipeline_mode = #tpu.pipeline_mode<synchronous>, transform_indices = @transform_4, window_bounds = array<i64: 1, 64>}, {pipeline_mode = #tpu.pipeline_mode<synchronous>, transform_indices = @transform_5, window_bounds = array<i64: 576, 128>}, {pipeline_mode = #tpu.pipeline_mode<synchronous>, transform_indices = @transform_6, window_bounds = array<i64: 1, 128>}, {pipeline_mode = #tpu.pipeline_mode<synchronous>, transform_indices = @transform_7, window_bounds = array<i64: 512, 512>}, {pipeline_mode = #tpu.pipeline_mode<synchronous>, transform_indices = @transform_8, window_bounds = array<i64: 1, 512>}, {pipeline_mode = #tpu.pipeline_mode<synchronous>, transform_indices = @transform_9, window_bounds = array<i64: 512, 256>}, {pipeline_mode = #tpu.pipeline_mode<synchronous>, transform_indices = @transform_10, window_bounds = array<i64: 1, 256>}, {pipeline_mode = #tpu.pipeline_mode<synchronous>, transform_indices = @transform_11, window_bounds = array<i64: 256, 2>}, {pipeline_mode = #tpu.pipeline_mode<synchronous>, transform_indices = @transform_12, window_bounds = array<i64: 1, 2>}, {transform_indices = @transform_13, window_bounds = array<i64: 1, 1, 2>}]} {
    %c0 = arith.constant 0 : index
    %c0_0 = arith.constant 0 : index
    %c0_1 = arith.constant 0 : index
    %0 = vector.load %arg1[%c0, %c0_0, %c0_1] : memref<1x324x8xf32, #tpu.memory_space<vmem>>, vector<1x286x8xf32>
    %1 = vector.shape_cast %0 : vector<1x286x8xf32> to vector<286x8xf32>
    %2 = arith.truncf %1 : vector<286x8xf32> to vector<286x8xbf16>
    %c0_2 = arith.constant 0 : index
    %c0_3 = arith.constant 0 : index
    %3 = vector.load %arg15[%c0_2, %c0_3] : memref<286x72xbf16, #tpu.memory_space<vmem>>, vector<286x8xbf16>
    tpu.vector_store %arg15[%c0_2, %c0_3], %2 {strides = array<i32>} : memref<286x72xbf16, #tpu.memory_space<vmem>>, vector<286x8xbf16>,
    %c0_4 = arith.constant 0 : index
    %c1 = arith.constant 1 : index
    %c0_5 = arith.constant 0 : index
    %4 = vector.load %arg1[%c0_4, %c1, %c0_5] : memref<1x324x8xf32, #tpu.memory_space<vmem>>, vector<1x286x8xf32>
    %5 = vector.shape_cast %4 : vector<1x286x8xf32> to vector<286x8xf32>
    %6 = arith.truncf %5 : vector<286x8xf32> to vector<286x8xbf16>
    %c0_6 = arith.constant 0 : index
    %c8 = arith.constant 8 : index
    %7 = vector.load %arg15[%c0_6, %c8] : memref<286x72xbf16, #tpu.memory_space<vmem>>, vector<286x8xbf16>
    tpu.vector_store %arg15[%c0_6, %c8], %6 {strides = array<i32>} : memref<286x72xbf16, #tpu.memory_space<vmem>>, vector<286x8xbf16>,
    %c0_7 = arith.constant 0 : index
    %c2 = arith.constant 2 : index
    %c0_8 = arith.constant 0 : index
    %8 = vector.load %arg1[%c0_7, %c2, %c0_8] : memref<1x324x8xf32, #tpu.memory_space<vmem>>, vector<1x286x8xf32>
    %9 = vector.shape_cast %8 : vector<1x286x8xf32> to vector<286x8xf32>
    %10 = arith.truncf %9 : vector<286x8xf32> to vector<286x8xbf16>
    %c0_9 = arith.constant 0 : index
    %c16 = arith.constant 16 : index
    %11 = vector.load %arg15[%c0_9, %c16] : memref<286x72xbf16, #tpu.memory_space<vmem>>, vector<286x8xbf16>
    tpu.vector_store %arg15[%c0_9, %c16], %10 {strides = array<i32>} : memref<286x72xbf16, #tpu.memory_space<vmem>>, vector<286x8xbf16>,
    %c0_10 = arith.constant 0 : index
    %c18 = arith.constant 18 : index
    %c0_11 = arith.constant 0 : index
    %12 = vector.load %arg1[%c0_10, %c18, %c0_11] : memref<1x324x8xf32, #tpu.memory_space<vmem>>, vector<1x286x8xf32>
    %13 = vector.shape_cast %12 : vector<1x286x8xf32> to vector<286x8xf32>
    %14 = arith.truncf %13 : vector<286x8xf32> to vector<286x8xbf16>
    %c0_12 = arith.constant 0 : index
    %c24 = arith.constant 24 : index
    %15 = vector.load %arg15[%c0_12, %c24] : memref<286x72xbf16, #tpu.memory_space<vmem>>, vector<286x8xbf16>
    tpu.vector_store %arg15[%c0_12, %c24], %14 {strides = array<i32>} : memref<286x72xbf16, #tpu.memory_space<vmem>>, vector<286x8xbf16>,
    %c0_13 = arith.constant 0 : index
    %c19 = arith.constant 19 : index
    %c0_14 = arith.constant 0 : index
    %16 = vector.load %arg1[%c0_13, %c19, %c0_14] : memref<1x324x8xf32, #tpu.memory_space<vmem>>, vector<1x286x8xf32>
    %17 = vector.shape_cast %16 : vector<1x286x8xf32> to vector<286x8xf32>
    %18 = arith.truncf %17 : vector<286x8xf32> to vector<286x8xbf16>
    %c0_15 = arith.constant 0 : index
    %c32 = arith.constant 32 : index
    %19 = vector.load %arg15[%c0_15, %c32] : memref<286x72xbf16, #tpu.memory_space<vmem>>, vector<286x8xbf16>
    tpu.vector_store %arg15[%c0_15, %c32], %18 {strides = array<i32>} : memref<286x72xbf16, #tpu.memory_space<vmem>>, vector<286x8xbf16>,
    %c0_16 = arith.constant 0 : index
    %c20 = arith.constant 20 : index
    %c0_17 = arith.constant 0 : index
    %20 = vector.load %arg1[%c0_16, %c20, %c0_17] : memref<1x324x8xf32, #tpu.memory_space<vmem>>, vector<1x286x8xf32>
    %21 = vector.shape_cast %20 : vector<1x286x8xf32> to vector<286x8xf32>
    %22 = arith.truncf %21 : vector<286x8xf32> to vector<286x8xbf16>
    %c0_18 = arith.constant 0 : index
    %c40 = arith.constant 40 : index
    %23 = vector.load %arg15[%c0_18, %c40] : memref<286x72xbf16, #tpu.memory_space<vmem>>, vector<286x8xbf16>
    tpu.vector_store %arg15[%c0_18, %c40], %22 {strides = array<i32>} : memref<286x72xbf16, #tpu.memory_space<vmem>>, vector<286x8xbf16>,
    %c0_19 = arith.constant 0 : index
    %c36 = arith.constant 36 : index
    %c0_20 = arith.constant 0 : index
    %24 = vector.load %arg1[%c0_19, %c36, %c0_20] : memref<1x324x8xf32, #tpu.memory_space<vmem>>, vector<1x286x8xf32>
    %25 = vector.shape_cast %24 : vector<1x286x8xf32> to vector<286x8xf32>
    %26 = arith.truncf %25 : vector<286x8xf32> to vector<286x8xbf16>
    %c0_21 = arith.constant 0 : index
    %c48 = arith.constant 48 : index
    %27 = vector.load %arg15[%c0_21, %c48] : memref<286x72xbf16, #tpu.memory_space<vmem>>, vector<286x8xbf16>
    tpu.vector_store %arg15[%c0_21, %c48], %26 {strides = array<i32>} : memref<286x72xbf16, #tpu.memory_space<vmem>>, vector<286x8xbf16>,
    %c0_22 = arith.constant 0 : index
    %c37 = arith.constant 37 : index
    %c0_23 = arith.constant 0 : index
    %28 = vector.load %arg1[%c0_22, %c37, %c0_23] : memref<1x324x8xf32, #tpu.memory_space<vmem>>, vector<1x286x8xf32>
    %29 = vector.shape_cast %28 : vector<1x286x8xf32> to vector<286x8xf32>
    %30 = arith.truncf %29 : vector<286x8xf32> to vector<286x8xbf16>
    %c0_24 = arith.constant 0 : index
    %c56 = arith.constant 56 : index
    %31 = vector.load %arg15[%c0_24, %c56] : memref<286x72xbf16, #tpu.memory_space<vmem>>, vector<286x8xbf16>
    tpu.vector_store %arg15[%c0_24, %c56], %30 {strides = array<i32>} : memref<286x72xbf16, #tpu.memory_space<vmem>>, vector<286x8xbf16>,
    %c0_25 = arith.constant 0 : index
    %c38 = arith.constant 38 : index
    %c0_26 = arith.constant 0 : index
    %32 = vector.load %arg1[%c0_25, %c38, %c0_26] : memref<1x324x8xf32, #tpu.memory_space<vmem>>, vector<1x286x8xf32>
    %33 = vector.shape_cast %32 : vector<1x286x8xf32> to vector<286x8xf32>
    %34 = arith.truncf %33 : vector<286x8xf32> to vector<286x8xbf16>
    %c0_27 = arith.constant 0 : index
    %c64 = arith.constant 64 : index
    %35 = vector.load %arg15[%c0_27, %c64] : memref<286x72xbf16, #tpu.memory_space<vmem>>, vector<286x8xbf16>
    tpu.vector_store %arg15[%c0_27, %c64], %34 {strides = array<i32>} : memref<286x72xbf16, #tpu.memory_space<vmem>>, vector<286x8xbf16>,
    %c0_28 = arith.constant 0 : index
    %c0_29 = arith.constant 0 : index
    %36 = vector.load %arg15[%c0_28, %c0_29] : memref<286x72xbf16, #tpu.memory_space<vmem>>, vector<286x72xbf16>
    %c0_30 = arith.constant 0 : index
    %c0_31 = arith.constant 0 : index
    %37 = vector.load %arg2[%c0_30, %c0_31] : memref<72x32xbf16, #tpu.memory_space<vmem>>, vector<72x32xbf16>
    %cst = arith.constant dense<0.000000e+00> : vector<286x32xf32>
    %38 = tpu.matmul %36, %37, %cst {dimension_numbers = #tpu.dot_dimension_numbers<[1], [0], [0], [1], [0, 0, 1, 1], [], []>} : vector<286x72xbf16>, vector<72x32xbf16>, vector<286x32xf32> -> vector<286x32xf32>
    %c0_32 = arith.constant 0 : index
    %c0_33 = arith.constant 0 : index
    %39 = vector.load %arg3[%c0_32, %c0_33] : memref<1x32xf32, #tpu.memory_space<vmem>>, vector<1x32xf32>
    %40 = vector.broadcast %39 : vector<1x32xf32> to vector<286x32xf32>
    %41 = arith.addf %38, %40 : vector<286x32xf32>
    %cst_34 = arith.constant 0.000000e+00 : f32
    %42 = vector.broadcast %cst_34 : f32 to vector<286x32xf32>
    %43 = arith.maximumf %41, %42 : vector<286x32xf32>
    %c0_35 = arith.constant 0 : index
    %c0_36 = arith.constant 0 : index
    %44 = vector.load %arg16[%c0_35, %c0_36] : memref<286x32xf32, #tpu.memory_space<vmem>>, vector<286x32xf32>
    tpu.vector_store %arg16[%c0_35, %c0_36], %43 {strides = array<i32>} : memref<286x32xf32, #tpu.memory_space<vmem>>, vector<286x32xf32>,
    %c0_37 = arith.constant 0 : index
    %c0_38 = arith.constant 0 : index
    %45 = vector.load %arg16[%c0_37, %c0_38] : memref<286x32xf32, #tpu.memory_space<vmem>>, vector<267x32xf32>
    %c1_39 = arith.constant 1 : index
    %c0_40 = arith.constant 0 : index
    %46 = vector.load %arg16[%c1_39, %c0_40] : memref<286x32xf32, #tpu.memory_space<vmem>>, vector<267x32xf32>
    %47 = arith.maximumf %45, %46 : vector<267x32xf32>
    %c18_41 = arith.constant 18 : index
    %c0_42 = arith.constant 0 : index
    %48 = vector.load %arg16[%c18_41, %c0_42] : memref<286x32xf32, #tpu.memory_space<vmem>>, vector<267x32xf32>
    %c19_43 = arith.constant 19 : index
    %c0_44 = arith.constant 0 : index
    %49 = vector.load %arg16[%c19_43, %c0_44] : memref<286x32xf32, #tpu.memory_space<vmem>>, vector<267x32xf32>
    %50 = arith.maximumf %48, %49 : vector<267x32xf32>
    %51 = arith.maximumf %47, %50 : vector<267x32xf32>
    %c0_45 = arith.constant 0 : index
    %c0_46 = arith.constant 0 : index
    %52 = vector.load %arg17[%c0_45, %c0_46] : memref<267x32xf32, #tpu.memory_space<vmem>>, vector<267x32xf32>
    tpu.vector_store %arg17[%c0_45, %c0_46], %51 {strides = array<i32>} : memref<267x32xf32, #tpu.memory_space<vmem>>, vector<267x32xf32>,
    %cst_47 = arith.constant 0.000000e+00 : f32
    %53 = vector.broadcast %cst_47 : f32 to vector<100x32xf32>
    %c0_48 = arith.constant 0 : index
    %c0_49 = arith.constant 0 : index
    %54 = vector.load %arg18[%c0_48, %c0_49] : memref<100x32xf32, #tpu.memory_space<vmem>>, vector<100x32xf32>
    tpu.vector_store %arg18[%c0_48, %c0_49], %53 {strides = array<i32>} : memref<100x32xf32, #tpu.memory_space<vmem>>, vector<100x32xf32>,
    %c0_50 = arith.constant 0 : index
    %c0_51 = arith.constant 0 : index
    %55 = tpu.strided_load %arg17[%c0_50, %c0_51] {strides = array<i32: 2, 1>} : memref<267x32xf32, #tpu.memory_space<vmem>>, vector<8x32xf32>
    %c11 = arith.constant 11 : index
    %c0_52 = arith.constant 0 : index
    %56 = vector.load %arg18[%c11, %c0_52] : memref<100x32xf32, #tpu.memory_space<vmem>>, vector<8x32xf32>
    tpu.vector_store %arg18[%c11, %c0_52], %55 {strides = array<i32>} : memref<100x32xf32, #tpu.memory_space<vmem>>, vector<8x32xf32>,
    %c36_53 = arith.constant 36 : index
    %c0_54 = arith.constant 0 : index
    %57 = tpu.strided_load %arg17[%c36_53, %c0_54] {strides = array<i32: 2, 1>} : memref<267x32xf32, #tpu.memory_space<vmem>>, vector<8x32xf32>
    %c21 = arith.constant 21 : index
    %c0_55 = arith.constant 0 : index
    %58 = vector.load %arg18[%c21, %c0_55] : memref<100x32xf32, #tpu.memory_space<vmem>>, vector<8x32xf32>
    tpu.vector_store %arg18[%c21, %c0_55], %57 {strides = array<i32>} : memref<100x32xf32, #tpu.memory_space<vmem>>, vector<8x32xf32>,
    %c72 = arith.constant 72 : index
    %c0_56 = arith.constant 0 : index
    %59 = tpu.strided_load %arg17[%c72, %c0_56] {strides = array<i32: 2, 1>} : memref<267x32xf32, #tpu.memory_space<vmem>>, vector<8x32xf32>
    %c31 = arith.constant 31 : index
    %c0_57 = arith.constant 0 : index
    %60 = vector.load %arg18[%c31, %c0_57] : memref<100x32xf32, #tpu.memory_space<vmem>>, vector<8x32xf32>
    tpu.vector_store %arg18[%c31, %c0_57], %59 {strides = array<i32>} : memref<100x32xf32, #tpu.memory_space<vmem>>, vector<8x32xf32>,
    %c108 = arith.constant 108 : index
    %c0_58 = arith.constant 0 : index
    %61 = tpu.strided_load %arg17[%c108, %c0_58] {strides = array<i32: 2, 1>} : memref<267x32xf32, #tpu.memory_space<vmem>>, vector<8x32xf32>
    %c41 = arith.constant 41 : index
    %c0_59 = arith.constant 0 : index
    %62 = vector.load %arg18[%c41, %c0_59] : memref<100x32xf32, #tpu.memory_space<vmem>>, vector<8x32xf32>
    tpu.vector_store %arg18[%c41, %c0_59], %61 {strides = array<i32>} : memref<100x32xf32, #tpu.memory_space<vmem>>, vector<8x32xf32>,
    %c144 = arith.constant 144 : index
    %c0_60 = arith.constant 0 : index
    %63 = tpu.strided_load %arg17[%c144, %c0_60] {strides = array<i32: 2, 1>} : memref<267x32xf32, #tpu.memory_space<vmem>>, vector<8x32xf32>
    %c51 = arith.constant 51 : index
    %c0_61 = arith.constant 0 : index
    %64 = vector.load %arg18[%c51, %c0_61] : memref<100x32xf32, #tpu.memory_space<vmem>>, vector<8x32xf32>
    tpu.vector_store %arg18[%c51, %c0_61], %63 {strides = array<i32>} : memref<100x32xf32, #tpu.memory_space<vmem>>, vector<8x32xf32>,
    %c180 = arith.constant 180 : index
    %c0_62 = arith.constant 0 : index
    %65 = tpu.strided_load %arg17[%c180, %c0_62] {strides = array<i32: 2, 1>} : memref<267x32xf32, #tpu.memory_space<vmem>>, vector<8x32xf32>
    %c61 = arith.constant 61 : index
    %c0_63 = arith.constant 0 : index
    %66 = vector.load %arg18[%c61, %c0_63] : memref<100x32xf32, #tpu.memory_space<vmem>>, vector<8x32xf32>
    tpu.vector_store %arg18[%c61, %c0_63], %65 {strides = array<i32>} : memref<100x32xf32, #tpu.memory_space<vmem>>, vector<8x32xf32>,
    %c216 = arith.constant 216 : index
    %c0_64 = arith.constant 0 : index
    %67 = tpu.strided_load %arg17[%c216, %c0_64] {strides = array<i32: 2, 1>} : memref<267x32xf32, #tpu.memory_space<vmem>>, vector<8x32xf32>
    %c71 = arith.constant 71 : index
    %c0_65 = arith.constant 0 : index
    %68 = vector.load %arg18[%c71, %c0_65] : memref<100x32xf32, #tpu.memory_space<vmem>>, vector<8x32xf32>
    tpu.vector_store %arg18[%c71, %c0_65], %67 {strides = array<i32>} : memref<100x32xf32, #tpu.memory_space<vmem>>, vector<8x32xf32>,
    %c252 = arith.constant 252 : index
    %c0_66 = arith.constant 0 : index
    %69 = tpu.strided_load %arg17[%c252, %c0_66] {strides = array<i32: 2, 1>} : memref<267x32xf32, #tpu.memory_space<vmem>>, vector<8x32xf32>
    %c81 = arith.constant 81 : index
    %c0_67 = arith.constant 0 : index
    %70 = vector.load %arg18[%c81, %c0_67] : memref<100x32xf32, #tpu.memory_space<vmem>>, vector<8x32xf32>
    tpu.vector_store %arg18[%c81, %c0_67], %69 {strides = array<i32>} : memref<100x32xf32, #tpu.memory_space<vmem>>, vector<8x32xf32>,
    %c0_68 = arith.constant 0 : index
    %c0_69 = arith.constant 0 : index
    %71 = vector.load %arg18[%c0_68, %c0_69] : memref<100x32xf32, #tpu.memory_space<vmem>>, vector<78x32xf32>
    %72 = arith.truncf %71 : vector<78x32xf32> to vector<78x32xbf16>
    %c0_70 = arith.constant 0 : index
    %c0_71 = arith.constant 0 : index
    %73 = vector.load %arg19[%c0_70, %c0_71] : memref<78x288xbf16, #tpu.memory_space<vmem>>, vector<78x32xbf16>
    tpu.vector_store %arg19[%c0_70, %c0_71], %72 {strides = array<i32>} : memref<78x288xbf16, #tpu.memory_space<vmem>>, vector<78x32xbf16>,
    %c1_72 = arith.constant 1 : index
    %c0_73 = arith.constant 0 : index
    %74 = vector.load %arg18[%c1_72, %c0_73] : memref<100x32xf32, #tpu.memory_space<vmem>>, vector<78x32xf32>
    %75 = arith.truncf %74 : vector<78x32xf32> to vector<78x32xbf16>
    %c0_74 = arith.constant 0 : index
    %c32_75 = arith.constant 32 : index
    %76 = vector.load %arg19[%c0_74, %c32_75] : memref<78x288xbf16, #tpu.memory_space<vmem>>, vector<78x32xbf16>
    tpu.vector_store %arg19[%c0_74, %c32_75], %75 {strides = array<i32>} : memref<78x288xbf16, #tpu.memory_space<vmem>>, vector<78x32xbf16>,
    %c2_76 = arith.constant 2 : index
    %c0_77 = arith.constant 0 : index
    %77 = vector.load %arg18[%c2_76, %c0_77] : memref<100x32xf32, #tpu.memory_space<vmem>>, vector<78x32xf32>
    %78 = arith.truncf %77 : vector<78x32xf32> to vector<78x32xbf16>
    %c0_78 = arith.constant 0 : index
    %c64_79 = arith.constant 64 : index
    %79 = vector.load %arg19[%c0_78, %c64_79] : memref<78x288xbf16, #tpu.memory_space<vmem>>, vector<78x32xbf16>
    tpu.vector_store %arg19[%c0_78, %c64_79], %78 {strides = array<i32>} : memref<78x288xbf16, #tpu.memory_space<vmem>>, vector<78x32xbf16>,
    %c10 = arith.constant 10 : index
    %c0_80 = arith.constant 0 : index
    %80 = vector.load %arg18[%c10, %c0_80] : memref<100x32xf32, #tpu.memory_space<vmem>>, vector<78x32xf32>
    %81 = arith.truncf %80 : vector<78x32xf32> to vector<78x32xbf16>
    %c0_81 = arith.constant 0 : index
    %c96 = arith.constant 96 : index
    %82 = vector.load %arg19[%c0_81, %c96] : memref<78x288xbf16, #tpu.memory_space<vmem>>, vector<78x32xbf16>
    tpu.vector_store %arg19[%c0_81, %c96], %81 {strides = array<i32>} : memref<78x288xbf16, #tpu.memory_space<vmem>>, vector<78x32xbf16>,
    %c11_82 = arith.constant 11 : index
    %c0_83 = arith.constant 0 : index
    %83 = vector.load %arg18[%c11_82, %c0_83] : memref<100x32xf32, #tpu.memory_space<vmem>>, vector<78x32xf32>
    %84 = arith.truncf %83 : vector<78x32xf32> to vector<78x32xbf16>
    %c0_84 = arith.constant 0 : index
    %c128 = arith.constant 128 : index
    %85 = vector.load %arg19[%c0_84, %c128] : memref<78x288xbf16, #tpu.memory_space<vmem>>, vector<78x32xbf16>
    tpu.vector_store %arg19[%c0_84, %c128], %84 {strides = array<i32>} : memref<78x288xbf16, #tpu.memory_space<vmem>>, vector<78x32xbf16>,
    %c12 = arith.constant 12 : index
    %c0_85 = arith.constant 0 : index
    %86 = vector.load %arg18[%c12, %c0_85] : memref<100x32xf32, #tpu.memory_space<vmem>>, vector<78x32xf32>
    %87 = arith.truncf %86 : vector<78x32xf32> to vector<78x32xbf16>
    %c0_86 = arith.constant 0 : index
    %c160 = arith.constant 160 : index
    %88 = vector.load %arg19[%c0_86, %c160] : memref<78x288xbf16, #tpu.memory_space<vmem>>, vector<78x32xbf16>
    tpu.vector_store %arg19[%c0_86, %c160], %87 {strides = array<i32>} : memref<78x288xbf16, #tpu.memory_space<vmem>>, vector<78x32xbf16>,
    %c20_87 = arith.constant 20 : index
    %c0_88 = arith.constant 0 : index
    %89 = vector.load %arg18[%c20_87, %c0_88] : memref<100x32xf32, #tpu.memory_space<vmem>>, vector<78x32xf32>
    %90 = arith.truncf %89 : vector<78x32xf32> to vector<78x32xbf16>
    %c0_89 = arith.constant 0 : index
    %c192 = arith.constant 192 : index
    %91 = vector.load %arg19[%c0_89, %c192] : memref<78x288xbf16, #tpu.memory_space<vmem>>, vector<78x32xbf16>
    tpu.vector_store %arg19[%c0_89, %c192], %90 {strides = array<i32>} : memref<78x288xbf16, #tpu.memory_space<vmem>>, vector<78x32xbf16>,
    %c21_90 = arith.constant 21 : index
    %c0_91 = arith.constant 0 : index
    %92 = vector.load %arg18[%c21_90, %c0_91] : memref<100x32xf32, #tpu.memory_space<vmem>>, vector<78x32xf32>
    %93 = arith.truncf %92 : vector<78x32xf32> to vector<78x32xbf16>
    %c0_92 = arith.constant 0 : index
    %c224 = arith.constant 224 : index
    %94 = vector.load %arg19[%c0_92, %c224] : memref<78x288xbf16, #tpu.memory_space<vmem>>, vector<78x32xbf16>
    tpu.vector_store %arg19[%c0_92, %c224], %93 {strides = array<i32>} : memref<78x288xbf16, #tpu.memory_space<vmem>>, vector<78x32xbf16>,
    %c22 = arith.constant 22 : index
    %c0_93 = arith.constant 0 : index
    %95 = vector.load %arg18[%c22, %c0_93] : memref<100x32xf32, #tpu.memory_space<vmem>>, vector<78x32xf32>
    %96 = arith.truncf %95 : vector<78x32xf32> to vector<78x32xbf16>
    %c0_94 = arith.constant 0 : index
    %c256 = arith.constant 256 : index
    %97 = vector.load %arg19[%c0_94, %c256] : memref<78x288xbf16, #tpu.memory_space<vmem>>, vector<78x32xbf16>
    tpu.vector_store %arg19[%c0_94, %c256], %96 {strides = array<i32>} : memref<78x288xbf16, #tpu.memory_space<vmem>>, vector<78x32xbf16>,
    %c0_95 = arith.constant 0 : index
    %c0_96 = arith.constant 0 : index
    %98 = vector.load %arg19[%c0_95, %c0_96] : memref<78x288xbf16, #tpu.memory_space<vmem>>, vector<78x288xbf16>
    %c0_97 = arith.constant 0 : index
    %c0_98 = arith.constant 0 : index
    %99 = vector.load %arg4[%c0_97, %c0_98] : memref<288x64xbf16, #tpu.memory_space<vmem>>, vector<288x64xbf16>
    %cst_99 = arith.constant dense<0.000000e+00> : vector<78x64xf32>
    %100 = tpu.matmul %98, %99, %cst_99 {dimension_numbers = #tpu.dot_dimension_numbers<[1], [0], [0], [1], [0, 0, 1, 1], [], []>} : vector<78x288xbf16>, vector<288x64xbf16>, vector<78x64xf32> -> vector<78x64xf32>
    %c0_100 = arith.constant 0 : index
    %c0_101 = arith.constant 0 : index
    %101 = vector.load %arg5[%c0_100, %c0_101] : memref<1x64xf32, #tpu.memory_space<vmem>>, vector<1x64xf32>
    %102 = vector.broadcast %101 : vector<1x64xf32> to vector<78x64xf32>
    %103 = arith.addf %100, %102 : vector<78x64xf32>
    %cst_102 = arith.constant 0.000000e+00 : f32
    %104 = vector.broadcast %cst_102 : f32 to vector<78x64xf32>
    %105 = arith.maximumf %103, %104 : vector<78x64xf32>
    %c0_103 = arith.constant 0 : index
    %c0_104 = arith.constant 0 : index
    %106 = vector.load %arg20[%c0_103, %c0_104] : memref<78x64xf32, #tpu.memory_space<vmem>>, vector<78x64xf32>
    tpu.vector_store %arg20[%c0_103, %c0_104], %105 {strides = array<i32>} : memref<78x64xf32, #tpu.memory_space<vmem>>, vector<78x64xf32>,
    %c0_105 = arith.constant 0 : index
    %c0_106 = arith.constant 0 : index
    %107 = vector.load %arg20[%c0_105, %c0_106] : memref<78x64xf32, #tpu.memory_space<vmem>>, vector<67x64xf32>
    %c1_107 = arith.constant 1 : index
    %c0_108 = arith.constant 0 : index
    %108 = vector.load %arg20[%c1_107, %c0_108] : memref<78x64xf32, #tpu.memory_space<vmem>>, vector<67x64xf32>
    %109 = arith.maximumf %107, %108 : vector<67x64xf32>
    %c10_109 = arith.constant 10 : index
    %c0_110 = arith.constant 0 : index
    %110 = vector.load %arg20[%c10_109, %c0_110] : memref<78x64xf32, #tpu.memory_space<vmem>>, vector<67x64xf32>
    %c11_111 = arith.constant 11 : index
    %c0_112 = arith.constant 0 : index
    %111 = vector.load %arg20[%c11_111, %c0_112] : memref<78x64xf32, #tpu.memory_space<vmem>>, vector<67x64xf32>
    %112 = arith.maximumf %110, %111 : vector<67x64xf32>
    %113 = arith.maximumf %109, %112 : vector<67x64xf32>
    %c0_113 = arith.constant 0 : index
    %c0_114 = arith.constant 0 : index
    %114 = vector.load %arg21[%c0_113, %c0_114] : memref<67x64xf32, #tpu.memory_space<vmem>>, vector<67x64xf32>
    tpu.vector_store %arg21[%c0_113, %c0_114], %113 {strides = array<i32>} : memref<67x64xf32, #tpu.memory_space<vmem>>, vector<67x64xf32>,
    %cst_115 = arith.constant 0.000000e+00 : f32
    %115 = vector.broadcast %cst_115 : f32 to vector<36x64xf32>
    %c0_116 = arith.constant 0 : index
    %c0_117 = arith.constant 0 : index
    %116 = vector.load %arg22[%c0_116, %c0_117] : memref<36x64xf32, #tpu.memory_space<vmem>>, vector<36x64xf32>
    tpu.vector_store %arg22[%c0_116, %c0_117], %115 {strides = array<i32>} : memref<36x64xf32, #tpu.memory_space<vmem>>, vector<36x64xf32>,
    %c0_118 = arith.constant 0 : index
    %c0_119 = arith.constant 0 : index
    %117 = tpu.strided_load %arg21[%c0_118, %c0_119] {strides = array<i32: 2, 1>} : memref<67x64xf32, #tpu.memory_space<vmem>>, vector<4x64xf32>
    %c7 = arith.constant 7 : index
    %c0_120 = arith.constant 0 : index
    %118 = vector.load %arg22[%c7, %c0_120] : memref<36x64xf32, #tpu.memory_space<vmem>>, vector<4x64xf32>
    tpu.vector_store %arg22[%c7, %c0_120], %117 {strides = array<i32>} : memref<36x64xf32, #tpu.memory_space<vmem>>, vector<4x64xf32>,
    %c20_121 = arith.constant 20 : index
    %c0_122 = arith.constant 0 : index
    %119 = tpu.strided_load %arg21[%c20_121, %c0_122] {strides = array<i32: 2, 1>} : memref<67x64xf32, #tpu.memory_space<vmem>>, vector<4x64xf32>
    %c13 = arith.constant 13 : index
    %c0_123 = arith.constant 0 : index
    %120 = vector.load %arg22[%c13, %c0_123] : memref<36x64xf32, #tpu.memory_space<vmem>>, vector<4x64xf32>
    tpu.vector_store %arg22[%c13, %c0_123], %119 {strides = array<i32>} : memref<36x64xf32, #tpu.memory_space<vmem>>, vector<4x64xf32>,
    %c40_124 = arith.constant 40 : index
    %c0_125 = arith.constant 0 : index
    %121 = tpu.strided_load %arg21[%c40_124, %c0_125] {strides = array<i32: 2, 1>} : memref<67x64xf32, #tpu.memory_space<vmem>>, vector<4x64xf32>
    %c19_126 = arith.constant 19 : index
    %c0_127 = arith.constant 0 : index
    %122 = vector.load %arg22[%c19_126, %c0_127] : memref<36x64xf32, #tpu.memory_space<vmem>>, vector<4x64xf32>
    tpu.vector_store %arg22[%c19_126, %c0_127], %121 {strides = array<i32>} : memref<36x64xf32, #tpu.memory_space<vmem>>, vector<4x64xf32>,
    %c60 = arith.constant 60 : index
    %c0_128 = arith.constant 0 : index
    %123 = tpu.strided_load %arg21[%c60, %c0_128] {strides = array<i32: 2, 1>} : memref<67x64xf32, #tpu.memory_space<vmem>>, vector<4x64xf32>
    %c25 = arith.constant 25 : index
    %c0_129 = arith.constant 0 : index
    %124 = vector.load %arg22[%c25, %c0_129] : memref<36x64xf32, #tpu.memory_space<vmem>>, vector<4x64xf32>
    tpu.vector_store %arg22[%c25, %c0_129], %123 {strides = array<i32>} : memref<36x64xf32, #tpu.memory_space<vmem>>, vector<4x64xf32>,
    %c0_130 = arith.constant 0 : index
    %c0_131 = arith.constant 0 : index
    %125 = vector.load %arg22[%c0_130, %c0_131] : memref<36x64xf32, #tpu.memory_space<vmem>>, vector<22x64xf32>
    %126 = arith.truncf %125 : vector<22x64xf32> to vector<22x64xbf16>
    %c0_132 = arith.constant 0 : index
    %c0_133 = arith.constant 0 : index
    %127 = vector.load %arg23[%c0_132, %c0_133] : memref<22x576xbf16, #tpu.memory_space<vmem>>, vector<22x64xbf16>
    tpu.vector_store %arg23[%c0_132, %c0_133], %126 {strides = array<i32>} : memref<22x576xbf16, #tpu.memory_space<vmem>>, vector<22x64xbf16>,
    %c1_134 = arith.constant 1 : index
    %c0_135 = arith.constant 0 : index
    %128 = vector.load %arg22[%c1_134, %c0_135] : memref<36x64xf32, #tpu.memory_space<vmem>>, vector<22x64xf32>
    %129 = arith.truncf %128 : vector<22x64xf32> to vector<22x64xbf16>
    %c0_136 = arith.constant 0 : index
    %c64_137 = arith.constant 64 : index
    %130 = vector.load %arg23[%c0_136, %c64_137] : memref<22x576xbf16, #tpu.memory_space<vmem>>, vector<22x64xbf16>
    tpu.vector_store %arg23[%c0_136, %c64_137], %129 {strides = array<i32>} : memref<22x576xbf16, #tpu.memory_space<vmem>>, vector<22x64xbf16>,
    %c2_138 = arith.constant 2 : index
    %c0_139 = arith.constant 0 : index
    %131 = vector.load %arg22[%c2_138, %c0_139] : memref<36x64xf32, #tpu.memory_space<vmem>>, vector<22x64xf32>
    %132 = arith.truncf %131 : vector<22x64xf32> to vector<22x64xbf16>
    %c0_140 = arith.constant 0 : index
    %c128_141 = arith.constant 128 : index
    %133 = vector.load %arg23[%c0_140, %c128_141] : memref<22x576xbf16, #tpu.memory_space<vmem>>, vector<22x64xbf16>
    tpu.vector_store %arg23[%c0_140, %c128_141], %132 {strides = array<i32>} : memref<22x576xbf16, #tpu.memory_space<vmem>>, vector<22x64xbf16>,
    %c6 = arith.constant 6 : index
    %c0_142 = arith.constant 0 : index
    %134 = vector.load %arg22[%c6, %c0_142] : memref<36x64xf32, #tpu.memory_space<vmem>>, vector<22x64xf32>
    %135 = arith.truncf %134 : vector<22x64xf32> to vector<22x64xbf16>
    %c0_143 = arith.constant 0 : index
    %c192_144 = arith.constant 192 : index
    %136 = vector.load %arg23[%c0_143, %c192_144] : memref<22x576xbf16, #tpu.memory_space<vmem>>, vector<22x64xbf16>
    tpu.vector_store %arg23[%c0_143, %c192_144], %135 {strides = array<i32>} : memref<22x576xbf16, #tpu.memory_space<vmem>>, vector<22x64xbf16>,
    %c7_145 = arith.constant 7 : index
    %c0_146 = arith.constant 0 : index
    %137 = vector.load %arg22[%c7_145, %c0_146] : memref<36x64xf32, #tpu.memory_space<vmem>>, vector<22x64xf32>
    %138 = arith.truncf %137 : vector<22x64xf32> to vector<22x64xbf16>
    %c0_147 = arith.constant 0 : index
    %c256_148 = arith.constant 256 : index
    %139 = vector.load %arg23[%c0_147, %c256_148] : memref<22x576xbf16, #tpu.memory_space<vmem>>, vector<22x64xbf16>
    tpu.vector_store %arg23[%c0_147, %c256_148], %138 {strides = array<i32>} : memref<22x576xbf16, #tpu.memory_space<vmem>>, vector<22x64xbf16>,
    %c8_149 = arith.constant 8 : index
    %c0_150 = arith.constant 0 : index
    %140 = vector.load %arg22[%c8_149, %c0_150] : memref<36x64xf32, #tpu.memory_space<vmem>>, vector<22x64xf32>
    %141 = arith.truncf %140 : vector<22x64xf32> to vector<22x64xbf16>
    %c0_151 = arith.constant 0 : index
    %c320 = arith.constant 320 : index
    %142 = vector.load %arg23[%c0_151, %c320] : memref<22x576xbf16, #tpu.memory_space<vmem>>, vector<22x64xbf16>
    tpu.vector_store %arg23[%c0_151, %c320], %141 {strides = array<i32>} : memref<22x576xbf16, #tpu.memory_space<vmem>>, vector<22x64xbf16>,
    %c12_152 = arith.constant 12 : index
    %c0_153 = arith.constant 0 : index
    %143 = vector.load %arg22[%c12_152, %c0_153] : memref<36x64xf32, #tpu.memory_space<vmem>>, vector<22x64xf32>
    %144 = arith.truncf %143 : vector<22x64xf32> to vector<22x64xbf16>
    %c0_154 = arith.constant 0 : index
    %c384 = arith.constant 384 : index
    %145 = vector.load %arg23[%c0_154, %c384] : memref<22x576xbf16, #tpu.memory_space<vmem>>, vector<22x64xbf16>
    tpu.vector_store %arg23[%c0_154, %c384], %144 {strides = array<i32>} : memref<22x576xbf16, #tpu.memory_space<vmem>>, vector<22x64xbf16>,
    %c13_155 = arith.constant 13 : index
    %c0_156 = arith.constant 0 : index
    %146 = vector.load %arg22[%c13_155, %c0_156] : memref<36x64xf32, #tpu.memory_space<vmem>>, vector<22x64xf32>
    %147 = arith.truncf %146 : vector<22x64xf32> to vector<22x64xbf16>
    %c0_157 = arith.constant 0 : index
    %c448 = arith.constant 448 : index
    %148 = vector.load %arg23[%c0_157, %c448] : memref<22x576xbf16, #tpu.memory_space<vmem>>, vector<22x64xbf16>
    tpu.vector_store %arg23[%c0_157, %c448], %147 {strides = array<i32>} : memref<22x576xbf16, #tpu.memory_space<vmem>>, vector<22x64xbf16>,
    %c14 = arith.constant 14 : index
    %c0_158 = arith.constant 0 : index
    %149 = vector.load %arg22[%c14, %c0_158] : memref<36x64xf32, #tpu.memory_space<vmem>>, vector<22x64xf32>
    %150 = arith.truncf %149 : vector<22x64xf32> to vector<22x64xbf16>
    %c0_159 = arith.constant 0 : index
    %c512 = arith.constant 512 : index
    %151 = vector.load %arg23[%c0_159, %c512] : memref<22x576xbf16, #tpu.memory_space<vmem>>, vector<22x64xbf16>
    tpu.vector_store %arg23[%c0_159, %c512], %150 {strides = array<i32>} : memref<22x576xbf16, #tpu.memory_space<vmem>>, vector<22x64xbf16>,
    %c0_160 = arith.constant 0 : index
    %c0_161 = arith.constant 0 : index
    %152 = vector.load %arg23[%c0_160, %c0_161] : memref<22x576xbf16, #tpu.memory_space<vmem>>, vector<22x576xbf16>
    %c0_162 = arith.constant 0 : index
    %c0_163 = arith.constant 0 : index
    %153 = vector.load %arg6[%c0_162, %c0_163] : memref<576x128xbf16, #tpu.memory_space<vmem>>, vector<576x128xbf16>
    %cst_164 = arith.constant dense<0.000000e+00> : vector<22x128xf32>
    %154 = tpu.matmul %152, %153, %cst_164 {dimension_numbers = #tpu.dot_dimension_numbers<[1], [0], [0], [1], [0, 0, 1, 1], [], []>} : vector<22x576xbf16>, vector<576x128xbf16>, vector<22x128xf32> -> vector<22x128xf32>
    %c0_165 = arith.constant 0 : index
    %c0_166 = arith.constant 0 : index
    %155 = vector.load %arg7[%c0_165, %c0_166] : memref<1x128xf32, #tpu.memory_space<vmem>>, vector<1x128xf32>
    %156 = vector.broadcast %155 : vector<1x128xf32> to vector<22x128xf32>
    %157 = arith.addf %154, %156 : vector<22x128xf32>
    %cst_167 = arith.constant 0.000000e+00 : f32
    %158 = vector.broadcast %cst_167 : f32 to vector<22x128xf32>
    %159 = arith.maximumf %157, %158 : vector<22x128xf32>
    %c0_168 = arith.constant 0 : index
    %c0_169 = arith.constant 0 : index
    %160 = vector.load %arg24[%c0_168, %c0_169] : memref<22x128xf32, #tpu.memory_space<vmem>>, vector<22x128xf32>
    tpu.vector_store %arg24[%c0_168, %c0_169], %159 {strides = array<i32>} : memref<22x128xf32, #tpu.memory_space<vmem>>, vector<22x128xf32>,
    %c0_170 = arith.constant 0 : index
    %c0_171 = arith.constant 0 : index
    %161 = vector.load %arg24[%c0_170, %c0_171] : memref<22x128xf32, #tpu.memory_space<vmem>>, vector<15x128xf32>
    %c1_172 = arith.constant 1 : index
    %c0_173 = arith.constant 0 : index
    %162 = vector.load %arg24[%c1_172, %c0_173] : memref<22x128xf32, #tpu.memory_space<vmem>>, vector<15x128xf32>
    %163 = arith.maximumf %161, %162 : vector<15x128xf32>
    %c6_174 = arith.constant 6 : index
    %c0_175 = arith.constant 0 : index
    %164 = vector.load %arg24[%c6_174, %c0_175] : memref<22x128xf32, #tpu.memory_space<vmem>>, vector<15x128xf32>
    %c7_176 = arith.constant 7 : index
    %c0_177 = arith.constant 0 : index
    %165 = vector.load %arg24[%c7_176, %c0_177] : memref<22x128xf32, #tpu.memory_space<vmem>>, vector<15x128xf32>
    %166 = arith.maximumf %164, %165 : vector<15x128xf32>
    %167 = arith.maximumf %163, %166 : vector<15x128xf32>
    %c0_178 = arith.constant 0 : index
    %c0_179 = arith.constant 0 : index
    %168 = vector.load %arg25[%c0_178, %c0_179] : memref<15x128xf32, #tpu.memory_space<vmem>>, vector<15x128xf32>
    tpu.vector_store %arg25[%c0_178, %c0_179], %167 {strides = array<i32>} : memref<15x128xf32, #tpu.memory_space<vmem>>, vector<15x128xf32>,
    %c0_180 = arith.constant 0 : index
    %c0_181 = arith.constant 0 : index
    %169 = vector.load %arg25[%c0_180, %c0_181] : memref<15x128xf32, #tpu.memory_space<vmem>>, vector<1x128xf32>
    %c2_182 = arith.constant 2 : index
    %c0_183 = arith.constant 0 : index
    %170 = vector.load %arg25[%c2_182, %c0_183] : memref<15x128xf32, #tpu.memory_space<vmem>>, vector<1x128xf32>
    %c12_184 = arith.constant 12 : index
    %c0_185 = arith.constant 0 : index
    %171 = vector.load %arg25[%c12_184, %c0_185] : memref<15x128xf32, #tpu.memory_space<vmem>>, vector<1x128xf32>
    %c14_186 = arith.constant 14 : index
    %c0_187 = arith.constant 0 : index
    %172 = vector.load %arg25[%c14_186, %c0_187] : memref<15x128xf32, #tpu.memory_space<vmem>>, vector<1x128xf32>
    %173 = tpu.concatenate %169, %170, %171, %172 in 1 : vector<1x128xf32>, vector<1x128xf32>, vector<1x128xf32>, vector<1x128xf32> -> vector<1x512xf32>
    %174 = arith.truncf %173 : vector<1x512xf32> to vector<1x512xbf16>
    %c0_188 = arith.constant 0 : index
    %c0_189 = arith.constant 0 : index
    %175 = vector.load %arg8[%c0_188, %c0_189] : memref<512x512xbf16, #tpu.memory_space<vmem>>, vector<512x512xbf16>
    %cst_190 = arith.constant dense<0.000000e+00> : vector<1x512xf32>
    %176 = tpu.matmul %174, %175, %cst_190 {dimension_numbers = #tpu.dot_dimension_numbers<[1], [0], [0], [1], [0, 0, 1, 1], [], []>} : vector<1x512xbf16>, vector<512x512xbf16>, vector<1x512xf32> -> vector<1x512xf32>
    %c0_191 = arith.constant 0 : index
    %c0_192 = arith.constant 0 : index
    %177 = vector.load %arg9[%c0_191, %c0_192] : memref<1x512xf32, #tpu.memory_space<vmem>>, vector<1x512xf32>
    %178 = arith.addf %176, %177 : vector<1x512xf32>
    %cst_193 = arith.constant 0.000000e+00 : f32
    %179 = vector.broadcast %cst_193 : f32 to vector<1x512xf32>
    %180 = arith.maximumf %178, %179 : vector<1x512xf32>
    %181 = arith.truncf %180 : vector<1x512xf32> to vector<1x512xbf16>
    %c0_194 = arith.constant 0 : index
    %c0_195 = arith.constant 0 : index
    %182 = vector.load %arg10[%c0_194, %c0_195] : memref<512x256xbf16, #tpu.memory_space<vmem>>, vector<512x256xbf16>
    %cst_196 = arith.constant dense<0.000000e+00> : vector<1x256xf32>
    %183 = tpu.matmul %181, %182, %cst_196 {dimension_numbers = #tpu.dot_dimension_numbers<[1], [0], [0], [1], [0, 0, 1, 1], [], []>} : vector<1x512xbf16>, vector<512x256xbf16>, vector<1x256xf32> -> vector<1x256xf32>
    %c0_197 = arith.constant 0 : index
    %c0_198 = arith.constant 0 : index
    %184 = vector.load %arg11[%c0_197, %c0_198] : memref<1x256xf32, #tpu.memory_space<vmem>>, vector<1x256xf32>
    %185 = arith.addf %183, %184 : vector<1x256xf32>
    %cst_199 = arith.constant 0.000000e+00 : f32
    %186 = vector.broadcast %cst_199 : f32 to vector<1x256xf32>
    %187 = arith.maximumf %185, %186 : vector<1x256xf32>
    %188 = arith.truncf %187 : vector<1x256xf32> to vector<1x256xbf16>
    %c0_200 = arith.constant 0 : index
    %c0_201 = arith.constant 0 : index
    %189 = vector.load %arg12[%c0_200, %c0_201] : memref<256x2xbf16, #tpu.memory_space<vmem>>, vector<256x2xbf16>
    %cst_202 = arith.constant dense<0.000000e+00> : vector<1x2xf32>
    %190 = tpu.matmul %188, %189, %cst_202 {dimension_numbers = #tpu.dot_dimension_numbers<[1], [0], [0], [1], [0, 0, 1, 1], [], []>} : vector<1x256xbf16>, vector<256x2xbf16>, vector<1x2xf32> -> vector<1x2xf32>
    %c0_203 = arith.constant 0 : index
    %c0_204 = arith.constant 0 : index
    %191 = vector.load %arg13[%c0_203, %c0_204] : memref<1x2xf32, #tpu.memory_space<vmem>>, vector<1x2xf32>
    %192 = arith.addf %190, %191 : vector<1x2xf32>
    %c0_205 = arith.constant 0 : index
    %c0_206 = arith.constant 0 : index
    %c0_207 = arith.constant 0 : index
    %193 = vector.load %arg14[%c0_205, %c0_206, %c0_207] : memref<1x1x2xf32, #tpu.memory_space<vmem>>, vector<1x1x2xf32>
    %194 = vector.shape_cast %193 : vector<1x1x2xf32> to vector<1x2xf32>
    %195 = vector.shape_cast %192 : vector<1x2xf32> to vector<1x1x2xf32>
    tpu.vector_store %arg14[%c0_205, %c0_206, %c0_207], %195 {strides = array<i32>} : memref<1x1x2xf32, #tpu.memory_space<vmem>>, vector<1x1x2xf32>,
    return
  }
  func.func @transform_0(%arg0: i32) -> (i32, i32, i32) {
    %c0_i32 = arith.constant 0 : i32
    %c0_i32_0 = arith.constant 0 : i32
    %c0_i32_1 = arith.constant 0 : i32
    return %arg0, %c0_i32, %c0_i32_0 : i32, i32, i32
  }
  func.func @transform_1(%arg0: i32) -> (i32, i32) {
    %c0_i32 = arith.constant 0 : i32
    %c0_i32_0 = arith.constant 0 : i32
    %c0_i32_1 = arith.constant 0 : i32
    return %c0_i32, %c0_i32_0 : i32, i32
  }
  func.func @transform_2(%arg0: i32) -> (i32, i32) {
    %c0_i32 = arith.constant 0 : i32
    %c0_i32_0 = arith.constant 0 : i32
    %c0_i32_1 = arith.constant 0 : i32
    return %c0_i32, %c0_i32_0 : i32, i32
  }
  func.func @transform_3(%arg0: i32) -> (i32, i32) {
    %c0_i32 = arith.constant 0 : i32
    %c0_i32_0 = arith.constant 0 : i32
    %c0_i32_1 = arith.constant 0 : i32
    return %c0_i32, %c0_i32_0 : i32, i32
  }
  func.func @transform_4(%arg0: i32) -> (i32, i32) {
    %c0_i32 = arith.constant 0 : i32
    %c0_i32_0 = arith.constant 0 : i32
    %c0_i32_1 = arith.constant 0 : i32
    return %c0_i32, %c0_i32_0 : i32, i32
  }
  func.func @transform_5(%arg0: i32) -> (i32, i32) {
    %c0_i32 = arith.constant 0 : i32
    %c0_i32_0 = arith.constant 0 : i32
    %c0_i32_1 = arith.constant 0 : i32
    return %c0_i32, %c0_i32_0 : i32, i32
  }
  func.func @transform_6(%arg0: i32) -> (i32, i32) {
    %c0_i32 = arith.constant 0 : i32
    %c0_i32_0 = arith.constant 0 : i32
    %c0_i32_1 = arith.constant 0 : i32
    return %c0_i32, %c0_i32_0 : i32, i32
  }
  func.func @transform_7(%arg0: i32) -> (i32, i32) {
    %c0_i32 = arith.constant 0 : i32
    %c0_i32_0 = arith.constant 0 : i32
    %c0_i32_1 = arith.constant 0 : i32
    return %c0_i32, %c0_i32_0 : i32, i32
  }
  func.func @transform_8(%arg0: i32) -> (i32, i32) {
    %c0_i32 = arith.constant 0 : i32
    %c0_i32_0 = arith.constant 0 : i32
    %c0_i32_1 = arith.constant 0 : i32
    return %c0_i32, %c0_i32_0 : i32, i32
  }
  func.func @transform_9(%arg0: i32) -> (i32, i32) {
    %c0_i32 = arith.constant 0 : i32
    %c0_i32_0 = arith.constant 0 : i32
    %c0_i32_1 = arith.constant 0 : i32
    return %c0_i32, %c0_i32_0 : i32, i32
  }
  func.func @transform_10(%arg0: i32) -> (i32, i32) {
    %c0_i32 = arith.constant 0 : i32
    %c0_i32_0 = arith.constant 0 : i32
    %c0_i32_1 = arith.constant 0 : i32
    return %c0_i32, %c0_i32_0 : i32, i32
  }
  func.func @transform_11(%arg0: i32) -> (i32, i32) {
    %c0_i32 = arith.constant 0 : i32
    %c0_i32_0 = arith.constant 0 : i32
    %c0_i32_1 = arith.constant 0 : i32
    return %c0_i32, %c0_i32_0 : i32, i32
  }
  func.func @transform_12(%arg0: i32) -> (i32, i32) {
    %c0_i32 = arith.constant 0 : i32
    %c0_i32_0 = arith.constant 0 : i32
    %c0_i32_1 = arith.constant 0 : i32
    return %c0_i32, %c0_i32_0 : i32, i32
  }
  func.func @transform_13(%arg0: i32) -> (i32, i32, i32) {
    %c0_i32 = arith.constant 0 : i32
    %c0_i32_0 = arith.constant 0 : i32
    %c0_i32_1 = arith.constant 0 : i32
    return %arg0, %c0_i32, %c0_i32_0 : i32, i32, i32
  }
}

</mosaic_0001>

<llo_original>
// kernel: cnn_forward.1
$region0: #{cnn_forward.1}
  #allocation0 [shape = 'u32[]', space=smem, size = 0x4, offset = 0x4, fixed_abs, tag = 'smem constant byte address 0x4 - core index']
  #allocation1 [shape = 'u32[144,128]{1,0:T(1,128)}', space=vmem, size = 0x12000, scoped, tag = 'internal scratch']
  #allocation2 [shape = 'bf16[286,72]{1,0:T(8,128)(2,1)}', space=vmem, size = 0x12000, scoped, tag = 'scratch operand']
  #allocation3 [shape = 'f32[286,32]{1,0:T(8,128)}', space=vmem, size = 0x24000, scoped, tag = 'scratch operand']
  #allocation4 [shape = 'f32[267,32]{1,0:T(8,128)}', space=vmem, size = 0x22000, scoped, tag = 'scratch operand']
  #allocation5 [shape = 'f32[100,32]{1,0:T(8,128)}', space=vmem, size = 0xd000, scoped, tag = 'scratch operand']
  #allocation6 [shape = 'bf16[78,288]{1,0:T(8,128)(2,1)}', space=vmem, size = 0xf000, scoped, tag = 'scratch operand']
  #allocation7 [shape = 'f32[78,64]{1,0:T(8,128)}', space=vmem, size = 0xa000, scoped, tag = 'scratch operand']
  #allocation8 [shape = 'f32[67,64]{1,0:T(8,128)}', space=vmem, size = 0x9000, scoped, tag = 'scratch operand']
  #allocation9 [shape = 'f32[36,64]{1,0:T(8,128)}', space=vmem, size = 0x5000, scoped, tag = 'scratch operand']
  #allocation10 [shape = 'bf16[22,576]{1,0:T(8,128)(2,1)}', space=vmem, size = 0x7800, scoped, tag = 'scratch operand']
  #allocation11 [shape = 'f32[22,128]{1,0:T(8,128)}', space=vmem, size = 0x3000, scoped, tag = 'scratch operand']
  #allocation12 [shape = 'f32[15,128]{1,0:T(8,128)}', space=vmem, size = 0x2000, scoped, tag = 'scratch operand']
  %s0 = inlined_call_operand.vmem [shape: f32[2,324,8], index: 0, kind: input, shape index: {}]
  %s1 = inlined_call_operand.vmem [shape: bf16[72,32], index: 1, kind: input, shape index: {}]
  %s2 = inlined_call_operand.vmem [shape: f32[1,32], index: 2, kind: input, shape index: {}]
  %s3 = inlined_call_operand.vmem [shape: bf16[288,64], index: 3, kind: input, shape index: {}]
  %s4 = inlined_call_operand.vmem [shape: f32[1,64], index: 4, kind: input, shape index: {}]
  %s5 = inlined_call_operand.vmem [shape: bf16[576,128], index: 5, kind: input, shape index: {}]
  %s6 = inlined_call_operand.vmem [shape: f32[1,128], index: 6, kind: input, shape index: {}]
  %s7 = inlined_call_operand.vmem [shape: bf16[512,512], index: 7, kind: input, shape index: {}]
  %s8 = inlined_call_operand.vmem [shape: f32[1,512], index: 8, kind: input, shape index: {}]
  %s9 = inlined_call_operand.vmem [shape: bf16[512,256], index: 9, kind: input, shape index: {}]
  %s10 = inlined_call_operand.vmem [shape: f32[1,256], index: 10, kind: input, shape index: {}]
  %s11 = inlined_call_operand.vmem [shape: bf16[256,2], index: 11, kind: input, shape index: {}]
  %s12 = inlined_call_operand.vmem [shape: f32[1,2], index: 12, kind: input, shape index: {}]
  %s13 = inlined_call_operand.hbm [shape: f32[2,1,2], index: 13, kind: output, shape index: {}]
  %s14 = sld [smem:[#allocation0]]
  $region85: #{cnn_forward.1} parent=0
    _
  %s16 = ssub.s32 1, %s14
  %s17 = scalar_select 0, %s16, %s14
  $region1: #{cnn_forward.1} parent=0
    #allocation13 [shape = 'u8[1024]{0}', space=vmem, size = 0x400, scoped, tag = 'output window, operand 0']
    #allocation14 [shape = 's32[2]{0}', space=sflag, size = 0x8, scoped, tag = 'scoped memory for cnn_forward.1']
    %18 = vsyncpa [#allocation14], 0
    %s19 = scalar_lea.sflag [#allocation14], 1
    %20 = vsyncpa %s19, 0
    loop: start=0, step=1, limit=4
    $region2: #{cnn_forward.1} parent=1 // loop_pre_header
      _
    $region3: #{cnn_forward.1} parent=1 // loop_header
      %s22 = sphi 0, %s26
      %p23 = scmp.ge.s32.totalorder %s22, 4
      %s32 = sphi 0, %s34
      %s35 = sphi 0, %s32
      %s36 = sphi 0, %s35
      %s52 = sphi 0, %s36
      %s56 = sphi 0, %s56
      %s58 = sphi 0, %s56
      %s59 = sphi 0, %s58
      %s73 = sphi 0, %s59
      %s77 = sphi 0, %s77
      %s79 = sphi 0, %s77
      %s80 = sphi 0, %s79
      %s94 = sphi 0, %s80
      %s98 = sphi 0, %s98
      %s100 = sphi 0, %s98
      %s101 = sphi 0, %s100
      %s115 = sphi 0, %s101
      %s119 = sphi 0, %s119
      %s121 = sphi 0, %s119
      %s122 = sphi 0, %s121
      %s136 = sphi 0, %s122
      %s140 = sphi 0, %s140
      %s142 = sphi 0, %s140
      %s143 = sphi 0, %s142
      %s157 = sphi 0, %s143
      %s161 = sphi 0, %s161
      %s163 = sphi 0, %s161
      %s164 = sphi 0, %s163
      %s178 = sphi 0, %s164
      %s182 = sphi 0, %s182
      %s184 = sphi 0, %s182
      %s185 = sphi 0, %s184
      %s199 = sphi 0, %s185
      %s203 = sphi 0, %s203
      %s205 = sphi 0, %s203
      %s206 = sphi 0, %s205
      %s220 = sphi 0, %s206
      %s224 = sphi 0, %s224
      %s226 = sphi 0, %s224
      %s227 = sphi 0, %s226
      %s241 = sphi 0, %s227
      %s245 = sphi 0, %s245
      %s247 = sphi 0, %s245
      %s248 = sphi 0, %s247
      %s262 = sphi 0, %s248
      %s266 = sphi 0, %s266
      %s268 = sphi 0, %s266
      %s269 = sphi 0, %s268
      %s283 = sphi 0, %s269
      %s287 = sphi 0, %s287
      %s289 = sphi 0, %s287
      %s290 = sphi 0, %s289
      %s304 = sphi 0, %s290
      %s310 = sphi 0, %s312
      %s313 = sphi 0, %s310
      %s314 = sphi 0, %s313
      %s330 = sphi 0, %s314
    $region4: #{cnn_forward.1} parent=1 // loop_header_branch
      %25 = sbr.rel (%p23) target = $region8
    $region5: #{cnn_forward.1} parent=1 // loop_body
      %s27 = ssub.s32 %s22, 1
      %s28 = ssub.s32 %s22, 2
      %s29 = sadd.s32 %s22, 1
      %s30 = ssub.s32 %s22, %s29
      %p31 = scmp.eq.s32.totalorder %s30, 0
      %s33 = sadd.s32 %s32, 1
      %s34 = scalar_select %p31, %s32, %s33
      %p37 = pneg %p31
      %p38 = scmp.eq.s32.totalorder %s22, 1
      %p39 = por %p37, %p38
      %p40 = scmp.ne.s32.totalorder %s32, %s35
      %p41 = scmp.eq.s32.totalorder %s22, 0
      %p42 = por %p40, %p41
      %p43 = scmp.ne.s32.totalorder %s32, %s35
      %p44 = scmp.eq.s32.totalorder %s27, 1
      %p45 = por %p43, %p44
      %p46 = scmp.ne.s32.totalorder %s35, %s36
      %p47 = scmp.eq.s32.totalorder %s27, 0
      %p48 = por %p46, %p47
      %p49 = scmp.ne.s32.totalorder %s35, %s36
      %p50 = scmp.eq.s32.totalorder %s28, 1
      %p51 = por %p49, %p50
      %p53 = scmp.ne.s32.totalorder %s36, %s52
      %p54 = scmp.eq.s32.totalorder %s28, 0
      %p55 = por %p53, %p54
      %s57 = sadd.s32 %s56, 1
      %p60 = scmp.eq.s32.totalorder %s22, 1
      %p61 = scmp.ne.s32.totalorder %s56, %s58
      %p62 = scmp.eq.s32.totalorder %s22, 0
      %p63 = por %p61, %p62
      %p64 = scmp.ne.s32.totalorder %s56, %s58
      %p65 = scmp.eq.s32.totalorder %s27, 1
      %p66 = por %p64, %p65
      %p67 = scmp.ne.s32.totalorder %s58, %s59
      %p68 = scmp.eq.s32.totalorder %s27, 0
      %p69 = por %p67, %p68
      %p70 = scmp.ne.s32.totalorder %s58, %s59
      %p71 = scmp.eq.s32.totalorder %s28, 1
      %p72 = por %p70, %p71
      %p74 = scmp.ne.s32.totalorder %s59, %s73
      %p75 = scmp.eq.s32.totalorder %s28, 0
      %p76 = por %p74, %p75
      %s78 = sadd.s32 %s77, 1
      %p81 = scmp.eq.s32.totalorder %s22, 1
      %p82 = scmp.ne.s32.totalorder %s77, %s79
      %p83 = scmp.eq.s32.totalorder %s22, 0
      %p84 = por %p82, %p83
      %p85 = scmp.ne.s32.totalorder %s77, %s79
      %p86 = scmp.eq.s32.totalorder %s27, 1
      %p87 = por %p85, %p86
      %p88 = scmp.ne.s32.totalorder %s79, %s80
      %p89 = scmp.eq.s32.totalorder %s27, 0
      %p90 = por %p88, %p89
      %p91 = scmp.ne.s32.totalorder %s79, %s80
      %p92 = scmp.eq.s32.totalorder %s28, 1
      %p93 = por %p91, %p92
      %p95 = scmp.ne.s32.totalorder %s80, %s94
      %p96 = scmp.eq.s32.totalorder %s28, 0
      %p97 = por %p95, %p96
      %s99 = sadd.s32 %s98, 1
      %p102 = scmp.eq.s32.totalorder %s22, 1
      %p103 = scmp.ne.s32.totalorder %s98, %s100
      %p104 = scmp.eq.s32.totalorder %s22, 0
      %p105 = por %p103, %p104
      %p106 = scmp.ne.s32.totalorder %s98, %s100
      %p107 = scmp.eq.s32.totalorder %s27, 1
      %p108 = por %p106, %p107
      %p109 = scmp.ne.s32.totalorder %s100, %s101
      %p110 = scmp.eq.s32.totalorder %s27, 0
      %p111 = por %p109, %p110
      %p112 = scmp.ne.s32.totalorder %s100, %s101
      %p113 = scmp.eq.s32.totalorder %s28, 1
      %p114 = por %p112, %p113
      %p116 = scmp.ne.s32.totalorder %s101, %s115
      %p117 = scmp.eq.s32.totalorder %s28, 0
      %p118 = por %p116, %p117
      %s120 = sadd.s32 %s119, 1
      %p123 = scmp.eq.s32.totalorder %s22, 1
      %p124 = scmp.ne.s32.totalorder %s119, %s121
      %p125 = scmp.eq.s32.totalorder %s22, 0
      %p126 = por %p124, %p125
      %p127 = scmp.ne.s32.totalorder %s119, %s121
      %p128 = scmp.eq.s32.totalorder %s27, 1
      %p129 = por %p127, %p128
      %p130 = scmp.ne.s32.totalorder %s121, %s122
      %p131 = scmp.eq.s32.totalorder %s27, 0
      %p132 = por %p130, %p131
      %p133 = scmp.ne.s32.totalorder %s121, %s122
      %p134 = scmp.eq.s32.totalorder %s28, 1
      %p135 = por %p133, %p134
      %p137 = scmp.ne.s32.totalorder %s122, %s136
      %p138 = scmp.eq.s32.totalorder %s28, 0
      %p139 = por %p137, %p138
      %s141 = sadd.s32 %s140, 1
      %p144 = scmp.eq.s32.totalorder %s22, 1
      %p145 = scmp.ne.s32.totalorder %s140, %s142
      %p146 = scmp.eq.s32.totalorder %s22, 0
      %p147 = por %p145, %p146
      %p148 = scmp.ne.s32.totalorder %s140, %s142
      %p149 = scmp.eq.s32.totalorder %s27, 1
      %p150 = por %p148, %p149
      %p151 = scmp.ne.s32.totalorder %s142, %s143
      %p152 = scmp.eq.s32.totalorder %s27, 0
      %p153 = por %p151, %p152
      %p154 = scmp.ne.s32.totalorder %s142, %s143
      %p155 = scmp.eq.s32.totalorder %s28, 1
      %p156 = por %p154, %p155
      %p158 = scmp.ne.s32.totalorder %s143, %s157
      %p159 = scmp.eq.s32.totalorder %s28, 0
      %p160 = por %p158, %p159
      %s162 = sadd.s32 %s161, 1
      %p165 = scmp.eq.s32.totalorder %s22, 1
      %p166 = scmp.ne.s32.totalorder %s161, %s163
      %p167 = scmp.eq.s32.totalorder %s22, 0
      %p168 = por %p166, %p167
      %p169 = scmp.ne.s32.totalorder %s161, %s163
      %p170 = scmp.eq.s32.totalorder %s27, 1
      %p171 = por %p169, %p170
      %p172 = scmp.ne.s32.totalorder %s163, %s164
      %p173 = scmp.eq.s32.totalorder %s27, 0
      %p174 = por %p172, %p173
      %p175 = scmp.ne.s32.totalorder %s163, %s164
      %p176 = scmp.eq.s32.totalorder %s28, 1
      %p177 = por %p175, %p176
      %p179 = scmp.ne.s32.totalorder %s164, %s178
      %p180 = scmp.eq.s32.totalorder %s28, 0
      %p181 = por %p179, %p180
      %s183 = sadd.s32 %s182, 1
      %p186 = scmp.eq.s32.totalorder %s22, 1
      %p187 = scmp.ne.s32.totalorder %s182, %s184
      %p188 = scmp.eq.s32.totalorder %s22, 0
      %p189 = por %p187, %p188
      %p190 = scmp.ne.s32.totalorder %s182, %s184
      %p191 = scmp.eq.s32.totalorder %s27, 1
      %p192 = por %p190, %p191
      %p193 = scmp.ne.s32.totalorder %s184, %s185
      %p194 = scmp.eq.s32.totalorder %s27, 0
      %p195 = por %p193, %p194
      %p196 = scmp.ne.s32.totalorder %s184, %s185
      %p197 = scmp.eq.s32.totalorder %s28, 1
      %p198 = por %p196, %p197
      %p200 = scmp.ne.s32.totalorder %s185, %s199
      %p201 = scmp.eq.s32.totalorder %s28, 0
      %p202 = por %p200, %p201
      %s204 = sadd.s32 %s203, 1
      %p207 = scmp.eq.s32.totalorder %s22, 1
      %p208 = scmp.ne.s32.totalorder %s203, %s205
      %p209 = scmp.eq.s32.totalorder %s22, 0
      %p210 = por %p208, %p209
      %p211 = scmp.ne.s32.totalorder %s203, %s205
      %p212 = scmp.eq.s32.totalorder %s27, 1
      %p213 = por %p211, %p212
      %p214 = scmp.ne.s32.totalorder %s205, %s206
      %p215 = scmp.eq.s32.totalorder %s27, 0
      %p216 = por %p214, %p215
      %p217 = scmp.ne.s32.totalorder %s205, %s206
      %p218 = scmp.eq.s32.totalorder %s28, 1
      %p219 = por %p217, %p218
      %p221 = scmp.ne.s32.totalorder %s206, %s220
      %p222 = scmp.eq.s32.totalorder %s28, 0
      %p223 = por %p221, %p222
      %s225 = sadd.s32 %s224, 1
      %p228 = scmp.eq.s32.totalorder %s22, 1
      %p229 = scmp.ne.s32.totalorder %s224, %s226
      %p230 = scmp.eq.s32.totalorder %s22, 0
      %p231 = por %p229, %p230
      %p232 = scmp.ne.s32.totalorder %s224, %s226
      %p233 = scmp.eq.s32.totalorder %s27, 1
      %p234 = por %p232, %p233
      %p235 = scmp.ne.s32.totalorder %s226, %s227
      %p236 = scmp.eq.s32.totalorder %s27, 0
      %p237 = por %p235, %p236
      %p238 = scmp.ne.s32.totalorder %s226, %s227
      %p239 = scmp.eq.s32.totalorder %s28, 1
      %p240 = por %p238, %p239
      %p242 = scmp.ne.s32.totalorder %s227, %s241
      %p243 = scmp.eq.s32.totalorder %s28, 0
      %p244 = por %p242, %p243
      %s246 = sadd.s32 %s245, 1
      %p249 = scmp.eq.s32.totalorder %s22, 1
      %p250 = scmp.ne.s32.totalorder %s245, %s247
      %p251 = scmp.eq.s32.totalorder %s22, 0
      %p252 = por %p250, %p251
      %p253 = scmp.ne.s32.totalorder %s245, %s247
      %p254 = scmp.eq.s32.totalorder %s27, 1
      %p255 = por %p253, %p254
      %p256 = scmp.ne.s32.totalorder %s247, %s248
      %p257 = scmp.eq.s32.totalorder %s27, 0
      %p258 = por %p256, %p257
      %p259 = scmp.ne.s32.totalorder %s247, %s248
      %p260 = scmp.eq.s32.totalorder %s28, 1
      %p261 = por %p259, %p260
      %p263 = scmp.ne.s32.totalorder %s248, %s262
      %p264 = scmp.eq.s32.totalorder %s28, 0
      %p265 = por %p263, %p264
      %s267 = sadd.s32 %s266, 1
      %p270 = scmp.eq.s32.totalorder %s22, 1
      %p271 = scmp.ne.s32.totalorder %s266, %s268
      %p272 = scmp.eq.s32.totalorder %s22, 0
      %p273 = por %p271, %p272
      %p274 = scmp.ne.s32.totalorder %s266, %s268
      %p275 = scmp.eq.s32.totalorder %s27, 1
      %p276 = por %p274, %p275
      %p277 = scmp.ne.s32.totalorder %s268, %s269
      %p278 = scmp.eq.s32.totalorder %s27, 0
      %p279 = por %p277, %p278
      %p280 = scmp.ne.s32.totalorder %s268, %s269
      %p281 = scmp.eq.s32.totalorder %s28, 1
      %p282 = por %p280, %p281
      %p284 = scmp.ne.s32.totalorder %s269, %s283
      %p285 = scmp.eq.s32.totalorder %s28, 0
      %p286 = por %p284, %p285
      %s288 = sadd.s32 %s287, 1
      %p291 = scmp.eq.s32.totalorder %s22, 1
      %p292 = scmp.ne.s32.totalorder %s287, %s289
      %p293 = scmp.eq.s32.totalorder %s22, 0
      %p294 = por %p292, %p293
      %p295 = scmp.ne.s32.totalorder %s287, %s289
      %p296 = scmp.eq.s32.totalorder %s27, 1
      %p297 = por %p295, %p296
      %p298 = scmp.ne.s32.totalorder %s289, %s290
      %p299 = scmp.eq.s32.totalorder %s27, 0
      %p300 = por %p298, %p299
      %p301 = scmp.ne.s32.totalorder %s289, %s290
      %p302 = scmp.eq.s32.totalorder %s28, 1
      %p303 = por %p301, %p302
      %p305 = scmp.ne.s32.totalorder %s290, %s304
      %p306 = scmp.eq.s32.totalorder %s28, 0
      %p307 = por %p305, %p306
      %s308 = ssub.s32 %s22, %s29
      %p309 = scmp.eq.s32.totalorder %s308, 0
      %s311 = sadd.s32 %s310, 1
      %s312 = scalar_select %p309, %s310, %s311
      %p315 = pneg %p309
      %p316 = scmp.eq.s32.totalorder %s22, 1
      %p317 = por %p315, %p316
      %p318 = scmp.ne.s32.totalorder %s310, %s313
      %p319 = scmp.eq.s32.totalorder %s22, 0
      %p320 = por %p318, %p319
      %p321 = scmp.ne.s32.totalorder %s310, %s313
      %p322 = scmp.eq.s32.totalorder %s27, 1
      %p323 = por %p321, %p322
      %p324 = scmp.ne.s32.totalorder %s313, %s314
      %p325 = scmp.eq.s32.totalorder %s27, 0
      %p326 = por %p324, %p325
      %p327 = scmp.ne.s32.totalorder %s313, %s314
      %p328 = scmp.eq.s32.totalorder %s28, 1
      %p329 = por %p327, %p328
      %p331 = scmp.ne.s32.totalorder %s314, %s330
      %p332 = scmp.eq.s32.totalorder %s28, 0
      %p333 = por %p331, %p332
      %p334 = scmp.le.s32.totalorder 1, %s22
      %p335 = scmp.lt.s32.totalorder %s22, 3
      %p336 = pnand %p334, %p335
      %p337 = pneg %p336
      // Predicated region
      $region9: #{cnn_forward.1} parent=5 // pred_check
        _
      $region10: #{cnn_forward.1} parent=5 // pred_check_branch
        %339 = sbr.rel (%p336) target = $region12
      $region11: #{cnn_forward.1} parent=5 // pred_region
        %s340 = ssub.s32 %s22, 1
        // Predicated region
        $region13: #{cnn_forward.1} parent=11 // pred_check
          %p341 = pneg %p69
        $region14: #{cnn_forward.1} parent=11 // pred_check_branch
          %343 = sbr.rel (%p341) target = $region16
        $region15: #{cnn_forward.1} parent=11 // pred_region
          _
        $region16: #{cnn_forward.1} parent=11 // pred_fallthru
          _
        // Predicated region
        $region17: #{cnn_forward.1} parent=11 // pred_check
          %p344 = pneg %p90
        $region18: #{cnn_forward.1} parent=11 // pred_check_branch
          %346 = sbr.rel (%p344) target = $region20
        $region19: #{cnn_forward.1} parent=11 // pred_region
          _
        $region20: #{cnn_forward.1} parent=11 // pred_fallthru
          _
        // Predicated region
        $region21: #{cnn_forward.1} parent=11 // pred_check
          %p347 = pneg %p111
        $region22: #{cnn_forward.1} parent=11 // pred_check_branch
          %349 = sbr.rel (%p347) target = $region24
        $region23: #{cnn_forward.1} parent=11 // pred_region
          _
        $region24: #{cnn_forward.1} parent=11 // pred_fallthru
          _
        // Predicated region
        $region25: #{cnn_forward.1} parent=11 // pred_check
          %p350 = pneg %p132
        $region26: #{cnn_forward.1} parent=11 // pred_check_branch
          %352 = sbr.rel (%p350) target = $region28
        $region27: #{cnn_forward.1} parent=11 // pred_region
          _
        $region28: #{cnn_forward.1} parent=11 // pred_fallthru
          _
        // Predicated region
        $region29: #{cnn_forward.1} parent=11 // pred_check
          %p353 = pneg %p153
        $region30: #{cnn_forward.1} parent=11 // pred_check_branch
          %355 = sbr.rel (%p353) target = $region32
        $region31: #{cnn_forward.1} parent=11 // pred_region
          _
        $region32: #{cnn_forward.1} parent=11 // pred_fallthru
          _
        // Predicated region
        $region33: #{cnn_forward.1} parent=11 // pred_check
          %p356 = pneg %p174
        $region34: #{cnn_forward.1} parent=11 // pred_check_branch
          %358 = sbr.rel (%p356) target = $region36
        $region35: #{cnn_forward.1} parent=11 // pred_region
          _
        $region36: #{cnn_forward.1} parent=11 // pred_fallthru
          _
        // Predicated region
        $region37: #{cnn_forward.1} parent=11 // pred_check
          %p359 = pneg %p195
        $region38: #{cnn_forward.1} parent=11 // pred_check_branch
          %361 = sbr.rel (%p359) target = $region40
        $region39: #{cnn_forward.1} parent=11 // pred_region
          _
        $region40: #{cnn_forward.1} parent=11 // pred_fallthru
          _
        // Predicated region
        $region41: #{cnn_forward.1} parent=11 // pred_check
          %p362 = pneg %p216
        $region42: #{cnn_forward.1} parent=11 // pred_check_branch
          %364 = sbr.rel (%p362) target = $region44
        $region43: #{cnn_forward.1} parent=11 // pred_region
          _
        $region44: #{cnn_forward.1} parent=11 // pred_fallthru
          _
        // Predicated region
        $region45: #{cnn_forward.1} parent=11 // pred_check
          %p365 = pneg %p237
        $region46: #{cnn_forward.1} parent=11 // pred_check_branch
          %367 = sbr.rel (%p365) target = $region48
        $region47: #{cnn_forward.1} parent=11 // pred_region
          _
        $region48: #{cnn_forward.1} parent=11 // pred_fallthru
          _
        // Predicated region
        $region49: #{cnn_forward.1} parent=11 // pred_check
          %p368 = pneg %p258
        $region50: #{cnn_forward.1} parent=11 // pred_check_branch
          %370 = sbr.rel (%p368) target = $region52
        $region51: #{cnn_forward.1} parent=11 // pred_region
          _
        $region52: #{cnn_forward.1} parent=11 // pred_fallthru
          _
        // Predicated region
        $region53: #{cnn_forward.1} parent=11 // pred_check
          %p371 = pneg %p279
        $region54: #{cnn_forward.1} parent=11 // pred_check_branch
          %373 = sbr.rel (%p371) target = $region56
        $region55: #{cnn_forward.1} parent=11 // pred_region
          _
        $region56: #{cnn_forward.1} parent=11 // pred_fallthru
          _
        // Predicated region
        $region57: #{cnn_forward.1} parent=11 // pred_check
          %p374 = pneg %p300
        $region58: #{cnn_forward.1} parent=11 // pred_check_branch
          %376 = sbr.rel (%p374) target = $region60
        $region59: #{cnn_forward.1} parent=11 // pred_region
          _
        $region60: #{cnn_forward.1} parent=11 // pred_fallthru
          _
      $region12: #{cnn_forward.1} parent=5 // pred_fallthru
        _
      %p377 = scmp.lt.s32.totalorder %s22, 2
      // Predicated region
      $region61: #{cnn_forward.1} parent=5 // pred_check
        %p378 = pneg %p377
      $region62: #{cnn_forward.1} parent=5 // pred_check_branch
        %380 = sbr.rel (%p378) target = $region64
      $region63: #{cnn_forward.1} parent=5 // pred_region
        // Predicated region
        $region65: #{cnn_forward.1} parent=63 // pred_check
          %p381 = pneg %p42
        $region66: #{cnn_forward.1} parent=63 // pred_check_branch
          %383 = sbr.rel (%p381) target = $region68
        $region67: #{cnn_forward.1} parent=63 // pred_region
          %p384 = scmp.lt.s32.totalorder %s22, 1
          %s385 = scalar_select %p384, %s22, 1
          %s386 = smul.addr %s385, 41
          %s387 = smul.addr %s386, 8
          %s388 = scalar_lea.vmem %s0, %s387
        $region68: #{cnn_forward.1} parent=63 // pred_fallthru
          _
      $region64: #{cnn_forward.1} parent=5 // pred_fallthru
        _
      %p389 = scmp.le.s32.totalorder 1, %s22
      %p390 = scmp.lt.s32.totalorder %s22, 3
      %p391 = pnand %p389, %p390
      %p392 = pneg %p391
      // Predicated region
      $region69: #{cnn_forward.1} parent=5 // pred_check
        _
      $region70: #{cnn_forward.1} parent=5 // pred_check_branch
        %394 = sbr.rel (%p391) target = $region72
      $region71: #{cnn_forward.1} parent=5 // pred_region
        %s395 = ssub.s32 %s22, 1
        %p396 = scmp.lt.s32.totalorder %s27, 1
        %s397 = scalar_select %p396, %s27, 1
        %s398 = smul.addr %s397, 41
        %s399 = smul.addr %s398, 8
        %s400 = scalar_lea.vmem %s0, %s399
        %p401 = pneg %p48
        %p402 = pneg %p45
        %p403 = pneg %p69
        %p404 = pneg %p66
        %p405 = pneg %p90
        %p406 = pneg %p87
        %p407 = pneg %p111
        %p408 = pneg %p108
        %p409 = pneg %p132
        %p410 = pneg %p129
        %p411 = pneg %p153
        %p412 = pneg %p150
        %p413 = pneg %p174
        %p414 = pneg %p171
        %p415 = pneg %p195
        %p416 = pneg %p192
        %p417 = pneg %p216
        %p418 = pneg %p213
        %p419 = pneg %p237
        %p420 = pneg %p234
        %p421 = pneg %p258
        %p422 = pneg %p255
        %p423 = pneg %p279
        %p424 = pneg %p276
        %p425 = pneg %p300
        %p426 = pneg %p297
        %p427 = pneg %p326
        %p428 = pneg %p323
        %s429 = sand.u32 %s313, 1
        %s430 = scalar_lea.sflag [#allocation14], %s429
        %s431 = sand.u32 %s313, 1
        %s432 = scalar_lea.vmem [#allocation13], %s431
        %p433 = scmp.lt.s32.totalorder %s27, 1
        %s434 = scalar_select %p433, %s27, 1
        %s435 = smul.addr %s434, 41
        %s436 = smul.addr %s435, 8
        %s437 = scalar_lea.vmem %s0, %s436
        %v439 = vld [vmem:[%s437] sm:$0xff]
        %v440 = vld [vmem:[%s437 + $0x8] sm:$0xff]
        %v441 = vld [vmem:[%s437 + $0x10] sm:$0xff]
        %v442 = vld [vmem:[%s437 + $0x18] sm:$0xff]
        %v443 = vld [vmem:[%s437 + $0x20] sm:$0xff]
        %v444 = vld [vmem:[%s437 + $0x28] sm:$0xff]
        %v445 = vld [vmem:[%s437 + $0x30] sm:$0xff]
        %v446 = vld [vmem:[%s437 + $0x38] sm:$0xff]
        %v447 = vld [vmem:[%s437 + $0x40] sm:$0xff]
        %v448 = vld [vmem:[%s437 + $0x48] sm:$0xff]
        %v449 = vld [vmem:[%s437 + $0x50] sm:$0xff]
        %v450 = vld [vmem:[%s437 + $0x58] sm:$0xff]
        %v451 = vld [vmem:[%s437 + $0x60] sm:$0xff]
        %v452 = vld [vmem:[%s437 + $0x68] sm:$0xff]
        %v453 = vld [vmem:[%s437 + $0x70] sm:$0xff]
        %v454 = vld [vmem:[%s437 + $0x78] sm:$0xff]
        %v455 = vld [vmem:[%s437 + $0x80] sm:$0xff]
        %v456 = vld [vmem:[%s437 + $0x88] sm:$0xff]
        %v457 = vld [vmem:[%s437 + $0x90] sm:$0xff]
        %v458 = vld [vmem:[%s437 + $0x98] sm:$0xff]
        %v459 = vld [vmem:[%s437 + $0xa0] sm:$0xff]
        %v460 = vld [vmem:[%s437 + $0xa8] sm:$0xff]
        %v461 = vld [vmem:[%s437 + $0xb0] sm:$0xff]
        %v462 = vld [vmem:[%s437 + $0xb8] sm:$0xff]
        %v463 = vld [vmem:[%s437 + $0xc0] sm:$0xff]
        %v464 = vld [vmem:[%s437 + $0xc8] sm:$0xff]
        %v465 = vld [vmem:[%s437 + $0xd0] sm:$0xff]
        %v466 = vld [vmem:[%s437 + $0xd8] sm:$0xff]
        %v467 = vld [vmem:[%s437 + $0xe0] sm:$0xff]
        %v468 = vld [vmem:[%s437 + $0xe8] sm:$0xff]
        %v469 = vld [vmem:[%s437 + $0xf0] sm:$0xff]
        %v470 = vld [vmem:[%s437 + $0xf8] sm:$0xff]
        %v471 = vld [vmem:[%s437 + $0x100] sm:$0xff]
        %v472 = vld [vmem:[%s437 + $0x108] sm:$0xff]
        %v473 = vld [vmem:[%s437 + $0x110] sm:$0xff]
        %v474 = vld [vmem:[%s437 + $0x118] sm:$0x3f]
        %v475 = vpack.c.bf16 %v440, %v439
        %v476 = vpack.c.bf16 %v442, %v441
        %v477 = vpack.c.bf16 %v444, %v443
        %v478 = vpack.c.bf16 %v446, %v445
        %v479 = vpack.c.bf16 %v448, %v447
        %v480 = vpack.c.bf16 %v450, %v449
        %v481 = vpack.c.bf16 %v452, %v451
        %v482 = vpack.c.bf16 %v454, %v453
        %v483 = vpack.c.bf16 %v456, %v455
        %v484 = vpack.c.bf16 %v458, %v457
        %v485 = vpack.c.bf16 %v460, %v459
        %v486 = vpack.c.bf16 %v462, %v461
        %v487 = vpack.c.bf16 %v464, %v463
        %v488 = vpack.c.bf16 %v466, %v465
        %v489 = vpack.c.bf16 %v468, %v467
        %v490 = vpack.c.bf16 %v470, %v469
        %v491 = vpack.c.bf16 %v472, %v471
        %v492 = vpack.c.bf16 %v474, %v473
        %v511 = vunpack.c.l.b16 %v475
        %v512 = vunpack.c.h.b16 %v475
        %v513 = vunpack.c.l.b16 %v476
        %v514 = vunpack.c.h.b16 %v476
        %v515 = vunpack.c.l.b16 %v477
        %v516 = vunpack.c.h.b16 %v477
        %v517 = vunpack.c.l.b16 %v478
        %v518 = vunpack.c.h.b16 %v478
        %v519 = vunpack.c.l.b16 %v479
        %v520 = vunpack.c.h.b16 %v479
        %v521 = vunpack.c.l.b16 %v480
        %v522 = vunpack.c.h.b16 %v480
        %v523 = vunpack.c.l.b16 %v481
        %v524 = vunpack.c.h.b16 %v481
        %v525 = vunpack.c.l.b16 %v482
        %v526 = vunpack.c.h.b16 %v482
        %v527 = vunpack.c.l.b16 %v483
        %v528 = vunpack.c.h.b16 %v483
        %v529 = vunpack.c.l.b16 %v484
        %v530 = vunpack.c.h.b16 %v484
        %v531 = vunpack.c.l.b16 %v485
        %v532 = vunpack.c.h.b16 %v485
        %v533 = vunpack.c.l.b16 %v486
        %v534 = vunpack.c.h.b16 %v486
        %v535 = vunpack.c.l.b16 %v487
        %v536 = vunpack.c.h.b16 %v487
        %v537 = vunpack.c.l.b16 %v488
        %v538 = vunpack.c.h.b16 %v488
        %v539 = vunpack.c.l.b16 %v489
        %v540 = vunpack.c.h.b16 %v489
        %v541 = vunpack.c.l.b16 %v490
        %v542 = vunpack.c.h.b16 %v490
        %v543 = vunpack.c.l.b16 %v491
        %v544 = vunpack.c.h.b16 %v491
        %v545 = vunpack.c.l.b16 %v492
        %v546 = vunpack.c.h.b16 %v492
        %v547 = vpack.c.b16 %v511, %v511
        %v548 = vpack.c.b16 %v512, %v512
        %v549 = vpack.c.b16 %v513, %v513
        %v550 = vpack.c.b16 %v514, %v514
        %v551 = vpack.c.b16 %v515, %v515
        %v552 = vpack.c.b16 %v516, %v516
        %v553 = vpack.c.b16 %v517, %v517
        %v554 = vpack.c.b16 %v518, %v518
        %v555 = vpack.c.b16 %v519, %v519
        %v556 = vpack.c.b16 %v520, %v520
        %v557 = vpack.c.b16 %v521, %v521
        %v558 = vpack.c.b16 %v522, %v522
        %v559 = vpack.c.b16 %v523, %v523
        %v560 = vpack.c.b16 %v524, %v524
        %v561 = vpack.c.b16 %v525, %v525
        %v562 = vpack.c.b16 %v526, %v526
        %v563 = vpack.c.b16 %v527, %v527
        %v564 = vpack.c.b16 %v528, %v528
        %v565 = vpack.c.b16 %v529, %v529
        %v566 = vpack.c.b16 %v530, %v530
        %v567 = vpack.c.b16 %v531, %v531
        %v568 = vpack.c.b16 %v532, %v532
        %v569 = vpack.c.b16 %v533, %v533
        %v570 = vpack.c.b16 %v534, %v534
        %v571 = vpack.c.b16 %v535, %v535
        %v572 = vpack.c.b16 %v536, %v536
        %v573 = vpack.c.b16 %v537, %v537
        %v574 = vpack.c.b16 %v538, %v538
        %v575 = vpack.c.b16 %v539, %v539
        %v576 = vpack.c.b16 %v540, %v540
        %v577 = vpack.c.b16 %v541, %v541
        %v578 = vpack.c.b16 %v542, %v542
        %v579 = vpack.c.b16 %v543, %v543
        %v580 = vpack.c.b16 %v544, %v544
        %v581 = vpack.c.b16 %v545, %v545
        %v582 = vpack.c.b16 %v546, %v546
        %vm619 = vcmask 60416
        %620 = vst.msk [vmem:[#allocation2] sm:$0xf] %vm619, %v547
        %621 = vst.msk [vmem:[#allocation2 + $0x4] sm:$0xf] %vm619, %v548
        %622 = vst.msk [vmem:[#allocation2 + $0x8] sm:$0xf] %vm619, %v549
        %623 = vst.msk [vmem:[#allocation2 + $0xc] sm:$0xf] %vm619, %v550
        %624 = vst.msk [vmem:[#allocation2 + $0x10] sm:$0xf] %vm619, %v551
        %625 = vst.msk [vmem:[#allocation2 + $0x14] sm:$0xf] %vm619, %v552
        %626 = vst.msk [vmem:[#allocation2 + $0x18] sm:$0xf] %vm619, %v553
        %627 = vst.msk [vmem:[#allocation2 + $0x1c] sm:$0xf] %vm619, %v554
        %628 = vst.msk [vmem:[#allocation2 + $0x20] sm:$0xf] %vm619, %v555
        %629 = vst.msk [vmem:[#allocation2 + $0x24] sm:$0xf] %vm619, %v556
        %630 = vst.msk [vmem:[#allocation2 + $0x28] sm:$0xf] %vm619, %v557
        %631 = vst.msk [vmem:[#allocation2 + $0x2c] sm:$0xf] %vm619, %v558
        %632 = vst.msk [vmem:[#allocation2 + $0x30] sm:$0xf] %vm619, %v559
        %633 = vst.msk [vmem:[#allocation2 + $0x34] sm:$0xf] %vm619, %v560
        %634 = vst.msk [vmem:[#allocation2 + $0x38] sm:$0xf] %vm619, %v561
        %635 = vst.msk [vmem:[#allocation2 + $0x3c] sm:$0xf] %vm619, %v562
        %636 = vst.msk [vmem:[#allocation2 + $0x40] sm:$0xf] %vm619, %v563
        %637 = vst.msk [vmem:[#allocation2 + $0x44] sm:$0xf] %vm619, %v564
        %638 = vst.msk [vmem:[#allocation2 + $0x48] sm:$0xf] %vm619, %v565
        %639 = vst.msk [vmem:[#allocation2 + $0x4c] sm:$0xf] %vm619, %v566
        %640 = vst.msk [vmem:[#allocation2 + $0x50] sm:$0xf] %vm619, %v567
        %641 = vst.msk [vmem:[#allocation2 + $0x54] sm:$0xf] %vm619, %v568
        %642 = vst.msk [vmem:[#allocation2 + $0x58] sm:$0xf] %vm619, %v569
        %643 = vst.msk [vmem:[#allocation2 + $0x5c] sm:$0xf] %vm619, %v570
        %644 = vst.msk [vmem:[#allocation2 + $0x60] sm:$0xf] %vm619, %v571
        %645 = vst.msk [vmem:[#allocation2 + $0x64] sm:$0xf] %vm619, %v572
        %646 = vst.msk [vmem:[#allocation2 + $0x68] sm:$0xf] %vm619, %v573
        %647 = vst.msk [vmem:[#allocation2 + $0x6c] sm:$0xf] %vm619, %v574
        %648 = vst.msk [vmem:[#allocation2 + $0x70] sm:$0xf] %vm619, %v575
        %649 = vst.msk [vmem:[#allocation2 + $0x74] sm:$0xf] %vm619, %v576
        %650 = vst.msk [vmem:[#allocation2 + $0x78] sm:$0xf] %vm619, %v577
        %651 = vst.msk [vmem:[#allocation2 + $0x7c] sm:$0xf] %vm619, %v578
        %652 = vst.msk [vmem:[#allocation2 + $0x80] sm:$0xf] %vm619, %v579
        %653 = vst.msk [vmem:[#allocation2 + $0x84] sm:$0xf] %vm619, %v580
        %654 = vst.msk [vmem:[#allocation2 + $0x88] sm:$0xf] %vm619, %v581
        %vm655 = vcmask 59392
        %656 = vst.msk [vmem:[#allocation2 + $0x8c] sm:$0x7] %vm655, %v582
        %v657 = vld [vmem:[%s437 + $0x1] sm:$0xff]
        %v658 = vld [vmem:[%s437 + $0x9] sm:$0xff]
        %v659 = vld [vmem:[%s437 + $0x11] sm:$0xff]
        %v660 = vld [vmem:[%s437 + $0x19] sm:$0xff]
        %v661 = vld [vmem:[%s437 + $0x21] sm:$0xff]
        %v662 = vld [vmem:[%s437 + $0x29] sm:$0xff]
        %v663 = vld [vmem:[%s437 + $0x31] sm:$0xff]
        %v664 = vld [vmem:[%s437 + $0x39] sm:$0xff]
        %v665 = vld [vmem:[%s437 + $0x41] sm:$0xff]
        %v666 = vld [vmem:[%s437 + $0x49] sm:$0xff]
        %v667 = vld [vmem:[%s437 + $0x51] sm:$0xff]
        %v668 = vld [vmem:[%s437 + $0x59] sm:$0xff]
        %v669 = vld [vmem:[%s437 + $0x61] sm:$0xff]
        %v670 = vld [vmem:[%s437 + $0x69] sm:$0xff]
        %v671 = vld [vmem:[%s437 + $0x71] sm:$0xff]
        %v672 = vld [vmem:[%s437 + $0x79] sm:$0xff]
        %v673 = vld [vmem:[%s437 + $0x81] sm:$0xff]
        %v674 = vld [vmem:[%s437 + $0x89] sm:$0xff]
        %v675 = vld [vmem:[%s437 + $0x91] sm:$0xff]
        %v676 = vld [vmem:[%s437 + $0x99] sm:$0xff]
        %v677 = vld [vmem:[%s437 + $0xa1] sm:$0xff]
        %v678 = vld [vmem:[%s437 + $0xa9] sm:$0xff]
        %v679 = vld [vmem:[%s437 + $0xb1] sm:$0xff]
        %v680 = vld [vmem:[%s437 + $0xb9] sm:$0xff]
        %v681 = vld [vmem:[%s437 + $0xc1] sm:$0xff]
        %v682 = vld [vmem:[%s437 + $0xc9] sm:$0xff]
        %v683 = vld [vmem:[%s437 + $0xd1] sm:$0xff]
        %v684 = vld [vmem:[%s437 + $0xd9] sm:$0xff]
        %v685 = vld [vmem:[%s437 + $0xe1] sm:$0xff]
        %v686 = vld [vmem:[%s437 + $0xe9] sm:$0xff]
        %v687 = vld [vmem:[%s437 + $0xf1] sm:$0xff]
        %v688 = vld [vmem:[%s437 + $0xf9] sm:$0xff]
        %v689 = vld [vmem:[%s437 + $0x101] sm:$0xff]
        %v690 = vld [vmem:[%s437 + $0x109] sm:$0xff]
        %v691 = vld [vmem:[%s437 + $0x111] sm:$0xff]
        %v692 = vld [vmem:[%s437 + $0x119] sm:$0x3f]
        %v693 = vpack.c.bf16 %v658, %v657
        %v694 = vpack.c.bf16 %v660, %v659
        %v695 = vpack.c.bf16 %v662, %v661
        %v696 = vpack.c.bf16 %v664, %v663
        %v697 = vpack.c.bf16 %v666, %v665
        %v698 = vpack.c.bf16 %v668, %v667
        %v699 = vpack.c.bf16 %v670, %v669
        %v700 = vpack.c.bf16 %v672, %v671
        %v701 = vpack.c.bf16 %v674, %v673
        %v702 = vpack.c.bf16 %v676, %v675
        %v703 = vpack.c.bf16 %v678, %v677
        %v704 = vpack.c.bf16 %v680, %v679
        %v705 = vpack.c.bf16 %v682, %v681
        %v706 = vpack.c.bf16 %v684, %v683
        %v707 = vpack.c.bf16 %v686, %v685
        %v708 = vpack.c.bf16 %v688, %v687
        %v709 = vpack.c.bf16 %v690, %v689
        %v710 = vpack.c.bf16 %v692, %v691
        %v729 = vunpack.c.l.b16 %v693
        %v730 = vunpack.c.h.b16 %v693
        %v731 = vunpack.c.l.b16 %v694
        %v732 = vunpack.c.h.b16 %v694
        %v733 = vunpack.c.l.b16 %v695
        %v734 = vunpack.c.h.b16 %v695
        %v735 = vunpack.c.l.b16 %v696
        %v736 = vunpack.c.h.b16 %v696
        %v737 = vunpack.c.l.b16 %v697
        %v738 = vunpack.c.h.b16 %v697
        %v739 = vunpack.c.l.b16 %v698
        %v740 = vunpack.c.h.b16 %v698
        %v741 = vunpack.c.l.b16 %v699
        %v742 = vunpack.c.h.b16 %v699
        %v743 = vunpack.c.l.b16 %v700
        %v744 = vunpack.c.h.b16 %v700
        %v745 = vunpack.c.l.b16 %v701
        %v746 = vunpack.c.h.b16 %v701
        %v747 = vunpack.c.l.b16 %v702
        %v748 = vunpack.c.h.b16 %v702
        %v749 = vunpack.c.l.b16 %v703
        %v750 = vunpack.c.h.b16 %v703
        %v751 = vunpack.c.l.b16 %v704
        %v752 = vunpack.c.h.b16 %v704
        %v753 = vunpack.c.l.b16 %v705
        %v754 = vunpack.c.h.b16 %v705
        %v755 = vunpack.c.l.b16 %v706
        %v756 = vunpack.c.h.b16 %v706
        %v757 = vunpack.c.l.b16 %v707
        %v758 = vunpack.c.h.b16 %v707
        %v759 = vunpack.c.l.b16 %v708
        %v760 = vunpack.c.h.b16 %v708
        %v761 = vunpack.c.l.b16 %v709
        %v762 = vunpack.c.h.b16 %v709
        %v763 = vunpack.c.l.b16 %v710
        %v764 = vunpack.c.h.b16 %v710
        %v765 = vpack.c.b16 %v729, %v729
        %v766 = vpack.c.b16 %v730, %v730
        %v767 = vpack.c.b16 %v731, %v731
        %v768 = vpack.c.b16 %v732, %v732
        %v769 = vpack.c.b16 %v733, %v733
        %v770 = vpack.c.b16 %v734, %v734
        %v771 = vpack.c.b16 %v735, %v735
        %v772 = vpack.c.b16 %v736, %v736
        %v773 = vpack.c.b16 %v737, %v737
        %v774 = vpack.c.b16 %v738, %v738
        %v775 = vpack.c.b16 %v739, %v739
        %v776 = vpack.c.b16 %v740, %v740
        %v777 = vpack.c.b16 %v741, %v741
        %v778 = vpack.c.b16 %v742, %v742
        %v779 = vpack.c.b16 %v743, %v743
        %v780 = vpack.c.b16 %v744, %v744
        %v781 = vpack.c.b16 %v745, %v745
        %v782 = vpack.c.b16 %v746, %v746
        %v783 = vpack.c.b16 %v747, %v747
        %v784 = vpack.c.b16 %v748, %v748
        %v785 = vpack.c.b16 %v749, %v749
        %v786 = vpack.c.b16 %v750, %v750
        %v787 = vpack.c.b16 %v751, %v751
        %v788 = vpack.c.b16 %v752, %v752
        %v789 = vpack.c.b16 %v753, %v753
        %v790 = vpack.c.b16 %v754, %v754
        %v791 = vpack.c.b16 %v755, %v755
        %v792 = vpack.c.b16 %v756, %v756
        %v793 = vpack.c.b16 %v757, %v757
        %v794 = vpack.c.b16 %v758, %v758
        %v795 = vpack.c.b16 %v759, %v759
        %v796 = vpack.c.b16 %v760, %v760
        %v797 = vpack.c.b16 %v761, %v761
        %v798 = vpack.c.b16 %v762, %v762
        %v799 = vpack.c.b16 %v763, %v763
        %v800 = vpack.c.b16 %v764, %v764
        %801 = vrot.lane.b32.xlu0 %v765, 8
        %v802 = vpop.permute.xlu0 %801
        %803 = vrot.lane.b32.xlu0 %v766, 8
        %v804 = vpop.permute.xlu0 %803
        %805 = vrot.lane.b32.xlu0 %v767, 8
        %v806 = vpop.permute.xlu0 %805
        %807 = vrot.lane.b32.xlu0 %v768, 8
        %v808 = vpop.permute.xlu0 %807
        %809 = vrot.lane.b32.xlu0 %v769, 8
        %v810 = vpop.permute.xlu0 %809
        %811 = vrot.lane.b32.xlu0 %v770, 8
        %v812 = vpop.permute.xlu0 %811
        %813 = vrot.lane.b32.xlu0 %v771, 8
        %v814 = vpop.permute.xlu0 %813
        %815 = vrot.lane.b32.xlu0 %v772, 8
        %v816 = vpop.permute.xlu0 %815
        %817 = vrot.lane.b32.xlu0 %v773, 8
        %v818 = vpop.permute.xlu0 %817
        %819 = vrot.lane.b32.xlu0 %v774, 8
        %v820 = vpop.permute.xlu0 %819
        %821 = vrot.lane.b32.xlu0 %v775, 8
        %v822 = vpop.permute.xlu0 %821
        %823 = vrot.lane.b32.xlu0 %v776, 8
        %v824 = vpop.permute.xlu0 %823
        %825 = vrot.lane.b32.xlu0 %v777, 8
        %v826 = vpop.permute.xlu0 %825
        %827 = vrot.lane.b32.xlu0 %v778, 8
        %v828 = vpop.permute.xlu0 %827
        %829 = vrot.lane.b32.xlu0 %v779, 8
        %v830 = vpop.permute.xlu0 %829
        %831 = vrot.lane.b32.xlu0 %v780, 8
        %v832 = vpop.permute.xlu0 %831
        %833 = vrot.lane.b32.xlu0 %v781, 8
        %v834 = vpop.permute.xlu0 %833
        %835 = vrot.lane.b32.xlu0 %v782, 8
        %v836 = vpop.permute.xlu0 %835
        %837 = vrot.lane.b32.xlu0 %v783, 8
        %v838 = vpop.permute.xlu0 %837
        %839 = vrot.lane.b32.xlu0 %v784, 8
        %v840 = vpop.permute.xlu0 %839
        %841 = vrot.lane.b32.xlu0 %v785, 8
        %v842 = vpop.permute.xlu0 %841
        %843 = vrot.lane.b32.xlu0 %v786, 8
        %v844 = vpop.permute.xlu0 %843
        %845 = vrot.lane.b32.xlu0 %v787, 8
        %v846 = vpop.permute.xlu0 %845
        %847 = vrot.lane.b32.xlu0 %v788, 8
        %v848 = vpop.permute.xlu0 %847
        %849 = vrot.lane.b32.xlu0 %v789, 8
        %v850 = vpop.permute.xlu0 %849
        %851 = vrot.lane.b32.xlu0 %v790, 8
        %v852 = vpop.permute.xlu0 %851
        %853 = vrot.lane.b32.xlu0 %v791, 8
        %v854 = vpop.permute.xlu0 %853
        %855 = vrot.lane.b32.xlu0 %v792, 8
        %v856 = vpop.permute.xlu0 %855
        %857 = vrot.lane.b32.xlu0 %v793, 8
        %v858 = vpop.permute.xlu0 %857
        %859 = vrot.lane.b32.xlu0 %v794, 8
        %v860 = vpop.permute.xlu0 %859
        %861 = vrot.lane.b32.xlu0 %v795, 8
        %v862 = vpop.permute.xlu0 %861
        %863 = vrot.lane.b32.xlu0 %v796, 8
        %v864 = vpop.permute.xlu0 %863
        %865 = vrot.lane.b32.xlu0 %v797, 8
        %v866 = vpop.permute.xlu0 %865
        %867 = vrot.lane.b32.xlu0 %v798, 8
        %v868 = vpop.permute.xlu0 %867
        %869 = vrot.lane.b32.xlu0 %v799, 8
        %v870 = vpop.permute.xlu0 %869
        %871 = vrot.lane.b32.xlu0 %v800, 8
        %v872 = vpop.permute.xlu0 %871
        %vm909 = vcmask 126016
        %910 = vst.msk [vmem:[#allocation2] sm:$0xf] %vm909, %v802
        %911 = vst.msk [vmem:[#allocation2 + $0x4] sm:$0xf] %vm909, %v804
        %912 = vst.msk [vmem:[#allocation2 + $0x8] sm:$0xf] %vm909, %v806
        %913 = vst.msk [vmem:[#allocation2 + $0xc] sm:$0xf] %vm909, %v808
        %914 = vst.msk [vmem:[#allocation2 + $0x10] sm:$0xf] %vm909, %v810
        %915 = vst.msk [vmem:[#allocation2 + $0x14] sm:$0xf] %vm909, %v812
        %916 = vst.msk [vmem:[#allocation2 + $0x18] sm:$0xf] %vm909, %v814
        %917 = vst.msk [vmem:[#allocation2 + $0x1c] sm:$0xf] %vm909, %v816
        %918 = vst.msk [vmem:[#allocation2 + $0x20] sm:$0xf] %vm909, %v818
        %919 = vst.msk [vmem:[#allocation2 + $0x24] sm:$0xf] %vm909, %v820
        %920 = vst.msk [vmem:[#allocation2 + $0x28] sm:$0xf] %vm909, %v822
        %921 = vst.msk [vmem:[#allocation2 + $0x2c] sm:$0xf] %vm909, %v824
        %922 = vst.msk [vmem:[#allocation2 + $0x30] sm:$0xf] %vm909, %v826
        %923 = vst.msk [vmem:[#allocation2 + $0x34] sm:$0xf] %vm909, %v828
        %924 = vst.msk [vmem:[#allocation2 + $0x38] sm:$0xf] %vm909, %v830
        %925 = vst.msk [vmem:[#allocation2 + $0x3c] sm:$0xf] %vm909, %v832
        %926 = vst.msk [vmem:[#allocation2 + $0x40] sm:$0xf] %vm909, %v834
        %927 = vst.msk [vmem:[#allocation2 + $0x44] sm:$0xf] %vm909, %v836
        %928 = vst.msk [vmem:[#allocation2 + $0x48] sm:$0xf] %vm909, %v838
        %929 = vst.msk [vmem:[#allocation2 + $0x4c] sm:$0xf] %vm909, %v840
        %930 = vst.msk [vmem:[#allocation2 + $0x50] sm:$0xf] %vm909, %v842
        %931 = vst.msk [vmem:[#allocation2 + $0x54] sm:$0xf] %vm909, %v844
        %932 = vst.msk [vmem:[#allocation2 + $0x58] sm:$0xf] %vm909, %v846
        %933 = vst.msk [vmem:[#allocation2 + $0x5c] sm:$0xf] %vm909, %v848
        %934 = vst.msk [vmem:[#allocation2 + $0x60] sm:$0xf] %vm909, %v850
        %935 = vst.msk [vmem:[#allocation2 + $0x64] sm:$0xf] %vm909, %v852
        %936 = vst.msk [vmem:[#allocation2 + $0x68] sm:$0xf] %vm909, %v854
        %937 = vst.msk [vmem:[#allocation2 + $0x6c] sm:$0xf] %vm909, %v856
        %938 = vst.msk [vmem:[#allocation2 + $0x70] sm:$0xf] %vm909, %v858
        %939 = vst.msk [vmem:[#allocation2 + $0x74] sm:$0xf] %vm909, %v860
        %940 = vst.msk [vmem:[#allocation2 + $0x78] sm:$0xf] %vm909, %v862
        %941 = vst.msk [vmem:[#allocation2 + $0x7c] sm:$0xf] %vm909, %v864
        %942 = vst.msk [vmem:[#allocation2 + $0x80] sm:$0xf] %vm909, %v866
        %943 = vst.msk [vmem:[#allocation2 + $0x84] sm:$0xf] %vm909, %v868
        %944 = vst.msk [vmem:[#allocation2 + $0x88] sm:$0xf] %vm909, %v870
        %vm945 = vcmask 124992
        %946 = vst.msk [vmem:[#allocation2 + $0x8c] sm:$0x7] %vm945, %v872
        %v947 = vld [vmem:[%s437 + $0x2] sm:$0xff]
        %v948 = vld [vmem:[%s437 + $0xa] sm:$0xff]
        %v949 = vld [vmem:[%s437 + $0x12] sm:$0xff]
        %v950 = vld [vmem:[%s437 + $0x1a] sm:$0xff]
        %v951 = vld [vmem:[%s437 + $0x22] sm:$0xff]
        %v952 = vld [vmem:[%s437 + $0x2a] sm:$0xff]
        %v953 = vld [vmem:[%s437 + $0x32] sm:$0xff]
        %v954 = vld [vmem:[%s437 + $0x3a] sm:$0xff]
        %v955 = vld [vmem:[%s437 + $0x42] sm:$0xff]
        %v956 = vld [vmem:[%s437 + $0x4a] sm:$0xff]
        %v957 = vld [vmem:[%s437 + $0x52] sm:$0xff]
        %v958 = vld [vmem:[%s437 + $0x5a] sm:$0xff]
        %v959 = vld [vmem:[%s437 + $0x62] sm:$0xff]
        %v960 = vld [vmem:[%s437 + $0x6a] sm:$0xff]
        %v961 = vld [vmem:[%s437 + $0x72] sm:$0xff]
        %v962 = vld [vmem:[%s437 + $0x7a] sm:$0xff]
        %v963 = vld [vmem:[%s437 + $0x82] sm:$0xff]
        %v964 = vld [vmem:[%s437 + $0x8a] sm:$0xff]
        %v965 = vld [vmem:[%s437 + $0x92] sm:$0xff]
        %v966 = vld [vmem:[%s437 + $0x9a] sm:$0xff]
        %v967 = vld [vmem:[%s437 + $0xa2] sm:$0xff]
        %v968 = vld [vmem:[%s437 + $0xaa] sm:$0xff]
        %v969 = vld [vmem:[%s437 + $0xb2] sm:$0xff]
        %v970 = vld [vmem:[%s437 + $0xba] sm:$0xff]
        %v971 = vld [vmem:[%s437 + $0xc2] sm:$0xff]
        %v972 = vld [vmem:[%s437 + $0xca] sm:$0xff]
        %v973 = vld [vmem:[%s437 + $0xd2] sm:$0xff]
        %v974 = vld [vmem:[%s437 + $0xda] sm:$0xff]
        %v975 = vld [vmem:[%s437 + $0xe2] sm:$0xff]
        %v976 = vld [vmem:[%s437 + $0xea] sm:$0xff]
        %v977 = vld [vmem:[%s437 + $0xf2] sm:$0xff]
        %v978 = vld [vmem:[%s437 + $0xfa] sm:$0xff]
        %v979 = vld [vmem:[%s437 + $0x102] sm:$0xff]
        %v980 = vld [vmem:[%s437 + $0x10a] sm:$0xff]
        %v981 = vld [vmem:[%s437 + $0x112] sm:$0xff]
        %v982 = vld [vmem:[%s437 + $0x11a] sm:$0x3f]
        %v983 = vpack.c.bf16 %v948, %v947
        %v984 = vpack.c.bf16 %v950, %v949
        %v985 = vpack.c.bf16 %v952, %v951
        %v986 = vpack.c.bf16 %v954, %v953
        %v987 = vpack.c.bf16 %v956, %v955
        %v988 = vpack.c.bf16 %v958, %v957
        %v989 = vpack.c.bf16 %v960, %v959
        %v990 = vpack.c.bf16 %v962, %v961
        %v991 = vpack.c.bf16 %v964, %v963
        %v992 = vpack.c.bf16 %v966, %v965
        %v993 = vpack.c.bf16 %v968, %v967
        %v994 = vpack.c.bf16 %v970, %v969
        %v995 = vpack.c.bf16 %v972, %v971
        %v996 = vpack.c.bf16 %v974, %v973
        %v997 = vpack.c.bf16 %v976, %v975
        %v998 = vpack.c.bf16 %v978, %v977
        %v999 = vpack.c.bf16 %v980, %v979
        %v1000 = vpack.c.bf16 %v982, %v981
        %v1019 = vunpack.c.l.b16 %v983
        %v1020 = vunpack.c.h.b16 %v983
        %v1021 = vunpack.c.l.b16 %v984
        %v1022 = vunpack.c.h.b16 %v984
        %v1023 = vunpack.c.l.b16 %v985
        %v1024 = vunpack.c.h.b16 %v985
        %v1025 = vunpack.c.l.b16 %v986
        %v1026 = vunpack.c.h.b16 %v986
        %v1027 = vunpack.c.l.b16 %v987
        %v1028 = vunpack.c.h.b16 %v987
        %v1029 = vunpack.c.l.b16 %v988
        %v1030 = vunpack.c.h.b16 %v988
        %v1031 = vunpack.c.l.b16 %v989
        %v1032 = vunpack.c.h.b16 %v989
        %v1033 = vunpack.c.l.b16 %v990
        %v1034 = vunpack.c.h.b16 %v990
        %v1035 = vunpack.c.l.b16 %v991
        %v1036 = vunpack.c.h.b16 %v991
        %v1037 = vunpack.c.l.b16 %v992
        %v1038 = vunpack.c.h.b16 %v992
        %v1039 = vunpack.c.l.b16 %v993
        %v1040 = vunpack.c.h.b16 %v993
        %v1041 = vunpack.c.l.b16 %v994
        %v1042 = vunpack.c.h.b16 %v994
        %v1043 = vunpack.c.l.b16 %v995
        %v1044 = vunpack.c.h.b16 %v995
        %v1045 = vunpack.c.l.b16 %v996
        %v1046 = vunpack.c.h.b16 %v996
        %v1047 = vunpack.c.l.b16 %v997
        %v1048 = vunpack.c.h.b16 %v997
        %v1049 = vunpack.c.l.b16 %v998
        %v1050 = vunpack.c.h.b16 %v998
        %v1051 = vunpack.c.l.b16 %v999
        %v1052 = vunpack.c.h.b16 %v999
        %v1053 = vunpack.c.l.b16 %v1000
        %v1054 = vunpack.c.h.b16 %v1000
        %v1055 = vpack.c.b16 %v1019, %v1019
        %v1056 = vpack.c.b16 %v1020, %v1020
        %v1057 = vpack.c.b16 %v1021, %v1021
        %v1058 = vpack.c.b16 %v1022, %v1022
        %v1059 = vpack.c.b16 %v1023, %v1023
        %v1060 = vpack.c.b16 %v1024, %v1024
        %v1061 = vpack.c.b16 %v1025, %v1025
        %v1062 = vpack.c.b16 %v1026, %v1026
        %v1063 = vpack.c.b16 %v1027, %v1027
        %v1064 = vpack.c.b16 %v1028, %v1028
        %v1065 = vpack.c.b16 %v1029, %v1029
        %v1066 = vpack.c.b16 %v1030, %v1030
        %v1067 = vpack.c.b16 %v1031, %v1031
        %v1068 = vpack.c.b16 %v1032, %v1032
        %v1069 = vpack.c.b16 %v1033, %v1033
        %v1070 = vpack.c.b16 %v1034, %v1034
        %v1071 = vpack.c.b16 %v1035, %v1035
        %v1072 = vpack.c.b16 %v1036, %v1036
        %v1073 = vpack.c.b16 %v1037, %v1037
        %v1074 = vpack.c.b16 %v1038, %v1038
        %v1075 = vpack.c.b16 %v1039, %v1039
        %v1076 = vpack.c.b16 %v1040, %v1040
        %v1077 = vpack.c.b16 %v1041, %v1041
        %v1078 = vpack.c.b16 %v1042, %v1042
        %v1079 = vpack.c.b16 %v1043, %v1043
        %v1080 = vpack.c.b16 %v1044, %v1044
        %v1081 = vpack.c.b16 %v1045, %v1045
        %v1082 = vpack.c.b16 %v1046, %v1046
        %v1083 = vpack.c.b16 %v1047, %v1047
        %v1084 = vpack.c.b16 %v1048, %v1048
        %v1085 = vpack.c.b16 %v1049, %v1049
        %v1086 = vpack.c.b16 %v1050, %v1050
        %v1087 = vpack.c.b16 %v1051, %v1051
        %v1088 = vpack.c.b16 %v1052, %v1052
        %v1089 = vpack.c.b16 %v1053, %v1053
        %v1090 = vpack.c.b16 %v1054, %v1054
        %1091 = vrot.lane.b32.xlu0 %v1055, 16
        %v1092 = vpop.permute.xlu0 %1091
        %1093 = vrot.lane.b32.xlu0 %v1056, 16
        %v1094 = vpop.permute.xlu0 %1093
        %1095 = vrot.lane.b32.xlu0 %v1057, 16
        %v1096 = vpop.permute.xlu0 %1095
        %1097 = vrot.lane.b32.xlu0 %v1058, 16
        %v1098 = vpop.permute.xlu0 %1097
        %1099 = vrot.lane.b32.xlu0 %v1059, 16
        %v1100 = vpop.permute.xlu0 %1099
        %1101 = vrot.lane.b32.xlu0 %v1060, 16
        %v1102 = vpop.permute.xlu0 %1101
        %1103 = vrot.lane.b32.xlu0 %v1061, 16
        %v1104 = vpop.permute.xlu0 %1103
        %1105 = vrot.lane.b32.xlu0 %v1062, 16
        %v1106 = vpop.permute.xlu0 %1105
        %1107 = vrot.lane.b32.xlu0 %v1063, 16
        %v1108 = vpop.permute.xlu0 %1107
        %1109 = vrot.lane.b32.xlu0 %v1064, 16
        %v1110 = vpop.permute.xlu0 %1109
        %1111 = vrot.lane.b32.xlu0 %v1065, 16
        %v1112 = vpop.permute.xlu0 %1111
        %1113 = vrot.lane.b32.xlu0 %v1066, 16
        %v1114 = vpop.permute.xlu0 %1113
        %1115 = vrot.lane.b32.xlu0 %v1067, 16
        %v1116 = vpop.permute.xlu0 %1115
        %1117 = vrot.lane.b32.xlu0 %v1068, 16
        %v1118 = vpop.permute.xlu0 %1117
        %1119 = vrot.lane.b32.xlu0 %v1069, 16
        %v1120 = vpop.permute.xlu0 %1119
        %1121 = vrot.lane.b32.xlu0 %v1070, 16
        %v1122 = vpop.permute.xlu0 %1121
        %1123 = vrot.lane.b32.xlu0 %v1071, 16
        %v1124 = vpop.permute.xlu0 %1123
        %1125 = vrot.lane.b32.xlu0 %v1072, 16
        %v1126 = vpop.permute.xlu0 %1125
        %1127 = vrot.lane.b32.xlu0 %v1073, 16
        %v1128 = vpop.permute.xlu0 %1127
        %1129 = vrot.lane.b32.xlu0 %v1074, 16
        %v1130 = vpop.permute.xlu0 %1129
        %1131 = vrot.lane.b32.xlu0 %v1075, 16
        %v1132 = vpop.permute.xlu0 %1131
        %1133 = vrot.lane.b32.xlu0 %v1076, 16
        %v1134 = vpop.permute.xlu0 %1133
        %1135 = vrot.lane.b32.xlu0 %v1077, 16
        %v1136 = vpop.permute.xlu0 %1135
        %1137 = vrot.lane.b32.xlu0 %v1078, 16
        %v1138 = vpop.permute.xlu0 %1137
        %1139 = vrot.lane.b32.xlu0 %v1079, 16
        %v1140 = vpop.permute.xlu0 %1139
        %1141 = vrot.lane.b32.xlu0 %v1080, 16
        %v1142 = vpop.permute.xlu0 %1141
        %1143 = vrot.lane.b32.xlu0 %v1081, 16
        %v1144 = vpop.permute.xlu0 %1143
        %1145 = vrot.lane.b32.xlu0 %v1082, 16
        %v1146 = vpop.permute.xlu0 %1145
        %1147 = vrot.lane.b32.xlu0 %v1083, 16
        %v1148 = vpop.permute.xlu0 %1147
        %1149 = vrot.lane.b32.xlu0 %v1084, 16
        %v1150 = vpop.permute.xlu0 %1149
        %1151 = vrot.lane.b32.xlu0 %v1085, 16
        %v1152 = vpop.permute.xlu0 %1151
        %1153 = vrot.lane.b32.xlu0 %v1086, 16
        %v1154 = vpop.permute.xlu0 %1153
        %1155 = vrot.lane.b32.xlu0 %v1087, 16
        %v1156 = vpop.permute.xlu0 %1155
        %1157 = vrot.lane.b32.xlu0 %v1088, 16
        %v1158 = vpop.permute.xlu0 %1157
        %1159 = vrot.lane.b32.xlu0 %v1089, 16
        %v1160 = vpop.permute.xlu0 %1159
        %1161 = vrot.lane.b32.xlu0 %v1090, 16
        %v1162 = vpop.permute.xlu0 %1161
        %vm1199 = vcmask 191616
        %1200 = vst.msk [vmem:[#allocation2] sm:$0xf] %vm1199, %v1092
        %1201 = vst.msk [vmem:[#allocation2 + $0x4] sm:$0xf] %vm1199, %v1094
        %1202 = vst.msk [vmem:[#allocation2 + $0x8] sm:$0xf] %vm1199, %v1096
        %1203 = vst.msk [vmem:[#allocation2 + $0xc] sm:$0xf] %vm1199, %v1098
        %1204 = vst.msk [vmem:[#allocation2 + $0x10] sm:$0xf] %vm1199, %v1100
        %1205 = vst.msk [vmem:[#allocation2 + $0x14] sm:$0xf] %vm1199, %v1102
        %1206 = vst.msk [vmem:[#allocation2 + $0x18] sm:$0xf] %vm1199, %v1104
        %1207 = vst.msk [vmem:[#allocation2 + $0x1c] sm:$0xf] %vm1199, %v1106
        %1208 = vst.msk [vmem:[#allocation2 + $0x20] sm:$0xf] %vm1199, %v1108
        %1209 = vst.msk [vmem:[#allocation2 + $0x24] sm:$0xf] %vm1199, %v1110
        %1210 = vst.msk [vmem:[#allocation2 + $0x28] sm:$0xf] %vm1199, %v1112
        %1211 = vst.msk [vmem:[#allocation2 + $0x2c] sm:$0xf] %vm1199, %v1114
        %1212 = vst.msk [vmem:[#allocation2 + $0x30] sm:$0xf] %vm1199, %v1116
        %1213 = vst.msk [vmem:[#allocation2 + $0x34] sm:$0xf] %vm1199, %v1118
        %1214 = vst.msk [vmem:[#allocation2 + $0x38] sm:$0xf] %vm1199, %v1120
        %1215 = vst.msk [vmem:[#allocation2 + $0x3c] sm:$0xf] %vm1199, %v1122
        %1216 = vst.msk [vmem:[#allocation2 + $0x40] sm:$0xf] %vm1199, %v1124
        %1217 = vst.msk [vmem:[#allocation2 + $0x44] sm:$0xf] %vm1199, %v1126
        %1218 = vst.msk [vmem:[#allocation2 + $0x48] sm:$0xf] %vm1199, %v1128
        %1219 = vst.msk [vmem:[#allocation2 + $0x4c] sm:$0xf] %vm1199, %v1130
        %1220 = vst.msk [vmem:[#allocation2 + $0x50] sm:$0xf] %vm1199, %v1132
        %1221 = vst.msk [vmem:[#allocation2 + $0x54] sm:$0xf] %vm1199, %v1134
        %1222 = vst.msk [vmem:[#allocation2 + $0x58] sm:$0xf] %vm1199, %v1136
        %1223 = vst.msk [vmem:[#allocation2 + $0x5c] sm:$0xf] %vm1199, %v1138
        %1224 = vst.msk [vmem:[#allocation2 + $0x60] sm:$0xf] %vm1199, %v1140
        %1225 = vst.msk [vmem:[#allocation2 + $0x64] sm:$0xf] %vm1199, %v1142
        %1226 = vst.msk [vmem:[#allocation2 + $0x68] sm:$0xf] %vm1199, %v1144
        %1227 = vst.msk [vmem:[#allocation2 + $0x6c] sm:$0xf] %vm1199, %v1146
        %1228 = vst.msk [vmem:[#allocation2 + $0x70] sm:$0xf] %vm1199, %v1148
        %1229 = vst.msk [vmem:[#allocation2 + $0x74] sm:$0xf] %vm1199, %v1150
        %1230 = vst.msk [vmem:[#allocation2 + $0x78] sm:$0xf] %vm1199, %v1152
        %1231 = vst.msk [vmem:[#allocation2 + $0x7c] sm:$0xf] %vm1199, %v1154
        %1232 = vst.msk [vmem:[#allocation2 + $0x80] sm:$0xf] %vm1199, %v1156
        %1233 = vst.msk [vmem:[#allocation2 + $0x84] sm:$0xf] %vm1199, %v1158
        %1234 = vst.msk [vmem:[#allocation2 + $0x88] sm:$0xf] %vm1199, %v1160
        %vm1235 = vcmask 190592
        %1236 = vst.msk [vmem:[#allocation2 + $0x8c] sm:$0x7] %vm1235, %v1162
        %v1237 = vld [vmem:[%s437 + $0x12] sm:$0xff]
        %v1238 = vld [vmem:[%s437 + $0x1a] sm:$0xff]
        %v1239 = vld [vmem:[%s437 + $0x22] sm:$0xff]
        %v1240 = vld [vmem:[%s437 + $0x2a] sm:$0xff]
        %v1241 = vld [vmem:[%s437 + $0x32] sm:$0xff]
        %v1242 = vld [vmem:[%s437 + $0x3a] sm:$0xff]
        %v1243 = vld [vmem:[%s437 + $0x42] sm:$0xff]
        %v1244 = vld [vmem:[%s437 + $0x4a] sm:$0xff]
        %v1245 = vld [vmem:[%s437 + $0x52] sm:$0xff]
        %v1246 = vld [vmem:[%s437 + $0x5a] sm:$0xff]
        %v1247 = vld [vmem:[%s437 + $0x62] sm:$0xff]
        %v1248 = vld [vmem:[%s437 + $0x6a] sm:$0xff]
        %v1249 = vld [vmem:[%s437 + $0x72] sm:$0xff]
        %v1250 = vld [vmem:[%s437 + $0x7a] sm:$0xff]
        %v1251 = vld [vmem:[%s437 + $0x82] sm:$0xff]
        %v1252 = vld [vmem:[%s437 + $0x8a] sm:$0xff]
        %v1253 = vld [vmem:[%s437 + $0x92] sm:$0xff]
        %v1254 = vld [vmem:[%s437 + $0x9a] sm:$0xff]
        %v1255 = vld [vmem:[%s437 + $0xa2] sm:$0xff]
        %v1256 = vld [vmem:[%s437 + $0xaa] sm:$0xff]
        %v1257 = vld [vmem:[%s437 + $0xb2] sm:$0xff]
        %v1258 = vld [vmem:[%s437 + $0xba] sm:$0xff]
        %v1259 = vld [vmem:[%s437 + $0xc2] sm:$0xff]
        %v1260 = vld [vmem:[%s437 + $0xca] sm:$0xff]
        %v1261 = vld [vmem:[%s437 + $0xd2] sm:$0xff]
        %v1262 = vld [vmem:[%s437 + $0xda] sm:$0xff]
        %v1263 = vld [vmem:[%s437 + $0xe2] sm:$0xff]
        %v1264 = vld [vmem:[%s437 + $0xea] sm:$0xff]
        %v1265 = vld [vmem:[%s437 + $0xf2] sm:$0xff]
        %v1266 = vld [vmem:[%s437 + $0xfa] sm:$0xff]
        %v1267 = vld [vmem:[%s437 + $0x102] sm:$0xff]
        %v1268 = vld [vmem:[%s437 + $0x10a] sm:$0xff]
        %v1269 = vld [vmem:[%s437 + $0x112] sm:$0xff]
        %v1270 = vld [vmem:[%s437 + $0x11a] sm:$0xff]
        %v1271 = vld [vmem:[%s437 + $0x122] sm:$0xff]
        %v1272 = vld [vmem:[%s437 + $0x12a] sm:$0x3f]
        %v1273 = vpack.c.bf16 %v1238, %v1237
        %v1274 = vpack.c.bf16 %v1240, %v1239
        %v1275 = vpack.c.bf16 %v1242, %v1241
        %v1276 = vpack.c.bf16 %v1244, %v1243
        %v1277 = vpack.c.bf16 %v1246, %v1245
        %v1278 = vpack.c.bf16 %v1248, %v1247
        %v1279 = vpack.c.bf16 %v1250, %v1249
        %v1280 = vpack.c.bf16 %v1252, %v1251
        %v1281 = vpack.c.bf16 %v1254, %v1253
        %v1282 = vpack.c.bf16 %v1256, %v1255
        %v1283 = vpack.c.bf16 %v1258, %v1257
        %v1284 = vpack.c.bf16 %v1260, %v1259
        %v1285 = vpack.c.bf16 %v1262, %v1261
        %v1286 = vpack.c.bf16 %v1264, %v1263
        %v1287 = vpack.c.bf16 %v1266, %v1265
        %v1288 = vpack.c.bf16 %v1268, %v1267
        %v1289 = vpack.c.bf16 %v1270, %v1269
        %v1290 = vpack.c.bf16 %v1272, %v1271
        %v1309 = vunpack.c.l.b16 %v1273
        %v1310 = vunpack.c.h.b16 %v1273
        %v1311 = vunpack.c.l.b16 %v1274
        %v1312 = vunpack.c.h.b16 %v1274
        %v1313 = vunpack.c.l.b16 %v1275
        %v1314 = vunpack.c.h.b16 %v1275
        %v1315 = vunpack.c.l.b16 %v1276
        %v1316 = vunpack.c.h.b16 %v1276
        %v1317 = vunpack.c.l.b16 %v1277
        %v1318 = vunpack.c.h.b16 %v1277
        %v1319 = vunpack.c.l.b16 %v1278
        %v1320 = vunpack.c.h.b16 %v1278
        %v1321 = vunpack.c.l.b16 %v1279
        %v1322 = vunpack.c.h.b16 %v1279
        %v1323 = vunpack.c.l.b16 %v1280
        %v1324 = vunpack.c.h.b16 %v1280
        %v1325 = vunpack.c.l.b16 %v1281
        %v1326 = vunpack.c.h.b16 %v1281
        %v1327 = vunpack.c.l.b16 %v1282
        %v1328 = vunpack.c.h.b16 %v1282
        %v1329 = vunpack.c.l.b16 %v1283
        %v1330 = vunpack.c.h.b16 %v1283
        %v1331 = vunpack.c.l.b16 %v1284
        %v1332 = vunpack.c.h.b16 %v1284
        %v1333 = vunpack.c.l.b16 %v1285
        %v1334 = vunpack.c.h.b16 %v1285
        %v1335 = vunpack.c.l.b16 %v1286
        %v1336 = vunpack.c.h.b16 %v1286
        %v1337 = vunpack.c.l.b16 %v1287
        %v1338 = vunpack.c.h.b16 %v1287
        %v1339 = vunpack.c.l.b16 %v1288
        %v1340 = vunpack.c.h.b16 %v1288
        %v1341 = vunpack.c.l.b16 %v1289
        %v1342 = vunpack.c.h.b16 %v1289
        %v1343 = vunpack.c.l.b16 %v1290
        %v1344 = vunpack.c.h.b16 %v1290
        %v1345 = vpack.c.b16 %v1309, %v1309
        %v1346 = vpack.c.b16 %v1310, %v1310
        %v1347 = vpack.c.b16 %v1311, %v1311
        %v1348 = vpack.c.b16 %v1312, %v1312
        %v1349 = vpack.c.b16 %v1313, %v1313
        %v1350 = vpack.c.b16 %v1314, %v1314
        %v1351 = vpack.c.b16 %v1315, %v1315
        %v1352 = vpack.c.b16 %v1316, %v1316
        %v1353 = vpack.c.b16 %v1317, %v1317
        %v1354 = vpack.c.b16 %v1318, %v1318
        %v1355 = vpack.c.b16 %v1319, %v1319
        %v1356 = vpack.c.b16 %v1320, %v1320
        %v1357 = vpack.c.b16 %v1321, %v1321
        %v1358 = vpack.c.b16 %v1322, %v1322
        %v1359 = vpack.c.b16 %v1323, %v1323
        %v1360 = vpack.c.b16 %v1324, %v1324
        %v1361 = vpack.c.b16 %v1325, %v1325
        %v1362 = vpack.c.b16 %v1326, %v1326
        %v1363 = vpack.c.b16 %v1327, %v1327
        %v1364 = vpack.c.b16 %v1328, %v1328
        %v1365 = vpack.c.b16 %v1329, %v1329
        %v1366 = vpack.c.b16 %v1330, %v1330
        %v1367 = vpack.c.b16 %v1331, %v1331
        %v1368 = vpack.c.b16 %v1332, %v1332
        %v1369 = vpack.c.b16 %v1333, %v1333
        %v1370 = vpack.c.b16 %v1334, %v1334
        %v1371 = vpack.c.b16 %v1335, %v1335
        %v1372 = vpack.c.b16 %v1336, %v1336
        %v1373 = vpack.c.b16 %v1337, %v1337
        %v1374 = vpack.c.b16 %v1338, %v1338
        %v1375 = vpack.c.b16 %v1339, %v1339
        %v1376 = vpack.c.b16 %v1340, %v1340
        %v1377 = vpack.c.b16 %v1341, %v1341
        %v1378 = vpack.c.b16 %v1342, %v1342
        %v1379 = vpack.c.b16 %v1343, %v1343
        %v1380 = vpack.c.b16 %v1344, %v1344
        %1381 = vrot.lane.b32.xlu0 %v1345, 24
        %v1382 = vpop.permute.xlu0 %1381
        %1383 = vrot.lane.b32.xlu0 %v1346, 24
        %v1384 = vpop.permute.xlu0 %1383
        %1385 = vrot.lane.b32.xlu0 %v1347, 24
        %v1386 = vpop.permute.xlu0 %1385
        %1387 = vrot.lane.b32.xlu0 %v1348, 24
        %v1388 = vpop.permute.xlu0 %1387
        %1389 = vrot.lane.b32.xlu0 %v1349, 24
        %v1390 = vpop.permute.xlu0 %1389
        %1391 = vrot.lane.b32.xlu0 %v1350, 24
        %v1392 = vpop.permute.xlu0 %1391
        %1393 = vrot.lane.b32.xlu0 %v1351, 24
        %v1394 = vpop.permute.xlu0 %1393
        %1395 = vrot.lane.b32.xlu0 %v1352, 24
        %v1396 = vpop.permute.xlu0 %1395
        %1397 = vrot.lane.b32.xlu0 %v1353, 24
        %v1398 = vpop.permute.xlu0 %1397
        %1399 = vrot.lane.b32.xlu0 %v1354, 24
        %v1400 = vpop.permute.xlu0 %1399
        %1401 = vrot.lane.b32.xlu0 %v1355, 24
        %v1402 = vpop.permute.xlu0 %1401
        %1403 = vrot.lane.b32.xlu0 %v1356, 24
        %v1404 = vpop.permute.xlu0 %1403
        %1405 = vrot.lane.b32.xlu0 %v1357, 24
        %v1406 = vpop.permute.xlu0 %1405
        %1407 = vrot.lane.b32.xlu0 %v1358, 24
        %v1408 = vpop.permute.xlu0 %1407
        %1409 = vrot.lane.b32.xlu0 %v1359, 24
        %v1410 = vpop.permute.xlu0 %1409
        %1411 = vrot.lane.b32.xlu0 %v1360, 24
        %v1412 = vpop.permute.xlu0 %1411
        %1413 = vrot.lane.b32.xlu0 %v1361, 24
        %v1414 = vpop.permute.xlu0 %1413
        %1415 = vrot.lane.b32.xlu0 %v1362, 24
        %v1416 = vpop.permute.xlu0 %1415
        %1417 = vrot.lane.b32.xlu0 %v1363, 24
        %v1418 = vpop.permute.xlu0 %1417
        %1419 = vrot.lane.b32.xlu0 %v1364, 24
        %v1420 = vpop.permute.xlu0 %1419
        %1421 = vrot.lane.b32.xlu0 %v1365, 24
        %v1422 = vpop.permute.xlu0 %1421
        %1423 = vrot.lane.b32.xlu0 %v1366, 24
        %v1424 = vpop.permute.xlu0 %1423
        %1425 = vrot.lane.b32.xlu0 %v1367, 24
        %v1426 = vpop.permute.xlu0 %1425
        %1427 = vrot.lane.b32.xlu0 %v1368, 24
        %v1428 = vpop.permute.xlu0 %1427
        %1429 = vrot.lane.b32.xlu0 %v1369, 24
        %v1430 = vpop.permute.xlu0 %1429
        %1431 = vrot.lane.b32.xlu0 %v1370, 24
        %v1432 = vpop.permute.xlu0 %1431
        %1433 = vrot.lane.b32.xlu0 %v1371, 24
        %v1434 = vpop.permute.xlu0 %1433
        %1435 = vrot.lane.b32.xlu0 %v1372, 24
        %v1436 = vpop.permute.xlu0 %1435
        %1437 = vrot.lane.b32.xlu0 %v1373, 24
        %v1438 = vpop.permute.xlu0 %1437
        %1439 = vrot.lane.b32.xlu0 %v1374, 24
        %v1440 = vpop.permute.xlu0 %1439
        %1441 = vrot.lane.b32.xlu0 %v1375, 24
        %v1442 = vpop.permute.xlu0 %1441
        %1443 = vrot.lane.b32.xlu0 %v1376, 24
        %v1444 = vpop.permute.xlu0 %1443
        %1445 = vrot.lane.b32.xlu0 %v1377, 24
        %v1446 = vpop.permute.xlu0 %1445
        %1447 = vrot.lane.b32.xlu0 %v1378, 24
        %v1448 = vpop.permute.xlu0 %1447
        %1449 = vrot.lane.b32.xlu0 %v1379, 24
        %v1450 = vpop.permute.xlu0 %1449
        %1451 = vrot.lane.b32.xlu0 %v1380, 24
        %v1452 = vpop.permute.xlu0 %1451
        %vm1489 = vcmask 257216
        %1490 = vst.msk [vmem:[#allocation2] sm:$0xf] %vm1489, %v1382
        %1491 = vst.msk [vmem:[#allocation2 + $0x4] sm:$0xf] %vm1489, %v1384
        %1492 = vst.msk [vmem:[#allocation2 + $0x8] sm:$0xf] %vm1489, %v1386
        %1493 = vst.msk [vmem:[#allocation2 + $0xc] sm:$0xf] %vm1489, %v1388
        %1494 = vst.msk [vmem:[#allocation2 + $0x10] sm:$0xf] %vm1489, %v1390
        %1495 = vst.msk [vmem:[#allocation2 + $0x14] sm:$0xf] %vm1489, %v1392
        %1496 = vst.msk [vmem:[#allocation2 + $0x18] sm:$0xf] %vm1489, %v1394
        %1497 = vst.msk [vmem:[#allocation2 + $0x1c] sm:$0xf] %vm1489, %v1396
        %1498 = vst.msk [vmem:[#allocation2 + $0x20] sm:$0xf] %vm1489, %v1398
        %1499 = vst.msk [vmem:[#allocation2 + $0x24] sm:$0xf] %vm1489, %v1400
        %1500 = vst.msk [vmem:[#allocation2 + $0x28] sm:$0xf] %vm1489, %v1402
        %1501 = vst.msk [vmem:[#allocation2 + $0x2c] sm:$0xf] %vm1489, %v1404
        %1502 = vst.msk [vmem:[#allocation2 + $0x30] sm:$0xf] %vm1489, %v1406
        %1503 = vst.msk [vmem:[#allocation2 + $0x34] sm:$0xf] %vm1489, %v1408
        %1504 = vst.msk [vmem:[#allocation2 + $0x38] sm:$0xf] %vm1489, %v1410
        %1505 = vst.msk [vmem:[#allocation2 + $0x3c] sm:$0xf] %vm1489, %v1412
        %1506 = vst.msk [vmem:[#allocation2 + $0x40] sm:$0xf] %vm1489, %v1414
        %1507 = vst.msk [vmem:[#allocation2 + $0x44] sm:$0xf] %vm1489, %v1416
        %1508 = vst.msk [vmem:[#allocation2 + $0x48] sm:$0xf] %vm1489, %v1418
        %1509 = vst.msk [vmem:[#allocation2 + $0x4c] sm:$0xf] %vm1489, %v1420
        %1510 = vst.msk [vmem:[#allocation2 + $0x50] sm:$0xf] %vm1489, %v1422
        %1511 = vst.msk [vmem:[#allocation2 + $0x54] sm:$0xf] %vm1489, %v1424
        %1512 = vst.msk [vmem:[#allocation2 + $0x58] sm:$0xf] %vm1489, %v1426
        %1513 = vst.msk [vmem:[#allocation2 + $0x5c] sm:$0xf] %vm1489, %v1428
        %1514 = vst.msk [vmem:[#allocation2 + $0x60] sm:$0xf] %vm1489, %v1430
        %1515 = vst.msk [vmem:[#allocation2 + $0x64] sm:$0xf] %vm1489, %v1432
        %1516 = vst.msk [vmem:[#allocation2 + $0x68] sm:$0xf] %vm1489, %v1434
        %1517 = vst.msk [vmem:[#allocation2 + $0x6c] sm:$0xf] %vm1489, %v1436
        %1518 = vst.msk [vmem:[#allocation2 + $0x70] sm:$0xf] %vm1489, %v1438
        %1519 = vst.msk [vmem:[#allocation2 + $0x74] sm:$0xf] %vm1489, %v1440
        %1520 = vst.msk [vmem:[#allocation2 + $0x78] sm:$0xf] %vm1489, %v1442
        %1521 = vst.msk [vmem:[#allocation2 + $0x7c] sm:$0xf] %vm1489, %v1444
        %1522 = vst.msk [vmem:[#allocation2 + $0x80] sm:$0xf] %vm1489, %v1446
        %1523 = vst.msk [vmem:[#allocation2 + $0x84] sm:$0xf] %vm1489, %v1448
        %1524 = vst.msk [vmem:[#allocation2 + $0x88] sm:$0xf] %vm1489, %v1450
        %vm1525 = vcmask 256192
        %1526 = vst.msk [vmem:[#allocation2 + $0x8c] sm:$0x7] %vm1525, %v1452
        %v1527 = vld [vmem:[%s437 + $0x13] sm:$0xff]
        %v1528 = vld [vmem:[%s437 + $0x1b] sm:$0xff]
        %v1529 = vld [vmem:[%s437 + $0x23] sm:$0xff]
        %v1530 = vld [vmem:[%s437 + $0x2b] sm:$0xff]
        %v1531 = vld [vmem:[%s437 + $0x33] sm:$0xff]
        %v1532 = vld [vmem:[%s437 + $0x3b] sm:$0xff]
        %v1533 = vld [vmem:[%s437 + $0x43] sm:$0xff]
        %v1534 = vld [vmem:[%s437 + $0x4b] sm:$0xff]
        %v1535 = vld [vmem:[%s437 + $0x53] sm:$0xff]
        %v1536 = vld [vmem:[%s437 + $0x5b] sm:$0xff]
        %v1537 = vld [vmem:[%s437 + $0x63] sm:$0xff]
        %v1538 = vld [vmem:[%s437 + $0x6b] sm:$0xff]
        %v1539 = vld [vmem:[%s437 + $0x73] sm:$0xff]
        %v1540 = vld [vmem:[%s437 + $0x7b] sm:$0xff]
        %v1541 = vld [vmem:[%s437 + $0x83] sm:$0xff]
        %v1542 = vld [vmem:[%s437 + $0x8b] sm:$0xff]
        %v1543 = vld [vmem:[%s437 + $0x93] sm:$0xff]
        %v1544 = vld [vmem:[%s437 + $0x9b] sm:$0xff]
        %v1545 = vld [vmem:[%s437 + $0xa3] sm:$0xff]
        %v1546 = vld [vmem:[%s437 + $0xab] sm:$0xff]
        %v1547 = vld [vmem:[%s437 + $0xb3] sm:$0xff]
        %v1548 = vld [vmem:[%s437 + $0xbb] sm:$0xff]
        %v1549 = vld [vmem:[%s437 + $0xc3] sm:$0xff]
        %v1550 = vld [vmem:[%s437 + $0xcb] sm:$0xff]
        %v1551 = vld [vmem:[%s437 + $0xd3] sm:$0xff]
        %v1552 = vld [vmem:[%s437 + $0xdb] sm:$0xff]
        %v1553 = vld [vmem:[%s437 + $0xe3] sm:$0xff]
        %v1554 = vld [vmem:[%s437 + $0xeb] sm:$0xff]
        %v1555 = vld [vmem:[%s437 + $0xf3] sm:$0xff]
        %v1556 = vld [vmem:[%s437 + $0xfb] sm:$0xff]
        %v1557 = vld [vmem:[%s437 + $0x103] sm:$0xff]
        %v1558 = vld [vmem:[%s437 + $0x10b] sm:$0xff]
        %v1559 = vld [vmem:[%s437 + $0x113] sm:$0xff]
        %v1560 = vld [vmem:[%s437 + $0x11b] sm:$0xff]
        %v1561 = vld [vmem:[%s437 + $0x123] sm:$0xff]
        %v1562 = vld [vmem:[%s437 + $0x12b] sm:$0x3f]
        %v1563 = vpack.c.bf16 %v1528, %v1527
        %v1564 = vpack.c.bf16 %v1530, %v1529
        %v1565 = vpack.c.bf16 %v1532, %v1531
        %v1566 = vpack.c.bf16 %v1534, %v1533
        %v1567 = vpack.c.bf16 %v1536, %v1535
        %v1568 = vpack.c.bf16 %v1538, %v1537
        %v1569 = vpack.c.bf16 %v1540, %v1539
        %v1570 = vpack.c.bf16 %v1542, %v1541
        %v1571 = vpack.c.bf16 %v1544, %v1543
        %v1572 = vpack.c.bf16 %v1546, %v1545
        %v1573 = vpack.c.bf16 %v1548, %v1547
        %v1574 = vpack.c.bf16 %v1550, %v1549
        %v1575 = vpack.c.bf16 %v1552, %v1551
        %v1576 = vpack.c.bf16 %v1554, %v1553
        %v1577 = vpack.c.bf16 %v1556, %v1555
        %v1578 = vpack.c.bf16 %v1558, %v1557
        %v1579 = vpack.c.bf16 %v1560, %v1559
        %v1580 = vpack.c.bf16 %v1562, %v1561
        %v1599 = vunpack.c.l.b16 %v1563
        %v1600 = vunpack.c.h.b16 %v1563
        %v1601 = vunpack.c.l.b16 %v1564
        %v1602 = vunpack.c.h.b16 %v1564
        %v1603 = vunpack.c.l.b16 %v1565
        %v1604 = vunpack.c.h.b16 %v1565
        %v1605 = vunpack.c.l.b16 %v1566
        %v1606 = vunpack.c.h.b16 %v1566
        %v1607 = vunpack.c.l.b16 %v1567
        %v1608 = vunpack.c.h.b16 %v1567
        %v1609 = vunpack.c.l.b16 %v1568
        %v1610 = vunpack.c.h.b16 %v1568
        %v1611 = vunpack.c.l.b16 %v1569
        %v1612 = vunpack.c.h.b16 %v1569
        %v1613 = vunpack.c.l.b16 %v1570
        %v1614 = vunpack.c.h.b16 %v1570
        %v1615 = vunpack.c.l.b16 %v1571
        %v1616 = vunpack.c.h.b16 %v1571
        %v1617 = vunpack.c.l.b16 %v1572
        %v1618 = vunpack.c.h.b16 %v1572
        %v1619 = vunpack.c.l.b16 %v1573
        %v1620 = vunpack.c.h.b16 %v1573
        %v1621 = vunpack.c.l.b16 %v1574
        %v1622 = vunpack.c.h.b16 %v1574
        %v1623 = vunpack.c.l.b16 %v1575
        %v1624 = vunpack.c.h.b16 %v1575
        %v1625 = vunpack.c.l.b16 %v1576
        %v1626 = vunpack.c.h.b16 %v1576
        %v1627 = vunpack.c.l.b16 %v1577
        %v1628 = vunpack.c.h.b16 %v1577
        %v1629 = vunpack.c.l.b16 %v1578
        %v1630 = vunpack.c.h.b16 %v1578
        %v1631 = vunpack.c.l.b16 %v1579
        %v1632 = vunpack.c.h.b16 %v1579
        %v1633 = vunpack.c.l.b16 %v1580
        %v1634 = vunpack.c.h.b16 %v1580
        %v1635 = vpack.c.b16 %v1599, %v1599
        %v1636 = vpack.c.b16 %v1600, %v1600
        %v1637 = vpack.c.b16 %v1601, %v1601
        %v1638 = vpack.c.b16 %v1602, %v1602
        %v1639 = vpack.c.b16 %v1603, %v1603
        %v1640 = vpack.c.b16 %v1604, %v1604
        %v1641 = vpack.c.b16 %v1605, %v1605
        %v1642 = vpack.c.b16 %v1606, %v1606
        %v1643 = vpack.c.b16 %v1607, %v1607
        %v1644 = vpack.c.b16 %v1608, %v1608
        %v1645 = vpack.c.b16 %v1609, %v1609
        %v1646 = vpack.c.b16 %v1610, %v1610
        %v1647 = vpack.c.b16 %v1611, %v1611
        %v1648 = vpack.c.b16 %v1612, %v1612
        %v1649 = vpack.c.b16 %v1613, %v1613
        %v1650 = vpack.c.b16 %v1614, %v1614
        %v1651 = vpack.c.b16 %v1615, %v1615
        %v1652 = vpack.c.b16 %v1616, %v1616
        %v1653 = vpack.c.b16 %v1617, %v1617
        %v1654 = vpack.c.b16 %v1618, %v1618
        %v1655 = vpack.c.b16 %v1619, %v1619
        %v1656 = vpack.c.b16 %v1620, %v1620
        %v1657 = vpack.c.b16 %v1621, %v1621
        %v1658 = vpack.c.b16 %v1622, %v1622
        %v1659 = vpack.c.b16 %v1623, %v1623
        %v1660 = vpack.c.b16 %v1624, %v1624
        %v1661 = vpack.c.b16 %v1625, %v1625
        %v1662 = vpack.c.b16 %v1626, %v1626
        %v1663 = vpack.c.b16 %v1627, %v1627
        %v1664 = vpack.c.b16 %v1628, %v1628
        %v1665 = vpack.c.b16 %v1629, %v1629
        %v1666 = vpack.c.b16 %v1630, %v1630
        %v1667 = vpack.c.b16 %v1631, %v1631
        %v1668 = vpack.c.b16 %v1632, %v1632
        %v1669 = vpack.c.b16 %v1633, %v1633
        %v1670 = vpack.c.b16 %v1634, %v1634
        %1671 = vrot.lane.b32.xlu0 %v1635, 32
        %v1672 = vpop.permute.xlu0 %1671
        %1673 = vrot.lane.b32.xlu0 %v1636, 32
        %v1674 = vpop.permute.xlu0 %1673
        %1675 = vrot.lane.b32.xlu0 %v1637, 32
        %v1676 = vpop.permute.xlu0 %1675
        %1677 = vrot.lane.b32.xlu0 %v1638, 32
        %v1678 = vpop.permute.xlu0 %1677
        %1679 = vrot.lane.b32.xlu0 %v1639, 32
        %v1680 = vpop.permute.xlu0 %1679
        %1681 = vrot.lane.b32.xlu0 %v1640, 32
        %v1682 = vpop.permute.xlu0 %1681
        %1683 = vrot.lane.b32.xlu0 %v1641, 32
        %v1684 = vpop.permute.xlu0 %1683
        %1685 = vrot.lane.b32.xlu0 %v1642, 32
        %v1686 = vpop.permute.xlu0 %1685
        %1687 = vrot.lane.b32.xlu0 %v1643, 32
        %v1688 = vpop.permute.xlu0 %1687
        %1689 = vrot.lane.b32.xlu0 %v1644, 32
        %v1690 = vpop.permute.xlu0 %1689
        %1691 = vrot.lane.b32.xlu0 %v1645, 32
        %v1692 = vpop.permute.xlu0 %1691
        %1693 = vrot.lane.b32.xlu0 %v1646, 32
        %v1694 = vpop.permute.xlu0 %1693
        %1695 = vrot.lane.b32.xlu0 %v1647, 32
        %v1696 = vpop.permute.xlu0 %1695
        %1697 = vrot.lane.b32.xlu0 %v1648, 32
        %v1698 = vpop.permute.xlu0 %1697
        %1699 = vrot.lane.b32.xlu0 %v1649, 32
        %v1700 = vpop.permute.xlu0 %1699
        %1701 = vrot.lane.b32.xlu0 %v1650, 32
        %v1702 = vpop.permute.xlu0 %1701
        %1703 = vrot.lane.b32.xlu0 %v1651, 32
        %v1704 = vpop.permute.xlu0 %1703
        %1705 = vrot.lane.b32.xlu0 %v1652, 32
        %v1706 = vpop.permute.xlu0 %1705
        %1707 = vrot.lane.b32.xlu0 %v1653, 32
        %v1708 = vpop.permute.xlu0 %1707
        %1709 = vrot.lane.b32.xlu0 %v1654, 32
        %v1710 = vpop.permute.xlu0 %1709
        %1711 = vrot.lane.b32.xlu0 %v1655, 32
        %v1712 = vpop.permute.xlu0 %1711
        %1713 = vrot.lane.b32.xlu0 %v1656, 32
        %v1714 = vpop.permute.xlu0 %1713
        %1715 = vrot.lane.b32.xlu0 %v1657, 32
        %v1716 = vpop.permute.xlu0 %1715
        %1717 = vrot.lane.b32.xlu0 %v1658, 32
        %v1718 = vpop.permute.xlu0 %1717
        %1719 = vrot.lane.b32.xlu0 %v1659, 32
        %v1720 = vpop.permute.xlu0 %1719
        %1721 = vrot.lane.b32.xlu0 %v1660, 32
        %v1722 = vpop.permute.xlu0 %1721
        %1723 = vrot.lane.b32.xlu0 %v1661, 32
        %v1724 = vpop.permute.xlu0 %1723
        %1725 = vrot.lane.b32.xlu0 %v1662, 32
        %v1726 = vpop.permute.xlu0 %1725
        %1727 = vrot.lane.b32.xlu0 %v1663, 32
        %v1728 = vpop.permute.xlu0 %1727
        %1729 = vrot.lane.b32.xlu0 %v1664, 32
        %v1730 = vpop.permute.xlu0 %1729
        %1731 = vrot.lane.b32.xlu0 %v1665, 32
        %v1732 = vpop.permute.xlu0 %1731
        %1733 = vrot.lane.b32.xlu0 %v1666, 32
        %v1734 = vpop.permute.xlu0 %1733
        %1735 = vrot.lane.b32.xlu0 %v1667, 32
        %v1736 = vpop.permute.xlu0 %1735
        %1737 = vrot.lane.b32.xlu0 %v1668, 32
        %v1738 = vpop.permute.xlu0 %1737
        %1739 = vrot.lane.b32.xlu0 %v1669, 32
        %v1740 = vpop.permute.xlu0 %1739
        %1741 = vrot.lane.b32.xlu0 %v1670, 32
        %v1742 = vpop.permute.xlu0 %1741
        %vm1779 = vcmask 322816
        %1780 = vst.msk [vmem:[#allocation2] sm:$0xf] %vm1779, %v1672
        %1781 = vst.msk [vmem:[#allocation2 + $0x4] sm:$0xf] %vm1779, %v1674
        %1782 = vst.msk [vmem:[#allocation2 + $0x8] sm:$0xf] %vm1779, %v1676
        %1783 = vst.msk [vmem:[#allocation2 + $0xc] sm:$0xf] %vm1779, %v1678
        %1784 = vst.msk [vmem:[#allocation2 + $0x10] sm:$0xf] %vm1779, %v1680
        %1785 = vst.msk [vmem:[#allocation2 + $0x14] sm:$0xf] %vm1779, %v1682
        %1786 = vst.msk [vmem:[#allocation2 + $0x18] sm:$0xf] %vm1779, %v1684
        %1787 = vst.msk [vmem:[#allocation2 + $0x1c] sm:$0xf] %vm1779, %v1686
        %1788 = vst.msk [vmem:[#allocation2 + $0x20] sm:$0xf] %vm1779, %v1688
        %1789 = vst.msk [vmem:[#allocation2 + $0x24] sm:$0xf] %vm1779, %v1690
        %1790 = vst.msk [vmem:[#allocation2 + $0x28] sm:$0xf] %vm1779, %v1692
        %1791 = vst.msk [vmem:[#allocation2 + $0x2c] sm:$0xf] %vm1779, %v1694
        %1792 = vst.msk [vmem:[#allocation2 + $0x30] sm:$0xf] %vm1779, %v1696
        %1793 = vst.msk [vmem:[#allocation2 + $0x34] sm:$0xf] %vm1779, %v1698
        %1794 = vst.msk [vmem:[#allocation2 + $0x38] sm:$0xf] %vm1779, %v1700
        %1795 = vst.msk [vmem:[#allocation2 + $0x3c] sm:$0xf] %vm1779, %v1702
        %1796 = vst.msk [vmem:[#allocation2 + $0x40] sm:$0xf] %vm1779, %v1704
        %1797 = vst.msk [vmem:[#allocation2 + $0x44] sm:$0xf] %vm1779, %v1706
        %1798 = vst.msk [vmem:[#allocation2 + $0x48] sm:$0xf] %vm1779, %v1708
        %1799 = vst.msk [vmem:[#allocation2 + $0x4c] sm:$0xf] %vm1779, %v1710
        %1800 = vst.msk [vmem:[#allocation2 + $0x50] sm:$0xf] %vm1779, %v1712
        %1801 = vst.msk [vmem:[#allocation2 + $0x54] sm:$0xf] %vm1779, %v1714
        %1802 = vst.msk [vmem:[#allocation2 + $0x58] sm:$0xf] %vm1779, %v1716
        %1803 = vst.msk [vmem:[#allocation2 + $0x5c] sm:$0xf] %vm1779, %v1718
        %1804 = vst.msk [vmem:[#allocation2 + $0x60] sm:$0xf] %vm1779, %v1720
        %1805 = vst.msk [vmem:[#allocation2 + $0x64] sm:$0xf] %vm1779, %v1722
        %1806 = vst.msk [vmem:[#allocation2 + $0x68] sm:$0xf] %vm1779, %v1724
        %1807 = vst.msk [vmem:[#allocation2 + $0x6c] sm:$0xf] %vm1779, %v1726
        %1808 = vst.msk [vmem:[#allocation2 + $0x70] sm:$0xf] %vm1779, %v1728
        %1809 = vst.msk [vmem:[#allocation2 + $0x74] sm:$0xf] %vm1779, %v1730
        %1810 = vst.msk [vmem:[#allocation2 + $0x78] sm:$0xf] %vm1779, %v1732
        %1811 = vst.msk [vmem:[#allocation2 + $0x7c] sm:$0xf] %vm1779, %v1734
        %1812 = vst.msk [vmem:[#allocation2 + $0x80] sm:$0xf] %vm1779, %v1736
        %1813 = vst.msk [vmem:[#allocation2 + $0x84] sm:$0xf] %vm1779, %v1738
        %1814 = vst.msk [vmem:[#allocation2 + $0x88] sm:$0xf] %vm1779, %v1740
        %vm1815 = vcmask 321792
        %1816 = vst.msk [vmem:[#allocation2 + $0x8c] sm:$0x7] %vm1815, %v1742
        %v1817 = vld [vmem:[%s437 + $0x14] sm:$0xff]
        %v1818 = vld [vmem:[%s437 + $0x1c] sm:$0xff]
        %v1819 = vld [vmem:[%s437 + $0x24] sm:$0xff]
        %v1820 = vld [vmem:[%s437 + $0x2c] sm:$0xff]
        %v1821 = vld [vmem:[%s437 + $0x34] sm:$0xff]
        %v1822 = vld [vmem:[%s437 + $0x3c] sm:$0xff]
        %v1823 = vld [vmem:[%s437 + $0x44] sm:$0xff]
        %v1824 = vld [vmem:[%s437 + $0x4c] sm:$0xff]
        %v1825 = vld [vmem:[%s437 + $0x54] sm:$0xff]
        %v1826 = vld [vmem:[%s437 + $0x5c] sm:$0xff]
        %v1827 = vld [vmem:[%s437 + $0x64] sm:$0xff]
        %v1828 = vld [vmem:[%s437 + $0x6c] sm:$0xff]
        %v1829 = vld [vmem:[%s437 + $0x74] sm:$0xff]
        %v1830 = vld [vmem:[%s437 + $0x7c] sm:$0xff]
        %v1831 = vld [vmem:[%s437 + $0x84] sm:$0xff]
        %v1832 = vld [vmem:[%s437 + $0x8c] sm:$0xff]
        %v1833 = vld [vmem:[%s437 + $0x94] sm:$0xff]
        %v1834 = vld [vmem:[%s437 + $0x9c] sm:$0xff]
        %v1835 = vld [vmem:[%s437 + $0xa4] sm:$0xff]
        %v1836 = vld [vmem:[%s437 + $0xac] sm:$0xff]
        %v1837 = vld [vmem:[%s437 + $0xb4] sm:$0xff]
        %v1838 = vld [vmem:[%s437 + $0xbc] sm:$0xff]
        %v1839 = vld [vmem:[%s437 + $0xc4] sm:$0xff]
        %v1840 = vld [vmem:[%s437 + $0xcc] sm:$0xff]
        %v1841 = vld [vmem:[%s437 + $0xd4] sm:$0xff]
        %v1842 = vld [vmem:[%s437 + $0xdc] sm:$0xff]
        %v1843 = vld [vmem:[%s437 + $0xe4] sm:$0xff]
        %v1844 = vld [vmem:[%s437 + $0xec] sm:$0xff]
        %v1845 = vld [vmem:[%s437 + $0xf4] sm:$0xff]
        %v1846 = vld [vmem:[%s437 + $0xfc] sm:$0xff]
        %v1847 = vld [vmem:[%s437 + $0x104] sm:$0xff]
        %v1848 = vld [vmem:[%s437 + $0x10c] sm:$0xff]
        %v1849 = vld [vmem:[%s437 + $0x114] sm:$0xff]
        %v1850 = vld [vmem:[%s437 + $0x11c] sm:$0xff]
        %v1851 = vld [vmem:[%s437 + $0x124] sm:$0xff]
        %v1852 = vld [vmem:[%s437 + $0x12c] sm:$0x3f]
        %v1853 = vpack.c.bf16 %v1818, %v1817
        %v1854 = vpack.c.bf16 %v1820, %v1819
        %v1855 = vpack.c.bf16 %v1822, %v1821
        %v1856 = vpack.c.bf16 %v1824, %v1823
        %v1857 = vpack.c.bf16 %v1826, %v1825
        %v1858 = vpack.c.bf16 %v1828, %v1827
        %v1859 = vpack.c.bf16 %v1830, %v1829
        %v1860 = vpack.c.bf16 %v1832, %v1831
        %v1861 = vpack.c.bf16 %v1834, %v1833
        %v1862 = vpack.c.bf16 %v1836, %v1835
        %v1863 = vpack.c.bf16 %v1838, %v1837
        %v1864 = vpack.c.bf16 %v1840, %v1839
        %v1865 = vpack.c.bf16 %v1842, %v1841
        %v1866 = vpack.c.bf16 %v1844, %v1843
        %v1867 = vpack.c.bf16 %v1846, %v1845
        %v1868 = vpack.c.bf16 %v1848, %v1847
        %v1869 = vpack.c.bf16 %v1850, %v1849
        %v1870 = vpack.c.bf16 %v1852, %v1851
        %v1889 = vunpack.c.l.b16 %v1853
        %v1890 = vunpack.c.h.b16 %v1853
        %v1891 = vunpack.c.l.b16 %v1854
        %v1892 = vunpack.c.h.b16 %v1854
        %v1893 = vunpack.c.l.b16 %v1855
        %v1894 = vunpack.c.h.b16 %v1855
        %v1895 = vunpack.c.l.b16 %v1856
        %v1896 = vunpack.c.h.b16 %v1856
        %v1897 = vunpack.c.l.b16 %v1857
        %v1898 = vunpack.c.h.b16 %v1857
        %v1899 = vunpack.c.l.b16 %v1858
        %v1900 = vunpack.c.h.b16 %v1858
        %v1901 = vunpack.c.l.b16 %v1859
        %v1902 = vunpack.c.h.b16 %v1859
        %v1903 = vunpack.c.l.b16 %v1860
        %v1904 = vunpack.c.h.b16 %v1860
        %v1905 = vunpack.c.l.b16 %v1861
        %v1906 = vunpack.c.h.b16 %v1861
        %v1907 = vunpack.c.l.b16 %v1862
        %v1908 = vunpack.c.h.b16 %v1862
        %v1909 = vunpack.c.l.b16 %v1863
        %v1910 = vunpack.c.h.b16 %v1863
        %v1911 = vunpack.c.l.b16 %v1864
        %v1912 = vunpack.c.h.b16 %v1864
        %v1913 = vunpack.c.l.b16 %v1865
        %v1914 = vunpack.c.h.b16 %v1865
        %v1915 = vunpack.c.l.b16 %v1866
        %v1916 = vunpack.c.h.b16 %v1866
        %v1917 = vunpack.c.l.b16 %v1867
        %v1918 = vunpack.c.h.b16 %v1867
        %v1919 = vunpack.c.l.b16 %v1868
        %v1920 = vunpack.c.h.b16 %v1868
        %v1921 = vunpack.c.l.b16 %v1869
        %v1922 = vunpack.c.h.b16 %v1869
        %v1923 = vunpack.c.l.b16 %v1870
        %v1924 = vunpack.c.h.b16 %v1870
        %v1925 = vpack.c.b16 %v1889, %v1889
        %v1926 = vpack.c.b16 %v1890, %v1890
        %v1927 = vpack.c.b16 %v1891, %v1891
        %v1928 = vpack.c.b16 %v1892, %v1892
        %v1929 = vpack.c.b16 %v1893, %v1893
        %v1930 = vpack.c.b16 %v1894, %v1894
        %v1931 = vpack.c.b16 %v1895, %v1895
        %v1932 = vpack.c.b16 %v1896, %v1896
        %v1933 = vpack.c.b16 %v1897, %v1897
        %v1934 = vpack.c.b16 %v1898, %v1898
        %v1935 = vpack.c.b16 %v1899, %v1899
        %v1936 = vpack.c.b16 %v1900, %v1900
        %v1937 = vpack.c.b16 %v1901, %v1901
        %v1938 = vpack.c.b16 %v1902, %v1902
        %v1939 = vpack.c.b16 %v1903, %v1903
        %v1940 = vpack.c.b16 %v1904, %v1904
        %v1941 = vpack.c.b16 %v1905, %v1905
        %v1942 = vpack.c.b16 %v1906, %v1906
        %v1943 = vpack.c.b16 %v1907, %v1907
        %v1944 = vpack.c.b16 %v1908, %v1908
        %v1945 = vpack.c.b16 %v1909, %v1909
        %v1946 = vpack.c.b16 %v1910, %v1910
        %v1947 = vpack.c.b16 %v1911, %v1911
        %v1948 = vpack.c.b16 %v1912, %v1912
        %v1949 = vpack.c.b16 %v1913, %v1913
        %v1950 = vpack.c.b16 %v1914, %v1914
        %v1951 = vpack.c.b16 %v1915, %v1915
        %v1952 = vpack.c.b16 %v1916, %v1916
        %v1953 = vpack.c.b16 %v1917, %v1917
        %v1954 = vpack.c.b16 %v1918, %v1918
        %v1955 = vpack.c.b16 %v1919, %v1919
        %v1956 = vpack.c.b16 %v1920, %v1920
        %v1957 = vpack.c.b16 %v1921, %v1921
        %v1958 = vpack.c.b16 %v1922, %v1922
        %v1959 = vpack.c.b16 %v1923, %v1923
        %v1960 = vpack.c.b16 %v1924, %v1924
        %1961 = vrot.lane.b32.xlu0 %v1925, 40
        %v1962 = vpop.permute.xlu0 %1961
        %1963 = vrot.lane.b32.xlu0 %v1926, 40
        %v1964 = vpop.permute.xlu0 %1963
        %1965 = vrot.lane.b32.xlu0 %v1927, 40
        %v1966 = vpop.permute.xlu0 %1965
        %1967 = vrot.lane.b32.xlu0 %v1928, 40
        %v1968 = vpop.permute.xlu0 %1967
        %1969 = vrot.lane.b32.xlu0 %v1929, 40
        %v1970 = vpop.permute.xlu0 %1969
        %1971 = vrot.lane.b32.xlu0 %v1930, 40
        %v1972 = vpop.permute.xlu0 %1971
        %1973 = vrot.lane.b32.xlu0 %v1931, 40
        %v1974 = vpop.permute.xlu0 %1973
        %1975 = vrot.lane.b32.xlu0 %v1932, 40
        %v1976 = vpop.permute.xlu0 %1975
        %1977 = vrot.lane.b32.xlu0 %v1933, 40
        %v1978 = vpop.permute.xlu0 %1977
        %1979 = vrot.lane.b32.xlu0 %v1934, 40
        %v1980 = vpop.permute.xlu0 %1979
        %1981 = vrot.lane.b32.xlu0 %v1935, 40
        %v1982 = vpop.permute.xlu0 %1981
        %1983 = vrot.lane.b32.xlu0 %v1936, 40
        %v1984 = vpop.permute.xlu0 %1983
        %1985 = vrot.lane.b32.xlu0 %v1937, 40
        %v1986 = vpop.permute.xlu0 %1985
        %1987 = vrot.lane.b32.xlu0 %v1938, 40
        %v1988 = vpop.permute.xlu0 %1987
        %1989 = vrot.lane.b32.xlu0 %v1939, 40
        %v1990 = vpop.permute.xlu0 %1989
        %1991 = vrot.lane.b32.xlu0 %v1940, 40
        %v1992 = vpop.permute.xlu0 %1991
        %1993 = vrot.lane.b32.xlu0 %v1941, 40
        %v1994 = vpop.permute.xlu0 %1993
        %1995 = vrot.lane.b32.xlu0 %v1942, 40
        %v1996 = vpop.permute.xlu0 %1995
        %1997 = vrot.lane.b32.xlu0 %v1943, 40
        %v1998 = vpop.permute.xlu0 %1997
        %1999 = vrot.lane.b32.xlu0 %v1944, 40
        %v2000 = vpop.permute.xlu0 %1999
        %2001 = vrot.lane.b32.xlu0 %v1945, 40
        %v2002 = vpop.permute.xlu0 %2001
        %2003 = vrot.lane.b32.xlu0 %v1946, 40
        %v2004 = vpop.permute.xlu0 %2003
        %2005 = vrot.lane.b32.xlu0 %v1947, 40
        %v2006 = vpop.permute.xlu0 %2005
        %2007 = vrot.lane.b32.xlu0 %v1948, 40
        %v2008 = vpop.permute.xlu0 %2007
        %2009 = vrot.lane.b32.xlu0 %v1949, 40
        %v2010 = vpop.permute.xlu0 %2009
        %2011 = vrot.lane.b32.xlu0 %v1950, 40
        %v2012 = vpop.permute.xlu0 %2011
        %2013 = vrot.lane.b32.xlu0 %v1951, 40
        %v2014 = vpop.permute.xlu0 %2013
        %2015 = vrot.lane.b32.xlu0 %v1952, 40
        %v2016 = vpop.permute.xlu0 %2015
        %2017 = vrot.lane.b32.xlu0 %v1953, 40
        %v2018 = vpop.permute.xlu0 %2017
        %2019 = vrot.lane.b32.xlu0 %v1954, 40
        %v2020 = vpop.permute.xlu0 %2019
        %2021 = vrot.lane.b32.xlu0 %v1955, 40
        %v2022 = vpop.permute.xlu0 %2021
        %2023 = vrot.lane.b32.xlu0 %v1956, 40
        %v2024 = vpop.permute.xlu0 %2023
        %2025 = vrot.lane.b32.xlu0 %v1957, 40
        %v2026 = vpop.permute.xlu0 %2025
        %2027 = vrot.lane.b32.xlu0 %v1958, 40
        %v2028 = vpop.permute.xlu0 %2027
        %2029 = vrot.lane.b32.xlu0 %v1959, 40
        %v2030 = vpop.permute.xlu0 %2029
        %2031 = vrot.lane.b32.xlu0 %v1960, 40
        %v2032 = vpop.permute.xlu0 %2031
        %vm2069 = vcmask 388416
        %2070 = vst.msk [vmem:[#allocation2] sm:$0xf] %vm2069, %v1962
        %2071 = vst.msk [vmem:[#allocation2 + $0x4] sm:$0xf] %vm2069, %v1964
        %2072 = vst.msk [vmem:[#allocation2 + $0x8] sm:$0xf] %vm2069, %v1966
        %2073 = vst.msk [vmem:[#allocation2 + $0xc] sm:$0xf] %vm2069, %v1968
        %2074 = vst.msk [vmem:[#allocation2 + $0x10] sm:$0xf] %vm2069, %v1970
        %2075 = vst.msk [vmem:[#allocation2 + $0x14] sm:$0xf] %vm2069, %v1972
        %2076 = vst.msk [vmem:[#allocation2 + $0x18] sm:$0xf] %vm2069, %v1974
        %2077 = vst.msk [vmem:[#allocation2 + $0x1c] sm:$0xf] %vm2069, %v1976
        %2078 = vst.msk [vmem:[#allocation2 + $0x20] sm:$0xf] %vm2069, %v1978
        %2079 = vst.msk [vmem:[#allocation2 + $0x24] sm:$0xf] %vm2069, %v1980
        %2080 = vst.msk [vmem:[#allocation2 + $0x28] sm:$0xf] %vm2069, %v1982
        %2081 = vst.msk [vmem:[#allocation2 + $0x2c] sm:$0xf] %vm2069, %v1984
        %2082 = vst.msk [vmem:[#allocation2 + $0x30] sm:$0xf] %vm2069, %v1986
        %2083 = vst.msk [vmem:[#allocation2 + $0x34] sm:$0xf] %vm2069, %v1988
        %2084 = vst.msk [vmem:[#allocation2 + $0x38] sm:$0xf] %vm2069, %v1990
        %2085 = vst.msk [vmem:[#allocation2 + $0x3c] sm:$0xf] %vm2069, %v1992
        %2086 = vst.msk [vmem:[#allocation2 + $0x40] sm:$0xf] %vm2069, %v1994
        %2087 = vst.msk [vmem:[#allocation2 + $0x44] sm:$0xf] %vm2069, %v1996
        %2088 = vst.msk [vmem:[#allocation2 + $0x48] sm:$0xf] %vm2069, %v1998
        %2089 = vst.msk [vmem:[#allocation2 + $0x4c] sm:$0xf] %vm2069, %v2000
        %2090 = vst.msk [vmem:[#allocation2 + $0x50] sm:$0xf] %vm2069, %v2002
        %2091 = vst.msk [vmem:[#allocation2 + $0x54] sm:$0xf] %vm2069, %v2004
        %2092 = vst.msk [vmem:[#allocation2 + $0x58] sm:$0xf] %vm2069, %v2006
        %2093 = vst.msk [vmem:[#allocation2 + $0x5c] sm:$0xf] %vm2069, %v2008
        %2094 = vst.msk [vmem:[#allocation2 + $0x60] sm:$0xf] %vm2069, %v2010
        %2095 = vst.msk [vmem:[#allocation2 + $0x64] sm:$0xf] %vm2069, %v2012
        %2096 = vst.msk [vmem:[#allocation2 + $0x68] sm:$0xf] %vm2069, %v2014
        %2097 = vst.msk [vmem:[#allocation2 + $0x6c] sm:$0xf] %vm2069, %v2016
        %2098 = vst.msk [vmem:[#allocation2 + $0x70] sm:$0xf] %vm2069, %v2018
        %2099 = vst.msk [vmem:[#allocation2 + $0x74] sm:$0xf] %vm2069, %v2020
        %2100 = vst.msk [vmem:[#allocation2 + $0x78] sm:$0xf] %vm2069, %v2022
        %2101 = vst.msk [vmem:[#allocation2 + $0x7c] sm:$0xf] %vm2069, %v2024
        %2102 = vst.msk [vmem:[#allocation2 + $0x80] sm:$0xf] %vm2069, %v2026
        %2103 = vst.msk [vmem:[#allocation2 + $0x84] sm:$0xf] %vm2069, %v2028
        %2104 = vst.msk [vmem:[#allocation2 + $0x88] sm:$0xf] %vm2069, %v2030
        %vm2105 = vcmask 387392
        %2106 = vst.msk [vmem:[#allocation2 + $0x8c] sm:$0x7] %vm2105, %v2032
        %v2107 = vld [vmem:[%s437 + $0x24] sm:$0xff]
        %v2108 = vld [vmem:[%s437 + $0x2c] sm:$0xff]
        %v2109 = vld [vmem:[%s437 + $0x34] sm:$0xff]
        %v2110 = vld [vmem:[%s437 + $0x3c] sm:$0xff]
        %v2111 = vld [vmem:[%s437 + $0x44] sm:$0xff]
        %v2112 = vld [vmem:[%s437 + $0x4c] sm:$0xff]
        %v2113 = vld [vmem:[%s437 + $0x54] sm:$0xff]
        %v2114 = vld [vmem:[%s437 + $0x5c] sm:$0xff]
        %v2115 = vld [vmem:[%s437 + $0x64] sm:$0xff]
        %v2116 = vld [vmem:[%s437 + $0x6c] sm:$0xff]
        %v2117 = vld [vmem:[%s437 + $0x74] sm:$0xff]
        %v2118 = vld [vmem:[%s437 + $0x7c] sm:$0xff]
        %v2119 = vld [vmem:[%s437 + $0x84] sm:$0xff]
        %v2120 = vld [vmem:[%s437 + $0x8c] sm:$0xff]
        %v2121 = vld [vmem:[%s437 + $0x94] sm:$0xff]
        %v2122 = vld [vmem:[%s437 + $0x9c] sm:$0xff]
        %v2123 = vld [vmem:[%s437 + $0xa4] sm:$0xff]
        %v2124 = vld [vmem:[%s437 + $0xac] sm:$0xff]
        %v2125 = vld [vmem:[%s437 + $0xb4] sm:$0xff]
        %v2126 = vld [vmem:[%s437 + $0xbc] sm:$0xff]
        %v2127 = vld [vmem:[%s437 + $0xc4] sm:$0xff]
        %v2128 = vld [vmem:[%s437 + $0xcc] sm:$0xff]
        %v2129 = vld [vmem:[%s437 + $0xd4] sm:$0xff]
        %v2130 = vld [vmem:[%s437 + $0xdc] sm:$0xff]
        %v2131 = vld [vmem:[%s437 + $0xe4] sm:$0xff]
        %v2132 = vld [vmem:[%s437 + $0xec] sm:$0xff]
        %v2133 = vld [vmem:[%s437 + $0xf4] sm:$0xff]
        %v2134 = vld [vmem:[%s437 + $0xfc] sm:$0xff]
        %v2135 = vld [vmem:[%s437 + $0x104] sm:$0xff]
        %v2136 = vld [vmem:[%s437 + $0x10c] sm:$0xff]
        %v2137 = vld [vmem:[%s437 + $0x114] sm:$0xff]
        %v2138 = vld [vmem:[%s437 + $0x11c] sm:$0xff]
        %v2139 = vld [vmem:[%s437 + $0x124] sm:$0xff]
        %v2140 = vld [vmem:[%s437 + $0x12c] sm:$0xff]
        %v2141 = vld [vmem:[%s437 + $0x134] sm:$0xff]
        %v2142 = vld [vmem:[%s437 + $0x13c] sm:$0x3f]
        %v2143 = vpack.c.bf16 %v2108, %v2107
        %v2144 = vpack.c.bf16 %v2110, %v2109
        %v2145 = vpack.c.bf16 %v2112, %v2111
        %v2146 = vpack.c.bf16 %v2114, %v2113
        %v2147 = vpack.c.bf16 %v2116, %v2115
        %v2148 = vpack.c.bf16 %v2118, %v2117
        %v2149 = vpack.c.bf16 %v2120, %v2119
        %v2150 = vpack.c.bf16 %v2122, %v2121
        %v2151 = vpack.c.bf16 %v2124, %v2123
        %v2152 = vpack.c.bf16 %v2126, %v2125
        %v2153 = vpack.c.bf16 %v2128, %v2127
        %v2154 = vpack.c.bf16 %v2130, %v2129
        %v2155 = vpack.c.bf16 %v2132, %v2131
        %v2156 = vpack.c.bf16 %v2134, %v2133
        %v2157 = vpack.c.bf16 %v2136, %v2135
        %v2158 = vpack.c.bf16 %v2138, %v2137
        %v2159 = vpack.c.bf16 %v2140, %v2139
        %v2160 = vpack.c.bf16 %v2142, %v2141
        %v2179 = vunpack.c.l.b16 %v2143
        %v2180 = vunpack.c.h.b16 %v2143
        %v2181 = vunpack.c.l.b16 %v2144
        %v2182 = vunpack.c.h.b16 %v2144
        %v2183 = vunpack.c.l.b16 %v2145
        %v2184 = vunpack.c.h.b16 %v2145
        %v2185 = vunpack.c.l.b16 %v2146
        %v2186 = vunpack.c.h.b16 %v2146
        %v2187 = vunpack.c.l.b16 %v2147
        %v2188 = vunpack.c.h.b16 %v2147
        %v2189 = vunpack.c.l.b16 %v2148
        %v2190 = vunpack.c.h.b16 %v2148
        %v2191 = vunpack.c.l.b16 %v2149
        %v2192 = vunpack.c.h.b16 %v2149
        %v2193 = vunpack.c.l.b16 %v2150
        %v2194 = vunpack.c.h.b16 %v2150
        %v2195 = vunpack.c.l.b16 %v2151
        %v2196 = vunpack.c.h.b16 %v2151
        %v2197 = vunpack.c.l.b16 %v2152
        %v2198 = vunpack.c.h.b16 %v2152
        %v2199 = vunpack.c.l.b16 %v2153
        %v2200 = vunpack.c.h.b16 %v2153
        %v2201 = vunpack.c.l.b16 %v2154
        %v2202 = vunpack.c.h.b16 %v2154
        %v2203 = vunpack.c.l.b16 %v2155
        %v2204 = vunpack.c.h.b16 %v2155
        %v2205 = vunpack.c.l.b16 %v2156
        %v2206 = vunpack.c.h.b16 %v2156
        %v2207 = vunpack.c.l.b16 %v2157
        %v2208 = vunpack.c.h.b16 %v2157
        %v2209 = vunpack.c.l.b16 %v2158
        %v2210 = vunpack.c.h.b16 %v2158
        %v2211 = vunpack.c.l.b16 %v2159
        %v2212 = vunpack.c.h.b16 %v2159
        %v2213 = vunpack.c.l.b16 %v2160
        %v2214 = vunpack.c.h.b16 %v2160
        %v2215 = vpack.c.b16 %v2179, %v2179
        %v2216 = vpack.c.b16 %v2180, %v2180
        %v2217 = vpack.c.b16 %v2181, %v2181
        %v2218 = vpack.c.b16 %v2182, %v2182
        %v2219 = vpack.c.b16 %v2183, %v2183
        %v2220 = vpack.c.b16 %v2184, %v2184
        %v2221 = vpack.c.b16 %v2185, %v2185
        %v2222 = vpack.c.b16 %v2186, %v2186
        %v2223 = vpack.c.b16 %v2187, %v2187
        %v2224 = vpack.c.b16 %v2188, %v2188
        %v2225 = vpack.c.b16 %v2189, %v2189
        %v2226 = vpack.c.b16 %v2190, %v2190
        %v2227 = vpack.c.b16 %v2191, %v2191
        %v2228 = vpack.c.b16 %v2192, %v2192
        %v2229 = vpack.c.b16 %v2193, %v2193
        %v2230 = vpack.c.b16 %v2194, %v2194
        %v2231 = vpack.c.b16 %v2195, %v2195
        %v2232 = vpack.c.b16 %v2196, %v2196
        %v2233 = vpack.c.b16 %v2197, %v2197
        %v2234 = vpack.c.b16 %v2198, %v2198
        %v2235 = vpack.c.b16 %v2199, %v2199
        %v2236 = vpack.c.b16 %v2200, %v2200
        %v2237 = vpack.c.b16 %v2201, %v2201
        %v2238 = vpack.c.b16 %v2202, %v2202
        %v2239 = vpack.c.b16 %v2203, %v2203
        %v2240 = vpack.c.b16 %v2204, %v2204
        %v2241 = vpack.c.b16 %v2205, %v2205
        %v2242 = vpack.c.b16 %v2206, %v2206
        %v2243 = vpack.c.b16 %v2207, %v2207
        %v2244 = vpack.c.b16 %v2208, %v2208
        %v2245 = vpack.c.b16 %v2209, %v2209
        %v2246 = vpack.c.b16 %v2210, %v2210
        %v2247 = vpack.c.b16 %v2211, %v2211
        %v2248 = vpack.c.b16 %v2212, %v2212
        %v2249 = vpack.c.b16 %v2213, %v2213
        %v2250 = vpack.c.b16 %v2214, %v2214
        %2251 = vrot.lane.b32.xlu0 %v2215, 48
        %v2252 = vpop.permute.xlu0 %2251
        %2253 = vrot.lane.b32.xlu0 %v2216, 48
        %v2254 = vpop.permute.xlu0 %2253
        %2255 = vrot.lane.b32.xlu0 %v2217, 48
        %v2256 = vpop.permute.xlu0 %2255
        %2257 = vrot.lane.b32.xlu0 %v2218, 48
        %v2258 = vpop.permute.xlu0 %2257
        %2259 = vrot.lane.b32.xlu0 %v2219, 48
        %v2260 = vpop.permute.xlu0 %2259
        %2261 = vrot.lane.b32.xlu0 %v2220, 48
        %v2262 = vpop.permute.xlu0 %2261
        %2263 = vrot.lane.b32.xlu0 %v2221, 48
        %v2264 = vpop.permute.xlu0 %2263
        %2265 = vrot.lane.b32.xlu0 %v2222, 48
        %v2266 = vpop.permute.xlu0 %2265
        %2267 = vrot.lane.b32.xlu0 %v2223, 48
        %v2268 = vpop.permute.xlu0 %2267
        %2269 = vrot.lane.b32.xlu0 %v2224, 48
        %v2270 = vpop.permute.xlu0 %2269
        %2271 = vrot.lane.b32.xlu0 %v2225, 48
        %v2272 = vpop.permute.xlu0 %2271
        %2273 = vrot.lane.b32.xlu0 %v2226, 48
        %v2274 = vpop.permute.xlu0 %2273
        %2275 = vrot.lane.b32.xlu0 %v2227, 48
        %v2276 = vpop.permute.xlu0 %2275
        %2277 = vrot.lane.b32.xlu0 %v2228, 48
        %v2278 = vpop.permute.xlu0 %2277
        %2279 = vrot.lane.b32.xlu0 %v2229, 48
        %v2280 = vpop.permute.xlu0 %2279
        %2281 = vrot.lane.b32.xlu0 %v2230, 48
        %v2282 = vpop.permute.xlu0 %2281
        %2283 = vrot.lane.b32.xlu0 %v2231, 48
        %v2284 = vpop.permute.xlu0 %2283
        %2285 = vrot.lane.b32.xlu0 %v2232, 48
        %v2286 = vpop.permute.xlu0 %2285
        %2287 = vrot.lane.b32.xlu0 %v2233, 48
        %v2288 = vpop.permute.xlu0 %2287
        %2289 = vrot.lane.b32.xlu0 %v2234, 48
        %v2290 = vpop.permute.xlu0 %2289
        %2291 = vrot.lane.b32.xlu0 %v2235, 48
        %v2292 = vpop.permute.xlu0 %2291
        %2293 = vrot.lane.b32.xlu0 %v2236, 48
        %v2294 = vpop.permute.xlu0 %2293
        %2295 = vrot.lane.b32.xlu0 %v2237, 48
        %v2296 = vpop.permute.xlu0 %2295
        %2297 = vrot.lane.b32.xlu0 %v2238, 48
        %v2298 = vpop.permute.xlu0 %2297
        %2299 = vrot.lane.b32.xlu0 %v2239, 48
        %v2300 = vpop.permute.xlu0 %2299
        %2301 = vrot.lane.b32.xlu0 %v2240, 48
        %v2302 = vpop.permute.xlu0 %2301
        %2303 = vrot.lane.b32.xlu0 %v2241, 48
        %v2304 = vpop.permute.xlu0 %2303
        %2305 = vrot.lane.b32.xlu0 %v2242, 48
        %v2306 = vpop.permute.xlu0 %2305
        %2307 = vrot.lane.b32.xlu0 %v2243, 48
        %v2308 = vpop.permute.xlu0 %2307
        %2309 = vrot.lane.b32.xlu0 %v2244, 48
        %v2310 = vpop.permute.xlu0 %2309
        %2311 = vrot.lane.b32.xlu0 %v2245, 48
        %v2312 = vpop.permute.xlu0 %2311
        %2313 = vrot.lane.b32.xlu0 %v2246, 48
        %v2314 = vpop.permute.xlu0 %2313
        %2315 = vrot.lane.b32.xlu0 %v2247, 48
        %v2316 = vpop.permute.xlu0 %2315
        %2317 = vrot.lane.b32.xlu0 %v2248, 48
        %v2318 = vpop.permute.xlu0 %2317
        %2319 = vrot.lane.b32.xlu0 %v2249, 48
        %v2320 = vpop.permute.xlu0 %2319
        %2321 = vrot.lane.b32.xlu0 %v2250, 48
        %v2322 = vpop.permute.xlu0 %2321
        %vm2359 = vcmask 454016
        %2360 = vst.msk [vmem:[#allocation2] sm:$0xf] %vm2359, %v2252
        %2361 = vst.msk [vmem:[#allocation2 + $0x4] sm:$0xf] %vm2359, %v2254
        %2362 = vst.msk [vmem:[#allocation2 + $0x8] sm:$0xf] %vm2359, %v2256
        %2363 = vst.msk [vmem:[#allocation2 + $0xc] sm:$0xf] %vm2359, %v2258
        %2364 = vst.msk [vmem:[#allocation2 + $0x10] sm:$0xf] %vm2359, %v2260
        %2365 = vst.msk [vmem:[#allocation2 + $0x14] sm:$0xf] %vm2359, %v2262
        %2366 = vst.msk [vmem:[#allocation2 + $0x18] sm:$0xf] %vm2359, %v2264
        %2367 = vst.msk [vmem:[#allocation2 + $0x1c] sm:$0xf] %vm2359, %v2266
        %2368 = vst.msk [vmem:[#allocation2 + $0x20] sm:$0xf] %vm2359, %v2268
        %2369 = vst.msk [vmem:[#allocation2 + $0x24] sm:$0xf] %vm2359, %v2270
        %2370 = vst.msk [vmem:[#allocation2 + $0x28] sm:$0xf] %vm2359, %v2272
        %2371 = vst.msk [vmem:[#allocation2 + $0x2c] sm:$0xf] %vm2359, %v2274
        %2372 = vst.msk [vmem:[#allocation2 + $0x30] sm:$0xf] %vm2359, %v2276
        %2373 = vst.msk [vmem:[#allocation2 + $0x34] sm:$0xf] %vm2359, %v2278
        %2374 = vst.msk [vmem:[#allocation2 + $0x38] sm:$0xf] %vm2359, %v2280
        %2375 = vst.msk [vmem:[#allocation2 + $0x3c] sm:$0xf] %vm2359, %v2282
        %2376 = vst.msk [vmem:[#allocation2 + $0x40] sm:$0xf] %vm2359, %v2284
        %2377 = vst.msk [vmem:[#allocation2 + $0x44] sm:$0xf] %vm2359, %v2286
        %2378 = vst.msk [vmem:[#allocation2 + $0x48] sm:$0xf] %vm2359, %v2288
        %2379 = vst.msk [vmem:[#allocation2 + $0x4c] sm:$0xf] %vm2359, %v2290
        %2380 = vst.msk [vmem:[#allocation2 + $0x50] sm:$0xf] %vm2359, %v2292
        %2381 = vst.msk [vmem:[#allocation2 + $0x54] sm:$0xf] %vm2359, %v2294
        %2382 = vst.msk [vmem:[#allocation2 + $0x58] sm:$0xf] %vm2359, %v2296
        %2383 = vst.msk [vmem:[#allocation2 + $0x5c] sm:$0xf] %vm2359, %v2298
        %2384 = vst.msk [vmem:[#allocation2 + $0x60] sm:$0xf] %vm2359, %v2300
        %2385 = vst.msk [vmem:[#allocation2 + $0x64] sm:$0xf] %vm2359, %v2302
        %2386 = vst.msk [vmem:[#allocation2 + $0x68] sm:$0xf] %vm2359, %v2304
        %2387 = vst.msk [vmem:[#allocation2 + $0x6c] sm:$0xf] %vm2359, %v2306
        %2388 = vst.msk [vmem:[#allocation2 + $0x70] sm:$0xf] %vm2359, %v2308
        %2389 = vst.msk [vmem:[#allocation2 + $0x74] sm:$0xf] %vm2359, %v2310
        %2390 = vst.msk [vmem:[#allocation2 + $0x78] sm:$0xf] %vm2359, %v2312
        %2391 = vst.msk [vmem:[#allocation2 + $0x7c] sm:$0xf] %vm2359, %v2314
        %2392 = vst.msk [vmem:[#allocation2 + $0x80] sm:$0xf] %vm2359, %v2316
        %2393 = vst.msk [vmem:[#allocation2 + $0x84] sm:$0xf] %vm2359, %v2318
        %2394 = vst.msk [vmem:[#allocation2 + $0x88] sm:$0xf] %vm2359, %v2320
        %vm2395 = vcmask 452992
        %2396 = vst.msk [vmem:[#allocation2 + $0x8c] sm:$0x7] %vm2395, %v2322
        %v2397 = vld [vmem:[%s437 + $0x25] sm:$0xff]
        %v2398 = vld [vmem:[%s437 + $0x2d] sm:$0xff]
        %v2399 = vld [vmem:[%s437 + $0x35] sm:$0xff]
        %v2400 = vld [vmem:[%s437 + $0x3d] sm:$0xff]
        %v2401 = vld [vmem:[%s437 + $0x45] sm:$0xff]
        %v2402 = vld [vmem:[%s437 + $0x4d] sm:$0xff]
        %v2403 = vld [vmem:[%s437 + $0x55] sm:$0xff]
        %v2404 = vld [vmem:[%s437 + $0x5d] sm:$0xff]
        %v2405 = vld [vmem:[%s437 + $0x65] sm:$0xff]
        %v2406 = vld [vmem:[%s437 + $0x6d] sm:$0xff]
        %v2407 = vld [vmem:[%s437 + $0x75] sm:$0xff]
        %v2408 = vld [vmem:[%s437 + $0x7d] sm:$0xff]
        %v2409 = vld [vmem:[%s437 + $0x85] sm:$0xff]
        %v2410 = vld [vmem:[%s437 + $0x8d] sm:$0xff]
        %v2411 = vld [vmem:[%s437 + $0x95] sm:$0xff]
        %v2412 = vld [vmem:[%s437 + $0x9d] sm:$0xff]
        %v2413 = vld [vmem:[%s437 + $0xa5] sm:$0xff]
        %v2414 = vld [vmem:[%s437 + $0xad] sm:$0xff]
        %v2415 = vld [vmem:[%s437 + $0xb5] sm:$0xff]
        %v2416 = vld [vmem:[%s437 + $0xbd] sm:$0xff]
        %v2417 = vld [vmem:[%s437 + $0xc5] sm:$0xff]
        %v2418 = vld [vmem:[%s437 + $0xcd] sm:$0xff]
        %v2419 = vld [vmem:[%s437 + $0xd5] sm:$0xff]
        %v2420 = vld [vmem:[%s437 + $0xdd] sm:$0xff]
        %v2421 = vld [vmem:[%s437 + $0xe5] sm:$0xff]
        %v2422 = vld [vmem:[%s437 + $0xed] sm:$0xff]
        %v2423 = vld [vmem:[%s437 + $0xf5] sm:$0xff]
        %v2424 = vld [vmem:[%s437 + $0xfd] sm:$0xff]
        %v2425 = vld [vmem:[%s437 + $0x105] sm:$0xff]
        %v2426 = vld [vmem:[%s437 + $0x10d] sm:$0xff]
        %v2427 = vld [vmem:[%s437 + $0x115] sm:$0xff]
        %v2428 = vld [vmem:[%s437 + $0x11d] sm:$0xff]
        %v2429 = vld [vmem:[%s437 + $0x125] sm:$0xff]
        %v2430 = vld [vmem:[%s437 + $0x12d] sm:$0xff]
        %v2431 = vld [vmem:[%s437 + $0x135] sm:$0xff]
        %v2432 = vld [vmem:[%s437 + $0x13d] sm:$0x3f]
        %v2433 = vpack.c.bf16 %v2398, %v2397
        %v2434 = vpack.c.bf16 %v2400, %v2399
        %v2435 = vpack.c.bf16 %v2402, %v2401
        %v2436 = vpack.c.bf16 %v2404, %v2403
        %v2437 = vpack.c.bf16 %v2406, %v2405
        %v2438 = vpack.c.bf16 %v2408, %v2407
        %v2439 = vpack.c.bf16 %v2410, %v2409
        %v2440 = vpack.c.bf16 %v2412, %v2411
        %v2441 = vpack.c.bf16 %v2414, %v2413
        %v2442 = vpack.c.bf16 %v2416, %v2415
        %v2443 = vpack.c.bf16 %v2418, %v2417
        %v2444 = vpack.c.bf16 %v2420, %v2419
        %v2445 = vpack.c.bf16 %v2422, %v2421
        %v2446 = vpack.c.bf16 %v2424, %v2423
        %v2447 = vpack.c.bf16 %v2426, %v2425
        %v2448 = vpack.c.bf16 %v2428, %v2427
        %v2449 = vpack.c.bf16 %v2430, %v2429
        %v2450 = vpack.c.bf16 %v2432, %v2431
        %v2469 = vunpack.c.l.b16 %v2433
        %v2470 = vunpack.c.h.b16 %v2433
        %v2471 = vunpack.c.l.b16 %v2434
        %v2472 = vunpack.c.h.b16 %v2434
        %v2473 = vunpack.c.l.b16 %v2435
        %v2474 = vunpack.c.h.b16 %v2435
        %v2475 = vunpack.c.l.b16 %v2436
        %v2476 = vunpack.c.h.b16 %v2436
        %v2477 = vunpack.c.l.b16 %v2437
        %v2478 = vunpack.c.h.b16 %v2437
        %v2479 = vunpack.c.l.b16 %v2438
        %v2480 = vunpack.c.h.b16 %v2438
        %v2481 = vunpack.c.l.b16 %v2439
        %v2482 = vunpack.c.h.b16 %v2439
        %v2483 = vunpack.c.l.b16 %v2440
        %v2484 = vunpack.c.h.b16 %v2440
        %v2485 = vunpack.c.l.b16 %v2441
        %v2486 = vunpack.c.h.b16 %v2441
        %v2487 = vunpack.c.l.b16 %v2442
        %v2488 = vunpack.c.h.b16 %v2442
        %v2489 = vunpack.c.l.b16 %v2443
        %v2490 = vunpack.c.h.b16 %v2443
        %v2491 = vunpack.c.l.b16 %v2444
        %v2492 = vunpack.c.h.b16 %v2444
        %v2493 = vunpack.c.l.b16 %v2445
        %v2494 = vunpack.c.h.b16 %v2445
        %v2495 = vunpack.c.l.b16 %v2446
        %v2496 = vunpack.c.h.b16 %v2446
        %v2497 = vunpack.c.l.b16 %v2447
        %v2498 = vunpack.c.h.b16 %v2447
        %v2499 = vunpack.c.l.b16 %v2448
        %v2500 = vunpack.c.h.b16 %v2448
        %v2501 = vunpack.c.l.b16 %v2449
        %v2502 = vunpack.c.h.b16 %v2449
        %v2503 = vunpack.c.l.b16 %v2450
        %v2504 = vunpack.c.h.b16 %v2450
        %v2505 = vpack.c.b16 %v2469, %v2469
        %v2506 = vpack.c.b16 %v2470, %v2470
        %v2507 = vpack.c.b16 %v2471, %v2471
        %v2508 = vpack.c.b16 %v2472, %v2472
        %v2509 = vpack.c.b16 %v2473, %v2473
        %v2510 = vpack.c.b16 %v2474, %v2474
        %v2511 = vpack.c.b16 %v2475, %v2475
        %v2512 = vpack.c.b16 %v2476, %v2476
        %v2513 = vpack.c.b16 %v2477, %v2477
        %v2514 = vpack.c.b16 %v2478, %v2478
        %v2515 = vpack.c.b16 %v2479, %v2479
        %v2516 = vpack.c.b16 %v2480, %v2480
        %v2517 = vpack.c.b16 %v2481, %v2481
        %v2518 = vpack.c.b16 %v2482, %v2482
        %v2519 = vpack.c.b16 %v2483, %v2483
        %v2520 = vpack.c.b16 %v2484, %v2484
        %v2521 = vpack.c.b16 %v2485, %v2485
        %v2522 = vpack.c.b16 %v2486, %v2486
        %v2523 = vpack.c.b16 %v2487, %v2487
        %v2524 = vpack.c.b16 %v2488, %v2488
        %v2525 = vpack.c.b16 %v2489, %v2489
        %v2526 = vpack.c.b16 %v2490, %v2490
        %v2527 = vpack.c.b16 %v2491, %v2491
        %v2528 = vpack.c.b16 %v2492, %v2492
        %v2529 = vpack.c.b16 %v2493, %v2493
        %v2530 = vpack.c.b16 %v2494, %v2494
        %v2531 = vpack.c.b16 %v2495, %v2495
        %v2532 = vpack.c.b16 %v2496, %v2496
        %v2533 = vpack.c.b16 %v2497, %v2497
        %v2534 = vpack.c.b16 %v2498, %v2498
        %v2535 = vpack.c.b16 %v2499, %v2499
        %v2536 = vpack.c.b16 %v2500, %v2500
        %v2537 = vpack.c.b16 %v2501, %v2501
        %v2538 = vpack.c.b16 %v2502, %v2502
        %v2539 = vpack.c.b16 %v2503, %v2503
        %v2540 = vpack.c.b16 %v2504, %v2504
        %2541 = vrot.lane.b32.xlu0 %v2505, 56
        %v2542 = vpop.permute.xlu0 %2541
        %2543 = vrot.lane.b32.xlu0 %v2506, 56
        %v2544 = vpop.permute.xlu0 %2543
        %2545 = vrot.lane.b32.xlu0 %v2507, 56
        %v2546 = vpop.permute.xlu0 %2545
        %2547 = vrot.lane.b32.xlu0 %v2508, 56
        %v2548 = vpop.permute.xlu0 %2547
        %2549 = vrot.lane.b32.xlu0 %v2509, 56
        %v2550 = vpop.permute.xlu0 %2549
        %2551 = vrot.lane.b32.xlu0 %v2510, 56
        %v2552 = vpop.permute.xlu0 %2551
        %2553 = vrot.lane.b32.xlu0 %v2511, 56
        %v2554 = vpop.permute.xlu0 %2553
        %2555 = vrot.lane.b32.xlu0 %v2512, 56
        %v2556 = vpop.permute.xlu0 %2555
        %2557 = vrot.lane.b32.xlu0 %v2513, 56
        %v2558 = vpop.permute.xlu0 %2557
        %2559 = vrot.lane.b32.xlu0 %v2514, 56
        %v2560 = vpop.permute.xlu0 %2559
        %2561 = vrot.lane.b32.xlu0 %v2515, 56
        %v2562 = vpop.permute.xlu0 %2561
        %2563 = vrot.lane.b32.xlu0 %v2516, 56
        %v2564 = vpop.permute.xlu0 %2563
        %2565 = vrot.lane.b32.xlu0 %v2517, 56
        %v2566 = vpop.permute.xlu0 %2565
        %2567 = vrot.lane.b32.xlu0 %v2518, 56
        %v2568 = vpop.permute.xlu0 %2567
        %2569 = vrot.lane.b32.xlu0 %v2519, 56
        %v2570 = vpop.permute.xlu0 %2569
        %2571 = vrot.lane.b32.xlu0 %v2520, 56
        %v2572 = vpop.permute.xlu0 %2571
        %2573 = vrot.lane.b32.xlu0 %v2521, 56
        %v2574 = vpop.permute.xlu0 %2573
        %2575 = vrot.lane.b32.xlu0 %v2522, 56
        %v2576 = vpop.permute.xlu0 %2575
        %2577 = vrot.lane.b32.xlu0 %v2523, 56
        %v2578 = vpop.permute.xlu0 %2577
        %2579 = vrot.lane.b32.xlu0 %v2524, 56
        %v2580 = vpop.permute.xlu0 %2579
        %2581 = vrot.lane.b32.xlu0 %v2525, 56
        %v2582 = vpop.permute.xlu0 %2581
        %2583 = vrot.lane.b32.xlu0 %v2526, 56
        %v2584 = vpop.permute.xlu0 %2583
        %2585 = vrot.lane.b32.xlu0 %v2527, 56
        %v2586 = vpop.permute.xlu0 %2585
        %2587 = vrot.lane.b32.xlu0 %v2528, 56
        %v2588 = vpop.permute.xlu0 %2587
        %2589 = vrot.lane.b32.xlu0 %v2529, 56
        %v2590 = vpop.permute.xlu0 %2589
        %2591 = vrot.lane.b32.xlu0 %v2530, 56
        %v2592 = vpop.permute.xlu0 %2591
        %2593 = vrot.lane.b32.xlu0 %v2531, 56
        %v2594 = vpop.permute.xlu0 %2593
        %2595 = vrot.lane.b32.xlu0 %v2532, 56
        %v2596 = vpop.permute.xlu0 %2595
        %2597 = vrot.lane.b32.xlu0 %v2533, 56
        %v2598 = vpop.permute.xlu0 %2597
        %2599 = vrot.lane.b32.xlu0 %v2534, 56
        %v2600 = vpop.permute.xlu0 %2599
        %2601 = vrot.lane.b32.xlu0 %v2535, 56
        %v2602 = vpop.permute.xlu0 %2601
        %2603 = vrot.lane.b32.xlu0 %v2536, 56
        %v2604 = vpop.permute.xlu0 %2603
        %2605 = vrot.lane.b32.xlu0 %v2537, 56
        %v2606 = vpop.permute.xlu0 %2605
        %2607 = vrot.lane.b32.xlu0 %v2538, 56
        %v2608 = vpop.permute.xlu0 %2607
        %2609 = vrot.lane.b32.xlu0 %v2539, 56
        %v2610 = vpop.permute.xlu0 %2609
        %2611 = vrot.lane.b32.xlu0 %v2540, 56
        %v2612 = vpop.permute.xlu0 %2611
        %vm2649 = vcmask 519616
        %2650 = vst.msk [vmem:[#allocation2] sm:$0xf] %vm2649, %v2542
        %2651 = vst.msk [vmem:[#allocation2 + $0x4] sm:$0xf] %vm2649, %v2544
        %2652 = vst.msk [vmem:[#allocation2 + $0x8] sm:$0xf] %vm2649, %v2546
        %2653 = vst.msk [vmem:[#allocation2 + $0xc] sm:$0xf] %vm2649, %v2548
        %2654 = vst.msk [vmem:[#allocation2 + $0x10] sm:$0xf] %vm2649, %v2550
        %2655 = vst.msk [vmem:[#allocation2 + $0x14] sm:$0xf] %vm2649, %v2552
        %2656 = vst.msk [vmem:[#allocation2 + $0x18] sm:$0xf] %vm2649, %v2554
        %2657 = vst.msk [vmem:[#allocation2 + $0x1c] sm:$0xf] %vm2649, %v2556
        %2658 = vst.msk [vmem:[#allocation2 + $0x20] sm:$0xf] %vm2649, %v2558
        %2659 = vst.msk [vmem:[#allocation2 + $0x24] sm:$0xf] %vm2649, %v2560
        %2660 = vst.msk [vmem:[#allocation2 + $0x28] sm:$0xf] %vm2649, %v2562
        %2661 = vst.msk [vmem:[#allocation2 + $0x2c] sm:$0xf] %vm2649, %v2564
        %2662 = vst.msk [vmem:[#allocation2 + $0x30] sm:$0xf] %vm2649, %v2566
        %2663 = vst.msk [vmem:[#allocation2 + $0x34] sm:$0xf] %vm2649, %v2568
        %2664 = vst.msk [vmem:[#allocation2 + $0x38] sm:$0xf] %vm2649, %v2570
        %2665 = vst.msk [vmem:[#allocation2 + $0x3c] sm:$0xf] %vm2649, %v2572
        %2666 = vst.msk [vmem:[#allocation2 + $0x40] sm:$0xf] %vm2649, %v2574
        %2667 = vst.msk [vmem:[#allocation2 + $0x44] sm:$0xf] %vm2649, %v2576
        %2668 = vst.msk [vmem:[#allocation2 + $0x48] sm:$0xf] %vm2649, %v2578
        %2669 = vst.msk [vmem:[#allocation2 + $0x4c] sm:$0xf] %vm2649, %v2580
        %2670 = vst.msk [vmem:[#allocation2 + $0x50] sm:$0xf] %vm2649, %v2582
        %2671 = vst.msk [vmem:[#allocation2 + $0x54] sm:$0xf] %vm2649, %v2584
        %2672 = vst.msk [vmem:[#allocation2 + $0x58] sm:$0xf] %vm2649, %v2586
        %2673 = vst.msk [vmem:[#allocation2 + $0x5c] sm:$0xf] %vm2649, %v2588
        %2674 = vst.msk [vmem:[#allocation2 + $0x60] sm:$0xf] %vm2649, %v2590
        %2675 = vst.msk [vmem:[#allocation2 + $0x64] sm:$0xf] %vm2649, %v2592
        %2676 = vst.msk [vmem:[#allocation2 + $0x68] sm:$0xf] %vm2649, %v2594
        %2677 = vst.msk [vmem:[#allocation2 + $0x6c] sm:$0xf] %vm2649, %v2596
        %2678 = vst.msk [vmem:[#allocation2 + $0x70] sm:$0xf] %vm2649, %v2598
        %2679 = vst.msk [vmem:[#allocation2 + $0x74] sm:$0xf] %vm2649, %v2600
        %2680 = vst.msk [vmem:[#allocation2 + $0x78] sm:$0xf] %vm2649, %v2602
        %2681 = vst.msk [vmem:[#allocation2 + $0x7c] sm:$0xf] %vm2649, %v2604
        %2682 = vst.msk [vmem:[#allocation2 + $0x80] sm:$0xf] %vm2649, %v2606
        %2683 = vst.msk [vmem:[#allocation2 + $0x84] sm:$0xf] %vm2649, %v2608
        %2684 = vst.msk [vmem:[#allocation2 + $0x88] sm:$0xf] %vm2649, %v2610
        %vm2685 = vcmask 518592
        %2686 = vst.msk [vmem:[#allocation2 + $0x8c] sm:$0x7] %vm2685, %v2612
        %v2687 = vld [vmem:[%s437 + $0x26] sm:$0xff]
        %v2688 = vld [vmem:[%s437 + $0x2e] sm:$0xff]
        %v2689 = vld [vmem:[%s437 + $0x36] sm:$0xff]
        %v2690 = vld [vmem:[%s437 + $0x3e] sm:$0xff]
        %v2691 = vld [vmem:[%s437 + $0x46] sm:$0xff]
        %v2692 = vld [vmem:[%s437 + $0x4e] sm:$0xff]
        %v2693 = vld [vmem:[%s437 + $0x56] sm:$0xff]
        %v2694 = vld [vmem:[%s437 + $0x5e] sm:$0xff]
        %v2695 = vld [vmem:[%s437 + $0x66] sm:$0xff]
        %v2696 = vld [vmem:[%s437 + $0x6e] sm:$0xff]
        %v2697 = vld [vmem:[%s437 + $0x76] sm:$0xff]
        %v2698 = vld [vmem:[%s437 + $0x7e] sm:$0xff]
        %v2699 = vld [vmem:[%s437 + $0x86] sm:$0xff]
        %v2700 = vld [vmem:[%s437 + $0x8e] sm:$0xff]
        %v2701 = vld [vmem:[%s437 + $0x96] sm:$0xff]
        %v2702 = vld [vmem:[%s437 + $0x9e] sm:$0xff]
        %v2703 = vld [vmem:[%s437 + $0xa6] sm:$0xff]
        %v2704 = vld [vmem:[%s437 + $0xae] sm:$0xff]
        %v2705 = vld [vmem:[%s437 + $0xb6] sm:$0xff]
        %v2706 = vld [vmem:[%s437 + $0xbe] sm:$0xff]
        %v2707 = vld [vmem:[%s437 + $0xc6] sm:$0xff]
        %v2708 = vld [vmem:[%s437 + $0xce] sm:$0xff]
        %v2709 = vld [vmem:[%s437 + $0xd6] sm:$0xff]
        %v2710 = vld [vmem:[%s437 + $0xde] sm:$0xff]
        %v2711 = vld [vmem:[%s437 + $0xe6] sm:$0xff]
        %v2712 = vld [vmem:[%s437 + $0xee] sm:$0xff]
        %v2713 = vld [vmem:[%s437 + $0xf6] sm:$0xff]
        %v2714 = vld [vmem:[%s437 + $0xfe] sm:$0xff]
        %v2715 = vld [vmem:[%s437 + $0x106] sm:$0xff]
        %v2716 = vld [vmem:[%s437 + $0x10e] sm:$0xff]
        %v2717 = vld [vmem:[%s437 + $0x116] sm:$0xff]
        %v2718 = vld [vmem:[%s437 + $0x11e] sm:$0xff]
        %v2719 = vld [vmem:[%s437 + $0x126] sm:$0xff]
        %v2720 = vld [vmem:[%s437 + $0x12e] sm:$0xff]
        %v2721 = vld [vmem:[%s437 + $0x136] sm:$0xff]
        %v2722 = vld [vmem:[%s437 + $0x13e] sm:$0x3f]
        %v2723 = vpack.c.bf16 %v2688, %v2687
        %v2724 = vpack.c.bf16 %v2690, %v2689
        %v2725 = vpack.c.bf16 %v2692, %v2691
        %v2726 = vpack.c.bf16 %v2694, %v2693
        %v2727 = vpack.c.bf16 %v2696, %v2695
        %v2728 = vpack.c.bf16 %v2698, %v2697
        %v2729 = vpack.c.bf16 %v2700, %v2699
        %v2730 = vpack.c.bf16 %v2702, %v2701
        %v2731 = vpack.c.bf16 %v2704, %v2703
        %v2732 = vpack.c.bf16 %v2706, %v2705
        %v2733 = vpack.c.bf16 %v2708, %v2707
        %v2734 = vpack.c.bf16 %v2710, %v2709
        %v2735 = vpack.c.bf16 %v2712, %v2711
        %v2736 = vpack.c.bf16 %v2714, %v2713
        %v2737 = vpack.c.bf16 %v2716, %v2715
        %v2738 = vpack.c.bf16 %v2718, %v2717
        %v2739 = vpack.c.bf16 %v2720, %v2719
        %v2740 = vpack.c.bf16 %v2722, %v2721
        %v2759 = vunpack.c.l.b16 %v2723
        %v2760 = vunpack.c.h.b16 %v2723
        %v2761 = vunpack.c.l.b16 %v2724
        %v2762 = vunpack.c.h.b16 %v2724
        %v2763 = vunpack.c.l.b16 %v2725
        %v2764 = vunpack.c.h.b16 %v2725
        %v2765 = vunpack.c.l.b16 %v2726
        %v2766 = vunpack.c.h.b16 %v2726
        %v2767 = vunpack.c.l.b16 %v2727
        %v2768 = vunpack.c.h.b16 %v2727
        %v2769 = vunpack.c.l.b16 %v2728
        %v2770 = vunpack.c.h.b16 %v2728
        %v2771 = vunpack.c.l.b16 %v2729
        %v2772 = vunpack.c.h.b16 %v2729
        %v2773 = vunpack.c.l.b16 %v2730
        %v2774 = vunpack.c.h.b16 %v2730
        %v2775 = vunpack.c.l.b16 %v2731
        %v2776 = vunpack.c.h.b16 %v2731
        %v2777 = vunpack.c.l.b16 %v2732
        %v2778 = vunpack.c.h.b16 %v2732
        %v2779 = vunpack.c.l.b16 %v2733
        %v2780 = vunpack.c.h.b16 %v2733
        %v2781 = vunpack.c.l.b16 %v2734
        %v2782 = vunpack.c.h.b16 %v2734
        %v2783 = vunpack.c.l.b16 %v2735
        %v2784 = vunpack.c.h.b16 %v2735
        %v2785 = vunpack.c.l.b16 %v2736
        %v2786 = vunpack.c.h.b16 %v2736
        %v2787 = vunpack.c.l.b16 %v2737
        %v2788 = vunpack.c.h.b16 %v2737
        %v2789 = vunpack.c.l.b16 %v2738
        %v2790 = vunpack.c.h.b16 %v2738
        %v2791 = vunpack.c.l.b16 %v2739
        %v2792 = vunpack.c.h.b16 %v2739
        %v2793 = vunpack.c.l.b16 %v2740
        %v2794 = vunpack.c.h.b16 %v2740
        %v2795 = vpack.c.b16 %v2759, %v2759
        %v2796 = vpack.c.b16 %v2760, %v2760
        %v2797 = vpack.c.b16 %v2761, %v2761
        %v2798 = vpack.c.b16 %v2762, %v2762
        %v2799 = vpack.c.b16 %v2763, %v2763
        %v2800 = vpack.c.b16 %v2764, %v2764
        %v2801 = vpack.c.b16 %v2765, %v2765
        %v2802 = vpack.c.b16 %v2766, %v2766
        %v2803 = vpack.c.b16 %v2767, %v2767
        %v2804 = vpack.c.b16 %v2768, %v2768
        %v2805 = vpack.c.b16 %v2769, %v2769
        %v2806 = vpack.c.b16 %v2770, %v2770
        %v2807 = vpack.c.b16 %v2771, %v2771
        %v2808 = vpack.c.b16 %v2772, %v2772
        %v2809 = vpack.c.b16 %v2773, %v2773
        %v2810 = vpack.c.b16 %v2774, %v2774
        %v2811 = vpack.c.b16 %v2775, %v2775
        %v2812 = vpack.c.b16 %v2776, %v2776
        %v2813 = vpack.c.b16 %v2777, %v2777
        %v2814 = vpack.c.b16 %v2778, %v2778
        %v2815 = vpack.c.b16 %v2779, %v2779
        %v2816 = vpack.c.b16 %v2780, %v2780
        %v2817 = vpack.c.b16 %v2781, %v2781
        %v2818 = vpack.c.b16 %v2782, %v2782
        %v2819 = vpack.c.b16 %v2783, %v2783
        %v2820 = vpack.c.b16 %v2784, %v2784
        %v2821 = vpack.c.b16 %v2785, %v2785
        %v2822 = vpack.c.b16 %v2786, %v2786
        %v2823 = vpack.c.b16 %v2787, %v2787
        %v2824 = vpack.c.b16 %v2788, %v2788
        %v2825 = vpack.c.b16 %v2789, %v2789
        %v2826 = vpack.c.b16 %v2790, %v2790
        %v2827 = vpack.c.b16 %v2791, %v2791
        %v2828 = vpack.c.b16 %v2792, %v2792
        %v2829 = vpack.c.b16 %v2793, %v2793
        %v2830 = vpack.c.b16 %v2794, %v2794
        %2831 = vrot.lane.b32.xlu0 %v2795, 64
        %v2832 = vpop.permute.xlu0 %2831
        %2833 = vrot.lane.b32.xlu0 %v2796, 64
        %v2834 = vpop.permute.xlu0 %2833
        %2835 = vrot.lane.b32.xlu0 %v2797, 64
        %v2836 = vpop.permute.xlu0 %2835
        %2837 = vrot.lane.b32.xlu0 %v2798, 64
        %v2838 = vpop.permute.xlu0 %2837
        %2839 = vrot.lane.b32.xlu0 %v2799, 64
        %v2840 = vpop.permute.xlu0 %2839
        %2841 = vrot.lane.b32.xlu0 %v2800, 64
        %v2842 = vpop.permute.xlu0 %2841
        %2843 = vrot.lane.b32.xlu0 %v2801, 64
        %v2844 = vpop.permute.xlu0 %2843
        %2845 = vrot.lane.b32.xlu0 %v2802, 64
        %v2846 = vpop.permute.xlu0 %2845
        %2847 = vrot.lane.b32.xlu0 %v2803, 64
        %v2848 = vpop.permute.xlu0 %2847
        %2849 = vrot.lane.b32.xlu0 %v2804, 64
        %v2850 = vpop.permute.xlu0 %2849
        %2851 = vrot.lane.b32.xlu0 %v2805, 64
        %v2852 = vpop.permute.xlu0 %2851
        %2853 = vrot.lane.b32.xlu0 %v2806, 64
        %v2854 = vpop.permute.xlu0 %2853
        %2855 = vrot.lane.b32.xlu0 %v2807, 64
        %v2856 = vpop.permute.xlu0 %2855
        %2857 = vrot.lane.b32.xlu0 %v2808, 64
        %v2858 = vpop.permute.xlu0 %2857
        %2859 = vrot.lane.b32.xlu0 %v2809, 64
        %v2860 = vpop.permute.xlu0 %2859
        %2861 = vrot.lane.b32.xlu0 %v2810, 64
        %v2862 = vpop.permute.xlu0 %2861
        %2863 = vrot.lane.b32.xlu0 %v2811, 64
        %v2864 = vpop.permute.xlu0 %2863
        %2865 = vrot.lane.b32.xlu0 %v2812, 64
        %v2866 = vpop.permute.xlu0 %2865
        %2867 = vrot.lane.b32.xlu0 %v2813, 64
        %v2868 = vpop.permute.xlu0 %2867
        %2869 = vrot.lane.b32.xlu0 %v2814, 64
        %v2870 = vpop.permute.xlu0 %2869
        %2871 = vrot.lane.b32.xlu0 %v2815, 64
        %v2872 = vpop.permute.xlu0 %2871
        %2873 = vrot.lane.b32.xlu0 %v2816, 64
        %v2874 = vpop.permute.xlu0 %2873
        %2875 = vrot.lane.b32.xlu0 %v2817, 64
        %v2876 = vpop.permute.xlu0 %2875
        %2877 = vrot.lane.b32.xlu0 %v2818, 64
        %v2878 = vpop.permute.xlu0 %2877
        %2879 = vrot.lane.b32.xlu0 %v2819, 64
        %v2880 = vpop.permute.xlu0 %2879
        %2881 = vrot.lane.b32.xlu0 %v2820, 64
        %v2882 = vpop.permute.xlu0 %2881
        %2883 = vrot.lane.b32.xlu0 %v2821, 64
        %v2884 = vpop.permute.xlu0 %2883
        %2885 = vrot.lane.b32.xlu0 %v2822, 64
        %v2886 = vpop.permute.xlu0 %2885
        %2887 = vrot.lane.b32.xlu0 %v2823, 64
        %v2888 = vpop.permute.xlu0 %2887
        %2889 = vrot.lane.b32.xlu0 %v2824, 64
        %v2890 = vpop.permute.xlu0 %2889
        %2891 = vrot.lane.b32.xlu0 %v2825, 64
        %v2892 = vpop.permute.xlu0 %2891
        %2893 = vrot.lane.b32.xlu0 %v2826, 64
        %v2894 = vpop.permute.xlu0 %2893
        %2895 = vrot.lane.b32.xlu0 %v2827, 64
        %v2896 = vpop.permute.xlu0 %2895
        %2897 = vrot.lane.b32.xlu0 %v2828, 64
        %v2898 = vpop.permute.xlu0 %2897
        %2899 = vrot.lane.b32.xlu0 %v2829, 64
        %v2900 = vpop.permute.xlu0 %2899
        %2901 = vrot.lane.b32.xlu0 %v2830, 64
        %v2902 = vpop.permute.xlu0 %2901
        %vm2939 = vcmask 585216
        %2940 = vst.msk [vmem:[#allocation2] sm:$0xf] %vm2939, %v2832
        %2941 = vst.msk [vmem:[#allocation2 + $0x4] sm:$0xf] %vm2939, %v2834
        %2942 = vst.msk [vmem:[#allocation2 + $0x8] sm:$0xf] %vm2939, %v2836
        %2943 = vst.msk [vmem:[#allocation2 + $0xc] sm:$0xf] %vm2939, %v2838
        %2944 = vst.msk [vmem:[#allocation2 + $0x10] sm:$0xf] %vm2939, %v2840
        %2945 = vst.msk [vmem:[#allocation2 + $0x14] sm:$0xf] %vm2939, %v2842
        %2946 = vst.msk [vmem:[#allocation2 + $0x18] sm:$0xf] %vm2939, %v2844
        %2947 = vst.msk [vmem:[#allocation2 + $0x1c] sm:$0xf] %vm2939, %v2846
        %2948 = vst.msk [vmem:[#allocation2 + $0x20] sm:$0xf] %vm2939, %v2848
        %2949 = vst.msk [vmem:[#allocation2 + $0x24] sm:$0xf] %vm2939, %v2850
        %2950 = vst.msk [vmem:[#allocation2 + $0x28] sm:$0xf] %vm2939, %v2852
        %2951 = vst.msk [vmem:[#allocation2 + $0x2c] sm:$0xf] %vm2939, %v2854
        %2952 = vst.msk [vmem:[#allocation2 + $0x30] sm:$0xf] %vm2939, %v2856
        %2953 = vst.msk [vmem:[#allocation2 + $0x34] sm:$0xf] %vm2939, %v2858
        %2954 = vst.msk [vmem:[#allocation2 + $0x38] sm:$0xf] %vm2939, %v2860
        %2955 = vst.msk [vmem:[#allocation2 + $0x3c] sm:$0xf] %vm2939, %v2862
        %2956 = vst.msk [vmem:[#allocation2 + $0x40] sm:$0xf] %vm2939, %v2864
        %2957 = vst.msk [vmem:[#allocation2 + $0x44] sm:$0xf] %vm2939, %v2866
        %2958 = vst.msk [vmem:[#allocation2 + $0x48] sm:$0xf] %vm2939, %v2868
        %2959 = vst.msk [vmem:[#allocation2 + $0x4c] sm:$0xf] %vm2939, %v2870
        %2960 = vst.msk [vmem:[#allocation2 + $0x50] sm:$0xf] %vm2939, %v2872
        %2961 = vst.msk [vmem:[#allocation2 + $0x54] sm:$0xf] %vm2939, %v2874
        %2962 = vst.msk [vmem:[#allocation2 + $0x58] sm:$0xf] %vm2939, %v2876
        %2963 = vst.msk [vmem:[#allocation2 + $0x5c] sm:$0xf] %vm2939, %v2878
        %2964 = vst.msk [vmem:[#allocation2 + $0x60] sm:$0xf] %vm2939, %v2880
        %2965 = vst.msk [vmem:[#allocation2 + $0x64] sm:$0xf] %vm2939, %v2882
        %2966 = vst.msk [vmem:[#allocation2 + $0x68] sm:$0xf] %vm2939, %v2884
        %2967 = vst.msk [vmem:[#allocation2 + $0x6c] sm:$0xf] %vm2939, %v2886
        %2968 = vst.msk [vmem:[#allocation2 + $0x70] sm:$0xf] %vm2939, %v2888
        %2969 = vst.msk [vmem:[#allocation2 + $0x74] sm:$0xf] %vm2939, %v2890
        %2970 = vst.msk [vmem:[#allocation2 + $0x78] sm:$0xf] %vm2939, %v2892
        %2971 = vst.msk [vmem:[#allocation2 + $0x7c] sm:$0xf] %vm2939, %v2894
        %2972 = vst.msk [vmem:[#allocation2 + $0x80] sm:$0xf] %vm2939, %v2896
        %2973 = vst.msk [vmem:[#allocation2 + $0x84] sm:$0xf] %vm2939, %v2898
        %2974 = vst.msk [vmem:[#allocation2 + $0x88] sm:$0xf] %vm2939, %v2900
        %vm2975 = vcmask 584192
        %2976 = vst.msk [vmem:[#allocation2 + $0x8c] sm:$0x7] %vm2975, %v2902
        %v2977 = vld [vmem:[#allocation2] sm:$0xf]
        %v2978 = vld [vmem:[#allocation2 + $0x4] sm:$0xf]
        %v2979 = vld [vmem:[#allocation2 + $0x8] sm:$0xf]
        %v2980 = vld [vmem:[#allocation2 + $0xc] sm:$0xf]
        %v2981 = vld [vmem:[#allocation2 + $0x10] sm:$0xf]
        %v2982 = vld [vmem:[#allocation2 + $0x14] sm:$0xf]
        %v2983 = vld [vmem:[#allocation2 + $0x18] sm:$0xf]
        %v2984 = vld [vmem:[#allocation2 + $0x1c] sm:$0xf]
        %v2985 = vld [vmem:[#allocation2 + $0x20] sm:$0xf]
        %v2986 = vld [vmem:[#allocation2 + $0x24] sm:$0xf]
        %v2987 = vld [vmem:[#allocation2 + $0x28] sm:$0xf]
        %v2988 = vld [vmem:[#allocation2 + $0x2c] sm:$0xf]
        %v2989 = vld [vmem:[#allocation2 + $0x30] sm:$0xf]
        %v2990 = vld [vmem:[#allocation2 + $0x34] sm:$0xf]
        %v2991 = vld [vmem:[#allocation2 + $0x38] sm:$0xf]
        %v2992 = vld [vmem:[#allocation2 + $0x3c] sm:$0xf]
        %v2993 = vld [vmem:[#allocation2 + $0x40] sm:$0xf]
        %v2994 = vld [vmem:[#allocation2 + $0x44] sm:$0xf]
        %v2995 = vld [vmem:[#allocation2 + $0x48] sm:$0xf]
        %v2996 = vld [vmem:[#allocation2 + $0x4c] sm:$0xf]
        %v2997 = vld [vmem:[#allocation2 + $0x50] sm:$0xf]
        %v2998 = vld [vmem:[#allocation2 + $0x54] sm:$0xf]
        %v2999 = vld [vmem:[#allocation2 + $0x58] sm:$0xf]
        %v3000 = vld [vmem:[#allocation2 + $0x5c] sm:$0xf]
        %v3001 = vld [vmem:[#allocation2 + $0x60] sm:$0xf]
        %v3002 = vld [vmem:[#allocation2 + $0x64] sm:$0xf]
        %v3003 = vld [vmem:[#allocation2 + $0x68] sm:$0xf]
        %v3004 = vld [vmem:[#allocation2 + $0x6c] sm:$0xf]
        %v3005 = vld [vmem:[#allocation2 + $0x70] sm:$0xf]
        %v3006 = vld [vmem:[#allocation2 + $0x74] sm:$0xf]
        %v3007 = vld [vmem:[#allocation2 + $0x78] sm:$0xf]
        %v3008 = vld [vmem:[#allocation2 + $0x7c] sm:$0xf]
        %v3009 = vld [vmem:[#allocation2 + $0x80] sm:$0xf]
        %v3010 = vld [vmem:[#allocation2 + $0x84] sm:$0xf]
        %v3011 = vld [vmem:[#allocation2 + $0x88] sm:$0xf]
        %v3012 = vld [vmem:[#allocation2 + $0x8c] sm:$0x7]
        %v3013 = vld [vmem:[%s1] sm:$0xf]
        %v3014 = vld [vmem:[%s1 + $0x4] sm:$0xf]
        %v3015 = vld [vmem:[%s1 + $0x8] sm:$0xf]
        %v3016 = vld [vmem:[%s1 + $0xc] sm:$0xf]
        %v3017 = vld [vmem:[%s1 + $0x10] sm:$0xf]
        %v3018 = vld [vmem:[%s1 + $0x14] sm:$0xf]
        %v3019 = vld [vmem:[%s1 + $0x18] sm:$0xf]
        %v3020 = vld [vmem:[%s1 + $0x1c] sm:$0xf]
        %v3021 = vld [vmem:[%s1 + $0x20] sm:$0xf]
        %v3022 = vld [vmem:[%s2] sm:$0x1]
        %v3024 = vlaneseq
        %v3025 = vshrl.u32 %v3024, 7
        %v3026 = vsub.s32 0, %v3025
        %v3027 = vrot.slane %v3022, %v3026
        %v3065 = vunpack.c.l.b16 %v2977
        %v3066 = vunpack.c.l.b16 %v2978
        %v3067 = vunpack.c.l.b16 %v2979
        %v3068 = vunpack.c.l.b16 %v2980
        %v3069 = vunpack.c.l.b16 %v2981
        %v3070 = vunpack.c.l.b16 %v2982
        %v3071 = vunpack.c.l.b16 %v2983
        %v3072 = vunpack.c.l.b16 %v2984
        %v3073 = vunpack.c.l.b16 %v2985
        %v3074 = vunpack.c.l.b16 %v2986
        %v3075 = vunpack.c.l.b16 %v2987
        %v3076 = vunpack.c.l.b16 %v2988
        %v3077 = vunpack.c.l.b16 %v2989
        %v3078 = vunpack.c.l.b16 %v2990
        %v3079 = vunpack.c.l.b16 %v2991
        %v3080 = vunpack.c.l.b16 %v2992
        %v3081 = vunpack.c.l.b16 %v2993
        %v3082 = vunpack.c.l.b16 %v2994
        %v3083 = vunpack.c.l.b16 %v2995
        %v3084 = vunpack.c.l.b16 %v2996
        %v3085 = vunpack.c.l.b16 %v2997
        %v3086 = vunpack.c.l.b16 %v2998
        %v3087 = vunpack.c.l.b16 %v2999
        %v3088 = vunpack.c.l.b16 %v3000
        %v3089 = vunpack.c.l.b16 %v3001
        %v3090 = vunpack.c.l.b16 %v3002
        %v3091 = vunpack.c.l.b16 %v3003
        %v3092 = vunpack.c.l.b16 %v3004
        %v3093 = vunpack.c.l.b16 %v3005
        %v3094 = vunpack.c.l.b16 %v3006
        %v3095 = vunpack.c.l.b16 %v3007
        %v3096 = vunpack.c.l.b16 %v3008
        %v3097 = vunpack.c.l.b16 %v3009
        %v3098 = vunpack.c.l.b16 %v3010
        %v3099 = vunpack.c.l.b16 %v3011
        %v3100 = vunpack.c.l.b16 %v3012
        %v3101 = vpack.c.b16 %v3066, %v3065
        %v3102 = vpack.c.b16 %v3068, %v3067
        %v3103 = vpack.c.b16 %v3070, %v3069
        %v3104 = vpack.c.b16 %v3072, %v3071
        %v3105 = vpack.c.b16 %v3074, %v3073
        %v3106 = vpack.c.b16 %v3076, %v3075
        %v3107 = vpack.c.b16 %v3078, %v3077
        %v3108 = vpack.c.b16 %v3080, %v3079
        %v3109 = vpack.c.b16 %v3082, %v3081
        %v3110 = vpack.c.b16 %v3084, %v3083
        %v3111 = vpack.c.b16 %v3086, %v3085
        %v3112 = vpack.c.b16 %v3088, %v3087
        %v3113 = vpack.c.b16 %v3090, %v3089
        %v3114 = vpack.c.b16 %v3092, %v3091
        %v3115 = vpack.c.b16 %v3094, %v3093
        %v3116 = vpack.c.b16 %v3096, %v3095
        %v3117 = vpack.c.b16 %v3098, %v3097
        %v3118 = vpack.c.b16 %v3100, %v3099
        %v3128 = vunpack.c.l.b16 %v3013
        %v3129 = vunpack.c.l.b16 %v3014
        %v3130 = vunpack.c.l.b16 %v3015
        %v3131 = vunpack.c.l.b16 %v3016
        %v3132 = vunpack.c.l.b16 %v3017
        %v3133 = vunpack.c.l.b16 %v3018
        %v3134 = vunpack.c.l.b16 %v3019
        %v3135 = vunpack.c.l.b16 %v3020
        %v3136 = vunpack.c.l.b16 %v3021
        %v3137 = vpack.c.b16 %v3129, %v3128
        %v3138 = vpack.c.b16 %v3131, %v3130
        %v3139 = vpack.c.b16 %v3133, %v3132
        %v3140 = vpack.c.b16 %v3135, %v3134
        %v3141 = vpack.c.b16 %v3136, %v3136
        %vm3146 = vcmask 588800
        %v3148 = vsel %vm3146, %v3101, 0
        %v3151 = vsel %vm3146, %v3102, 0
        %v3154 = vsel %vm3146, %v3103, 0
        %v3157 = vsel %vm3146, %v3104, 0
        %v3160 = vsel %vm3146, %v3105, 0
        %v3163 = vsel %vm3146, %v3106, 0
        %v3166 = vsel %vm3146, %v3107, 0
        %v3169 = vsel %vm3146, %v3108, 0
        %v3172 = vsel %vm3146, %v3109, 0
        %v3175 = vsel %vm3146, %v3110, 0
        %v3178 = vsel %vm3146, %v3111, 0
        %v3181 = vsel %vm3146, %v3112, 0
        %v3184 = vsel %vm3146, %v3113, 0
        %v3187 = vsel %vm3146, %v3114, 0
        %v3190 = vsel %vm3146, %v3115, 0
        %v3193 = vsel %vm3146, %v3116, 0
        %v3196 = vsel %vm3146, %v3117, 0
        %v3199 = vsel %vm3146, %v3118, 0
        %vm3201 = vcmask 1043456
        %v3203 = vsel %vm3201, %v3141, 0
        %3205 = vmatprep.subr.bf16.mxu0 0
        %3206 = vmatpush1.bf16.msra.mxu0 %v3137
        %3207 = vmatprep.subr.bf16.mxu0 0
        %3208 = vmatpush1.bf16.msra.mxu0 %v3138
        %3209 = vmatprep.subr.bf16.mxu0 0
        %3210 = vmatpush1.bf16.msra.mxu0 %v3139
        %3211 = vmatprep.subr.bf16.mxu0 0
        %3212 = vmatpush1.bf16.msra.mxu0 %v3140
        %3213 = vmatprep.subr.bf16.mxu0 0
        %3214 = vmatpush1.bf16.msra.mxu0 %v3203
        %3215 = vmatprep.subr.bf16.mxu0 0
        %3216 = vmatpush1.bf16.msra.mxu0 0
        %3217 = vmatprep.subr.bf16.mxu0 0
        %3218 = vmatpush1.bf16.msra.mxu0 0
        %3219 = vmatprep.subr.bf16.mxu0 0
        %3220 = vmatpush1.bf16.msra.mxu0 0
        %3221 = vmatprep.subr.bf16.mxu0 0
        %3222 = vmatpush1.bf16.msra.mxu0 0
        %3223 = vmatprep.subr.bf16.mxu0 0
        %3224 = vmatpush1.bf16.msra.mxu0 0
        %3225 = vmatprep.subr.bf16.mxu0 0
        %3226 = vmatpush1.bf16.msra.mxu0 0
        %3227 = vmatprep.subr.bf16.mxu0 0
        %3228 = vmatpush1.bf16.msra.mxu0 0
        %3229 = vmatprep.subr.bf16.mxu0 0
        %3230 = vmatpush1.bf16.msra.mxu0 0
        %3231 = vmatprep.subr.bf16.mxu0 0
        %3232 = vmatpush1.bf16.msra.mxu0 0
        %3233 = vmatprep.subr.bf16.mxu0 0
        %3234 = vmatpush1.bf16.msra.mxu0 0
        %3235 = vmatprep.subr.bf16.mxu0 0
        %3236 = vmatpush1.bf16.msra.mxu0 0
        %3237 = vmatprep.mubr.bf16.mxu0 0
        %3238 = vmatmul.mubr.bf16.gmra.mrb[0].mxu0 %v3148
        %v3239 = vpop.f32.mrb[0].mxu0
        %v3240 = vadd.f32 %v3027, %v3239
        %v3241 = vpop.f32.mrb[0].mxu0
        %v3242 = vpop.f32.mrb[0].mxu0
        %v3243 = vadd.f32 %v3027, %v3242
        %v3244 = vpop.f32.mrb[0].mxu0
        %3245 = vmatprep.mubr.bf16.mxu0 0
        %3246 = vmatmul.mubr.bf16.gmra.mrb[0].mxu0 %v3151
        %v3247 = vpop.f32.mrb[0].mxu0
        %v3248 = vadd.f32 %v3027, %v3247
        %v3249 = vpop.f32.mrb[0].mxu0
        %v3250 = vpop.f32.mrb[0].mxu0
        %v3251 = vadd.f32 %v3027, %v3250
        %v3252 = vpop.f32.mrb[0].mxu0
        %3253 = vmatprep.mubr.bf16.mxu0 0
        %3254 = vmatmul.mubr.bf16.gmra.mrb[0].mxu0 %v3154
        %v3255 = vpop.f32.mrb[0].mxu0
        %v3256 = vadd.f32 %v3027, %v3255
        %v3257 = vpop.f32.mrb[0].mxu0
        %v3258 = vpop.f32.mrb[0].mxu0
        %v3259 = vadd.f32 %v3027, %v3258
        %v3260 = vpop.f32.mrb[0].mxu0
        %3261 = vmatprep.mubr.bf16.mxu0 0
        %3262 = vmatmul.mubr.bf16.gmra.mrb[0].mxu0 %v3157
        %v3263 = vpop.f32.mrb[0].mxu0
        %v3264 = vadd.f32 %v3027, %v3263
        %v3265 = vpop.f32.mrb[0].mxu0
        %v3266 = vpop.f32.mrb[0].mxu0
        %v3267 = vadd.f32 %v3027, %v3266
        %v3268 = vpop.f32.mrb[0].mxu0
        %3269 = vmatprep.mubr.bf16.mxu0 0
        %3270 = vmatmul.mubr.bf16.gmra.mrb[0].mxu0 %v3160
        %v3271 = vpop.f32.mrb[0].mxu0
        %v3272 = vadd.f32 %v3027, %v3271
        %v3273 = vpop.f32.mrb[0].mxu0
        %v3274 = vpop.f32.mrb[0].mxu0
        %v3275 = vadd.f32 %v3027, %v3274
        %v3276 = vpop.f32.mrb[0].mxu0
        %3277 = vmatprep.mubr.bf16.mxu0 0
        %3278 = vmatmul.mubr.bf16.gmra.mrb[0].mxu0 %v3163
        %v3279 = vpop.f32.mrb[0].mxu0
        %v3280 = vadd.f32 %v3027, %v3279
        %v3281 = vpop.f32.mrb[0].mxu0
        %v3282 = vpop.f32.mrb[0].mxu0
        %v3283 = vadd.f32 %v3027, %v3282
        %v3284 = vpop.f32.mrb[0].mxu0
        %3285 = vmatprep.mubr.bf16.mxu0 0
        %3286 = vmatmul.mubr.bf16.gmra.mrb[0].mxu0 %v3166
        %v3287 = vpop.f32.mrb[0].mxu0
        %v3288 = vadd.f32 %v3027, %v3287
        %v3289 = vpop.f32.mrb[0].mxu0
        %v3290 = vpop.f32.mrb[0].mxu0
        %v3291 = vadd.f32 %v3027, %v3290
        %v3292 = vpop.f32.mrb[0].mxu0
        %3293 = vmatprep.mubr.bf16.mxu0 0
        %3294 = vmatmul.mubr.bf16.gmra.mrb[0].mxu0 %v3169
        %v3295 = vpop.f32.mrb[0].mxu0
        %v3296 = vadd.f32 %v3027, %v3295
        %v3297 = vpop.f32.mrb[0].mxu0
        %v3298 = vpop.f32.mrb[0].mxu0
        %v3299 = vadd.f32 %v3027, %v3298
        %v3300 = vpop.f32.mrb[0].mxu0
        %3301 = vmatprep.mubr.bf16.mxu0 0
        %3302 = vmatmul.mubr.bf16.gmra.mrb[0].mxu0 %v3172
        %v3303 = vpop.f32.mrb[0].mxu0
        %v3304 = vadd.f32 %v3027, %v3303
        %v3305 = vpop.f32.mrb[0].mxu0
        %v3306 = vpop.f32.mrb[0].mxu0
        %v3307 = vadd.f32 %v3027, %v3306
        %v3308 = vpop.f32.mrb[0].mxu0
        %3309 = vmatprep.mubr.bf16.mxu0 0
        %3310 = vmatmul.mubr.bf16.gmra.mrb[0].mxu0 %v3175
        %v3311 = vpop.f32.mrb[0].mxu0
        %v3312 = vadd.f32 %v3027, %v3311
        %v3313 = vpop.f32.mrb[0].mxu0
        %v3314 = vpop.f32.mrb[0].mxu0
        %v3315 = vadd.f32 %v3027, %v3314
        %v3316 = vpop.f32.mrb[0].mxu0
        %3317 = vmatprep.mubr.bf16.mxu0 0
        %3318 = vmatmul.mubr.bf16.gmra.mrb[0].mxu0 %v3178
        %v3319 = vpop.f32.mrb[0].mxu0
        %v3320 = vadd.f32 %v3027, %v3319
        %v3321 = vpop.f32.mrb[0].mxu0
        %v3322 = vpop.f32.mrb[0].mxu0
        %v3323 = vadd.f32 %v3027, %v3322
        %v3324 = vpop.f32.mrb[0].mxu0
        %3325 = vmatprep.mubr.bf16.mxu0 0
        %3326 = vmatmul.mubr.bf16.gmra.mrb[0].mxu0 %v3181
        %v3327 = vpop.f32.mrb[0].mxu0
        %v3328 = vadd.f32 %v3027, %v3327
        %v3329 = vpop.f32.mrb[0].mxu0
        %v3330 = vpop.f32.mrb[0].mxu0
        %v3331 = vadd.f32 %v3027, %v3330
        %v3332 = vpop.f32.mrb[0].mxu0
        %3333 = vmatprep.mubr.bf16.mxu0 0
        %3334 = vmatmul.mubr.bf16.gmra.mrb[0].mxu0 %v3184
        %v3335 = vpop.f32.mrb[0].mxu0
        %v3336 = vadd.f32 %v3027, %v3335
        %v3337 = vpop.f32.mrb[0].mxu0
        %v3338 = vpop.f32.mrb[0].mxu0
        %v3339 = vadd.f32 %v3027, %v3338
        %v3340 = vpop.f32.mrb[0].mxu0
        %3341 = vmatprep.mubr.bf16.mxu0 0
        %3342 = vmatmul.mubr.bf16.gmra.mrb[0].mxu0 %v3187
        %v3343 = vpop.f32.mrb[0].mxu0
        %v3344 = vadd.f32 %v3027, %v3343
        %v3345 = vpop.f32.mrb[0].mxu0
        %v3346 = vpop.f32.mrb[0].mxu0
        %v3347 = vadd.f32 %v3027, %v3346
        %v3348 = vpop.f32.mrb[0].mxu0
        %3349 = vmatprep.mubr.bf16.mxu0 0
        %3350 = vmatmul.mubr.bf16.gmra.mrb[0].mxu0 %v3190
        %v3351 = vpop.f32.mrb[0].mxu0
        %v3352 = vadd.f32 %v3027, %v3351
        %v3353 = vpop.f32.mrb[0].mxu0
        %v3354 = vpop.f32.mrb[0].mxu0
        %v3355 = vadd.f32 %v3027, %v3354
        %v3356 = vpop.f32.mrb[0].mxu0
        %3357 = vmatprep.mubr.bf16.mxu0 0
        %3358 = vmatmul.mubr.bf16.gmra.mrb[0].mxu0 %v3193
        %v3359 = vpop.f32.mrb[0].mxu0
        %v3360 = vadd.f32 %v3027, %v3359
        %v3361 = vpop.f32.mrb[0].mxu0
        %v3362 = vpop.f32.mrb[0].mxu0
        %v3363 = vadd.f32 %v3027, %v3362
        %v3364 = vpop.f32.mrb[0].mxu0
        %3365 = vmatprep.mubr.bf16.mxu0 0
        %3366 = vmatmul.mubr.bf16.gmra.mrb[0].mxu0 %v3196
        %v3367 = vpop.f32.mrb[0].mxu0
        %v3368 = vadd.f32 %v3027, %v3367
        %v3369 = vpop.f32.mrb[0].mxu0
        %v3370 = vpop.f32.mrb[0].mxu0
        %v3371 = vadd.f32 %v3027, %v3370
        %v3372 = vpop.f32.mrb[0].mxu0
        %3373 = vmatprep.mubr.bf16.mxu0 0
        %3374 = vmatmul.mubr.bf16.gmra.mrb[0].mxu0 %v3199
        %v3375 = vpop.f32.mrb[0].mxu0
        %v3376 = vadd.f32 %v3027, %v3375
        %v3377 = vpop.f32.mrb[0].mxu0
        %v3378 = vpop.f32.mrb[0].mxu0
        %v3379 = vadd.f32 %v3027, %v3378
        %v3380 = vpop.f32.mrb[0].mxu0
        %3381 = vdwg.mxu0
        %v3382 = vmax.f32 %v3240, 0.0
        %v3383 = vmax.f32 %v3243, 0.0
        %v3384 = vmax.f32 %v3248, 0.0
        %v3385 = vmax.f32 %v3251, 0.0
        %v3386 = vmax.f32 %v3256, 0.0
        %v3387 = vmax.f32 %v3259, 0.0
        %v3388 = vmax.f32 %v3264, 0.0
        %v3389 = vmax.f32 %v3267, 0.0
        %v3390 = vmax.f32 %v3272, 0.0
        %v3391 = vmax.f32 %v3275, 0.0
        %v3392 = vmax.f32 %v3280, 0.0
        %v3393 = vmax.f32 %v3283, 0.0
        %v3394 = vmax.f32 %v3288, 0.0
        %v3395 = vmax.f32 %v3291, 0.0
        %v3396 = vmax.f32 %v3296, 0.0
        %v3397 = vmax.f32 %v3299, 0.0
        %v3398 = vmax.f32 %v3304, 0.0
        %v3399 = vmax.f32 %v3307, 0.0
        %v3400 = vmax.f32 %v3312, 0.0
        %v3401 = vmax.f32 %v3315, 0.0
        %v3402 = vmax.f32 %v3320, 0.0
        %v3403 = vmax.f32 %v3323, 0.0
        %v3404 = vmax.f32 %v3328, 0.0
        %v3405 = vmax.f32 %v3331, 0.0
        %v3406 = vmax.f32 %v3336, 0.0
        %v3407 = vmax.f32 %v3339, 0.0
        %v3408 = vmax.f32 %v3344, 0.0
        %v3409 = vmax.f32 %v3347, 0.0
        %v3410 = vmax.f32 %v3352, 0.0
        %v3411 = vmax.f32 %v3355, 0.0
        %v3412 = vmax.f32 %v3360, 0.0
        %v3413 = vmax.f32 %v3363, 0.0
        %v3414 = vmax.f32 %v3368, 0.0
        %v3415 = vmax.f32 %v3371, 0.0
        %v3416 = vmax.f32 %v3376, 0.0
        %v3417 = vmax.f32 %v3379, 0.0
        %vm3418 = vcmask 261120
        %3419 = vst.msk [vmem:[#allocation3] sm:$0xff] %vm3418, %v3382
        %3420 = vst.msk [vmem:[#allocation3 + $0x8] sm:$0xff] %vm3418, %v3383
        %3421 = vst.msk [vmem:[#allocation3 + $0x10] sm:$0xff] %vm3418, %v3384
        %3422 = vst.msk [vmem:[#allocation3 + $0x18] sm:$0xff] %vm3418, %v3385
        %3423 = vst.msk [vmem:[#allocation3 + $0x20] sm:$0xff] %vm3418, %v3386
        %3424 = vst.msk [vmem:[#allocation3 + $0x28] sm:$0xff] %vm3418, %v3387
        %3425 = vst.msk [vmem:[#allocation3 + $0x30] sm:$0xff] %vm3418, %v3388
        %3426 = vst.msk [vmem:[#allocation3 + $0x38] sm:$0xff] %vm3418, %v3389
        %3427 = vst.msk [vmem:[#allocation3 + $0x40] sm:$0xff] %vm3418, %v3390
        %3428 = vst.msk [vmem:[#allocation3 + $0x48] sm:$0xff] %vm3418, %v3391
        %3429 = vst.msk [vmem:[#allocation3 + $0x50] sm:$0xff] %vm3418, %v3392
        %3430 = vst.msk [vmem:[#allocation3 + $0x58] sm:$0xff] %vm3418, %v3393
        %3431 = vst.msk [vmem:[#allocation3 + $0x60] sm:$0xff] %vm3418, %v3394
        %3432 = vst.msk [vmem:[#allocation3 + $0x68] sm:$0xff] %vm3418, %v3395
        %3433 = vst.msk [vmem:[#allocation3 + $0x70] sm:$0xff] %vm3418, %v3396
        %3434 = vst.msk [vmem:[#allocation3 + $0x78] sm:$0xff] %vm3418, %v3397
        %3435 = vst.msk [vmem:[#allocation3 + $0x80] sm:$0xff] %vm3418, %v3398
        %3436 = vst.msk [vmem:[#allocation3 + $0x88] sm:$0xff] %vm3418, %v3399
        %3437 = vst.msk [vmem:[#allocation3 + $0x90] sm:$0xff] %vm3418, %v3400
        %3438 = vst.msk [vmem:[#allocation3 + $0x98] sm:$0xff] %vm3418, %v3401
        %3439 = vst.msk [vmem:[#allocation3 + $0xa0] sm:$0xff] %vm3418, %v3402
        %3440 = vst.msk [vmem:[#allocation3 + $0xa8] sm:$0xff] %vm3418, %v3403
        %3441 = vst.msk [vmem:[#allocation3 + $0xb0] sm:$0xff] %vm3418, %v3404
        %3442 = vst.msk [vmem:[#allocation3 + $0xb8] sm:$0xff] %vm3418, %v3405
        %3443 = vst.msk [vmem:[#allocation3 + $0xc0] sm:$0xff] %vm3418, %v3406
        %3444 = vst.msk [vmem:[#allocation3 + $0xc8] sm:$0xff] %vm3418, %v3407
        %3445 = vst.msk [vmem:[#allocation3 + $0xd0] sm:$0xff] %vm3418, %v3408
        %3446 = vst.msk [vmem:[#allocation3 + $0xd8] sm:$0xff] %vm3418, %v3409
        %3447 = vst.msk [vmem:[#allocation3 + $0xe0] sm:$0xff] %vm3418, %v3410
        %3448 = vst.msk [vmem:[#allocation3 + $0xe8] sm:$0xff] %vm3418, %v3411
        %3449 = vst.msk [vmem:[#allocation3 + $0xf0] sm:$0xff] %vm3418, %v3412
        %3450 = vst.msk [vmem:[#allocation3 + $0xf8] sm:$0xff] %vm3418, %v3413
        %3451 = vst.msk [vmem:[#allocation3 + $0x100] sm:$0xff] %vm3418, %v3414
        %3452 = vst.msk [vmem:[#allocation3 + $0x108] sm:$0xff] %vm3418, %v3415
        %3453 = vst.msk [vmem:[#allocation3 + $0x110] sm:$0xff] %vm3418, %v3416
        %vm3454 = vcmask 259072
        %3455 = vst.msk [vmem:[#allocation3 + $0x118] sm:$0x3f] %vm3454, %v3417
        %v3456 = vld [vmem:[#allocation3] sm:$0xff]
        %v3457 = vld [vmem:[#allocation3 + $0x8] sm:$0xff]
        %v3458 = vld [vmem:[#allocation3 + $0x10] sm:$0xff]
        %v3459 = vld [vmem:[#allocation3 + $0x18] sm:$0xff]
        %v3460 = vld [vmem:[#allocation3 + $0x20] sm:$0xff]
        %v3461 = vld [vmem:[#allocation3 + $0x28] sm:$0xff]
        %v3462 = vld [vmem:[#allocation3 + $0x30] sm:$0xff]
        %v3463 = vld [vmem:[#allocation3 + $0x38] sm:$0xff]
        %v3464 = vld [vmem:[#allocation3 + $0x40] sm:$0xff]
        %v3465 = vld [vmem:[#allocation3 + $0x48] sm:$0xff]
        %v3466 = vld [vmem:[#allocation3 + $0x50] sm:$0xff]
        %v3467 = vld [vmem:[#allocation3 + $0x58] sm:$0xff]
        %v3468 = vld [vmem:[#allocation3 + $0x60] sm:$0xff]
        %v3469 = vld [vmem:[#allocation3 + $0x68] sm:$0xff]
        %v3470 = vld [vmem:[#allocation3 + $0x70] sm:$0xff]
        %v3471 = vld [vmem:[#allocation3 + $0x78] sm:$0xff]
        %v3472 = vld [vmem:[#allocation3 + $0x80] sm:$0xff]
        %v3473 = vld [vmem:[#allocation3 + $0x88] sm:$0xff]
        %v3474 = vld [vmem:[#allocation3 + $0x90] sm:$0xff]
        %v3475 = vld [vmem:[#allocation3 + $0x98] sm:$0xff]
        %v3476 = vld [vmem:[#allocation3 + $0xa0] sm:$0xff]
        %v3477 = vld [vmem:[#allocation3 + $0xa8] sm:$0xff]
        %v3478 = vld [vmem:[#allocation3 + $0xb0] sm:$0xff]
        %v3479 = vld [vmem:[#allocation3 + $0xb8] sm:$0xff]
        %v3480 = vld [vmem:[#allocation3 + $0xc0] sm:$0xff]
        %v3481 = vld [vmem:[#allocation3 + $0xc8] sm:$0xff]
        %v3482 = vld [vmem:[#allocation3 + $0xd0] sm:$0xff]
        %v3483 = vld [vmem:[#allocation3 + $0xd8] sm:$0xff]
        %v3484 = vld [vmem:[#allocation3 + $0xe0] sm:$0xff]
        %v3485 = vld [vmem:[#allocation3 + $0xe8] sm:$0xff]
        %v3486 = vld [vmem:[#allocation3 + $0xf0] sm:$0xff]
        %v3487 = vld [vmem:[#allocation3 + $0xf8] sm:$0xff]
        %v3488 = vld [vmem:[#allocation3 + $0x100] sm:$0xff]
        %v3489 = vld [vmem:[#allocation3 + $0x108] sm:$0x7]
        %v3490 = vld [vmem:[#allocation3 + $0x1] sm:$0xff]
        %v3491 = vld [vmem:[#allocation3 + $0x9] sm:$0xff]
        %v3492 = vld [vmem:[#allocation3 + $0x11] sm:$0xff]
        %v3493 = vld [vmem:[#allocation3 + $0x19] sm:$0xff]
        %v3494 = vld [vmem:[#allocation3 + $0x21] sm:$0xff]
        %v3495 = vld [vmem:[#allocation3 + $0x29] sm:$0xff]
        %v3496 = vld [vmem:[#allocation3 + $0x31] sm:$0xff]
        %v3497 = vld [vmem:[#allocation3 + $0x39] sm:$0xff]
        %v3498 = vld [vmem:[#allocation3 + $0x41] sm:$0xff]
        %v3499 = vld [vmem:[#allocation3 + $0x49] sm:$0xff]
        %v3500 = vld [vmem:[#allocation3 + $0x51] sm:$0xff]
        %v3501 = vld [vmem:[#allocation3 + $0x59] sm:$0xff]
        %v3502 = vld [vmem:[#allocation3 + $0x61] sm:$0xff]
        %v3503 = vld [vmem:[#allocation3 + $0x69] sm:$0xff]
        %v3504 = vld [vmem:[#allocation3 + $0x71] sm:$0xff]
        %v3505 = vld [vmem:[#allocation3 + $0x79] sm:$0xff]
        %v3506 = vld [vmem:[#allocation3 + $0x81] sm:$0xff]
        %v3507 = vld [vmem:[#allocation3 + $0x89] sm:$0xff]
        %v3508 = vld [vmem:[#allocation3 + $0x91] sm:$0xff]
        %v3509 = vld [vmem:[#allocation3 + $0x99] sm:$0xff]
        %v3510 = vld [vmem:[#allocation3 + $0xa1] sm:$0xff]
        %v3511 = vld [vmem:[#allocation3 + $0xa9] sm:$0xff]
        %v3512 = vld [vmem:[#allocation3 + $0xb1] sm:$0xff]
        %v3513 = vld [vmem:[#allocation3 + $0xb9] sm:$0xff]
        %v3514 = vld [vmem:[#allocation3 + $0xc1] sm:$0xff]
        %v3515 = vld [vmem:[#allocation3 + $0xc9] sm:$0xff]
        %v3516 = vld [vmem:[#allocation3 + $0xd1] sm:$0xff]
        %v3517 = vld [vmem:[#allocation3 + $0xd9] sm:$0xff]
        %v3518 = vld [vmem:[#allocation3 + $0xe1] sm:$0xff]
        %v3519 = vld [vmem:[#allocation3 + $0xe9] sm:$0xff]
        %v3520 = vld [vmem:[#allocation3 + $0xf1] sm:$0xff]
        %v3521 = vld [vmem:[#allocation3 + $0xf9] sm:$0xff]
        %v3522 = vld [vmem:[#allocation3 + $0x101] sm:$0xff]
        %v3523 = vld [vmem:[#allocation3 + $0x109] sm:$0x7]
        %v3524 = vmax.f32 %v3456, %v3490
        %v3525 = vmax.f32 %v3457, %v3491
        %v3526 = vmax.f32 %v3458, %v3492
        %v3527 = vmax.f32 %v3459, %v3493
        %v3528 = vmax.f32 %v3460, %v3494
        %v3529 = vmax.f32 %v3461, %v3495
        %v3530 = vmax.f32 %v3462, %v3496
        %v3531 = vmax.f32 %v3463, %v3497
        %v3532 = vmax.f32 %v3464, %v3498
        %v3533 = vmax.f32 %v3465, %v3499
        %v3534 = vmax.f32 %v3466, %v3500
        %v3535 = vmax.f32 %v3467, %v3501
        %v3536 = vmax.f32 %v3468, %v3502
        %v3537 = vmax.f32 %v3469, %v3503
        %v3538 = vmax.f32 %v3470, %v3504
        %v3539 = vmax.f32 %v3471, %v3505
        %v3540 = vmax.f32 %v3472, %v3506
        %v3541 = vmax.f32 %v3473, %v3507
        %v3542 = vmax.f32 %v3474, %v3508
        %v3543 = vmax.f32 %v3475, %v3509
        %v3544 = vmax.f32 %v3476, %v3510
        %v3545 = vmax.f32 %v3477, %v3511
        %v3546 = vmax.f32 %v3478, %v3512
        %v3547 = vmax.f32 %v3479, %v3513
        %v3548 = vmax.f32 %v3480, %v3514
        %v3549 = vmax.f32 %v3481, %v3515
        %v3550 = vmax.f32 %v3482, %v3516
        %v3551 = vmax.f32 %v3483, %v3517
        %v3552 = vmax.f32 %v3484, %v3518
        %v3553 = vmax.f32 %v3485, %v3519
        %v3554 = vmax.f32 %v3486, %v3520
        %v3555 = vmax.f32 %v3487, %v3521
        %v3556 = vmax.f32 %v3488, %v3522
        %v3557 = vmax.f32 %v3489, %v3523
        %v3558 = vld [vmem:[#allocation3 + $0x12] sm:$0xff]
        %v3559 = vld [vmem:[#allocation3 + $0x1a] sm:$0xff]
        %v3560 = vld [vmem:[#allocation3 + $0x22] sm:$0xff]
        %v3561 = vld [vmem:[#allocation3 + $0x2a] sm:$0xff]
        %v3562 = vld [vmem:[#allocation3 + $0x32] sm:$0xff]
        %v3563 = vld [vmem:[#allocation3 + $0x3a] sm:$0xff]
        %v3564 = vld [vmem:[#allocation3 + $0x42] sm:$0xff]
        %v3565 = vld [vmem:[#allocation3 + $0x4a] sm:$0xff]
        %v3566 = vld [vmem:[#allocation3 + $0x52] sm:$0xff]
        %v3567 = vld [vmem:[#allocation3 + $0x5a] sm:$0xff]
        %v3568 = vld [vmem:[#allocation3 + $0x62] sm:$0xff]
        %v3569 = vld [vmem:[#allocation3 + $0x6a] sm:$0xff]
        %v3570 = vld [vmem:[#allocation3 + $0x72] sm:$0xff]
        %v3571 = vld [vmem:[#allocation3 + $0x7a] sm:$0xff]
        %v3572 = vld [vmem:[#allocation3 + $0x82] sm:$0xff]
        %v3573 = vld [vmem:[#allocation3 + $0x8a] sm:$0xff]
        %v3574 = vld [vmem:[#allocation3 + $0x92] sm:$0xff]
        %v3575 = vld [vmem:[#allocation3 + $0x9a] sm:$0xff]
        %v3576 = vld [vmem:[#allocation3 + $0xa2] sm:$0xff]
        %v3577 = vld [vmem:[#allocation3 + $0xaa] sm:$0xff]
        %v3578 = vld [vmem:[#allocation3 + $0xb2] sm:$0xff]
        %v3579 = vld [vmem:[#allocation3 + $0xba] sm:$0xff]
        %v3580 = vld [vmem:[#allocation3 + $0xc2] sm:$0xff]
        %v3581 = vld [vmem:[#allocation3 + $0xca] sm:$0xff]
        %v3582 = vld [vmem:[#allocation3 + $0xd2] sm:$0xff]
        %v3583 = vld [vmem:[#allocation3 + $0xda] sm:$0xff]
        %v3584 = vld [vmem:[#allocation3 + $0xe2] sm:$0xff]
        %v3585 = vld [vmem:[#allocation3 + $0xea] sm:$0xff]
        %v3586 = vld [vmem:[#allocation3 + $0xf2] sm:$0xff]
        %v3587 = vld [vmem:[#allocation3 + $0xfa] sm:$0xff]
        %v3588 = vld [vmem:[#allocation3 + $0x102] sm:$0xff]
        %v3589 = vld [vmem:[#allocation3 + $0x10a] sm:$0xff]
        %v3590 = vld [vmem:[#allocation3 + $0x112] sm:$0xff]
        %v3591 = vld [vmem:[#allocation3 + $0x11a] sm:$0x7]
        %v3592 = vld [vmem:[#allocation3 + $0x13] sm:$0xff]
        %v3593 = vld [vmem:[#allocation3 + $0x1b] sm:$0xff]
        %v3594 = vld [vmem:[#allocation3 + $0x23] sm:$0xff]
        %v3595 = vld [vmem:[#allocation3 + $0x2b] sm:$0xff]
        %v3596 = vld [vmem:[#allocation3 + $0x33] sm:$0xff]
        %v3597 = vld [vmem:[#allocation3 + $0x3b] sm:$0xff]
        %v3598 = vld [vmem:[#allocation3 + $0x43] sm:$0xff]
        %v3599 = vld [vmem:[#allocation3 + $0x4b] sm:$0xff]
        %v3600 = vld [vmem:[#allocation3 + $0x53] sm:$0xff]
        %v3601 = vld [vmem:[#allocation3 + $0x5b] sm:$0xff]
        %v3602 = vld [vmem:[#allocation3 + $0x63] sm:$0xff]
        %v3603 = vld [vmem:[#allocation3 + $0x6b] sm:$0xff]
        %v3604 = vld [vmem:[#allocation3 + $0x73] sm:$0xff]
        %v3605 = vld [vmem:[#allocation3 + $0x7b] sm:$0xff]
        %v3606 = vld [vmem:[#allocation3 + $0x83] sm:$0xff]
        %v3607 = vld [vmem:[#allocation3 + $0x8b] sm:$0xff]
        %v3608 = vld [vmem:[#allocation3 + $0x93] sm:$0xff]
        %v3609 = vld [vmem:[#allocation3 + $0x9b] sm:$0xff]
        %v3610 = vld [vmem:[#allocation3 + $0xa3] sm:$0xff]
        %v3611 = vld [vmem:[#allocation3 + $0xab] sm:$0xff]
        %v3612 = vld [vmem:[#allocation3 + $0xb3] sm:$0xff]
        %v3613 = vld [vmem:[#allocation3 + $0xbb] sm:$0xff]
        %v3614 = vld [vmem:[#allocation3 + $0xc3] sm:$0xff]
        %v3615 = vld [vmem:[#allocation3 + $0xcb] sm:$0xff]
        %v3616 = vld [vmem:[#allocation3 + $0xd3] sm:$0xff]
        %v3617 = vld [vmem:[#allocation3 + $0xdb] sm:$0xff]
        %v3618 = vld [vmem:[#allocation3 + $0xe3] sm:$0xff]
        %v3619 = vld [vmem:[#allocation3 + $0xeb] sm:$0xff]
        %v3620 = vld [vmem:[#allocation3 + $0xf3] sm:$0xff]
        %v3621 = vld [vmem:[#allocation3 + $0xfb] sm:$0xff]
        %v3622 = vld [vmem:[#allocation3 + $0x103] sm:$0xff]
        %v3623 = vld [vmem:[#allocation3 + $0x10b] sm:$0xff]
        %v3624 = vld [vmem:[#allocation3 + $0x113] sm:$0xff]
        %v3625 = vld [vmem:[#allocation3 + $0x11b] sm:$0x7]
        %v3626 = vmax.f32 %v3558, %v3592
        %v3627 = vmax.f32 %v3559, %v3593
        %v3628 = vmax.f32 %v3560, %v3594
        %v3629 = vmax.f32 %v3561, %v3595
        %v3630 = vmax.f32 %v3562, %v3596
        %v3631 = vmax.f32 %v3563, %v3597
        %v3632 = vmax.f32 %v3564, %v3598
        %v3633 = vmax.f32 %v3565, %v3599
        %v3634 = vmax.f32 %v3566, %v3600
        %v3635 = vmax.f32 %v3567, %v3601
        %v3636 = vmax.f32 %v3568, %v3602
        %v3637 = vmax.f32 %v3569, %v3603
        %v3638 = vmax.f32 %v3570, %v3604
        %v3639 = vmax.f32 %v3571, %v3605
        %v3640 = vmax.f32 %v3572, %v3606
        %v3641 = vmax.f32 %v3573, %v3607
        %v3642 = vmax.f32 %v3574, %v3608
        %v3643 = vmax.f32 %v3575, %v3609
        %v3644 = vmax.f32 %v3576, %v3610
        %v3645 = vmax.f32 %v3577, %v3611
        %v3646 = vmax.f32 %v3578, %v3612
        %v3647 = vmax.f32 %v3579, %v3613
        %v3648 = vmax.f32 %v3580, %v3614
        %v3649 = vmax.f32 %v3581, %v3615
        %v3650 = vmax.f32 %v3582, %v3616
        %v3651 = vmax.f32 %v3583, %v3617
        %v3652 = vmax.f32 %v3584, %v3618
        %v3653 = vmax.f32 %v3585, %v3619
        %v3654 = vmax.f32 %v3586, %v3620
        %v3655 = vmax.f32 %v3587, %v3621
        %v3656 = vmax.f32 %v3588, %v3622
        %v3657 = vmax.f32 %v3589, %v3623
        %v3658 = vmax.f32 %v3590, %v3624
        %v3659 = vmax.f32 %v3591, %v3625
        %v3660 = vmax.f32 %v3524, %v3626
        %v3661 = vmax.f32 %v3525, %v3627
        %v3662 = vmax.f32 %v3526, %v3628
        %v3663 = vmax.f32 %v3527, %v3629
        %v3664 = vmax.f32 %v3528, %v3630
        %v3665 = vmax.f32 %v3529, %v3631
        %v3666 = vmax.f32 %v3530, %v3632
        %v3667 = vmax.f32 %v3531, %v3633
        %v3668 = vmax.f32 %v3532, %v3634
        %v3669 = vmax.f32 %v3533, %v3635
        %v3670 = vmax.f32 %v3534, %v3636
        %v3671 = vmax.f32 %v3535, %v3637
        %v3672 = vmax.f32 %v3536, %v3638
        %v3673 = vmax.f32 %v3537, %v3639
        %v3674 = vmax.f32 %v3538, %v3640
        %v3675 = vmax.f32 %v3539, %v3641
        %v3676 = vmax.f32 %v3540, %v3642
        %v3677 = vmax.f32 %v3541, %v3643
        %v3678 = vmax.f32 %v3542, %v3644
        %v3679 = vmax.f32 %v3543, %v3645
        %v3680 = vmax.f32 %v3544, %v3646
        %v3681 = vmax.f32 %v3545, %v3647
        %v3682 = vmax.f32 %v3546, %v3648
        %v3683 = vmax.f32 %v3547, %v3649
        %v3684 = vmax.f32 %v3548, %v3650
        %v3685 = vmax.f32 %v3549, %v3651
        %v3686 = vmax.f32 %v3550, %v3652
        %v3687 = vmax.f32 %v3551, %v3653
        %v3688 = vmax.f32 %v3552, %v3654
        %v3689 = vmax.f32 %v3553, %v3655
        %v3690 = vmax.f32 %v3554, %v3656
        %v3691 = vmax.f32 %v3555, %v3657
        %v3692 = vmax.f32 %v3556, %v3658
        %v3693 = vmax.f32 %v3557, %v3659
        %3694 = vst.msk [vmem:[#allocation4] sm:$0xff] %vm3418, %v3660
        %3695 = vst.msk [vmem:[#allocation4 + $0x8] sm:$0xff] %vm3418, %v3661
        %3696 = vst.msk [vmem:[#allocation4 + $0x10] sm:$0xff] %vm3418, %v3662
        %3697 = vst.msk [vmem:[#allocation4 + $0x18] sm:$0xff] %vm3418, %v3663
        %3698 = vst.msk [vmem:[#allocation4 + $0x20] sm:$0xff] %vm3418, %v3664
        %3699 = vst.msk [vmem:[#allocation4 + $0x28] sm:$0xff] %vm3418, %v3665
        %3700 = vst.msk [vmem:[#allocation4 + $0x30] sm:$0xff] %vm3418, %v3666
        %3701 = vst.msk [vmem:[#allocation4 + $0x38] sm:$0xff] %vm3418, %v3667
        %3702 = vst.msk [vmem:[#allocation4 + $0x40] sm:$0xff] %vm3418, %v3668
        %3703 = vst.msk [vmem:[#allocation4 + $0x48] sm:$0xff] %vm3418, %v3669
        %3704 = vst.msk [vmem:[#allocation4 + $0x50] sm:$0xff] %vm3418, %v3670
        %3705 = vst.msk [vmem:[#allocation4 + $0x58] sm:$0xff] %vm3418, %v3671
        %3706 = vst.msk [vmem:[#allocation4 + $0x60] sm:$0xff] %vm3418, %v3672
        %3707 = vst.msk [vmem:[#allocation4 + $0x68] sm:$0xff] %vm3418, %v3673
        %3708 = vst.msk [vmem:[#allocation4 + $0x70] sm:$0xff] %vm3418, %v3674
        %3709 = vst.msk [vmem:[#allocation4 + $0x78] sm:$0xff] %vm3418, %v3675
        %3710 = vst.msk [vmem:[#allocation4 + $0x80] sm:$0xff] %vm3418, %v3676
        %3711 = vst.msk [vmem:[#allocation4 + $0x88] sm:$0xff] %vm3418, %v3677
        %3712 = vst.msk [vmem:[#allocation4 + $0x90] sm:$0xff] %vm3418, %v3678
        %3713 = vst.msk [vmem:[#allocation4 + $0x98] sm:$0xff] %vm3418, %v3679
        %3714 = vst.msk [vmem:[#allocation4 + $0xa0] sm:$0xff] %vm3418, %v3680
        %3715 = vst.msk [vmem:[#allocation4 + $0xa8] sm:$0xff] %vm3418, %v3681
        %3716 = vst.msk [vmem:[#allocation4 + $0xb0] sm:$0xff] %vm3418, %v3682
        %3717 = vst.msk [vmem:[#allocation4 + $0xb8] sm:$0xff] %vm3418, %v3683
        %3718 = vst.msk [vmem:[#allocation4 + $0xc0] sm:$0xff] %vm3418, %v3684
        %3719 = vst.msk [vmem:[#allocation4 + $0xc8] sm:$0xff] %vm3418, %v3685
        %3720 = vst.msk [vmem:[#allocation4 + $0xd0] sm:$0xff] %vm3418, %v3686
        %3721 = vst.msk [vmem:[#allocation4 + $0xd8] sm:$0xff] %vm3418, %v3687
        %3722 = vst.msk [vmem:[#allocation4 + $0xe0] sm:$0xff] %vm3418, %v3688
        %3723 = vst.msk [vmem:[#allocation4 + $0xe8] sm:$0xff] %vm3418, %v3689
        %3724 = vst.msk [vmem:[#allocation4 + $0xf0] sm:$0xff] %vm3418, %v3690
        %3725 = vst.msk [vmem:[#allocation4 + $0xf8] sm:$0xff] %vm3418, %v3691
        %3726 = vst.msk [vmem:[#allocation4 + $0x100] sm:$0xff] %vm3418, %v3692
        %vm3727 = vcmask 256000
        %3728 = vst.msk [vmem:[#allocation4 + $0x108] sm:$0x7] %vm3727, %v3693
        %3729 = vst.msk [vmem:[#allocation5] sm:$0xff] %vm3418, 0.0
        %3730 = vst.msk [vmem:[#allocation5 + $0x8] sm:$0xff] %vm3418, 0.0
        %3731 = vst.msk [vmem:[#allocation5 + $0x10] sm:$0xff] %vm3418, 0.0
        %3732 = vst.msk [vmem:[#allocation5 + $0x18] sm:$0xff] %vm3418, 0.0
        %3733 = vst.msk [vmem:[#allocation5 + $0x20] sm:$0xff] %vm3418, 0.0
        %3734 = vst.msk [vmem:[#allocation5 + $0x28] sm:$0xff] %vm3418, 0.0
        %3735 = vst.msk [vmem:[#allocation5 + $0x30] sm:$0xff] %vm3418, 0.0
        %3736 = vst.msk [vmem:[#allocation5 + $0x38] sm:$0xff] %vm3418, 0.0
        %3737 = vst.msk [vmem:[#allocation5 + $0x40] sm:$0xff] %vm3418, 0.0
        %3738 = vst.msk [vmem:[#allocation5 + $0x48] sm:$0xff] %vm3418, 0.0
        %3739 = vst.msk [vmem:[#allocation5 + $0x50] sm:$0xff] %vm3418, 0.0
        %3740 = vst.msk [vmem:[#allocation5 + $0x58] sm:$0xff] %vm3418, 0.0
        %vm3741 = vcmask 257024
        %3742 = vst.msk [vmem:[#allocation5 + $0x60] sm:$0xf] %vm3741, 0.0
        %v3743 = vld [vmem:[#allocation4] ss:$2 sm:$0xff]
        %3744 = vst.msk [vmem:[#allocation5 + $0xb] sm:$0xff] %vm3418, %v3743
        %s3745 = scalar_lea.vmem [#allocation4], 36
        %v3746 = vld [vmem:[%s3745] ss:$2 sm:$0xff]
        %3747 = vst.msk [vmem:[#allocation5 + $0x15] sm:$0xff] %vm3418, %v3746
        %s3748 = scalar_lea.vmem [#allocation4], 72
        %v3749 = vld [vmem:[%s3748] ss:$2 sm:$0xff]
        %3750 = vst.msk [vmem:[#allocation5 + $0x1f] sm:$0xff] %vm3418, %v3749
        %s3751 = scalar_lea.vmem [#allocation4], 108
        %v3752 = vld [vmem:[%s3751] ss:$2 sm:$0xff]
        %3753 = vst.msk [vmem:[#allocation5 + $0x29] sm:$0xff] %vm3418, %v3752
        %s3754 = scalar_lea.vmem [#allocation4], 144
        %v3755 = vld [vmem:[%s3754] ss:$2 sm:$0xff]
        %3756 = vst.msk [vmem:[#allocation5 + $0x33] sm:$0xff] %vm3418, %v3755
        %s3757 = scalar_lea.vmem [#allocation4], 180
        %v3758 = vld [vmem:[%s3757] ss:$2 sm:$0xff]
        %3759 = vst.msk [vmem:[#allocation5 + $0x3d] sm:$0xff] %vm3418, %v3758
        %s3760 = scalar_lea.vmem [#allocation4], 216
        %v3761 = vld [vmem:[%s3760] ss:$2 sm:$0xff]
        %3762 = vst.msk [vmem:[#allocation5 + $0x47] sm:$0xff] %vm3418, %v3761
        %s3763 = scalar_lea.vmem [#allocation4], 252
        %v3764 = vld [vmem:[%s3763] ss:$2 sm:$0xff]
        %3765 = vst.msk [vmem:[#allocation5 + $0x51] sm:$0xff] %vm3418, %v3764
        %v3766 = vld [vmem:[#allocation5] sm:$0xff]
        %v3767 = vld [vmem:[#allocation5 + $0x8] sm:$0xff]
        %v3768 = vld [vmem:[#allocation5 + $0x10] sm:$0xff]
        %v3769 = vld [vmem:[#allocation5 + $0x18] sm:$0xff]
        %v3770 = vld [vmem:[#allocation5 + $0x20] sm:$0xff]
        %v3771 = vld [vmem:[#allocation5 + $0x28] sm:$0xff]
        %v3772 = vld [vmem:[#allocation5 + $0x30] sm:$0xff]
        %v3773 = vld [vmem:[#allocation5 + $0x38] sm:$0xff]
        %v3774 = vld [vmem:[#allocation5 + $0x40] sm:$0xff]
        %v3775 = vld [vmem:[#allocation5 + $0x48] sm:$0x3f]
        %v3776 = vpack.c.bf16 %v3767, %v3766
        %v3777 = vpack.c.bf16 %v3769, %v3768
        %v3778 = vpack.c.bf16 %v3771, %v3770
        %v3779 = vpack.c.bf16 %v3773, %v3772
        %v3780 = vpack.c.bf16 %v3775, %v3774
        %v3786 = vunpack.c.l.b16 %v3776
        %v3787 = vunpack.c.h.b16 %v3776
        %v3788 = vunpack.c.l.b16 %v3777
        %v3789 = vunpack.c.h.b16 %v3777
        %v3790 = vunpack.c.l.b16 %v3778
        %v3791 = vunpack.c.h.b16 %v3778
        %v3792 = vunpack.c.l.b16 %v3779
        %v3793 = vunpack.c.h.b16 %v3779
        %v3794 = vunpack.c.l.b16 %v3780
        %v3795 = vunpack.c.h.b16 %v3780
        %v3796 = vpack.c.b16 %v3786, %v3786
        %v3797 = vpack.c.b16 %v3787, %v3787
        %v3798 = vpack.c.b16 %v3788, %v3788
        %v3799 = vpack.c.b16 %v3789, %v3789
        %v3800 = vpack.c.b16 %v3790, %v3790
        %v3801 = vpack.c.b16 %v3791, %v3791
        %v3802 = vpack.c.b16 %v3792, %v3792
        %v3803 = vpack.c.b16 %v3793, %v3793
        %v3804 = vpack.c.b16 %v3794, %v3794
        %v3805 = vpack.c.b16 %v3795, %v3795
        %3816 = vst.msk [vmem:[#allocation6] sm:$0xf] %vm3741, %v3796
        %3817 = vst.msk [vmem:[#allocation6 + $0xc] sm:$0xf] %vm3741, %v3797
        %3818 = vst.msk [vmem:[#allocation6 + $0x18] sm:$0xf] %vm3741, %v3798
        %3819 = vst.msk [vmem:[#allocation6 + $0x24] sm:$0xf] %vm3741, %v3799
        %3820 = vst.msk [vmem:[#allocation6 + $0x30] sm:$0xf] %vm3741, %v3800
        %3821 = vst.msk [vmem:[#allocation6 + $0x3c] sm:$0xf] %vm3741, %v3801
        %3822 = vst.msk [vmem:[#allocation6 + $0x48] sm:$0xf] %vm3741, %v3802
        %3823 = vst.msk [vmem:[#allocation6 + $0x54] sm:$0xf] %vm3741, %v3803
        %3824 = vst.msk [vmem:[#allocation6 + $0x60] sm:$0xf] %vm3741, %v3804
        %3825 = vst.msk [vmem:[#allocation6 + $0x6c] sm:$0x7] %vm3727, %v3805
        %v3826 = vld [vmem:[#allocation5 + $0x1] sm:$0xff]
        %v3827 = vld [vmem:[#allocation5 + $0x9] sm:$0xff]
        %v3828 = vld [vmem:[#allocation5 + $0x11] sm:$0xff]
        %v3829 = vld [vmem:[#allocation5 + $0x19] sm:$0xff]
        %v3830 = vld [vmem:[#allocation5 + $0x21] sm:$0xff]
        %v3831 = vld [vmem:[#allocation5 + $0x29] sm:$0xff]
        %v3832 = vld [vmem:[#allocation5 + $0x31] sm:$0xff]
        %v3833 = vld [vmem:[#allocation5 + $0x39] sm:$0xff]
        %v3834 = vld [vmem:[#allocation5 + $0x41] sm:$0xff]
        %v3835 = vld [vmem:[#allocation5 + $0x49] sm:$0x3f]
        %v3836 = vpack.c.bf16 %v3827, %v3826
        %v3837 = vpack.c.bf16 %v3829, %v3828
        %v3838 = vpack.c.bf16 %v3831, %v3830
        %v3839 = vpack.c.bf16 %v3833, %v3832
        %v3840 = vpack.c.bf16 %v3835, %v3834
        %v3846 = vunpack.c.l.b16 %v3836
        %v3847 = vunpack.c.h.b16 %v3836
        %v3848 = vunpack.c.l.b16 %v3837
        %v3849 = vunpack.c.h.b16 %v3837
        %v3850 = vunpack.c.l.b16 %v3838
        %v3851 = vunpack.c.h.b16 %v3838
        %v3852 = vunpack.c.l.b16 %v3839
        %v3853 = vunpack.c.h.b16 %v3839
        %v3854 = vunpack.c.l.b16 %v3840
        %v3855 = vunpack.c.h.b16 %v3840
        %v3856 = vpack.c.b16 %v3846, %v3846
        %v3857 = vpack.c.b16 %v3847, %v3847
        %v3858 = vpack.c.b16 %v3848, %v3848
        %v3859 = vpack.c.b16 %v3849, %v3849
        %v3860 = vpack.c.b16 %v3850, %v3850
        %v3861 = vpack.c.b16 %v3851, %v3851
        %v3862 = vpack.c.b16 %v3852, %v3852
        %v3863 = vpack.c.b16 %v3853, %v3853
        %v3864 = vpack.c.b16 %v3854, %v3854
        %v3865 = vpack.c.b16 %v3855, %v3855
        %3866 = vrot.lane.b32.xlu0 %v3856, 32
        %v3867 = vpop.permute.xlu0 %3866
        %3868 = vrot.lane.b32.xlu0 %v3857, 32
        %v3869 = vpop.permute.xlu0 %3868
        %3870 = vrot.lane.b32.xlu0 %v3858, 32
        %v3871 = vpop.permute.xlu0 %3870
        %3872 = vrot.lane.b32.xlu0 %v3859, 32
        %v3873 = vpop.permute.xlu0 %3872
        %3874 = vrot.lane.b32.xlu0 %v3860, 32
        %v3875 = vpop.permute.xlu0 %3874
        %3876 = vrot.lane.b32.xlu0 %v3861, 32
        %v3877 = vpop.permute.xlu0 %3876
        %3878 = vrot.lane.b32.xlu0 %v3862, 32
        %v3879 = vpop.permute.xlu0 %3878
        %3880 = vrot.lane.b32.xlu0 %v3863, 32
        %v3881 = vpop.permute.xlu0 %3880
        %3882 = vrot.lane.b32.xlu0 %v3864, 32
        %v3883 = vpop.permute.xlu0 %3882
        %3884 = vrot.lane.b32.xlu0 %v3865, 32
        %v3885 = vpop.permute.xlu0 %3884
        %vm3896 = vcmask 519424
        %3897 = vst.msk [vmem:[#allocation6] sm:$0xf] %vm3896, %v3867
        %3898 = vst.msk [vmem:[#allocation6 + $0xc] sm:$0xf] %vm3896, %v3869
        %3899 = vst.msk [vmem:[#allocation6 + $0x18] sm:$0xf] %vm3896, %v3871
        %3900 = vst.msk [vmem:[#allocation6 + $0x24] sm:$0xf] %vm3896, %v3873
        %3901 = vst.msk [vmem:[#allocation6 + $0x30] sm:$0xf] %vm3896, %v3875
        %3902 = vst.msk [vmem:[#allocation6 + $0x3c] sm:$0xf] %vm3896, %v3877
        %3903 = vst.msk [vmem:[#allocation6 + $0x48] sm:$0xf] %vm3896, %v3879
        %3904 = vst.msk [vmem:[#allocation6 + $0x54] sm:$0xf] %vm3896, %v3881
        %3905 = vst.msk [vmem:[#allocation6 + $0x60] sm:$0xf] %vm3896, %v3883
        %vm3906 = vcmask 518400
        %3907 = vst.msk [vmem:[#allocation6 + $0x6c] sm:$0x7] %vm3906, %v3885
        %v3908 = vld [vmem:[#allocation5 + $0x2] sm:$0xff]
        %v3909 = vld [vmem:[#allocation5 + $0xa] sm:$0xff]
        %v3910 = vld [vmem:[#allocation5 + $0x12] sm:$0xff]
        %v3911 = vld [vmem:[#allocation5 + $0x1a] sm:$0xff]
        %v3912 = vld [vmem:[#allocation5 + $0x22] sm:$0xff]
        %v3913 = vld [vmem:[#allocation5 + $0x2a] sm:$0xff]
        %v3914 = vld [vmem:[#allocation5 + $0x32] sm:$0xff]
        %v3915 = vld [vmem:[#allocation5 + $0x3a] sm:$0xff]
        %v3916 = vld [vmem:[#allocation5 + $0x42] sm:$0xff]
        %v3917 = vld [vmem:[#allocation5 + $0x4a] sm:$0x3f]
        %v3918 = vpack.c.bf16 %v3909, %v3908
        %v3919 = vpack.c.bf16 %v3911, %v3910
        %v3920 = vpack.c.bf16 %v3913, %v3912
        %v3921 = vpack.c.bf16 %v3915, %v3914
        %v3922 = vpack.c.bf16 %v3917, %v3916
        %v3928 = vunpack.c.l.b16 %v3918
        %v3929 = vunpack.c.h.b16 %v3918
        %v3930 = vunpack.c.l.b16 %v3919
        %v3931 = vunpack.c.h.b16 %v3919
        %v3932 = vunpack.c.l.b16 %v3920
        %v3933 = vunpack.c.h.b16 %v3920
        %v3934 = vunpack.c.l.b16 %v3921
        %v3935 = vunpack.c.h.b16 %v3921
        %v3936 = vunpack.c.l.b16 %v3922
        %v3937 = vunpack.c.h.b16 %v3922
        %v3938 = vpack.c.b16 %v3928, %v3928
        %v3939 = vpack.c.b16 %v3929, %v3929
        %v3940 = vpack.c.b16 %v3930, %v3930
        %v3941 = vpack.c.b16 %v3931, %v3931
        %v3942 = vpack.c.b16 %v3932, %v3932
        %v3943 = vpack.c.b16 %v3933, %v3933
        %v3944 = vpack.c.b16 %v3934, %v3934
        %v3945 = vpack.c.b16 %v3935, %v3935
        %v3946 = vpack.c.b16 %v3936, %v3936
        %v3947 = vpack.c.b16 %v3937, %v3937
        %3948 = vrot.lane.b32.xlu0 %v3938, 64
        %v3949 = vpop.permute.xlu0 %3948
        %3950 = vrot.lane.b32.xlu0 %v3939, 64
        %v3951 = vpop.permute.xlu0 %3950
        %3952 = vrot.lane.b32.xlu0 %v3940, 64
        %v3953 = vpop.permute.xlu0 %3952
        %3954 = vrot.lane.b32.xlu0 %v3941, 64
        %v3955 = vpop.permute.xlu0 %3954
        %3956 = vrot.lane.b32.xlu0 %v3942, 64
        %v3957 = vpop.permute.xlu0 %3956
        %3958 = vrot.lane.b32.xlu0 %v3943, 64
        %v3959 = vpop.permute.xlu0 %3958
        %3960 = vrot.lane.b32.xlu0 %v3944, 64
        %v3961 = vpop.permute.xlu0 %3960
        %3962 = vrot.lane.b32.xlu0 %v3945, 64
        %v3963 = vpop.permute.xlu0 %3962
        %3964 = vrot.lane.b32.xlu0 %v3946, 64
        %v3965 = vpop.permute.xlu0 %3964
        %3966 = vrot.lane.b32.xlu0 %v3947, 64
        %v3967 = vpop.permute.xlu0 %3966
        %vm3978 = vcmask 781824
        %3979 = vst.msk [vmem:[#allocation6] sm:$0xf] %vm3978, %v3949
        %3980 = vst.msk [vmem:[#allocation6 + $0xc] sm:$0xf] %vm3978, %v3951
        %3981 = vst.msk [vmem:[#allocation6 + $0x18] sm:$0xf] %vm3978, %v3953
        %3982 = vst.msk [vmem:[#allocation6 + $0x24] sm:$0xf] %vm3978, %v3955
        %3983 = vst.msk [vmem:[#allocation6 + $0x30] sm:$0xf] %vm3978, %v3957
        %3984 = vst.msk [vmem:[#allocation6 + $0x3c] sm:$0xf] %vm3978, %v3959
        %3985 = vst.msk [vmem:[#allocation6 + $0x48] sm:$0xf] %vm3978, %v3961
        %3986 = vst.msk [vmem:[#allocation6 + $0x54] sm:$0xf] %vm3978, %v3963
        %3987 = vst.msk [vmem:[#allocation6 + $0x60] sm:$0xf] %vm3978, %v3965
        %vm3988 = vcmask 780800
        %3989 = vst.msk [vmem:[#allocation6 + $0x6c] sm:$0x7] %vm3988, %v3967
        %v3990 = vld [vmem:[#allocation5 + $0xa] sm:$0xff]
        %v3991 = vld [vmem:[#allocation5 + $0x12] sm:$0xff]
        %v3992 = vld [vmem:[#allocation5 + $0x1a] sm:$0xff]
        %v3993 = vld [vmem:[#allocation5 + $0x22] sm:$0xff]
        %v3994 = vld [vmem:[#allocation5 + $0x2a] sm:$0xff]
        %v3995 = vld [vmem:[#allocation5 + $0x32] sm:$0xff]
        %v3996 = vld [vmem:[#allocation5 + $0x3a] sm:$0xff]
        %v3997 = vld [vmem:[#allocation5 + $0x42] sm:$0xff]
        %v3998 = vld [vmem:[#allocation5 + $0x4a] sm:$0xff]
        %v3999 = vld [vmem:[#allocation5 + $0x52] sm:$0x3f]
        %v4000 = vpack.c.bf16 %v3991, %v3990
        %v4001 = vpack.c.bf16 %v3993, %v3992
        %v4002 = vpack.c.bf16 %v3995, %v3994
        %v4003 = vpack.c.bf16 %v3997, %v3996
        %v4004 = vpack.c.bf16 %v3999, %v3998
        %v4010 = vunpack.c.l.b16 %v4000
        %v4011 = vunpack.c.h.b16 %v4000
        %v4012 = vunpack.c.l.b16 %v4001
        %v4013 = vunpack.c.h.b16 %v4001
        %v4014 = vunpack.c.l.b16 %v4002
        %v4015 = vunpack.c.h.b16 %v4002
        %v4016 = vunpack.c.l.b16 %v4003
        %v4017 = vunpack.c.h.b16 %v4003
        %v4018 = vunpack.c.l.b16 %v4004
        %v4019 = vunpack.c.h.b16 %v4004
        %v4020 = vpack.c.b16 %v4010, %v4010
        %v4021 = vpack.c.b16 %v4011, %v4011
        %v4022 = vpack.c.b16 %v4012, %v4012
        %v4023 = vpack.c.b16 %v4013, %v4013
        %v4024 = vpack.c.b16 %v4014, %v4014
        %v4025 = vpack.c.b16 %v4015, %v4015
        %v4026 = vpack.c.b16 %v4016, %v4016
        %v4027 = vpack.c.b16 %v4017, %v4017
        %v4028 = vpack.c.b16 %v4018, %v4018
        %v4029 = vpack.c.b16 %v4019, %v4019
        %4030 = vrot.lane.b32.xlu0 %v4020, 96
        %v4031 = vpop.permute.xlu0 %4030
        %4032 = vrot.lane.b32.xlu0 %v4021, 96
        %v4033 = vpop.permute.xlu0 %4032
        %4034 = vrot.lane.b32.xlu0 %v4022, 96
        %v4035 = vpop.permute.xlu0 %4034
        %4036 = vrot.lane.b32.xlu0 %v4023, 96
        %v4037 = vpop.permute.xlu0 %4036
        %4038 = vrot.lane.b32.xlu0 %v4024, 96
        %v4039 = vpop.permute.xlu0 %4038
        %4040 = vrot.lane.b32.xlu0 %v4025, 96
        %v4041 = vpop.permute.xlu0 %4040
        %4042 = vrot.lane.b32.xlu0 %v4026, 96
        %v4043 = vpop.permute.xlu0 %4042
        %4044 = vrot.lane.b32.xlu0 %v4027, 96
        %v4045 = vpop.permute.xlu0 %4044
        %4046 = vrot.lane.b32.xlu0 %v4028, 96
        %v4047 = vpop.permute.xlu0 %4046
        %4048 = vrot.lane.b32.xlu0 %v4029, 96
        %v4049 = vpop.permute.xlu0 %4048
        %vm4060 = vcmask 1044224
        %4061 = vst.msk [vmem:[#allocation6] sm:$0xf] %vm4060, %v4031
        %4062 = vst.msk [vmem:[#allocation6 + $0xc] sm:$0xf] %vm4060, %v4033
        %4063 = vst.msk [vmem:[#allocation6 + $0x18] sm:$0xf] %vm4060, %v4035
        %4064 = vst.msk [vmem:[#allocation6 + $0x24] sm:$0xf] %vm4060, %v4037
        %4065 = vst.msk [vmem:[#allocation6 + $0x30] sm:$0xf] %vm4060, %v4039
        %4066 = vst.msk [vmem:[#allocation6 + $0x3c] sm:$0xf] %vm4060, %v4041
        %4067 = vst.msk [vmem:[#allocation6 + $0x48] sm:$0xf] %vm4060, %v4043
        %4068 = vst.msk [vmem:[#allocation6 + $0x54] sm:$0xf] %vm4060, %v4045
        %4069 = vst.msk [vmem:[#allocation6 + $0x60] sm:$0xf] %vm4060, %v4047
        %vm4070 = vcmask 1043200
        %4071 = vst.msk [vmem:[#allocation6 + $0x6c] sm:$0x7] %vm4070, %v4049
        %v4072 = vld [vmem:[#allocation5 + $0xb] sm:$0xff]
        %v4073 = vld [vmem:[#allocation5 + $0x13] sm:$0xff]
        %v4074 = vld [vmem:[#allocation5 + $0x1b] sm:$0xff]
        %v4075 = vld [vmem:[#allocation5 + $0x23] sm:$0xff]
        %v4076 = vld [vmem:[#allocation5 + $0x2b] sm:$0xff]
        %v4077 = vld [vmem:[#allocation5 + $0x33] sm:$0xff]
        %v4078 = vld [vmem:[#allocation5 + $0x3b] sm:$0xff]
        %v4079 = vld [vmem:[#allocation5 + $0x43] sm:$0xff]
        %v4080 = vld [vmem:[#allocation5 + $0x4b] sm:$0xff]
        %v4081 = vld [vmem:[#allocation5 + $0x53] sm:$0x3f]
        %v4082 = vpack.c.bf16 %v4073, %v4072
        %v4083 = vpack.c.bf16 %v4075, %v4074
        %v4084 = vpack.c.bf16 %v4077, %v4076
        %v4085 = vpack.c.bf16 %v4079, %v4078
        %v4086 = vpack.c.bf16 %v4081, %v4080
        %v4092 = vunpack.c.l.b16 %v4082
        %v4093 = vunpack.c.h.b16 %v4082
        %v4094 = vunpack.c.l.b16 %v4083
        %v4095 = vunpack.c.h.b16 %v4083
        %v4096 = vunpack.c.l.b16 %v4084
        %v4097 = vunpack.c.h.b16 %v4084
        %v4098 = vunpack.c.l.b16 %v4085
        %v4099 = vunpack.c.h.b16 %v4085
        %v4100 = vunpack.c.l.b16 %v4086
        %v4101 = vunpack.c.h.b16 %v4086
        %v4102 = vpack.c.b16 %v4092, %v4092
        %v4103 = vpack.c.b16 %v4093, %v4093
        %v4104 = vpack.c.b16 %v4094, %v4094
        %v4105 = vpack.c.b16 %v4095, %v4095
        %v4106 = vpack.c.b16 %v4096, %v4096
        %v4107 = vpack.c.b16 %v4097, %v4097
        %v4108 = vpack.c.b16 %v4098, %v4098
        %v4109 = vpack.c.b16 %v4099, %v4099
        %v4110 = vpack.c.b16 %v4100, %v4100
        %v4111 = vpack.c.b16 %v4101, %v4101
        %4122 = vst.msk [vmem:[#allocation6 + $0x4] sm:$0xf] %vm3741, %v4102
        %4123 = vst.msk [vmem:[#allocation6 + $0x10] sm:$0xf] %vm3741, %v4103
        %4124 = vst.msk [vmem:[#allocation6 + $0x1c] sm:$0xf] %vm3741, %v4104
        %4125 = vst.msk [vmem:[#allocation6 + $0x28] sm:$0xf] %vm3741, %v4105
        %4126 = vst.msk [vmem:[#allocation6 + $0x34] sm:$0xf] %vm3741, %v4106
        %4127 = vst.msk [vmem:[#allocation6 + $0x40] sm:$0xf] %vm3741, %v4107
        %4128 = vst.msk [vmem:[#allocation6 + $0x4c] sm:$0xf] %vm3741, %v4108
        %4129 = vst.msk [vmem:[#allocation6 + $0x58] sm:$0xf] %vm3741, %v4109
        %4130 = vst.msk [vmem:[#allocation6 + $0x64] sm:$0xf] %vm3741, %v4110
        %4131 = vst.msk [vmem:[#allocation6 + $0x70] sm:$0x7] %vm3727, %v4111
        %v4132 = vld [vmem:[#allocation5 + $0xc] sm:$0xff]
        %v4133 = vld [vmem:[#allocation5 + $0x14] sm:$0xff]
        %v4134 = vld [vmem:[#allocation5 + $0x1c] sm:$0xff]
        %v4135 = vld [vmem:[#allocation5 + $0x24] sm:$0xff]
        %v4136 = vld [vmem:[#allocation5 + $0x2c] sm:$0xff]
        %v4137 = vld [vmem:[#allocation5 + $0x34] sm:$0xff]
        %v4138 = vld [vmem:[#allocation5 + $0x3c] sm:$0xff]
        %v4139 = vld [vmem:[#allocation5 + $0x44] sm:$0xff]
        %v4140 = vld [vmem:[#allocation5 + $0x4c] sm:$0xff]
        %v4141 = vld [vmem:[#allocation5 + $0x54] sm:$0x3f]
        %v4142 = vpack.c.bf16 %v4133, %v4132
        %v4143 = vpack.c.bf16 %v4135, %v4134
        %v4144 = vpack.c.bf16 %v4137, %v4136
        %v4145 = vpack.c.bf16 %v4139, %v4138
        %v4146 = vpack.c.bf16 %v4141, %v4140
        %v4152 = vunpack.c.l.b16 %v4142
        %v4153 = vunpack.c.h.b16 %v4142
        %v4154 = vunpack.c.l.b16 %v4143
        %v4155 = vunpack.c.h.b16 %v4143
        %v4156 = vunpack.c.l.b16 %v4144
        %v4157 = vunpack.c.h.b16 %v4144
        %v4158 = vunpack.c.l.b16 %v4145
        %v4159 = vunpack.c.h.b16 %v4145
        %v4160 = vunpack.c.l.b16 %v4146
        %v4161 = vunpack.c.h.b16 %v4146
        %v4162 = vpack.c.b16 %v4152, %v4152
        %v4163 = vpack.c.b16 %v4153, %v4153
        %v4164 = vpack.c.b16 %v4154, %v4154
        %v4165 = vpack.c.b16 %v4155, %v4155
        %v4166 = vpack.c.b16 %v4156, %v4156
        %v4167 = vpack.c.b16 %v4157, %v4157
        %v4168 = vpack.c.b16 %v4158, %v4158
        %v4169 = vpack.c.b16 %v4159, %v4159
        %v4170 = vpack.c.b16 %v4160, %v4160
        %v4171 = vpack.c.b16 %v4161, %v4161
        %4172 = vrot.lane.b32.xlu0 %v4162, 32
        %v4173 = vpop.permute.xlu0 %4172
        %4174 = vrot.lane.b32.xlu0 %v4163, 32
        %v4175 = vpop.permute.xlu0 %4174
        %4176 = vrot.lane.b32.xlu0 %v4164, 32
        %v4177 = vpop.permute.xlu0 %4176
        %4178 = vrot.lane.b32.xlu0 %v4165, 32
        %v4179 = vpop.permute.xlu0 %4178
        %4180 = vrot.lane.b32.xlu0 %v4166, 32
        %v4181 = vpop.permute.xlu0 %4180
        %4182 = vrot.lane.b32.xlu0 %v4167, 32
        %v4183 = vpop.permute.xlu0 %4182
        %4184 = vrot.lane.b32.xlu0 %v4168, 32
        %v4185 = vpop.permute.xlu0 %4184
        %4186 = vrot.lane.b32.xlu0 %v4169, 32
        %v4187 = vpop.permute.xlu0 %4186
        %4188 = vrot.lane.b32.xlu0 %v4170, 32
        %v4189 = vpop.permute.xlu0 %4188
        %4190 = vrot.lane.b32.xlu0 %v4171, 32
        %v4191 = vpop.permute.xlu0 %4190
        %4202 = vst.msk [vmem:[#allocation6 + $0x4] sm:$0xf] %vm3896, %v4173
        %4203 = vst.msk [vmem:[#allocation6 + $0x10] sm:$0xf] %vm3896, %v4175
        %4204 = vst.msk [vmem:[#allocation6 + $0x1c] sm:$0xf] %vm3896, %v4177
        %4205 = vst.msk [vmem:[#allocation6 + $0x28] sm:$0xf] %vm3896, %v4179
        %4206 = vst.msk [vmem:[#allocation6 + $0x34] sm:$0xf] %vm3896, %v4181
        %4207 = vst.msk [vmem:[#allocation6 + $0x40] sm:$0xf] %vm3896, %v4183
        %4208 = vst.msk [vmem:[#allocation6 + $0x4c] sm:$0xf] %vm3896, %v4185
        %4209 = vst.msk [vmem:[#allocation6 + $0x58] sm:$0xf] %vm3896, %v4187
        %4210 = vst.msk [vmem:[#allocation6 + $0x64] sm:$0xf] %vm3896, %v4189
        %4211 = vst.msk [vmem:[#allocation6 + $0x70] sm:$0x7] %vm3906, %v4191
        %v4212 = vld [vmem:[#allocation5 + $0x14] sm:$0xff]
        %v4213 = vld [vmem:[#allocation5 + $0x1c] sm:$0xff]
        %v4214 = vld [vmem:[#allocation5 + $0x24] sm:$0xff]
        %v4215 = vld [vmem:[#allocation5 + $0x2c] sm:$0xff]
        %v4216 = vld [vmem:[#allocation5 + $0x34] sm:$0xff]
        %v4217 = vld [vmem:[#allocation5 + $0x3c] sm:$0xff]
        %v4218 = vld [vmem:[#allocation5 + $0x44] sm:$0xff]
        %v4219 = vld [vmem:[#allocation5 + $0x4c] sm:$0xff]
        %v4220 = vld [vmem:[#allocation5 + $0x54] sm:$0xff]
        %v4221 = vld [vmem:[#allocation5 + $0x5c] sm:$0x3f]
        %v4222 = vpack.c.bf16 %v4213, %v4212
        %v4223 = vpack.c.bf16 %v4215, %v4214
        %v4224 = vpack.c.bf16 %v4217, %v4216
        %v4225 = vpack.c.bf16 %v4219, %v4218
        %v4226 = vpack.c.bf16 %v4221, %v4220
        %v4232 = vunpack.c.l.b16 %v4222
        %v4233 = vunpack.c.h.b16 %v4222
        %v4234 = vunpack.c.l.b16 %v4223
        %v4235 = vunpack.c.h.b16 %v4223
        %v4236 = vunpack.c.l.b16 %v4224
        %v4237 = vunpack.c.h.b16 %v4224
        %v4238 = vunpack.c.l.b16 %v4225
        %v4239 = vunpack.c.h.b16 %v4225
        %v4240 = vunpack.c.l.b16 %v4226
        %v4241 = vunpack.c.h.b16 %v4226
        %v4242 = vpack.c.b16 %v4232, %v4232
        %v4243 = vpack.c.b16 %v4233, %v4233
        %v4244 = vpack.c.b16 %v4234, %v4234
        %v4245 = vpack.c.b16 %v4235, %v4235
        %v4246 = vpack.c.b16 %v4236, %v4236
        %v4247 = vpack.c.b16 %v4237, %v4237
        %v4248 = vpack.c.b16 %v4238, %v4238
        %v4249 = vpack.c.b16 %v4239, %v4239
        %v4250 = vpack.c.b16 %v4240, %v4240
        %v4251 = vpack.c.b16 %v4241, %v4241
        %4252 = vrot.lane.b32.xlu0 %v4242, 64
        %v4253 = vpop.permute.xlu0 %4252
        %4254 = vrot.lane.b32.xlu0 %v4243, 64
        %v4255 = vpop.permute.xlu0 %4254
        %4256 = vrot.lane.b32.xlu0 %v4244, 64
        %v4257 = vpop.permute.xlu0 %4256
        %4258 = vrot.lane.b32.xlu0 %v4245, 64
        %v4259 = vpop.permute.xlu0 %4258
        %4260 = vrot.lane.b32.xlu0 %v4246, 64
        %v4261 = vpop.permute.xlu0 %4260
        %4262 = vrot.lane.b32.xlu0 %v4247, 64
        %v4263 = vpop.permute.xlu0 %4262
        %4264 = vrot.lane.b32.xlu0 %v4248, 64
        %v4265 = vpop.permute.xlu0 %4264
        %4266 = vrot.lane.b32.xlu0 %v4249, 64
        %v4267 = vpop.permute.xlu0 %4266
        %4268 = vrot.lane.b32.xlu0 %v4250, 64
        %v4269 = vpop.permute.xlu0 %4268
        %4270 = vrot.lane.b32.xlu0 %v4251, 64
        %v4271 = vpop.permute.xlu0 %4270
        %4282 = vst.msk [vmem:[#allocation6 + $0x4] sm:$0xf] %vm3978, %v4253
        %4283 = vst.msk [vmem:[#allocation6 + $0x10] sm:$0xf] %vm3978, %v4255
        %4284 = vst.msk [vmem:[#allocation6 + $0x1c] sm:$0xf] %vm3978, %v4257
        %4285 = vst.msk [vmem:[#allocation6 + $0x28] sm:$0xf] %vm3978, %v4259
        %4286 = vst.msk [vmem:[#allocation6 + $0x34] sm:$0xf] %vm3978, %v4261
        %4287 = vst.msk [vmem:[#allocation6 + $0x40] sm:$0xf] %vm3978, %v4263
        %4288 = vst.msk [vmem:[#allocation6 + $0x4c] sm:$0xf] %vm3978, %v4265
        %4289 = vst.msk [vmem:[#allocation6 + $0x58] sm:$0xf] %vm3978, %v4267
        %4290 = vst.msk [vmem:[#allocation6 + $0x64] sm:$0xf] %vm3978, %v4269
        %4291 = vst.msk [vmem:[#allocation6 + $0x70] sm:$0x7] %vm3988, %v4271
        %v4292 = vld [vmem:[#allocation5 + $0x15] sm:$0xff]
        %v4293 = vld [vmem:[#allocation5 + $0x1d] sm:$0xff]
        %v4294 = vld [vmem:[#allocation5 + $0x25] sm:$0xff]
        %v4295 = vld [vmem:[#allocation5 + $0x2d] sm:$0xff]
        %v4296 = vld [vmem:[#allocation5 + $0x35] sm:$0xff]
        %v4297 = vld [vmem:[#allocation5 + $0x3d] sm:$0xff]
        %v4298 = vld [vmem:[#allocation5 + $0x45] sm:$0xff]
        %v4299 = vld [vmem:[#allocation5 + $0x4d] sm:$0xff]
        %v4300 = vld [vmem:[#allocation5 + $0x55] sm:$0xff]
        %v4301 = vld [vmem:[#allocation5 + $0x5d] sm:$0x3f]
        %v4302 = vpack.c.bf16 %v4293, %v4292
        %v4303 = vpack.c.bf16 %v4295, %v4294
        %v4304 = vpack.c.bf16 %v4297, %v4296
        %v4305 = vpack.c.bf16 %v4299, %v4298
        %v4306 = vpack.c.bf16 %v4301, %v4300
        %v4312 = vunpack.c.l.b16 %v4302
        %v4313 = vunpack.c.h.b16 %v4302
        %v4314 = vunpack.c.l.b16 %v4303
        %v4315 = vunpack.c.h.b16 %v4303
        %v4316 = vunpack.c.l.b16 %v4304
        %v4317 = vunpack.c.h.b16 %v4304
        %v4318 = vunpack.c.l.b16 %v4305
        %v4319 = vunpack.c.h.b16 %v4305
        %v4320 = vunpack.c.l.b16 %v4306
        %v4321 = vunpack.c.h.b16 %v4306
        %v4322 = vpack.c.b16 %v4312, %v4312
        %v4323 = vpack.c.b16 %v4313, %v4313
        %v4324 = vpack.c.b16 %v4314, %v4314
        %v4325 = vpack.c.b16 %v4315, %v4315
        %v4326 = vpack.c.b16 %v4316, %v4316
        %v4327 = vpack.c.b16 %v4317, %v4317
        %v4328 = vpack.c.b16 %v4318, %v4318
        %v4329 = vpack.c.b16 %v4319, %v4319
        %v4330 = vpack.c.b16 %v4320, %v4320
        %v4331 = vpack.c.b16 %v4321, %v4321
        %4332 = vrot.lane.b32.xlu0 %v4322, 96
        %v4333 = vpop.permute.xlu0 %4332
        %4334 = vrot.lane.b32.xlu0 %v4323, 96
        %v4335 = vpop.permute.xlu0 %4334
        %4336 = vrot.lane.b32.xlu0 %v4324, 96
        %v4337 = vpop.permute.xlu0 %4336
        %4338 = vrot.lane.b32.xlu0 %v4325, 96
        %v4339 = vpop.permute.xlu0 %4338
        %4340 = vrot.lane.b32.xlu0 %v4326, 96
        %v4341 = vpop.permute.xlu0 %4340
        %4342 = vrot.lane.b32.xlu0 %v4327, 96
        %v4343 = vpop.permute.xlu0 %4342
        %4344 = vrot.lane.b32.xlu0 %v4328, 96
        %v4345 = vpop.permute.xlu0 %4344
        %4346 = vrot.lane.b32.xlu0 %v4329, 96
        %v4347 = vpop.permute.xlu0 %4346
        %4348 = vrot.lane.b32.xlu0 %v4330, 96
        %v4349 = vpop.permute.xlu0 %4348
        %4350 = vrot.lane.b32.xlu0 %v4331, 96
        %v4351 = vpop.permute.xlu0 %4350
        %4362 = vst.msk [vmem:[#allocation6 + $0x4] sm:$0xf] %vm4060, %v4333
        %4363 = vst.msk [vmem:[#allocation6 + $0x10] sm:$0xf] %vm4060, %v4335
        %4364 = vst.msk [vmem:[#allocation6 + $0x1c] sm:$0xf] %vm4060, %v4337
        %4365 = vst.msk [vmem:[#allocation6 + $0x28] sm:$0xf] %vm4060, %v4339
        %4366 = vst.msk [vmem:[#allocation6 + $0x34] sm:$0xf] %vm4060, %v4341
        %4367 = vst.msk [vmem:[#allocation6 + $0x40] sm:$0xf] %vm4060, %v4343
        %4368 = vst.msk [vmem:[#allocation6 + $0x4c] sm:$0xf] %vm4060, %v4345
        %4369 = vst.msk [vmem:[#allocation6 + $0x58] sm:$0xf] %vm4060, %v4347
        %4370 = vst.msk [vmem:[#allocation6 + $0x64] sm:$0xf] %vm4060, %v4349
        %4371 = vst.msk [vmem:[#allocation6 + $0x70] sm:$0x7] %vm4070, %v4351
        %v4372 = vld [vmem:[#allocation5 + $0x16] sm:$0xff]
        %v4373 = vld [vmem:[#allocation5 + $0x1e] sm:$0xff]
        %v4374 = vld [vmem:[#allocation5 + $0x26] sm:$0xff]
        %v4375 = vld [vmem:[#allocation5 + $0x2e] sm:$0xff]
        %v4376 = vld [vmem:[#allocation5 + $0x36] sm:$0xff]
        %v4377 = vld [vmem:[#allocation5 + $0x3e] sm:$0xff]
        %v4378 = vld [vmem:[#allocation5 + $0x46] sm:$0xff]
        %v4379 = vld [vmem:[#allocation5 + $0x4e] sm:$0xff]
        %v4380 = vld [vmem:[#allocation5 + $0x56] sm:$0xff]
        %v4381 = vld [vmem:[#allocation5 + $0x5e] sm:$0x3f]
        %v4382 = vpack.c.bf16 %v4373, %v4372
        %v4383 = vpack.c.bf16 %v4375, %v4374
        %v4384 = vpack.c.bf16 %v4377, %v4376
        %v4385 = vpack.c.bf16 %v4379, %v4378
        %v4386 = vpack.c.bf16 %v4381, %v4380
        %v4392 = vunpack.c.l.b16 %v4382
        %v4393 = vunpack.c.h.b16 %v4382
        %v4394 = vunpack.c.l.b16 %v4383
        %v4395 = vunpack.c.h.b16 %v4383
        %v4396 = vunpack.c.l.b16 %v4384
        %v4397 = vunpack.c.h.b16 %v4384
        %v4398 = vunpack.c.l.b16 %v4385
        %v4399 = vunpack.c.h.b16 %v4385
        %v4400 = vunpack.c.l.b16 %v4386
        %v4401 = vunpack.c.h.b16 %v4386
        %v4402 = vpack.c.b16 %v4392, %v4392
        %v4403 = vpack.c.b16 %v4393, %v4393
        %v4404 = vpack.c.b16 %v4394, %v4394
        %v4405 = vpack.c.b16 %v4395, %v4395
        %v4406 = vpack.c.b16 %v4396, %v4396
        %v4407 = vpack.c.b16 %v4397, %v4397
        %v4408 = vpack.c.b16 %v4398, %v4398
        %v4409 = vpack.c.b16 %v4399, %v4399
        %v4410 = vpack.c.b16 %v4400, %v4400
        %v4411 = vpack.c.b16 %v4401, %v4401
        %4422 = vst.msk [vmem:[#allocation6 + $0x8] sm:$0xf] %vm3741, %v4402
        %4423 = vst.msk [vmem:[#allocation6 + $0x14] sm:$0xf] %vm3741, %v4403
        %4424 = vst.msk [vmem:[#allocation6 + $0x20] sm:$0xf] %vm3741, %v4404
        %4425 = vst.msk [vmem:[#allocation6 + $0x2c] sm:$0xf] %vm3741, %v4405
        %4426 = vst.msk [vmem:[#allocation6 + $0x38] sm:$0xf] %vm3741, %v4406
        %4427 = vst.msk [vmem:[#allocation6 + $0x44] sm:$0xf] %vm3741, %v4407
        %4428 = vst.msk [vmem:[#allocation6 + $0x50] sm:$0xf] %vm3741, %v4408
        %4429 = vst.msk [vmem:[#allocation6 + $0x5c] sm:$0xf] %vm3741, %v4409
        %4430 = vst.msk [vmem:[#allocation6 + $0x68] sm:$0xf] %vm3741, %v4410
        %4431 = vst.msk [vmem:[#allocation6 + $0x74] sm:$0x7] %vm3727, %v4411
        %v4432 = vld [vmem:[#allocation6] sm:$0xff]
        %v4433 = vld [vmem:[#allocation6 + $0x8] sm:$0xf]
        %v4434 = vld [vmem:[#allocation6 + $0xc] sm:$0xff]
        %v4435 = vld [vmem:[#allocation6 + $0x14] sm:$0xf]
        %v4436 = vld [vmem:[#allocation6 + $0x18] sm:$0xff]
        %v4437 = vld [vmem:[#allocation6 + $0x20] sm:$0xf]
        %v4438 = vld [vmem:[#allocation6 + $0x24] sm:$0xff]
        %v4439 = vld [vmem:[#allocation6 + $0x2c] sm:$0xf]
        %v4440 = vld [vmem:[#allocation6 + $0x30] sm:$0xff]
        %v4441 = vld [vmem:[#allocation6 + $0x38] sm:$0xf]
        %v4442 = vld [vmem:[#allocation6 + $0x3c] sm:$0xff]
        %v4443 = vld [vmem:[#allocation6 + $0x44] sm:$0xf]
        %v4444 = vld [vmem:[#allocation6 + $0x48] sm:$0xff]
        %v4445 = vld [vmem:[#allocation6 + $0x50] sm:$0xf]
        %v4446 = vld [vmem:[#allocation6 + $0x54] sm:$0xff]
        %v4447 = vld [vmem:[#allocation6 + $0x5c] sm:$0xf]
        %v4448 = vld [vmem:[#allocation6 + $0x60] sm:$0xff]
        %v4449 = vld [vmem:[#allocation6 + $0x68] sm:$0xf]
        %v4450 = vld [vmem:[#allocation6 + $0x6c] sm:$0x77]
        %v4451 = vld [vmem:[#allocation6 + $0x74] sm:$0x7]
        %v4452 = vld [vmem:[%s3] sm:$0xf]
        %v4453 = vld [vmem:[%s3 + $0x4] sm:$0xf]
        %v4454 = vld [vmem:[%s3 + $0x8] sm:$0xf]
        %v4455 = vld [vmem:[%s3 + $0xc] sm:$0xf]
        %v4456 = vld [vmem:[%s3 + $0x10] sm:$0xf]
        %v4457 = vld [vmem:[%s3 + $0x14] sm:$0xf]
        %v4458 = vld [vmem:[%s3 + $0x18] sm:$0xf]
        %v4459 = vld [vmem:[%s3 + $0x1c] sm:$0xf]
        %v4460 = vld [vmem:[%s3 + $0x20] sm:$0xf]
        %v4461 = vld [vmem:[%s3 + $0x24] sm:$0xf]
        %v4462 = vld [vmem:[%s3 + $0x28] sm:$0xf]
        %v4463 = vld [vmem:[%s3 + $0x2c] sm:$0xf]
        %v4464 = vld [vmem:[%s3 + $0x30] sm:$0xf]
        %v4465 = vld [vmem:[%s3 + $0x34] sm:$0xf]
        %v4466 = vld [vmem:[%s3 + $0x38] sm:$0xf]
        %v4467 = vld [vmem:[%s3 + $0x3c] sm:$0xf]
        %v4468 = vld [vmem:[%s3 + $0x40] sm:$0xf]
        %v4469 = vld [vmem:[%s3 + $0x44] sm:$0xf]
        %v4470 = vld [vmem:[%s3 + $0x48] sm:$0xf]
        %v4471 = vld [vmem:[%s3 + $0x4c] sm:$0xf]
        %v4472 = vld [vmem:[%s3 + $0x50] sm:$0xf]
        %v4473 = vld [vmem:[%s3 + $0x54] sm:$0xf]
        %v4474 = vld [vmem:[%s3 + $0x58] sm:$0xf]
        %v4475 = vld [vmem:[%s3 + $0x5c] sm:$0xf]
        %v4476 = vld [vmem:[%s3 + $0x60] sm:$0xf]
        %v4477 = vld [vmem:[%s3 + $0x64] sm:$0xf]
        %v4478 = vld [vmem:[%s3 + $0x68] sm:$0xf]
        %v4479 = vld [vmem:[%s3 + $0x6c] sm:$0xf]
        %v4480 = vld [vmem:[%s3 + $0x70] sm:$0xf]
        %v4481 = vld [vmem:[%s3 + $0x74] sm:$0xf]
        %v4482 = vld [vmem:[%s3 + $0x78] sm:$0xf]
        %v4483 = vld [vmem:[%s3 + $0x7c] sm:$0xf]
        %v4484 = vld [vmem:[%s3 + $0x80] sm:$0xf]
        %v4485 = vld [vmem:[%s3 + $0x84] sm:$0xf]
        %v4486 = vld [vmem:[%s3 + $0x88] sm:$0xf]
        %v4487 = vld [vmem:[%s3 + $0x8c] sm:$0xf]
        %v4488 = vld [vmem:[%s4] sm:$0x1]
        %v4490 = vlaneseq
        %v4491 = vshrl.u32 %v4490, 7
        %v4492 = vsub.s32 0, %v4491
        %v4493 = vrot.slane %v4488, %v4492
        %v4515 = vunpack.c.l.b16 %v4432
        %v4516 = vunpack.c.h.b16 %v4432
        %v4517 = vunpack.c.l.b16 %v4433
        %v4518 = vunpack.c.l.b16 %v4434
        %v4519 = vunpack.c.h.b16 %v4434
        %v4520 = vunpack.c.l.b16 %v4435
        %v4521 = vunpack.c.l.b16 %v4436
        %v4522 = vunpack.c.h.b16 %v4436
        %v4523 = vunpack.c.l.b16 %v4437
        %v4524 = vunpack.c.l.b16 %v4438
        %v4525 = vunpack.c.h.b16 %v4438
        %v4526 = vunpack.c.l.b16 %v4439
        %v4527 = vunpack.c.l.b16 %v4440
        %v4528 = vunpack.c.h.b16 %v4440
        %v4529 = vunpack.c.l.b16 %v4441
        %v4530 = vunpack.c.l.b16 %v4442
        %v4531 = vunpack.c.h.b16 %v4442
        %v4532 = vunpack.c.l.b16 %v4443
        %v4533 = vunpack.c.l.b16 %v4444
        %v4534 = vunpack.c.h.b16 %v4444
        %v4535 = vunpack.c.l.b16 %v4445
        %v4536 = vunpack.c.l.b16 %v4446
        %v4537 = vunpack.c.h.b16 %v4446
        %v4538 = vunpack.c.l.b16 %v4447
        %v4539 = vunpack.c.l.b16 %v4448
        %v4540 = vunpack.c.h.b16 %v4448
        %v4541 = vunpack.c.l.b16 %v4449
        %v4542 = vunpack.c.l.b16 %v4450
        %v4543 = vunpack.c.h.b16 %v4450
        %v4544 = vunpack.c.l.b16 %v4451
        %v4545 = vpack.c.b16 %v4518, %v4515
        %v4546 = vpack.c.b16 %v4519, %v4516
        %v4547 = vpack.c.b16 %v4520, %v4517
        %v4548 = vpack.c.b16 %v4524, %v4521
        %v4549 = vpack.c.b16 %v4525, %v4522
        %v4550 = vpack.c.b16 %v4526, %v4523
        %v4551 = vpack.c.b16 %v4530, %v4527
        %v4552 = vpack.c.b16 %v4531, %v4528
        %v4553 = vpack.c.b16 %v4532, %v4529
        %v4554 = vpack.c.b16 %v4536, %v4533
        %v4555 = vpack.c.b16 %v4537, %v4534
        %v4556 = vpack.c.b16 %v4538, %v4535
        %v4557 = vpack.c.b16 %v4542, %v4539
        %v4558 = vpack.c.b16 %v4543, %v4540
        %v4559 = vpack.c.b16 %v4544, %v4541
        %v4606 = vunpack.c.l.b16 %v4452
        %v4607 = vunpack.c.l.b16 %v4453
        %v4608 = vunpack.c.l.b16 %v4454
        %v4609 = vunpack.c.l.b16 %v4455
        %v4610 = vunpack.c.l.b16 %v4456
        %v4611 = vunpack.c.l.b16 %v4457
        %v4612 = vunpack.c.l.b16 %v4458
        %v4613 = vunpack.c.l.b16 %v4459
        %v4614 = vunpack.c.l.b16 %v4460
        %v4615 = vunpack.c.l.b16 %v4461
        %v4616 = vunpack.c.l.b16 %v4462
        %v4617 = vunpack.c.l.b16 %v4463
        %v4618 = vunpack.c.l.b16 %v4464
        %v4619 = vunpack.c.l.b16 %v4465
        %v4620 = vunpack.c.l.b16 %v4466
        %v4621 = vunpack.c.l.b16 %v4467
        %v4622 = vunpack.c.l.b16 %v4468
        %v4623 = vunpack.c.l.b16 %v4469
        %v4624 = vunpack.c.l.b16 %v4470
        %v4625 = vunpack.c.l.b16 %v4471
        %v4626 = vunpack.c.l.b16 %v4472
        %v4627 = vunpack.c.l.b16 %v4473
        %v4628 = vunpack.c.l.b16 %v4474
        %v4629 = vunpack.c.l.b16 %v4475
        %v4630 = vunpack.c.l.b16 %v4476
        %v4631 = vunpack.c.l.b16 %v4477
        %v4632 = vunpack.c.l.b16 %v4478
        %v4633 = vunpack.c.l.b16 %v4479
        %v4634 = vunpack.c.l.b16 %v4480
        %v4635 = vunpack.c.l.b16 %v4481
        %v4636 = vunpack.c.l.b16 %v4482
        %v4637 = vunpack.c.l.b16 %v4483
        %v4638 = vunpack.c.l.b16 %v4484
        %v4639 = vunpack.c.l.b16 %v4485
        %v4640 = vunpack.c.l.b16 %v4486
        %v4641 = vunpack.c.l.b16 %v4487
        %v4642 = vpack.c.b16 %v4607, %v4606
        %v4643 = vpack.c.b16 %v4609, %v4608
        %v4644 = vpack.c.b16 %v4611, %v4610
        %v4645 = vpack.c.b16 %v4613, %v4612
        %v4646 = vpack.c.b16 %v4615, %v4614
        %v4647 = vpack.c.b16 %v4617, %v4616
        %v4648 = vpack.c.b16 %v4619, %v4618
        %v4649 = vpack.c.b16 %v4621, %v4620
        %v4650 = vpack.c.b16 %v4623, %v4622
        %v4651 = vpack.c.b16 %v4625, %v4624
        %v4652 = vpack.c.b16 %v4627, %v4626
        %v4653 = vpack.c.b16 %v4629, %v4628
        %v4654 = vpack.c.b16 %v4631, %v4630
        %v4655 = vpack.c.b16 %v4633, %v4632
        %v4656 = vpack.c.b16 %v4635, %v4634
        %v4657 = vpack.c.b16 %v4637, %v4636
        %v4658 = vpack.c.b16 %v4639, %v4638
        %v4659 = vpack.c.b16 %v4641, %v4640
        %v4679 = vsel %vm3418, %v4547, 0
        %v4682 = vsel %vm3418, %v4550, 0
        %v4685 = vsel %vm3418, %v4553, 0
        %v4688 = vsel %vm3418, %v4556, 0
        %v4691 = vsel %vm3418, %v4559, 0
        %4693 = vmatprep.subr.bf16.mxu0 0
        %4694 = vmatpush1.bf16.msra.mxu0 %v4642
        %4695 = vmatprep.subr.bf16.mxu0 0
        %4696 = vmatpush1.bf16.msra.mxu0 %v4643
        %4697 = vmatprep.subr.bf16.mxu0 0
        %4698 = vmatpush1.bf16.msra.mxu0 %v4644
        %4699 = vmatprep.subr.bf16.mxu0 0
        %4700 = vmatpush1.bf16.msra.mxu0 %v4645
        %4701 = vmatprep.subr.bf16.mxu0 0
        %4702 = vmatpush1.bf16.msra.mxu0 %v4646
        %4703 = vmatprep.subr.bf16.mxu0 0
        %4704 = vmatpush1.bf16.msra.mxu0 %v4647
        %4705 = vmatprep.subr.bf16.mxu0 0
        %4706 = vmatpush1.bf16.msra.mxu0 %v4648
        %4707 = vmatprep.subr.bf16.mxu0 0
        %4708 = vmatpush1.bf16.msra.mxu0 %v4649
        %4709 = vmatprep.subr.bf16.mxu0 0
        %4710 = vmatpush1.bf16.msra.mxu0 %v4650
        %4711 = vmatprep.subr.bf16.mxu0 0
        %4712 = vmatpush1.bf16.msra.mxu0 %v4651
        %4713 = vmatprep.subr.bf16.mxu0 0
        %4714 = vmatpush1.bf16.msra.mxu0 %v4652
        %4715 = vmatprep.subr.bf16.mxu0 0
        %4716 = vmatpush1.bf16.msra.mxu0 %v4653
        %4717 = vmatprep.subr.bf16.mxu0 0
        %4718 = vmatpush1.bf16.msra.mxu0 %v4654
        %4719 = vmatprep.subr.bf16.mxu0 0
        %4720 = vmatpush1.bf16.msra.mxu0 %v4655
        %4721 = vmatprep.subr.bf16.mxu0 0
        %4722 = vmatpush1.bf16.msra.mxu0 %v4656
        %4723 = vmatprep.subr.bf16.mxu0 0
        %4724 = vmatpush1.bf16.msra.mxu0 %v4657
        %4725 = vmatprep.mubr.bf16.mxu0 %v4546
        %4726 = vmatmul.mubr.bf16.gmra.mrb[0].mxu0 %v4545
        %v4727 = vpop.f32.mrb[0].mxu0
        %v4728 = vadd.f32 %v4493, %v4727
        %v4729 = vpop.f32.mrb[0].mxu0
        %v4730 = vpop.f32.mrb[0].mxu0
        %v4731 = vadd.f32 %v4493, %v4730
        %v4732 = vpop.f32.mrb[0].mxu0
        %4733 = vmatprep.mubr.bf16.mxu0 %v4549
        %4734 = vmatmul.mubr.bf16.gmra.mrb[0].mxu0 %v4548
        %v4735 = vpop.f32.mrb[0].mxu0
        %v4736 = vadd.f32 %v4493, %v4735
        %v4737 = vpop.f32.mrb[0].mxu0
        %v4738 = vpop.f32.mrb[0].mxu0
        %v4739 = vadd.f32 %v4493, %v4738
        %v4740 = vpop.f32.mrb[0].mxu0
        %4741 = vmatprep.mubr.bf16.mxu0 %v4552
        %4742 = vmatmul.mubr.bf16.gmra.mrb[0].mxu0 %v4551
        %v4743 = vpop.f32.mrb[0].mxu0
        %v4744 = vadd.f32 %v4493, %v4743
        %v4745 = vpop.f32.mrb[0].mxu0
        %v4746 = vpop.f32.mrb[0].mxu0
        %v4747 = vadd.f32 %v4493, %v4746
        %v4748 = vpop.f32.mrb[0].mxu0
        %4749 = vmatprep.mubr.bf16.mxu0 %v4555
        %4750 = vmatmul.mubr.bf16.gmra.mrb[0].mxu0 %v4554
        %v4751 = vpop.f32.mrb[0].mxu0
        %v4752 = vadd.f32 %v4493, %v4751
        %v4753 = vpop.f32.mrb[0].mxu0
        %v4754 = vpop.f32.mrb[0].mxu0
        %v4755 = vadd.f32 %v4493, %v4754
        %v4756 = vpop.f32.mrb[0].mxu0
        %4757 = vmatprep.mubr.bf16.mxu0 %v4558
        %4758 = vmatmul.mubr.bf16.gmra.mrb[0].mxu0 %v4557
        %v4759 = vpop.f32.mrb[0].mxu0
        %v4760 = vadd.f32 %v4493, %v4759
        %v4761 = vpop.f32.mrb[0].mxu0
        %v4762 = vpop.f32.mrb[0].mxu0
        %v4763 = vadd.f32 %v4493, %v4762
        %v4764 = vpop.f32.mrb[0].mxu0
        %4765 = vdwg.mxu0
        %4766 = vmatprep.subr.bf16.mxu0 0
        %4767 = vmatpush1.bf16.msra.mxu0 %v4658
        %4768 = vmatprep.subr.bf16.mxu0 0
        %4769 = vmatpush1.bf16.msra.mxu0 %v4659
        %4770 = vmatprep.subr.bf16.mxu0 0
        %4771 = vmatpush1.bf16.msra.mxu0 0
        %4772 = vmatprep.subr.bf16.mxu0 0
        %4773 = vmatpush1.bf16.msra.mxu0 0
        %4774 = vmatprep.subr.bf16.mxu0 0
        %4775 = vmatpush1.bf16.msra.mxu0 0
        %4776 = vmatprep.subr.bf16.mxu0 0
        %4777 = vmatpush1.bf16.msra.mxu0 0
        %4778 = vmatprep.subr.bf16.mxu0 0
        %4779 = vmatpush1.bf16.msra.mxu0 0
        %4780 = vmatprep.subr.bf16.mxu0 0
        %4781 = vmatpush1.bf16.msra.mxu0 0
        %4782 = vmatprep.subr.bf16.mxu0 0
        %4783 = vmatpush1.bf16.msra.mxu0 0
        %4784 = vmatprep.subr.bf16.mxu0 0
        %4785 = vmatpush1.bf16.msra.mxu0 0
        %4786 = vmatprep.subr.bf16.mxu0 0
        %4787 = vmatpush1.bf16.msra.mxu0 0
        %4788 = vmatprep.subr.bf16.mxu0 0
        %4789 = vmatpush1.bf16.msra.mxu0 0
        %4790 = vmatprep.subr.bf16.mxu0 0
        %4791 = vmatpush1.bf16.msra.mxu0 0
        %4792 = vmatprep.subr.bf16.mxu0 0
        %4793 = vmatpush1.bf16.msra.mxu0 0
        %4794 = vmatprep.subr.bf16.mxu0 0
        %4795 = vmatpush1.bf16.msra.mxu0 0
        %4796 = vmatprep.subr.bf16.mxu0 0
        %4797 = vmatpush1.bf16.msra.mxu0 0
        %4798 = vmatprep.mubr.bf16.mxu0 0
        %4799 = vmatmul.mubr.bf16.gmra.mrb[0].mxu0 %v4679
        %v4800 = vpop.f32.mrb[0].mxu0
        %v4801 = vadd.f32 %v4728, %v4800
        %v4802 = vpop.f32.mrb[0].mxu0
        %v4803 = vpop.f32.mrb[0].mxu0
        %v4804 = vadd.f32 %v4731, %v4803
        %v4805 = vpop.f32.mrb[0].mxu0
        %4806 = vmatprep.mubr.bf16.mxu0 0
        %4807 = vmatmul.mubr.bf16.gmra.mrb[0].mxu0 %v4682
        %v4808 = vpop.f32.mrb[0].mxu0
        %v4809 = vadd.f32 %v4736, %v4808
        %v4810 = vpop.f32.mrb[0].mxu0
        %v4811 = vpop.f32.mrb[0].mxu0
        %v4812 = vadd.f32 %v4739, %v4811
        %v4813 = vpop.f32.mrb[0].mxu0
        %4814 = vmatprep.mubr.bf16.mxu0 0
        %4815 = vmatmul.mubr.bf16.gmra.mrb[0].mxu0 %v4685
        %v4816 = vpop.f32.mrb[0].mxu0
        %v4817 = vadd.f32 %v4744, %v4816
        %v4818 = vpop.f32.mrb[0].mxu0
        %v4819 = vpop.f32.mrb[0].mxu0
        %v4820 = vadd.f32 %v4747, %v4819
        %v4821 = vpop.f32.mrb[0].mxu0
        %4822 = vmatprep.mubr.bf16.mxu0 0
        %4823 = vmatmul.mubr.bf16.gmra.mrb[0].mxu0 %v4688
        %v4824 = vpop.f32.mrb[0].mxu0
        %v4825 = vadd.f32 %v4752, %v4824
        %v4826 = vpop.f32.mrb[0].mxu0
        %v4827 = vpop.f32.mrb[0].mxu0
        %v4828 = vadd.f32 %v4755, %v4827
        %v4829 = vpop.f32.mrb[0].mxu0
        %4830 = vmatprep.mubr.bf16.mxu0 0
        %4831 = vmatmul.mubr.bf16.gmra.mrb[0].mxu0 %v4691
        %v4832 = vpop.f32.mrb[0].mxu0
        %v4833 = vadd.f32 %v4760, %v4832
        %v4834 = vpop.f32.mrb[0].mxu0
        %v4835 = vpop.f32.mrb[0].mxu0
        %v4836 = vadd.f32 %v4763, %v4835
        %v4837 = vpop.f32.mrb[0].mxu0
        %4838 = vdwg.mxu0
        %v4839 = vmax.f32 %v4801, 0.0
        %v4840 = vmax.f32 %v4804, 0.0
        %v4841 = vmax.f32 %v4809, 0.0
        %v4842 = vmax.f32 %v4812, 0.0
        %v4843 = vmax.f32 %v4817, 0.0
        %v4844 = vmax.f32 %v4820, 0.0
        %v4845 = vmax.f32 %v4825, 0.0
        %v4846 = vmax.f32 %v4828, 0.0
        %v4847 = vmax.f32 %v4833, 0.0
        %v4848 = vmax.f32 %v4836, 0.0
        %vm4849 = vcmask 523264
        %4850 = vst.msk [vmem:[#allocation7] sm:$0xff] %vm4849, %v4839
        %4851 = vst.msk [vmem:[#allocation7 + $0x8] sm:$0xff] %vm4849, %v4840
        %4852 = vst.msk [vmem:[#allocation7 + $0x10] sm:$0xff] %vm4849, %v4841
        %4853 = vst.msk [vmem:[#allocation7 + $0x18] sm:$0xff] %vm4849, %v4842
        %4854 = vst.msk [vmem:[#allocation7 + $0x20] sm:$0xff] %vm4849, %v4843
        %4855 = vst.msk [vmem:[#allocation7 + $0x28] sm:$0xff] %vm4849, %v4844
        %4856 = vst.msk [vmem:[#allocation7 + $0x30] sm:$0xff] %vm4849, %v4845
        %4857 = vst.msk [vmem:[#allocation7 + $0x38] sm:$0xff] %vm4849, %v4846
        %4858 = vst.msk [vmem:[#allocation7 + $0x40] sm:$0xff] %vm4849, %v4847
        %vm4859 = vcmask 521216
        %4860 = vst.msk [vmem:[#allocation7 + $0x48] sm:$0x3f] %vm4859, %v4848
        %v4861 = vld [vmem:[#allocation7] sm:$0xff]
        %v4862 = vld [vmem:[#allocation7 + $0x8] sm:$0xff]
        %v4863 = vld [vmem:[#allocation7 + $0x10] sm:$0xff]
        %v4864 = vld [vmem:[#allocation7 + $0x18] sm:$0xff]
        %v4865 = vld [vmem:[#allocation7 + $0x20] sm:$0xff]
        %v4866 = vld [vmem:[#allocation7 + $0x28] sm:$0xff]
        %v4867 = vld [vmem:[#allocation7 + $0x30] sm:$0xff]
        %v4868 = vld [vmem:[#allocation7 + $0x38] sm:$0xff]
        %v4869 = vld [vmem:[#allocation7 + $0x40] sm:$0x7]
        %v4870 = vld [vmem:[#allocation7 + $0x1] sm:$0xff]
        %v4871 = vld [vmem:[#allocation7 + $0x9] sm:$0xff]
        %v4872 = vld [vmem:[#allocation7 + $0x11] sm:$0xff]
        %v4873 = vld [vmem:[#allocation7 + $0x19] sm:$0xff]
        %v4874 = vld [vmem:[#allocation7 + $0x21] sm:$0xff]
        %v4875 = vld [vmem:[#allocation7 + $0x29] sm:$0xff]
        %v4876 = vld [vmem:[#allocation7 + $0x31] sm:$0xff]
        %v4877 = vld [vmem:[#allocation7 + $0x39] sm:$0xff]
        %v4878 = vld [vmem:[#allocation7 + $0x41] sm:$0x7]
        %v4879 = vmax.f32 %v4861, %v4870
        %v4880 = vmax.f32 %v4862, %v4871
        %v4881 = vmax.f32 %v4863, %v4872
        %v4882 = vmax.f32 %v4864, %v4873
        %v4883 = vmax.f32 %v4865, %v4874
        %v4884 = vmax.f32 %v4866, %v4875
        %v4885 = vmax.f32 %v4867, %v4876
        %v4886 = vmax.f32 %v4868, %v4877
        %v4887 = vmax.f32 %v4869, %v4878
        %v4888 = vld [vmem:[#allocation7 + $0xa] sm:$0xff]
        %v4889 = vld [vmem:[#allocation7 + $0x12] sm:$0xff]
        %v4890 = vld [vmem:[#allocation7 + $0x1a] sm:$0xff]
        %v4891 = vld [vmem:[#allocation7 + $0x22] sm:$0xff]
        %v4892 = vld [vmem:[#allocation7 + $0x2a] sm:$0xff]
        %v4893 = vld [vmem:[#allocation7 + $0x32] sm:$0xff]
        %v4894 = vld [vmem:[#allocation7 + $0x3a] sm:$0xff]
        %v4895 = vld [vmem:[#allocation7 + $0x42] sm:$0xff]
        %v4896 = vld [vmem:[#allocation7 + $0x4a] sm:$0x7]
        %v4897 = vld [vmem:[#allocation7 + $0xb] sm:$0xff]
        %v4898 = vld [vmem:[#allocation7 + $0x13] sm:$0xff]
        %v4899 = vld [vmem:[#allocation7 + $0x1b] sm:$0xff]
        %v4900 = vld [vmem:[#allocation7 + $0x23] sm:$0xff]
        %v4901 = vld [vmem:[#allocation7 + $0x2b] sm:$0xff]
        %v4902 = vld [vmem:[#allocation7 + $0x33] sm:$0xff]
        %v4903 = vld [vmem:[#allocation7 + $0x3b] sm:$0xff]
        %v4904 = vld [vmem:[#allocation7 + $0x43] sm:$0xff]
        %v4905 = vld [vmem:[#allocation7 + $0x4b] sm:$0x7]
        %v4906 = vmax.f32 %v4888, %v4897
        %v4907 = vmax.f32 %v4889, %v4898
        %v4908 = vmax.f32 %v4890, %v4899
        %v4909 = vmax.f32 %v4891, %v4900
        %v4910 = vmax.f32 %v4892, %v4901
        %v4911 = vmax.f32 %v4893, %v4902
        %v4912 = vmax.f32 %v4894, %v4903
        %v4913 = vmax.f32 %v4895, %v4904
        %v4914 = vmax.f32 %v4896, %v4905
        %v4915 = vmax.f32 %v4879, %v4906
        %v4916 = vmax.f32 %v4880, %v4907
        %v4917 = vmax.f32 %v4881, %v4908
        %v4918 = vmax.f32 %v4882, %v4909
        %v4919 = vmax.f32 %v4883, %v4910
        %v4920 = vmax.f32 %v4884, %v4911
        %v4921 = vmax.f32 %v4885, %v4912
        %v4922 = vmax.f32 %v4886, %v4913
        %v4923 = vmax.f32 %v4887, %v4914
        %4924 = vst.msk [vmem:[#allocation8] sm:$0xff] %vm4849, %v4915
        %4925 = vst.msk [vmem:[#allocation8 + $0x8] sm:$0xff] %vm4849, %v4916
        %4926 = vst.msk [vmem:[#allocation8 + $0x10] sm:$0xff] %vm4849, %v4917
        %4927 = vst.msk [vmem:[#allocation8 + $0x18] sm:$0xff] %vm4849, %v4918
        %4928 = vst.msk [vmem:[#allocation8 + $0x20] sm:$0xff] %vm4849, %v4919
        %4929 = vst.msk [vmem:[#allocation8 + $0x28] sm:$0xff] %vm4849, %v4920
        %4930 = vst.msk [vmem:[#allocation8 + $0x30] sm:$0xff] %vm4849, %v4921
        %4931 = vst.msk [vmem:[#allocation8 + $0x38] sm:$0xff] %vm4849, %v4922
        %vm4932 = vcmask 518144
        %4933 = vst.msk [vmem:[#allocation8 + $0x40] sm:$0x7] %vm4932, %v4923
        %4934 = vst.msk [vmem:[#allocation9] sm:$0xff] %vm4849, 0.0
        %4935 = vst.msk [vmem:[#allocation9 + $0x8] sm:$0xff] %vm4849, 0.0
        %4936 = vst.msk [vmem:[#allocation9 + $0x10] sm:$0xff] %vm4849, 0.0
        %4937 = vst.msk [vmem:[#allocation9 + $0x18] sm:$0xff] %vm4849, 0.0
        %vm4938 = vcmask 519168
        %4939 = vst.msk [vmem:[#allocation9 + $0x20] sm:$0xf] %vm4938, 0.0
        %v4940 = vld [vmem:[#allocation8] ss:$2 sm:$0xf]
        %4941 = vst.msk [vmem:[#allocation9 + $0x7] sm:$0xf] %vm4938, %v4940
        %s4942 = scalar_lea.vmem [#allocation8], 20
        %v4943 = vld [vmem:[%s4942] ss:$2 sm:$0xf]
        %4944 = vst.msk [vmem:[#allocation9 + $0xd] sm:$0xf] %vm4938, %v4943
        %s4945 = scalar_lea.vmem [#allocation8], 40
        %v4946 = vld [vmem:[%s4945] ss:$2 sm:$0xf]
        %4947 = vst.msk [vmem:[#allocation9 + $0x13] sm:$0xf] %vm4938, %v4946
        %s4948 = scalar_lea.vmem [#allocation8], 60
        %v4949 = vld [vmem:[%s4948] ss:$2 sm:$0xf]
        %4950 = vst.msk [vmem:[#allocation9 + $0x19] sm:$0xf] %vm4938, %v4949
        %v4951 = vld [vmem:[#allocation9] sm:$0xff]
        %v4952 = vld [vmem:[#allocation9 + $0x8] sm:$0xff]
        %v4953 = vld [vmem:[#allocation9 + $0x10] sm:$0x3f]
        %v4954 = vpack.c.bf16 %v4952, %v4951
        %v4955 = vpack.c.bf16 %v4953, %v4953
        %v4958 = vunpack.c.l.b16 %v4954
        %v4959 = vunpack.c.h.b16 %v4954
        %v4960 = vunpack.c.l.b16 %v4955
        %v4961 = vpack.c.b16 %v4958, %v4958
        %v4962 = vpack.c.b16 %v4959, %v4959
        %v4963 = vpack.c.b16 %v4960, %v4960
        %4967 = vst.msk [vmem:[#allocation10] sm:$0xf] %vm4938, %v4961
        %4968 = vst.msk [vmem:[#allocation10 + $0x14] sm:$0xf] %vm4938, %v4962
        %4969 = vst.msk [vmem:[#allocation10 + $0x28] sm:$0x7] %vm4932, %v4963
        %v4970 = vld [vmem:[#allocation9 + $0x1] sm:$0xff]
        %v4971 = vld [vmem:[#allocation9 + $0x9] sm:$0xff]
        %v4972 = vld [vmem:[#allocation9 + $0x11] sm:$0x3f]
        %v4973 = vpack.c.bf16 %v4971, %v4970
        %v4974 = vpack.c.bf16 %v4972, %v4972
        %v4977 = vunpack.c.l.b16 %v4973
        %v4978 = vunpack.c.h.b16 %v4973
        %v4979 = vunpack.c.l.b16 %v4974
        %v4980 = vpack.c.b16 %v4977, %v4977
        %v4981 = vpack.c.b16 %v4978, %v4978
        %v4982 = vpack.c.b16 %v4979, %v4979
        %4983 = vrot.lane.b32.xlu0 %v4980, 64
        %v4984 = vpop.permute.xlu0 %4983
        %4985 = vrot.lane.b32.xlu0 %v4981, 64
        %v4986 = vpop.permute.xlu0 %4985
        %4987 = vrot.lane.b32.xlu0 %v4982, 64
        %v4988 = vpop.permute.xlu0 %4987
        %vm4992 = vcmask 1043968
        %4993 = vst.msk [vmem:[#allocation10] sm:$0xf] %vm4992, %v4984
        %4994 = vst.msk [vmem:[#allocation10 + $0x14] sm:$0xf] %vm4992, %v4986
        %vm4995 = vcmask 1042944
        %4996 = vst.msk [vmem:[#allocation10 + $0x28] sm:$0x7] %vm4995, %v4988
        %v4997 = vld [vmem:[#allocation9 + $0x2] sm:$0xff]
        %v4998 = vld [vmem:[#allocation9 + $0xa] sm:$0xff]
        %v4999 = vld [vmem:[#allocation9 + $0x12] sm:$0x3f]
        %v5000 = vpack.c.bf16 %v4998, %v4997
        %v5001 = vpack.c.bf16 %v4999, %v4999
        %v5004 = vunpack.c.l.b16 %v5000
        %v5005 = vunpack.c.h.b16 %v5000
        %v5006 = vunpack.c.l.b16 %v5001
        %v5007 = vpack.c.b16 %v5004, %v5004
        %v5008 = vpack.c.b16 %v5005, %v5005
        %v5009 = vpack.c.b16 %v5006, %v5006
        %5013 = vst.msk [vmem:[#allocation10 + $0x4] sm:$0xf] %vm4938, %v5007
        %5014 = vst.msk [vmem:[#allocation10 + $0x18] sm:$0xf] %vm4938, %v5008
        %5015 = vst.msk [vmem:[#allocation10 + $0x2c] sm:$0x7] %vm4932, %v5009
        %v5016 = vld [vmem:[#allocation9 + $0x6] sm:$0xff]
        %v5017 = vld [vmem:[#allocation9 + $0xe] sm:$0xff]
        %v5018 = vld [vmem:[#allocation9 + $0x16] sm:$0x3f]
        %v5019 = vpack.c.bf16 %v5017, %v5016
        %v5020 = vpack.c.bf16 %v5018, %v5018
        %v5023 = vunpack.c.l.b16 %v5019
        %v5024 = vunpack.c.h.b16 %v5019
        %v5025 = vunpack.c.l.b16 %v5020
        %v5026 = vpack.c.b16 %v5023, %v5023
        %v5027 = vpack.c.b16 %v5024, %v5024
        %v5028 = vpack.c.b16 %v5025, %v5025
        %5029 = vrot.lane.b32.xlu0 %v5026, 64
        %v5030 = vpop.permute.xlu0 %5029
        %5031 = vrot.lane.b32.xlu0 %v5027, 64
        %v5032 = vpop.permute.xlu0 %5031
        %5033 = vrot.lane.b32.xlu0 %v5028, 64
        %v5034 = vpop.permute.xlu0 %5033
        %5038 = vst.msk [vmem:[#allocation10 + $0x4] sm:$0xf] %vm4992, %v5030
        %5039 = vst.msk [vmem:[#allocation10 + $0x18] sm:$0xf] %vm4992, %v5032
        %5040 = vst.msk [vmem:[#allocation10 + $0x2c] sm:$0x7] %vm4995, %v5034
        %v5041 = vld [vmem:[#allocation9 + $0x7] sm:$0xff]
        %v5042 = vld [vmem:[#allocation9 + $0xf] sm:$0xff]
        %v5043 = vld [vmem:[#allocation9 + $0x17] sm:$0x3f]
        %v5044 = vpack.c.bf16 %v5042, %v5041
        %v5045 = vpack.c.bf16 %v5043, %v5043
        %v5048 = vunpack.c.l.b16 %v5044
        %v5049 = vunpack.c.h.b16 %v5044
        %v5050 = vunpack.c.l.b16 %v5045
        %v5051 = vpack.c.b16 %v5048, %v5048
        %v5052 = vpack.c.b16 %v5049, %v5049
        %v5053 = vpack.c.b16 %v5050, %v5050
        %5057 = vst.msk [vmem:[#allocation10 + $0x8] sm:$0xf] %vm4938, %v5051
        %5058 = vst.msk [vmem:[#allocation10 + $0x1c] sm:$0xf] %vm4938, %v5052
        %5059 = vst.msk [vmem:[#allocation10 + $0x30] sm:$0x7] %vm4932, %v5053
        %v5060 = vld [vmem:[#allocation9 + $0x8] sm:$0xff]
        %v5061 = vld [vmem:[#allocation9 + $0x10] sm:$0xff]
        %v5062 = vld [vmem:[#allocation9 + $0x18] sm:$0x3f]
        %v5063 = vpack.c.bf16 %v5061, %v5060
        %v5064 = vpack.c.bf16 %v5062, %v5062
        %v5067 = vunpack.c.l.b16 %v5063
        %v5068 = vunpack.c.h.b16 %v5063
        %v5069 = vunpack.c.l.b16 %v5064
        %v5070 = vpack.c.b16 %v5067, %v5067
        %v5071 = vpack.c.b16 %v5068, %v5068
        %v5072 = vpack.c.b16 %v5069, %v5069
        %5073 = vrot.lane.b32.xlu0 %v5070, 64
        %v5074 = vpop.permute.xlu0 %5073
        %5075 = vrot.lane.b32.xlu0 %v5071, 64
        %v5076 = vpop.permute.xlu0 %5075
        %5077 = vrot.lane.b32.xlu0 %v5072, 64
        %v5078 = vpop.permute.xlu0 %5077
        %5082 = vst.msk [vmem:[#allocation10 + $0x8] sm:$0xf] %vm4992, %v5074
        %5083 = vst.msk [vmem:[#allocation10 + $0x1c] sm:$0xf] %vm4992, %v5076
        %5084 = vst.msk [vmem:[#allocation10 + $0x30] sm:$0x7] %vm4995, %v5078
        %v5085 = vld [vmem:[#allocation9 + $0xc] sm:$0xff]
        %v5086 = vld [vmem:[#allocation9 + $0x14] sm:$0xff]
        %v5087 = vld [vmem:[#allocation9 + $0x1c] sm:$0x3f]
        %v5088 = vpack.c.bf16 %v5086, %v5085
        %v5089 = vpack.c.bf16 %v5087, %v5087
        %v5092 = vunpack.c.l.b16 %v5088
        %v5093 = vunpack.c.h.b16 %v5088
        %v5094 = vunpack.c.l.b16 %v5089
        %v5095 = vpack.c.b16 %v5092, %v5092
        %v5096 = vpack.c.b16 %v5093, %v5093
        %v5097 = vpack.c.b16 %v5094, %v5094
        %5101 = vst.msk [vmem:[#allocation10 + $0xc] sm:$0xf] %vm4938, %v5095
        %5102 = vst.msk [vmem:[#allocation10 + $0x20] sm:$0xf] %vm4938, %v5096
        %5103 = vst.msk [vmem:[#allocation10 + $0x34] sm:$0x7] %vm4932, %v5097
        %v5104 = vld [vmem:[#allocation9 + $0xd] sm:$0xff]
        %v5105 = vld [vmem:[#allocation9 + $0x15] sm:$0xff]
        %v5106 = vld [vmem:[#allocation9 + $0x1d] sm:$0x3f]
        %v5107 = vpack.c.bf16 %v5105, %v5104
        %v5108 = vpack.c.bf16 %v5106, %v5106
        %v5111 = vunpack.c.l.b16 %v5107
        %v5112 = vunpack.c.h.b16 %v5107
        %v5113 = vunpack.c.l.b16 %v5108
        %v5114 = vpack.c.b16 %v5111, %v5111
        %v5115 = vpack.c.b16 %v5112, %v5112
        %v5116 = vpack.c.b16 %v5113, %v5113
        %5117 = vrot.lane.b32.xlu0 %v5114, 64
        %v5118 = vpop.permute.xlu0 %5117
        %5119 = vrot.lane.b32.xlu0 %v5115, 64
        %v5120 = vpop.permute.xlu0 %5119
        %5121 = vrot.lane.b32.xlu0 %v5116, 64
        %v5122 = vpop.permute.xlu0 %5121
        %5126 = vst.msk [vmem:[#allocation10 + $0xc] sm:$0xf] %vm4992, %v5118
        %5127 = vst.msk [vmem:[#allocation10 + $0x20] sm:$0xf] %vm4992, %v5120
        %5128 = vst.msk [vmem:[#allocation10 + $0x34] sm:$0x7] %vm4995, %v5122
        %v5129 = vld [vmem:[#allocation9 + $0xe] sm:$0xff]
        %v5130 = vld [vmem:[#allocation9 + $0x16] sm:$0xff]
        %v5131 = vld [vmem:[#allocation9 + $0x1e] sm:$0x3f]
        %v5132 = vpack.c.bf16 %v5130, %v5129
        %v5133 = vpack.c.bf16 %v5131, %v5131
        %v5136 = vunpack.c.l.b16 %v5132
        %v5137 = vunpack.c.h.b16 %v5132
        %v5138 = vunpack.c.l.b16 %v5133
        %v5139 = vpack.c.b16 %v5136, %v5136
        %v5140 = vpack.c.b16 %v5137, %v5137
        %v5141 = vpack.c.b16 %v5138, %v5138
        %5145 = vst.msk [vmem:[#allocation10 + $0x10] sm:$0xf] %vm4938, %v5139
        %5146 = vst.msk [vmem:[#allocation10 + $0x24] sm:$0xf] %vm4938, %v5140
        %5147 = vst.msk [vmem:[#allocation10 + $0x38] sm:$0x7] %vm4932, %v5141
        %v5148 = vld [vmem:[#allocation10] sm:$0xff]
        %v5149 = vld [vmem:[#allocation10 + $0x8] sm:$0xff]
        %v5150 = vld [vmem:[#allocation10 + $0x10] sm:$0xf]
        %v5151 = vld [vmem:[#allocation10 + $0x14] sm:$0xff]
        %v5152 = vld [vmem:[#allocation10 + $0x1c] sm:$0xff]
        %v5153 = vld [vmem:[#allocation10 + $0x24] sm:$0xf]
        %v5154 = vld [vmem:[#allocation10 + $0x28] sm:$0x77]
        %v5155 = vld [vmem:[#allocation10 + $0x30] sm:$0x77]
        %v5156 = vld [vmem:[#allocation10 + $0x38] sm:$0x7]
        %v5157 = vld [vmem:[%s5] sm:$0xf]
        %v5158 = vld [vmem:[%s5 + $0x4] sm:$0xf]
        %v5159 = vld [vmem:[%s5 + $0x8] sm:$0xf]
        %v5160 = vld [vmem:[%s5 + $0xc] sm:$0xf]
        %v5161 = vld [vmem:[%s5 + $0x10] sm:$0xf]
        %v5162 = vld [vmem:[%s5 + $0x14] sm:$0xf]
        %v5163 = vld [vmem:[%s5 + $0x18] sm:$0xf]
        %v5164 = vld [vmem:[%s5 + $0x1c] sm:$0xf]
        %v5165 = vld [vmem:[%s5 + $0x20] sm:$0xf]
        %v5166 = vld [vmem:[%s5 + $0x24] sm:$0xf]
        %v5167 = vld [vmem:[%s5 + $0x28] sm:$0xf]
        %v5168 = vld [vmem:[%s5 + $0x2c] sm:$0xf]
        %v5169 = vld [vmem:[%s5 + $0x30] sm:$0xf]
        %v5170 = vld [vmem:[%s5 + $0x34] sm:$0xf]
        %v5171 = vld [vmem:[%s5 + $0x38] sm:$0xf]
        %v5172 = vld [vmem:[%s5 + $0x3c] sm:$0xf]
        %v5173 = vld [vmem:[%s5 + $0x40] sm:$0xf]
        %v5174 = vld [vmem:[%s5 + $0x44] sm:$0xf]
        %v5175 = vld [vmem:[%s5 + $0x48] sm:$0xf]
        %v5176 = vld [vmem:[%s5 + $0x4c] sm:$0xf]
        %v5177 = vld [vmem:[%s5 + $0x50] sm:$0xf]
        %v5178 = vld [vmem:[%s5 + $0x54] sm:$0xf]
        %v5179 = vld [vmem:[%s5 + $0x58] sm:$0xf]
        %v5180 = vld [vmem:[%s5 + $0x5c] sm:$0xf]
        %v5181 = vld [vmem:[%s5 + $0x60] sm:$0xf]
        %v5182 = vld [vmem:[%s5 + $0x64] sm:$0xf]
        %v5183 = vld [vmem:[%s5 + $0x68] sm:$0xf]
        %v5184 = vld [vmem:[%s5 + $0x6c] sm:$0xf]
        %v5185 = vld [vmem:[%s5 + $0x70] sm:$0xf]
        %v5186 = vld [vmem:[%s5 + $0x74] sm:$0xf]
        %v5187 = vld [vmem:[%s5 + $0x78] sm:$0xf]
        %v5188 = vld [vmem:[%s5 + $0x7c] sm:$0xf]
        %v5189 = vld [vmem:[%s5 + $0x80] sm:$0xf]
        %v5190 = vld [vmem:[%s5 + $0x84] sm:$0xf]
        %v5191 = vld [vmem:[%s5 + $0x88] sm:$0xf]
        %v5192 = vld [vmem:[%s5 + $0x8c] sm:$0xf]
        %v5193 = vld [vmem:[%s5 + $0x90] sm:$0xf]
        %v5194 = vld [vmem:[%s5 + $0x94] sm:$0xf]
        %v5195 = vld [vmem:[%s5 + $0x98] sm:$0xf]
        %v5196 = vld [vmem:[%s5 + $0x9c] sm:$0xf]
        %v5197 = vld [vmem:[%s5 + $0xa0] sm:$0xf]
        %v5198 = vld [vmem:[%s5 + $0xa4] sm:$0xf]
        %v5199 = vld [vmem:[%s5 + $0xa8] sm:$0xf]
        %v5200 = vld [vmem:[%s5 + $0xac] sm:$0xf]
        %v5201 = vld [vmem:[%s5 + $0xb0] sm:$0xf]
        %v5202 = vld [vmem:[%s5 + $0xb4] sm:$0xf]
        %v5203 = vld [vmem:[%s5 + $0xb8] sm:$0xf]
        %v5204 = vld [vmem:[%s5 + $0xbc] sm:$0xf]
        %v5205 = vld [vmem:[%s5 + $0xc0] sm:$0xf]
        %v5206 = vld [vmem:[%s5 + $0xc4] sm:$0xf]
        %v5207 = vld [vmem:[%s5 + $0xc8] sm:$0xf]
        %v5208 = vld [vmem:[%s5 + $0xcc] sm:$0xf]
        %v5209 = vld [vmem:[%s5 + $0xd0] sm:$0xf]
        %v5210 = vld [vmem:[%s5 + $0xd4] sm:$0xf]
        %v5211 = vld [vmem:[%s5 + $0xd8] sm:$0xf]
        %v5212 = vld [vmem:[%s5 + $0xdc] sm:$0xf]
        %v5213 = vld [vmem:[%s5 + $0xe0] sm:$0xf]
        %v5214 = vld [vmem:[%s5 + $0xe4] sm:$0xf]
        %v5215 = vld [vmem:[%s5 + $0xe8] sm:$0xf]
        %v5216 = vld [vmem:[%s5 + $0xec] sm:$0xf]
        %v5217 = vld [vmem:[%s5 + $0xf0] sm:$0xf]
        %v5218 = vld [vmem:[%s5 + $0xf4] sm:$0xf]
        %v5219 = vld [vmem:[%s5 + $0xf8] sm:$0xf]
        %v5220 = vld [vmem:[%s5 + $0xfc] sm:$0xf]
        %v5221 = vld [vmem:[%s5 + $0x100] sm:$0xf]
        %v5222 = vld [vmem:[%s5 + $0x104] sm:$0xf]
        %v5223 = vld [vmem:[%s5 + $0x108] sm:$0xf]
        %v5224 = vld [vmem:[%s5 + $0x10c] sm:$0xf]
        %v5225 = vld [vmem:[%s5 + $0x110] sm:$0xf]
        %v5226 = vld [vmem:[%s5 + $0x114] sm:$0xf]
        %v5227 = vld [vmem:[%s5 + $0x118] sm:$0xf]
        %v5228 = vld [vmem:[%s5 + $0x11c] sm:$0xf]
        %v5229 = vld [vmem:[%s6] sm:$0x1]
        %v5231 = vlaneseq
        %v5232 = vshrl.u32 %v5231, 7
        %v5233 = vsub.s32 0, %v5232
        %v5234 = vrot.slane %v5229, %v5233
        %v5245 = vunpack.c.l.b16 %v5148
        %v5246 = vunpack.c.h.b16 %v5148
        %v5247 = vunpack.c.l.b16 %v5149
        %v5248 = vunpack.c.h.b16 %v5149
        %v5249 = vunpack.c.l.b16 %v5150
        %v5250 = vunpack.c.l.b16 %v5151
        %v5251 = vunpack.c.h.b16 %v5151
        %v5252 = vunpack.c.l.b16 %v5152
        %v5253 = vunpack.c.h.b16 %v5152
        %v5254 = vunpack.c.l.b16 %v5153
        %v5255 = vunpack.c.l.b16 %v5154
        %v5256 = vunpack.c.h.b16 %v5154
        %v5257 = vunpack.c.l.b16 %v5155
        %v5258 = vunpack.c.h.b16 %v5155
        %v5259 = vunpack.c.l.b16 %v5156
        %v5260 = vpack.c.b16 %v5250, %v5245
        %v5261 = vpack.c.b16 %v5251, %v5246
        %v5262 = vpack.c.b16 %v5252, %v5247
        %v5263 = vpack.c.b16 %v5253, %v5248
        %v5264 = vpack.c.b16 %v5254, %v5249
        %v5265 = vpack.c.b16 %v5255, %v5255
        %v5266 = vpack.c.b16 %v5256, %v5256
        %v5267 = vpack.c.b16 %v5257, %v5257
        %v5268 = vpack.c.b16 %v5258, %v5258
        %v5269 = vpack.c.b16 %v5259, %v5259
        %v5350 = vunpack.c.l.b16 %v5157
        %v5351 = vunpack.c.l.b16 %v5158
        %v5352 = vunpack.c.l.b16 %v5159
        %v5353 = vunpack.c.l.b16 %v5160
        %v5354 = vunpack.c.l.b16 %v5161
        %v5355 = vunpack.c.l.b16 %v5162
        %v5356 = vunpack.c.l.b16 %v5163
        %v5357 = vunpack.c.l.b16 %v5164
        %v5358 = vunpack.c.l.b16 %v5165
        %v5359 = vunpack.c.l.b16 %v5166
        %v5360 = vunpack.c.l.b16 %v5167
        %v5361 = vunpack.c.l.b16 %v5168
        %v5362 = vunpack.c.l.b16 %v5169
        %v5363 = vunpack.c.l.b16 %v5170
        %v5364 = vunpack.c.l.b16 %v5171
        %v5365 = vunpack.c.l.b16 %v5172
        %v5366 = vunpack.c.l.b16 %v5173
        %v5367 = vunpack.c.l.b16 %v5174
        %v5368 = vunpack.c.l.b16 %v5175
        %v5369 = vunpack.c.l.b16 %v5176
        %v5370 = vunpack.c.l.b16 %v5177
        %v5371 = vunpack.c.l.b16 %v5178
        %v5372 = vunpack.c.l.b16 %v5179
        %v5373 = vunpack.c.l.b16 %v5180
        %v5374 = vunpack.c.l.b16 %v5181
        %v5375 = vunpack.c.l.b16 %v5182
        %v5376 = vunpack.c.l.b16 %v5183
        %v5377 = vunpack.c.l.b16 %v5184
        %v5378 = vunpack.c.l.b16 %v5185
        %v5379 = vunpack.c.l.b16 %v5186
        %v5380 = vunpack.c.l.b16 %v5187
        %v5381 = vunpack.c.l.b16 %v5188
        %v5382 = vunpack.c.l.b16 %v5189
        %v5383 = vunpack.c.l.b16 %v5190
        %v5384 = vunpack.c.l.b16 %v5191
        %v5385 = vunpack.c.l.b16 %v5192
        %v5386 = vunpack.c.l.b16 %v5193
        %v5387 = vunpack.c.l.b16 %v5194
        %v5388 = vunpack.c.l.b16 %v5195
        %v5389 = vunpack.c.l.b16 %v5196
        %v5390 = vunpack.c.l.b16 %v5197
        %v5391 = vunpack.c.l.b16 %v5198
        %v5392 = vunpack.c.l.b16 %v5199
        %v5393 = vunpack.c.l.b16 %v5200
        %v5394 = vunpack.c.l.b16 %v5201
        %v5395 = vunpack.c.l.b16 %v5202
        %v5396 = vunpack.c.l.b16 %v5203
        %v5397 = vunpack.c.l.b16 %v5204
        %v5398 = vunpack.c.l.b16 %v5205
        %v5399 = vunpack.c.l.b16 %v5206
        %v5400 = vunpack.c.l.b16 %v5207
        %v5401 = vunpack.c.l.b16 %v5208
        %v5402 = vunpack.c.l.b16 %v5209
        %v5403 = vunpack.c.l.b16 %v5210
        %v5404 = vunpack.c.l.b16 %v5211
        %v5405 = vunpack.c.l.b16 %v5212
        %v5406 = vunpack.c.l.b16 %v5213
        %v5407 = vunpack.c.l.b16 %v5214
        %v5408 = vunpack.c.l.b16 %v5215
        %v5409 = vunpack.c.l.b16 %v5216
        %v5410 = vunpack.c.l.b16 %v5217
        %v5411 = vunpack.c.l.b16 %v5218
        %v5412 = vunpack.c.l.b16 %v5219
        %v5413 = vunpack.c.l.b16 %v5220
        %v5414 = vunpack.c.l.b16 %v5221
        %v5415 = vunpack.c.l.b16 %v5222
        %v5416 = vunpack.c.l.b16 %v5223
        %v5417 = vunpack.c.l.b16 %v5224
        %v5418 = vunpack.c.l.b16 %v5225
        %v5419 = vunpack.c.l.b16 %v5226
        %v5420 = vunpack.c.l.b16 %v5227
        %v5421 = vunpack.c.l.b16 %v5228
        %v5422 = vpack.c.b16 %v5351, %v5350
        %v5423 = vpack.c.b16 %v5353, %v5352
        %v5424 = vpack.c.b16 %v5355, %v5354
        %v5425 = vpack.c.b16 %v5357, %v5356
        %v5426 = vpack.c.b16 %v5359, %v5358
        %v5427 = vpack.c.b16 %v5361, %v5360
        %v5428 = vpack.c.b16 %v5363, %v5362
        %v5429 = vpack.c.b16 %v5365, %v5364
        %v5430 = vpack.c.b16 %v5367, %v5366
        %v5431 = vpack.c.b16 %v5369, %v5368
        %v5432 = vpack.c.b16 %v5371, %v5370
        %v5433 = vpack.c.b16 %v5373, %v5372
        %v5434 = vpack.c.b16 %v5375, %v5374
        %v5435 = vpack.c.b16 %v5377, %v5376
        %v5436 = vpack.c.b16 %v5379, %v5378
        %v5437 = vpack.c.b16 %v5381, %v5380
        %v5438 = vpack.c.b16 %v5383, %v5382
        %v5439 = vpack.c.b16 %v5385, %v5384
        %v5440 = vpack.c.b16 %v5387, %v5386
        %v5441 = vpack.c.b16 %v5389, %v5388
        %v5442 = vpack.c.b16 %v5391, %v5390
        %v5443 = vpack.c.b16 %v5393, %v5392
        %v5444 = vpack.c.b16 %v5395, %v5394
        %v5445 = vpack.c.b16 %v5397, %v5396
        %v5446 = vpack.c.b16 %v5399, %v5398
        %v5447 = vpack.c.b16 %v5401, %v5400
        %v5448 = vpack.c.b16 %v5403, %v5402
        %v5449 = vpack.c.b16 %v5405, %v5404
        %v5450 = vpack.c.b16 %v5407, %v5406
        %v5451 = vpack.c.b16 %v5409, %v5408
        %v5452 = vpack.c.b16 %v5411, %v5410
        %v5453 = vpack.c.b16 %v5413, %v5412
        %v5454 = vpack.c.b16 %v5415, %v5414
        %v5455 = vpack.c.b16 %v5417, %v5416
        %v5456 = vpack.c.b16 %v5419, %v5418
        %v5457 = vpack.c.b16 %v5421, %v5420
        %v5495 = vsel %vm4849, %v5264, 0
        %v5498 = vsel %vm4849, %v5269, 0
        %5500 = vmatprep.subr.bf16.mxu0 0
        %5501 = vmatpush1.bf16.msra.mxu0 %v5422
        %5502 = vmatprep.subr.bf16.mxu0 0
        %5503 = vmatpush1.bf16.msra.mxu0 %v5423
        %5504 = vmatprep.subr.bf16.mxu0 0
        %5505 = vmatpush1.bf16.msra.mxu0 %v5424
        %5506 = vmatprep.subr.bf16.mxu0 0
        %5507 = vmatpush1.bf16.msra.mxu0 %v5425
        %5508 = vmatprep.subr.bf16.mxu0 0
        %5509 = vmatpush1.bf16.msra.mxu0 %v5426
        %5510 = vmatprep.subr.bf16.mxu0 0
        %5511 = vmatpush1.bf16.msra.mxu0 %v5427
        %5512 = vmatprep.subr.bf16.mxu0 0
        %5513 = vmatpush1.bf16.msra.mxu0 %v5428
        %5514 = vmatprep.subr.bf16.mxu0 0
        %5515 = vmatpush1.bf16.msra.mxu0 %v5429
        %5516 = vmatprep.subr.bf16.mxu0 0
        %5517 = vmatpush1.bf16.msra.mxu0 %v5430
        %5518 = vmatprep.subr.bf16.mxu0 0
        %5519 = vmatpush1.bf16.msra.mxu0 %v5431
        %5520 = vmatprep.subr.bf16.mxu0 0
        %5521 = vmatpush1.bf16.msra.mxu0 %v5432
        %5522 = vmatprep.subr.bf16.mxu0 0
        %5523 = vmatpush1.bf16.msra.mxu0 %v5433
        %5524 = vmatprep.subr.bf16.mxu0 0
        %5525 = vmatpush1.bf16.msra.mxu0 %v5434
        %5526 = vmatprep.subr.bf16.mxu0 0
        %5527 = vmatpush1.bf16.msra.mxu0 %v5435
        %5528 = vmatprep.subr.bf16.mxu0 0
        %5529 = vmatpush1.bf16.msra.mxu0 %v5436
        %5530 = vmatprep.subr.bf16.mxu0 0
        %5531 = vmatpush1.bf16.msra.mxu0 %v5437
        %5532 = vmatprep.mubr.bf16.mxu0 %v5261
        %5533 = vmatmul.mubr.bf16.gmra.mrb[0].mxu0 %v5260
        %v5534 = vpop.f32.mrb[0].mxu0
        %v5535 = vadd.f32 %v5234, %v5534
        %v5536 = vpop.f32.mrb[0].mxu0
        %v5537 = vpop.f32.mrb[0].mxu0
        %v5538 = vadd.f32 %v5234, %v5537
        %v5539 = vpop.f32.mrb[0].mxu0
        %5540 = vmatprep.mubr.bf16.mxu0 %v5266
        %5541 = vmatmul.mubr.bf16.gmra.mrb[0].mxu0 %v5265
        %v5542 = vpop.f32.mrb[0].mxu0
        %v5543 = vadd.f32 %v5234, %v5542
        %v5544 = vpop.f32.mrb[0].mxu0
        %v5545 = vpop.f32.mrb[0].mxu0
        %v5546 = vpop.f32.mrb[0].mxu0
        %5547 = vdwg.mxu0
        %5548 = vmatprep.subr.bf16.mxu0 0
        %5549 = vmatpush1.bf16.msra.mxu0 %v5438
        %5550 = vmatprep.subr.bf16.mxu0 0
        %5551 = vmatpush1.bf16.msra.mxu0 %v5439
        %5552 = vmatprep.subr.bf16.mxu0 0
        %5553 = vmatpush1.bf16.msra.mxu0 %v5440
        %5554 = vmatprep.subr.bf16.mxu0 0
        %5555 = vmatpush1.bf16.msra.mxu0 %v5441
        %5556 = vmatprep.subr.bf16.mxu0 0
        %5557 = vmatpush1.bf16.msra.mxu0 %v5442
        %5558 = vmatprep.subr.bf16.mxu0 0
        %5559 = vmatpush1.bf16.msra.mxu0 %v5443
        %5560 = vmatprep.subr.bf16.mxu0 0
        %5561 = vmatpush1.bf16.msra.mxu0 %v5444
        %5562 = vmatprep.subr.bf16.mxu0 0
        %5563 = vmatpush1.bf16.msra.mxu0 %v5445
        %5564 = vmatprep.subr.bf16.mxu0 0
        %5565 = vmatpush1.bf16.msra.mxu0 %v5446
        %5566 = vmatprep.subr.bf16.mxu0 0
        %5567 = vmatpush1.bf16.msra.mxu0 %v5447
        %5568 = vmatprep.subr.bf16.mxu0 0
        %5569 = vmatpush1.bf16.msra.mxu0 %v5448
        %5570 = vmatprep.subr.bf16.mxu0 0
        %5571 = vmatpush1.bf16.msra.mxu0 %v5449
        %5572 = vmatprep.subr.bf16.mxu0 0
        %5573 = vmatpush1.bf16.msra.mxu0 %v5450
        %5574 = vmatprep.subr.bf16.mxu0 0
        %5575 = vmatpush1.bf16.msra.mxu0 %v5451
        %5576 = vmatprep.subr.bf16.mxu0 0
        %5577 = vmatpush1.bf16.msra.mxu0 %v5452
        %5578 = vmatprep.subr.bf16.mxu0 0
        %5579 = vmatpush1.bf16.msra.mxu0 %v5453
        %5580 = vmatprep.mubr.bf16.mxu0 %v5263
        %5581 = vmatmul.mubr.bf16.gmra.mrb[0].mxu0 %v5262
        %v5582 = vpop.f32.mrb[0].mxu0
        %v5583 = vadd.f32 %v5535, %v5582
        %v5584 = vpop.f32.mrb[0].mxu0
        %v5585 = vpop.f32.mrb[0].mxu0
        %v5586 = vadd.f32 %v5538, %v5585
        %v5587 = vpop.f32.mrb[0].mxu0
        %5588 = vmatprep.mubr.bf16.mxu0 %v5268
        %5589 = vmatmul.mubr.bf16.gmra.mrb[0].mxu0 %v5267
        %v5590 = vpop.f32.mrb[0].mxu0
        %v5591 = vadd.f32 %v5543, %v5590
        %v5592 = vpop.f32.mrb[0].mxu0
        %v5593 = vpop.f32.mrb[0].mxu0
        %v5594 = vpop.f32.mrb[0].mxu0
        %5595 = vdwg.mxu0
        %5596 = vmatprep.subr.bf16.mxu0 0
        %5597 = vmatpush1.bf16.msra.mxu0 %v5454
        %5598 = vmatprep.subr.bf16.mxu0 0
        %5599 = vmatpush1.bf16.msra.mxu0 %v5455
        %5600 = vmatprep.subr.bf16.mxu0 0
        %5601 = vmatpush1.bf16.msra.mxu0 %v5456
        %5602 = vmatprep.subr.bf16.mxu0 0
        %5603 = vmatpush1.bf16.msra.mxu0 %v5457
        %5604 = vmatprep.subr.bf16.mxu0 0
        %5605 = vmatpush1.bf16.msra.mxu0 0
        %5606 = vmatprep.subr.bf16.mxu0 0
        %5607 = vmatpush1.bf16.msra.mxu0 0
        %5608 = vmatprep.subr.bf16.mxu0 0
        %5609 = vmatpush1.bf16.msra.mxu0 0
        %5610 = vmatprep.subr.bf16.mxu0 0
        %5611 = vmatpush1.bf16.msra.mxu0 0
        %5612 = vmatprep.subr.bf16.mxu0 0
        %5613 = vmatpush1.bf16.msra.mxu0 0
        %5614 = vmatprep.subr.bf16.mxu0 0
        %5615 = vmatpush1.bf16.msra.mxu0 0
        %5616 = vmatprep.subr.bf16.mxu0 0
        %5617 = vmatpush1.bf16.msra.mxu0 0
        %5618 = vmatprep.subr.bf16.mxu0 0
        %5619 = vmatpush1.bf16.msra.mxu0 0
        %5620 = vmatprep.subr.bf16.mxu0 0
        %5621 = vmatpush1.bf16.msra.mxu0 0
        %5622 = vmatprep.subr.bf16.mxu0 0
        %5623 = vmatpush1.bf16.msra.mxu0 0
        %5624 = vmatprep.subr.bf16.mxu0 0
        %5625 = vmatpush1.bf16.msra.mxu0 0
        %5626 = vmatprep.subr.bf16.mxu0 0
        %5627 = vmatpush1.bf16.msra.mxu0 0
        %5628 = vmatprep.mubr.bf16.mxu0 0
        %5629 = vmatmul.mubr.bf16.gmra.mrb[0].mxu0 %v5495
        %v5630 = vpop.f32.mrb[0].mxu0
        %v5631 = vadd.f32 %v5583, %v5630
        %v5632 = vpop.f32.mrb[0].mxu0
        %v5633 = vpop.f32.mrb[0].mxu0
        %v5634 = vadd.f32 %v5586, %v5633
        %v5635 = vpop.f32.mrb[0].mxu0
        %5636 = vmatprep.mubr.bf16.mxu0 0
        %5637 = vmatmul.mubr.bf16.gmra.mrb[0].mxu0 %v5498
        %v5638 = vpop.f32.mrb[0].mxu0
        %v5639 = vadd.f32 %v5591, %v5638
        %v5640 = vpop.f32.mrb[0].mxu0
        %v5641 = vpop.f32.mrb[0].mxu0
        %v5642 = vpop.f32.mrb[0].mxu0
        %5643 = vdwg.mxu0
        %v5644 = vmax.f32 %v5631, 0.0
        %v5645 = vmax.f32 %v5634, 0.0
        %v5646 = vmax.f32 %v5639, 0.0
        %5647 = vst [vmem:[#allocation11] sm:$0xff] %v5644
        %5648 = vst [vmem:[#allocation11 + $0x8] sm:$0xff] %v5645
        %5649 = vst [vmem:[#allocation11 + $0x10] sm:$0x3f] %v5646
        %v5650 = vld [vmem:[#allocation11] sm:$0xff]
        %v5651 = vld [vmem:[#allocation11 + $0x8] sm:$0x7f]
        %v5652 = vld [vmem:[#allocation11 + $0x1] sm:$0xff]
        %v5653 = vld [vmem:[#allocation11 + $0x9] sm:$0x7f]
        %v5654 = vmax.f32 %v5650, %v5652
        %v5655 = vmax.f32 %v5651, %v5653
        %v5656 = vld [vmem:[#allocation11 + $0x6] sm:$0xff]
        %v5657 = vld [vmem:[#allocation11 + $0xe] sm:$0x7f]
        %v5658 = vld [vmem:[#allocation11 + $0x7] sm:$0xff]
        %v5659 = vld [vmem:[#allocation11 + $0xf] sm:$0x7f]
        %v5660 = vmax.f32 %v5656, %v5658
        %v5661 = vmax.f32 %v5657, %v5659
        %v5662 = vmax.f32 %v5654, %v5660
        %v5663 = vmax.f32 %v5655, %v5661
        %5664 = vst [vmem:[#allocation12] sm:$0xff] %v5662
        %5665 = vst [vmem:[#allocation12 + $0x8] sm:$0x7f] %v5663
        %v5666 = vld [vmem:[#allocation12] sm:$0x1]
        %v5667 = vld [vmem:[#allocation12 + $0x2] sm:$0x1]
        %v5668 = vld [vmem:[#allocation12 + $0xc] sm:$0x1]
        %v5669 = vld [vmem:[#allocation12 + $0xe] sm:$0x1]
        %v5670 = vpack.c.bf16 %v5666, %v5666
        %v5671 = vpack.c.bf16 %v5667, %v5667
        %v5672 = vpack.c.bf16 %v5668, %v5668
        %v5673 = vpack.c.bf16 %v5669, %v5669
        %v5674 = vld [vmem:[%s7] sm:$0xff]
        %v5675 = vld [vmem:[%s7 + $0x8] sm:$0xff]
        %v5676 = vld [vmem:[%s7 + $0x10] sm:$0xff]
        %v5677 = vld [vmem:[%s7 + $0x18] sm:$0xff]
        %v5678 = vld [vmem:[%s7 + $0x20] sm:$0xff]
        %v5679 = vld [vmem:[%s7 + $0x28] sm:$0xff]
        %v5680 = vld [vmem:[%s7 + $0x30] sm:$0xff]
        %v5681 = vld [vmem:[%s7 + $0x38] sm:$0xff]
        %v5682 = vld [vmem:[%s7 + $0x40] sm:$0xff]
        %v5683 = vld [vmem:[%s7 + $0x48] sm:$0xff]
        %v5684 = vld [vmem:[%s7 + $0x50] sm:$0xff]
        %v5685 = vld [vmem:[%s7 + $0x58] sm:$0xff]
        %v5686 = vld [vmem:[%s7 + $0x60] sm:$0xff]
        %v5687 = vld [vmem:[%s7 + $0x68] sm:$0xff]
        %v5688 = vld [vmem:[%s7 + $0x70] sm:$0xff]
        %v5689 = vld [vmem:[%s7 + $0x78] sm:$0xff]
        %v5690 = vld [vmem:[%s7 + $0x80] sm:$0xff]
        %v5691 = vld [vmem:[%s7 + $0x88] sm:$0xff]
        %v5692 = vld [vmem:[%s7 + $0x90] sm:$0xff]
        %v5693 = vld [vmem:[%s7 + $0x98] sm:$0xff]
        %v5694 = vld [vmem:[%s7 + $0xa0] sm:$0xff]
        %v5695 = vld [vmem:[%s7 + $0xa8] sm:$0xff]
        %v5696 = vld [vmem:[%s7 + $0xb0] sm:$0xff]
        %v5697 = vld [vmem:[%s7 + $0xb8] sm:$0xff]
        %v5698 = vld [vmem:[%s7 + $0xc0] sm:$0xff]
        %v5699 = vld [vmem:[%s7 + $0xc8] sm:$0xff]
        %v5700 = vld [vmem:[%s7 + $0xd0] sm:$0xff]
        %v5701 = vld [vmem:[%s7 + $0xd8] sm:$0xff]
        %v5702 = vld [vmem:[%s7 + $0xe0] sm:$0xff]
        %v5703 = vld [vmem:[%s7 + $0xe8] sm:$0xff]
        %v5704 = vld [vmem:[%s7 + $0xf0] sm:$0xff]
        %v5705 = vld [vmem:[%s7 + $0xf8] sm:$0xff]
        %v5706 = vld [vmem:[%s7 + $0x100] sm:$0xff]
        %v5707 = vld [vmem:[%s7 + $0x108] sm:$0xff]
        %v5708 = vld [vmem:[%s7 + $0x110] sm:$0xff]
        %v5709 = vld [vmem:[%s7 + $0x118] sm:$0xff]
        %v5710 = vld [vmem:[%s7 + $0x120] sm:$0xff]
        %v5711 = vld [vmem:[%s7 + $0x128] sm:$0xff]
        %v5712 = vld [vmem:[%s7 + $0x130] sm:$0xff]
        %v5713 = vld [vmem:[%s7 + $0x138] sm:$0xff]
        %v5714 = vld [vmem:[%s7 + $0x140] sm:$0xff]
        %v5715 = vld [vmem:[%s7 + $0x148] sm:$0xff]
        %v5716 = vld [vmem:[%s7 + $0x150] sm:$0xff]
        %v5717 = vld [vmem:[%s7 + $0x158] sm:$0xff]
        %v5718 = vld [vmem:[%s7 + $0x160] sm:$0xff]
        %v5719 = vld [vmem:[%s7 + $0x168] sm:$0xff]
        %v5720 = vld [vmem:[%s7 + $0x170] sm:$0xff]
        %v5721 = vld [vmem:[%s7 + $0x178] sm:$0xff]
        %v5722 = vld [vmem:[%s7 + $0x180] sm:$0xff]
        %v5723 = vld [vmem:[%s7 + $0x188] sm:$0xff]
        %v5724 = vld [vmem:[%s7 + $0x190] sm:$0xff]
        %v5725 = vld [vmem:[%s7 + $0x198] sm:$0xff]
        %v5726 = vld [vmem:[%s7 + $0x1a0] sm:$0xff]
        %v5727 = vld [vmem:[%s7 + $0x1a8] sm:$0xff]
        %v5728 = vld [vmem:[%s7 + $0x1b0] sm:$0xff]
        %v5729 = vld [vmem:[%s7 + $0x1b8] sm:$0xff]
        %v5730 = vld [vmem:[%s7 + $0x1c0] sm:$0xff]
        %v5731 = vld [vmem:[%s7 + $0x1c8] sm:$0xff]
        %v5732 = vld [vmem:[%s7 + $0x1d0] sm:$0xff]
        %v5733 = vld [vmem:[%s7 + $0x1d8] sm:$0xff]
        %v5734 = vld [vmem:[%s7 + $0x1e0] sm:$0xff]
        %v5735 = vld [vmem:[%s7 + $0x1e8] sm:$0xff]
        %v5736 = vld [vmem:[%s7 + $0x1f0] sm:$0xff]
        %v5737 = vld [vmem:[%s7 + $0x1f8] sm:$0xff]
        %v5738 = vld [vmem:[%s7 + $0x200] sm:$0xff]
        %v5739 = vld [vmem:[%s7 + $0x208] sm:$0xff]
        %v5740 = vld [vmem:[%s7 + $0x210] sm:$0xff]
        %v5741 = vld [vmem:[%s7 + $0x218] sm:$0xff]
        %v5742 = vld [vmem:[%s7 + $0x220] sm:$0xff]
        %v5743 = vld [vmem:[%s7 + $0x228] sm:$0xff]
        %v5744 = vld [vmem:[%s7 + $0x230] sm:$0xff]
        %v5745 = vld [vmem:[%s7 + $0x238] sm:$0xff]
        %v5746 = vld [vmem:[%s7 + $0x240] sm:$0xff]
        %v5747 = vld [vmem:[%s7 + $0x248] sm:$0xff]
        %v5748 = vld [vmem:[%s7 + $0x250] sm:$0xff]
        %v5749 = vld [vmem:[%s7 + $0x258] sm:$0xff]
        %v5750 = vld [vmem:[%s7 + $0x260] sm:$0xff]
        %v5751 = vld [vmem:[%s7 + $0x268] sm:$0xff]
        %v5752 = vld [vmem:[%s7 + $0x270] sm:$0xff]
        %v5753 = vld [vmem:[%s7 + $0x278] sm:$0xff]
        %v5754 = vld [vmem:[%s7 + $0x280] sm:$0xff]
        %v5755 = vld [vmem:[%s7 + $0x288] sm:$0xff]
        %v5756 = vld [vmem:[%s7 + $0x290] sm:$0xff]
        %v5757 = vld [vmem:[%s7 + $0x298] sm:$0xff]
        %v5758 = vld [vmem:[%s7 + $0x2a0] sm:$0xff]
        %v5759 = vld [vmem:[%s7 + $0x2a8] sm:$0xff]
        %v5760 = vld [vmem:[%s7 + $0x2b0] sm:$0xff]
        %v5761 = vld [vmem:[%s7 + $0x2b8] sm:$0xff]
        %v5762 = vld [vmem:[%s7 + $0x2c0] sm:$0xff]
        %v5763 = vld [vmem:[%s7 + $0x2c8] sm:$0xff]
        %v5764 = vld [vmem:[%s7 + $0x2d0] sm:$0xff]
        %v5765 = vld [vmem:[%s7 + $0x2d8] sm:$0xff]
        %v5766 = vld [vmem:[%s7 + $0x2e0] sm:$0xff]
        %v5767 = vld [vmem:[%s7 + $0x2e8] sm:$0xff]
        %v5768 = vld [vmem:[%s7 + $0x2f0] sm:$0xff]
        %v5769 = vld [vmem:[%s7 + $0x2f8] sm:$0xff]
        %v5770 = vld [vmem:[%s7 + $0x300] sm:$0xff]
        %v5771 = vld [vmem:[%s7 + $0x308] sm:$0xff]
        %v5772 = vld [vmem:[%s7 + $0x310] sm:$0xff]
        %v5773 = vld [vmem:[%s7 + $0x318] sm:$0xff]
        %v5774 = vld [vmem:[%s7 + $0x320] sm:$0xff]
        %v5775 = vld [vmem:[%s7 + $0x328] sm:$0xff]
        %v5776 = vld [vmem:[%s7 + $0x330] sm:$0xff]
        %v5777 = vld [vmem:[%s7 + $0x338] sm:$0xff]
        %v5778 = vld [vmem:[%s7 + $0x340] sm:$0xff]
        %v5779 = vld [vmem:[%s7 + $0x348] sm:$0xff]
        %v5780 = vld [vmem:[%s7 + $0x350] sm:$0xff]
        %v5781 = vld [vmem:[%s7 + $0x358] sm:$0xff]
        %v5782 = vld [vmem:[%s7 + $0x360] sm:$0xff]
        %v5783 = vld [vmem:[%s7 + $0x368] sm:$0xff]
        %v5784 = vld [vmem:[%s7 + $0x370] sm:$0xff]
        %v5785 = vld [vmem:[%s7 + $0x378] sm:$0xff]
        %v5786 = vld [vmem:[%s7 + $0x380] sm:$0xff]
        %v5787 = vld [vmem:[%s7 + $0x388] sm:$0xff]
        %v5788 = vld [vmem:[%s7 + $0x390] sm:$0xff]
        %v5789 = vld [vmem:[%s7 + $0x398] sm:$0xff]
        %v5790 = vld [vmem:[%s7 + $0x3a0] sm:$0xff]
        %v5791 = vld [vmem:[%s7 + $0x3a8] sm:$0xff]
        %v5792 = vld [vmem:[%s7 + $0x3b0] sm:$0xff]
        %v5793 = vld [vmem:[%s7 + $0x3b8] sm:$0xff]
        %v5794 = vld [vmem:[%s7 + $0x3c0] sm:$0xff]
        %v5795 = vld [vmem:[%s7 + $0x3c8] sm:$0xff]
        %v5796 = vld [vmem:[%s7 + $0x3d0] sm:$0xff]
        %v5797 = vld [vmem:[%s7 + $0x3d8] sm:$0xff]
        %v5798 = vld [vmem:[%s7 + $0x3e0] sm:$0xff]
        %v5799 = vld [vmem:[%s7 + $0x3e8] sm:$0xff]
        %v5800 = vld [vmem:[%s7 + $0x3f0] sm:$0xff]
        %v5801 = vld [vmem:[%s7 + $0x3f8] sm:$0xff]
        %v5802 = vld [vmem:[%s8] sm:$0xf]
        %v5931 = vunpack.c.l.b16 %v5674
        %v5932 = vunpack.c.h.b16 %v5674
        %v5933 = vunpack.c.l.b16 %v5675
        %v5934 = vunpack.c.h.b16 %v5675
        %v5935 = vunpack.c.l.b16 %v5676
        %v5936 = vunpack.c.h.b16 %v5676
        %v5937 = vunpack.c.l.b16 %v5677
        %v5938 = vunpack.c.h.b16 %v5677
        %v5939 = vunpack.c.l.b16 %v5678
        %v5940 = vunpack.c.h.b16 %v5678
        %v5941 = vunpack.c.l.b16 %v5679
        %v5942 = vunpack.c.h.b16 %v5679
        %v5943 = vunpack.c.l.b16 %v5680
        %v5944 = vunpack.c.h.b16 %v5680
        %v5945 = vunpack.c.l.b16 %v5681
        %v5946 = vunpack.c.h.b16 %v5681
        %v5947 = vunpack.c.l.b16 %v5682
        %v5948 = vunpack.c.h.b16 %v5682
        %v5949 = vunpack.c.l.b16 %v5683
        %v5950 = vunpack.c.h.b16 %v5683
        %v5951 = vunpack.c.l.b16 %v5684
        %v5952 = vunpack.c.h.b16 %v5684
        %v5953 = vunpack.c.l.b16 %v5685
        %v5954 = vunpack.c.h.b16 %v5685
        %v5955 = vunpack.c.l.b16 %v5686
        %v5956 = vunpack.c.h.b16 %v5686
        %v5957 = vunpack.c.l.b16 %v5687
        %v5958 = vunpack.c.h.b16 %v5687
        %v5959 = vunpack.c.l.b16 %v5688
        %v5960 = vunpack.c.h.b16 %v5688
        %v5961 = vunpack.c.l.b16 %v5689
        %v5962 = vunpack.c.h.b16 %v5689
        %v5963 = vunpack.c.l.b16 %v5690
        %v5964 = vunpack.c.h.b16 %v5690
        %v5965 = vunpack.c.l.b16 %v5691
        %v5966 = vunpack.c.h.b16 %v5691
        %v5967 = vunpack.c.l.b16 %v5692
        %v5968 = vunpack.c.h.b16 %v5692
        %v5969 = vunpack.c.l.b16 %v5693
        %v5970 = vunpack.c.h.b16 %v5693
        %v5971 = vunpack.c.l.b16 %v5694
        %v5972 = vunpack.c.h.b16 %v5694
        %v5973 = vunpack.c.l.b16 %v5695
        %v5974 = vunpack.c.h.b16 %v5695
        %v5975 = vunpack.c.l.b16 %v5696
        %v5976 = vunpack.c.h.b16 %v5696
        %v5977 = vunpack.c.l.b16 %v5697
        %v5978 = vunpack.c.h.b16 %v5697
        %v5979 = vunpack.c.l.b16 %v5698
        %v5980 = vunpack.c.h.b16 %v5698
        %v5981 = vunpack.c.l.b16 %v5699
        %v5982 = vunpack.c.h.b16 %v5699
        %v5983 = vunpack.c.l.b16 %v5700
        %v5984 = vunpack.c.h.b16 %v5700
        %v5985 = vunpack.c.l.b16 %v5701
        %v5986 = vunpack.c.h.b16 %v5701
        %v5987 = vunpack.c.l.b16 %v5702
        %v5988 = vunpack.c.h.b16 %v5702
        %v5989 = vunpack.c.l.b16 %v5703
        %v5990 = vunpack.c.h.b16 %v5703
        %v5991 = vunpack.c.l.b16 %v5704
        %v5992 = vunpack.c.h.b16 %v5704
        %v5993 = vunpack.c.l.b16 %v5705
        %v5994 = vunpack.c.h.b16 %v5705
        %v5995 = vunpack.c.l.b16 %v5706
        %v5996 = vunpack.c.h.b16 %v5706
        %v5997 = vunpack.c.l.b16 %v5707
        %v5998 = vunpack.c.h.b16 %v5707
        %v5999 = vunpack.c.l.b16 %v5708
        %v6000 = vunpack.c.h.b16 %v5708
        %v6001 = vunpack.c.l.b16 %v5709
        %v6002 = vunpack.c.h.b16 %v5709
        %v6003 = vunpack.c.l.b16 %v5710
        %v6004 = vunpack.c.h.b16 %v5710
        %v6005 = vunpack.c.l.b16 %v5711
        %v6006 = vunpack.c.h.b16 %v5711
        %v6007 = vunpack.c.l.b16 %v5712
        %v6008 = vunpack.c.h.b16 %v5712
        %v6009 = vunpack.c.l.b16 %v5713
        %v6010 = vunpack.c.h.b16 %v5713
        %v6011 = vunpack.c.l.b16 %v5714
        %v6012 = vunpack.c.h.b16 %v5714
        %v6013 = vunpack.c.l.b16 %v5715
        %v6014 = vunpack.c.h.b16 %v5715
        %v6015 = vunpack.c.l.b16 %v5716
        %v6016 = vunpack.c.h.b16 %v5716
        %v6017 = vunpack.c.l.b16 %v5717
        %v6018 = vunpack.c.h.b16 %v5717
        %v6019 = vunpack.c.l.b16 %v5718
        %v6020 = vunpack.c.h.b16 %v5718
        %v6021 = vunpack.c.l.b16 %v5719
        %v6022 = vunpack.c.h.b16 %v5719
        %v6023 = vunpack.c.l.b16 %v5720
        %v6024 = vunpack.c.h.b16 %v5720
        %v6025 = vunpack.c.l.b16 %v5721
        %v6026 = vunpack.c.h.b16 %v5721
        %v6027 = vunpack.c.l.b16 %v5722
        %v6028 = vunpack.c.h.b16 %v5722
        %v6029 = vunpack.c.l.b16 %v5723
        %v6030 = vunpack.c.h.b16 %v5723
        %v6031 = vunpack.c.l.b16 %v5724
        %v6032 = vunpack.c.h.b16 %v5724
        %v6033 = vunpack.c.l.b16 %v5725
        %v6034 = vunpack.c.h.b16 %v5725
        %v6035 = vunpack.c.l.b16 %v5726
        %v6036 = vunpack.c.h.b16 %v5726
        %v6037 = vunpack.c.l.b16 %v5727
        %v6038 = vunpack.c.h.b16 %v5727
        %v6039 = vunpack.c.l.b16 %v5728
        %v6040 = vunpack.c.h.b16 %v5728
        %v6041 = vunpack.c.l.b16 %v5729
        %v6042 = vunpack.c.h.b16 %v5729
        %v6043 = vunpack.c.l.b16 %v5730
        %v6044 = vunpack.c.h.b16 %v5730
        %v6045 = vunpack.c.l.b16 %v5731
        %v6046 = vunpack.c.h.b16 %v5731
        %v6047 = vunpack.c.l.b16 %v5732
        %v6048 = vunpack.c.h.b16 %v5732
        %v6049 = vunpack.c.l.b16 %v5733
        %v6050 = vunpack.c.h.b16 %v5733
        %v6051 = vunpack.c.l.b16 %v5734
        %v6052 = vunpack.c.h.b16 %v5734
        %v6053 = vunpack.c.l.b16 %v5735
        %v6054 = vunpack.c.h.b16 %v5735
        %v6055 = vunpack.c.l.b16 %v5736
        %v6056 = vunpack.c.h.b16 %v5736
        %v6057 = vunpack.c.l.b16 %v5737
        %v6058 = vunpack.c.h.b16 %v5737
        %v6059 = vunpack.c.l.b16 %v5738
        %v6060 = vunpack.c.h.b16 %v5738
        %v6061 = vunpack.c.l.b16 %v5739
        %v6062 = vunpack.c.h.b16 %v5739
        %v6063 = vunpack.c.l.b16 %v5740
        %v6064 = vunpack.c.h.b16 %v5740
        %v6065 = vunpack.c.l.b16 %v5741
        %v6066 = vunpack.c.h.b16 %v5741
        %v6067 = vunpack.c.l.b16 %v5742
        %v6068 = vunpack.c.h.b16 %v5742
        %v6069 = vunpack.c.l.b16 %v5743
        %v6070 = vunpack.c.h.b16 %v5743
        %v6071 = vunpack.c.l.b16 %v5744
        %v6072 = vunpack.c.h.b16 %v5744
        %v6073 = vunpack.c.l.b16 %v5745
        %v6074 = vunpack.c.h.b16 %v5745
        %v6075 = vunpack.c.l.b16 %v5746
        %v6076 = vunpack.c.h.b16 %v5746
        %v6077 = vunpack.c.l.b16 %v5747
        %v6078 = vunpack.c.h.b16 %v5747
        %v6079 = vunpack.c.l.b16 %v5748
        %v6080 = vunpack.c.h.b16 %v5748
        %v6081 = vunpack.c.l.b16 %v5749
        %v6082 = vunpack.c.h.b16 %v5749
        %v6083 = vunpack.c.l.b16 %v5750
        %v6084 = vunpack.c.h.b16 %v5750
        %v6085 = vunpack.c.l.b16 %v5751
        %v6086 = vunpack.c.h.b16 %v5751
        %v6087 = vunpack.c.l.b16 %v5752
        %v6088 = vunpack.c.h.b16 %v5752
        %v6089 = vunpack.c.l.b16 %v5753
        %v6090 = vunpack.c.h.b16 %v5753
        %v6091 = vunpack.c.l.b16 %v5754
        %v6092 = vunpack.c.h.b16 %v5754
        %v6093 = vunpack.c.l.b16 %v5755
        %v6094 = vunpack.c.h.b16 %v5755
        %v6095 = vunpack.c.l.b16 %v5756
        %v6096 = vunpack.c.h.b16 %v5756
        %v6097 = vunpack.c.l.b16 %v5757
        %v6098 = vunpack.c.h.b16 %v5757
        %v6099 = vunpack.c.l.b16 %v5758
        %v6100 = vunpack.c.h.b16 %v5758
        %v6101 = vunpack.c.l.b16 %v5759
        %v6102 = vunpack.c.h.b16 %v5759
        %v6103 = vunpack.c.l.b16 %v5760
        %v6104 = vunpack.c.h.b16 %v5760
        %v6105 = vunpack.c.l.b16 %v5761
        %v6106 = vunpack.c.h.b16 %v5761
        %v6107 = vunpack.c.l.b16 %v5762
        %v6108 = vunpack.c.h.b16 %v5762
        %v6109 = vunpack.c.l.b16 %v5763
        %v6110 = vunpack.c.h.b16 %v5763
        %v6111 = vunpack.c.l.b16 %v5764
        %v6112 = vunpack.c.h.b16 %v5764
        %v6113 = vunpack.c.l.b16 %v5765
        %v6114 = vunpack.c.h.b16 %v5765
        %v6115 = vunpack.c.l.b16 %v5766
        %v6116 = vunpack.c.h.b16 %v5766
        %v6117 = vunpack.c.l.b16 %v5767
        %v6118 = vunpack.c.h.b16 %v5767
        %v6119 = vunpack.c.l.b16 %v5768
        %v6120 = vunpack.c.h.b16 %v5768
        %v6121 = vunpack.c.l.b16 %v5769
        %v6122 = vunpack.c.h.b16 %v5769
        %v6123 = vunpack.c.l.b16 %v5770
        %v6124 = vunpack.c.h.b16 %v5770
        %v6125 = vunpack.c.l.b16 %v5771
        %v6126 = vunpack.c.h.b16 %v5771
        %v6127 = vunpack.c.l.b16 %v5772
        %v6128 = vunpack.c.h.b16 %v5772
        %v6129 = vunpack.c.l.b16 %v5773
        %v6130 = vunpack.c.h.b16 %v5773
        %v6131 = vunpack.c.l.b16 %v5774
        %v6132 = vunpack.c.h.b16 %v5774
        %v6133 = vunpack.c.l.b16 %v5775
        %v6134 = vunpack.c.h.b16 %v5775
        %v6135 = vunpack.c.l.b16 %v5776
        %v6136 = vunpack.c.h.b16 %v5776
        %v6137 = vunpack.c.l.b16 %v5777
        %v6138 = vunpack.c.h.b16 %v5777
        %v6139 = vunpack.c.l.b16 %v5778
        %v6140 = vunpack.c.h.b16 %v5778
        %v6141 = vunpack.c.l.b16 %v5779
        %v6142 = vunpack.c.h.b16 %v5779
        %v6143 = vunpack.c.l.b16 %v5780
        %v6144 = vunpack.c.h.b16 %v5780
        %v6145 = vunpack.c.l.b16 %v5781
        %v6146 = vunpack.c.h.b16 %v5781
        %v6147 = vunpack.c.l.b16 %v5782
        %v6148 = vunpack.c.h.b16 %v5782
        %v6149 = vunpack.c.l.b16 %v5783
        %v6150 = vunpack.c.h.b16 %v5783
        %v6151 = vunpack.c.l.b16 %v5784
        %v6152 = vunpack.c.h.b16 %v5784
        %v6153 = vunpack.c.l.b16 %v5785
        %v6154 = vunpack.c.h.b16 %v5785
        %v6155 = vunpack.c.l.b16 %v5786
        %v6156 = vunpack.c.h.b16 %v5786
        %v6157 = vunpack.c.l.b16 %v5787
        %v6158 = vunpack.c.h.b16 %v5787
        %v6159 = vunpack.c.l.b16 %v5788
        %v6160 = vunpack.c.h.b16 %v5788
        %v6161 = vunpack.c.l.b16 %v5789
        %v6162 = vunpack.c.h.b16 %v5789
        %v6163 = vunpack.c.l.b16 %v5790
        %v6164 = vunpack.c.h.b16 %v5790
        %v6165 = vunpack.c.l.b16 %v5791
        %v6166 = vunpack.c.h.b16 %v5791
        %v6167 = vunpack.c.l.b16 %v5792
        %v6168 = vunpack.c.h.b16 %v5792
        %v6169 = vunpack.c.l.b16 %v5793
        %v6170 = vunpack.c.h.b16 %v5793
        %v6171 = vunpack.c.l.b16 %v5794
        %v6172 = vunpack.c.h.b16 %v5794
        %v6173 = vunpack.c.l.b16 %v5795
        %v6174 = vunpack.c.h.b16 %v5795
        %v6175 = vunpack.c.l.b16 %v5796
        %v6176 = vunpack.c.h.b16 %v5796
        %v6177 = vunpack.c.l.b16 %v5797
        %v6178 = vunpack.c.h.b16 %v5797
        %v6179 = vunpack.c.l.b16 %v5798
        %v6180 = vunpack.c.h.b16 %v5798
        %v6181 = vunpack.c.l.b16 %v5799
        %v6182 = vunpack.c.h.b16 %v5799
        %v6183 = vunpack.c.l.b16 %v5800
        %v6184 = vunpack.c.h.b16 %v5800
        %v6185 = vunpack.c.l.b16 %v5801
        %v6186 = vunpack.c.h.b16 %v5801
        %v6187 = vpack.c.b16 %v5935, %v5931
        %v6188 = vpack.c.b16 %v5936, %v5932
        %v6189 = vpack.c.b16 %v5937, %v5933
        %v6190 = vpack.c.b16 %v5938, %v5934
        %v6191 = vpack.c.b16 %v5943, %v5939
        %v6192 = vpack.c.b16 %v5944, %v5940
        %v6193 = vpack.c.b16 %v5945, %v5941
        %v6194 = vpack.c.b16 %v5946, %v5942
        %v6195 = vpack.c.b16 %v5951, %v5947
        %v6196 = vpack.c.b16 %v5952, %v5948
        %v6197 = vpack.c.b16 %v5953, %v5949
        %v6198 = vpack.c.b16 %v5954, %v5950
        %v6199 = vpack.c.b16 %v5959, %v5955
        %v6200 = vpack.c.b16 %v5960, %v5956
        %v6201 = vpack.c.b16 %v5961, %v5957
        %v6202 = vpack.c.b16 %v5962, %v5958
        %v6203 = vpack.c.b16 %v5967, %v5963
        %v6204 = vpack.c.b16 %v5968, %v5964
        %v6205 = vpack.c.b16 %v5969, %v5965
        %v6206 = vpack.c.b16 %v5970, %v5966
        %v6207 = vpack.c.b16 %v5975, %v5971
        %v6208 = vpack.c.b16 %v5976, %v5972
        %v6209 = vpack.c.b16 %v5977, %v5973
        %v6210 = vpack.c.b16 %v5978, %v5974
        %v6211 = vpack.c.b16 %v5983, %v5979
        %v6212 = vpack.c.b16 %v5984, %v5980
        %v6213 = vpack.c.b16 %v5985, %v5981
        %v6214 = vpack.c.b16 %v5986, %v5982
        %v6215 = vpack.c.b16 %v5991, %v5987
        %v6216 = vpack.c.b16 %v5992, %v5988
        %v6217 = vpack.c.b16 %v5993, %v5989
        %v6218 = vpack.c.b16 %v5994, %v5990
        %v6219 = vpack.c.b16 %v5999, %v5995
        %v6220 = vpack.c.b16 %v6000, %v5996
        %v6221 = vpack.c.b16 %v6001, %v5997
        %v6222 = vpack.c.b16 %v6002, %v5998
        %v6223 = vpack.c.b16 %v6007, %v6003
        %v6224 = vpack.c.b16 %v6008, %v6004
        %v6225 = vpack.c.b16 %v6009, %v6005
        %v6226 = vpack.c.b16 %v6010, %v6006
        %v6227 = vpack.c.b16 %v6015, %v6011
        %v6228 = vpack.c.b16 %v6016, %v6012
        %v6229 = vpack.c.b16 %v6017, %v6013
        %v6230 = vpack.c.b16 %v6018, %v6014
        %v6231 = vpack.c.b16 %v6023, %v6019
        %v6232 = vpack.c.b16 %v6024, %v6020
        %v6233 = vpack.c.b16 %v6025, %v6021
        %v6234 = vpack.c.b16 %v6026, %v6022
        %v6235 = vpack.c.b16 %v6031, %v6027
        %v6236 = vpack.c.b16 %v6032, %v6028
        %v6237 = vpack.c.b16 %v6033, %v6029
        %v6238 = vpack.c.b16 %v6034, %v6030
        %v6239 = vpack.c.b16 %v6039, %v6035
        %v6240 = vpack.c.b16 %v6040, %v6036
        %v6241 = vpack.c.b16 %v6041, %v6037
        %v6242 = vpack.c.b16 %v6042, %v6038
        %v6243 = vpack.c.b16 %v6047, %v6043
        %v6244 = vpack.c.b16 %v6048, %v6044
        %v6245 = vpack.c.b16 %v6049, %v6045
        %v6246 = vpack.c.b16 %v6050, %v6046
        %v6247 = vpack.c.b16 %v6055, %v6051
        %v6248 = vpack.c.b16 %v6056, %v6052
        %v6249 = vpack.c.b16 %v6057, %v6053
        %v6250 = vpack.c.b16 %v6058, %v6054
        %v6251 = vpack.c.b16 %v6063, %v6059
        %v6252 = vpack.c.b16 %v6064, %v6060
        %v6253 = vpack.c.b16 %v6065, %v6061
        %v6254 = vpack.c.b16 %v6066, %v6062
        %v6255 = vpack.c.b16 %v6071, %v6067
        %v6256 = vpack.c.b16 %v6072, %v6068
        %v6257 = vpack.c.b16 %v6073, %v6069
        %v6258 = vpack.c.b16 %v6074, %v6070
        %v6259 = vpack.c.b16 %v6079, %v6075
        %v6260 = vpack.c.b16 %v6080, %v6076
        %v6261 = vpack.c.b16 %v6081, %v6077
        %v6262 = vpack.c.b16 %v6082, %v6078
        %v6263 = vpack.c.b16 %v6087, %v6083
        %v6264 = vpack.c.b16 %v6088, %v6084
        %v6265 = vpack.c.b16 %v6089, %v6085
        %v6266 = vpack.c.b16 %v6090, %v6086
        %v6267 = vpack.c.b16 %v6095, %v6091
        %v6268 = vpack.c.b16 %v6096, %v6092
        %v6269 = vpack.c.b16 %v6097, %v6093
        %v6270 = vpack.c.b16 %v6098, %v6094
        %v6271 = vpack.c.b16 %v6103, %v6099
        %v6272 = vpack.c.b16 %v6104, %v6100
        %v6273 = vpack.c.b16 %v6105, %v6101
        %v6274 = vpack.c.b16 %v6106, %v6102
        %v6275 = vpack.c.b16 %v6111, %v6107
        %v6276 = vpack.c.b16 %v6112, %v6108
        %v6277 = vpack.c.b16 %v6113, %v6109
        %v6278 = vpack.c.b16 %v6114, %v6110
        %v6279 = vpack.c.b16 %v6119, %v6115
        %v6280 = vpack.c.b16 %v6120, %v6116
        %v6281 = vpack.c.b16 %v6121, %v6117
        %v6282 = vpack.c.b16 %v6122, %v6118
        %v6283 = vpack.c.b16 %v6127, %v6123
        %v6284 = vpack.c.b16 %v6128, %v6124
        %v6285 = vpack.c.b16 %v6129, %v6125
        %v6286 = vpack.c.b16 %v6130, %v6126
        %v6287 = vpack.c.b16 %v6135, %v6131
        %v6288 = vpack.c.b16 %v6136, %v6132
        %v6289 = vpack.c.b16 %v6137, %v6133
        %v6290 = vpack.c.b16 %v6138, %v6134
        %v6291 = vpack.c.b16 %v6143, %v6139
        %v6292 = vpack.c.b16 %v6144, %v6140
        %v6293 = vpack.c.b16 %v6145, %v6141
        %v6294 = vpack.c.b16 %v6146, %v6142
        %v6295 = vpack.c.b16 %v6151, %v6147
        %v6296 = vpack.c.b16 %v6152, %v6148
        %v6297 = vpack.c.b16 %v6153, %v6149
        %v6298 = vpack.c.b16 %v6154, %v6150
        %v6299 = vpack.c.b16 %v6159, %v6155
        %v6300 = vpack.c.b16 %v6160, %v6156
        %v6301 = vpack.c.b16 %v6161, %v6157
        %v6302 = vpack.c.b16 %v6162, %v6158
        %v6303 = vpack.c.b16 %v6167, %v6163
        %v6304 = vpack.c.b16 %v6168, %v6164
        %v6305 = vpack.c.b16 %v6169, %v6165
        %v6306 = vpack.c.b16 %v6170, %v6166
        %v6307 = vpack.c.b16 %v6175, %v6171
        %v6308 = vpack.c.b16 %v6176, %v6172
        %v6309 = vpack.c.b16 %v6177, %v6173
        %v6310 = vpack.c.b16 %v6178, %v6174
        %v6311 = vpack.c.b16 %v6183, %v6179
        %v6312 = vpack.c.b16 %v6184, %v6180
        %v6313 = vpack.c.b16 %v6185, %v6181
        %v6314 = vpack.c.b16 %v6186, %v6182
        %v6444 = vlaneseq
        %v6445 = vshrl.u32 %v6444, 7
        %v6446 = vsub.s32 0, %v6445
        %v6447 = vrot.slane %v5802, %v6446
        %v6448 = vlaneseq
        %v6449 = vshrl.u32 %v6448, 7
        %v6450 = vsub.s32 1, %v6449
        %v6451 = vrot.slane %v5802, %v6450
        %v6452 = vlaneseq
        %v6453 = vshrl.u32 %v6452, 7
        %v6454 = vsub.s32 2, %v6453
        %v6455 = vrot.slane %v5802, %v6454
        %v6456 = vlaneseq
        %v6457 = vshrl.u32 %v6456, 7
        %v6458 = vsub.s32 3, %v6457
        %v6459 = vrot.slane %v5802, %v6458
        %6464 = vmatprep.subr.bf16.mxu0 %v6188
        %6465 = vmatpush1.bf16.msra.mxu0 %v6187
        %6466 = vmatprep.subr.bf16.mxu0 %v6192
        %6467 = vmatpush1.bf16.msra.mxu0 %v6191
        %6468 = vmatprep.subr.bf16.mxu0 %v6196
        %6469 = vmatpush1.bf16.msra.mxu0 %v6195
        %6470 = vmatprep.subr.bf16.mxu0 %v6200
        %6471 = vmatpush1.bf16.msra.mxu0 %v6199
        %6472 = vmatprep.subr.bf16.mxu0 %v6204
        %6473 = vmatpush1.bf16.msra.mxu0 %v6203
        %6474 = vmatprep.subr.bf16.mxu0 %v6208
        %6475 = vmatpush1.bf16.msra.mxu0 %v6207
        %6476 = vmatprep.subr.bf16.mxu0 %v6212
        %6477 = vmatpush1.bf16.msra.mxu0 %v6211
        %6478 = vmatprep.subr.bf16.mxu0 %v6216
        %6479 = vmatpush1.bf16.msra.mxu0 %v6215
        %6480 = vmatprep.subr.bf16.mxu0 %v6220
        %6481 = vmatpush1.bf16.msra.mxu0 %v6219
        %6482 = vmatprep.subr.bf16.mxu0 %v6224
        %6483 = vmatpush1.bf16.msra.mxu0 %v6223
        %6484 = vmatprep.subr.bf16.mxu0 %v6228
        %6485 = vmatpush1.bf16.msra.mxu0 %v6227
        %6486 = vmatprep.subr.bf16.mxu0 %v6232
        %6487 = vmatpush1.bf16.msra.mxu0 %v6231
        %6488 = vmatprep.subr.bf16.mxu0 %v6236
        %6489 = vmatpush1.bf16.msra.mxu0 %v6235
        %6490 = vmatprep.subr.bf16.mxu0 %v6240
        %6491 = vmatpush1.bf16.msra.mxu0 %v6239
        %6492 = vmatprep.subr.bf16.mxu0 %v6244
        %6493 = vmatpush1.bf16.msra.mxu0 %v6243
        %6494 = vmatprep.subr.bf16.mxu0 %v6248
        %6495 = vmatpush1.bf16.msra.mxu0 %v6247
        %6496 = vmatprep.mubr.bf16.mxu0 %v5671
        %6497 = vmatmul.mubr.bf16.gmra.mrb[0].mxu0 %v5670
        %v6498 = vpop.f32.mrb[0].mxu0
        %v6499 = vadd.f32 %v6447, %v6498
        %v6500 = vpop.f32.mrb[0].mxu0
        %v6501 = vadd.f32 %v6451, %v6500
        %v6502 = vpop.f32.mrb[0].mxu0
        %v6503 = vpop.f32.mrb[0].mxu0
        %6504 = vdwg.mxu0
        %6505 = vmatprep.subr.bf16.mxu0 %v6252
        %6506 = vmatpush1.bf16.msra.mxu0 %v6251
        %6507 = vmatprep.subr.bf16.mxu0 %v6256
        %6508 = vmatpush1.bf16.msra.mxu0 %v6255
        %6509 = vmatprep.subr.bf16.mxu0 %v6260
        %6510 = vmatpush1.bf16.msra.mxu0 %v6259
        %6511 = vmatprep.subr.bf16.mxu0 %v6264
        %6512 = vmatpush1.bf16.msra.mxu0 %v6263
        %6513 = vmatprep.subr.bf16.mxu0 %v6268
        %6514 = vmatpush1.bf16.msra.mxu0 %v6267
        %6515 = vmatprep.subr.bf16.mxu0 %v6272
        %6516 = vmatpush1.bf16.msra.mxu0 %v6271
        %6517 = vmatprep.subr.bf16.mxu0 %v6276
        %6518 = vmatpush1.bf16.msra.mxu0 %v6275
        %6519 = vmatprep.subr.bf16.mxu0 %v6280
        %6520 = vmatpush1.bf16.msra.mxu0 %v6279
        %6521 = vmatprep.subr.bf16.mxu0 %v6284
        %6522 = vmatpush1.bf16.msra.mxu0 %v6283
        %6523 = vmatprep.subr.bf16.mxu0 %v6288
        %6524 = vmatpush1.bf16.msra.mxu0 %v6287
        %6525 = vmatprep.subr.bf16.mxu0 %v6292
        %6526 = vmatpush1.bf16.msra.mxu0 %v6291
        %6527 = vmatprep.subr.bf16.mxu0 %v6296
        %6528 = vmatpush1.bf16.msra.mxu0 %v6295
        %6529 = vmatprep.subr.bf16.mxu0 %v6300
        %6530 = vmatpush1.bf16.msra.mxu0 %v6299
        %6531 = vmatprep.subr.bf16.mxu0 %v6304
        %6532 = vmatpush1.bf16.msra.mxu0 %v6303
        %6533 = vmatprep.subr.bf16.mxu0 %v6308
        %6534 = vmatpush1.bf16.msra.mxu0 %v6307
        %6535 = vmatprep.subr.bf16.mxu0 %v6312
        %6536 = vmatpush1.bf16.msra.mxu0 %v6311
        %6537 = vmatprep.mubr.bf16.mxu0 %v5673
        %6538 = vmatmul.mubr.bf16.gmra.mrb[0].mxu0 %v5672
        %v6539 = vpop.f32.mrb[0].mxu0
        %v6540 = vadd.f32 %v6499, %v6539
        %v6541 = vpop.f32.mrb[0].mxu0
        %v6542 = vadd.f32 %v6501, %v6541
        %v6543 = vpop.f32.mrb[0].mxu0
        %v6544 = vpop.f32.mrb[0].mxu0
        %6545 = vdwg.mxu0
        %6546 = vmatprep.subr.bf16.mxu0 %v6190
        %6547 = vmatpush1.bf16.msra.mxu0 %v6189
        %6548 = vmatprep.subr.bf16.mxu0 %v6194
        %6549 = vmatpush1.bf16.msra.mxu0 %v6193
        %6550 = vmatprep.subr.bf16.mxu0 %v6198
        %6551 = vmatpush1.bf16.msra.mxu0 %v6197
        %6552 = vmatprep.subr.bf16.mxu0 %v6202
        %6553 = vmatpush1.bf16.msra.mxu0 %v6201
        %6554 = vmatprep.subr.bf16.mxu0 %v6206
        %6555 = vmatpush1.bf16.msra.mxu0 %v6205
        %6556 = vmatprep.subr.bf16.mxu0 %v6210
        %6557 = vmatpush1.bf16.msra.mxu0 %v6209
        %6558 = vmatprep.subr.bf16.mxu0 %v6214
        %6559 = vmatpush1.bf16.msra.mxu0 %v6213
        %6560 = vmatprep.subr.bf16.mxu0 %v6218
        %6561 = vmatpush1.bf16.msra.mxu0 %v6217
        %6562 = vmatprep.subr.bf16.mxu0 %v6222
        %6563 = vmatpush1.bf16.msra.mxu0 %v6221
        %6564 = vmatprep.subr.bf16.mxu0 %v6226
        %6565 = vmatpush1.bf16.msra.mxu0 %v6225
        %6566 = vmatprep.subr.bf16.mxu0 %v6230
        %6567 = vmatpush1.bf16.msra.mxu0 %v6229
        %6568 = vmatprep.subr.bf16.mxu0 %v6234
        %6569 = vmatpush1.bf16.msra.mxu0 %v6233
        %6570 = vmatprep.subr.bf16.mxu0 %v6238
        %6571 = vmatpush1.bf16.msra.mxu0 %v6237
        %6572 = vmatprep.subr.bf16.mxu0 %v6242
        %6573 = vmatpush1.bf16.msra.mxu0 %v6241
        %6574 = vmatprep.subr.bf16.mxu0 %v6246
        %6575 = vmatpush1.bf16.msra.mxu0 %v6245
        %6576 = vmatprep.subr.bf16.mxu0 %v6250
        %6577 = vmatpush1.bf16.msra.mxu0 %v6249
        %6578 = vmatprep.mubr.bf16.mxu0 %v5671
        %6579 = vmatmul.mubr.bf16.gmra.mrb[0].mxu0 %v5670
        %v6580 = vpop.f32.mrb[0].mxu0
        %v6581 = vadd.f32 %v6455, %v6580
        %v6582 = vpop.f32.mrb[0].mxu0
        %v6583 = vadd.f32 %v6459, %v6582
        %v6584 = vpop.f32.mrb[0].mxu0
        %v6585 = vpop.f32.mrb[0].mxu0
        %6586 = vdwg.mxu0
        %6587 = vmatprep.subr.bf16.mxu0 %v6254
        %6588 = vmatpush1.bf16.msra.mxu0 %v6253
        %6589 = vmatprep.subr.bf16.mxu0 %v6258
        %6590 = vmatpush1.bf16.msra.mxu0 %v6257
        %6591 = vmatprep.subr.bf16.mxu0 %v6262
        %6592 = vmatpush1.bf16.msra.mxu0 %v6261
        %6593 = vmatprep.subr.bf16.mxu0 %v6266
        %6594 = vmatpush1.bf16.msra.mxu0 %v6265
        %6595 = vmatprep.subr.bf16.mxu0 %v6270
        %6596 = vmatpush1.bf16.msra.mxu0 %v6269
        %6597 = vmatprep.subr.bf16.mxu0 %v6274
        %6598 = vmatpush1.bf16.msra.mxu0 %v6273
        %6599 = vmatprep.subr.bf16.mxu0 %v6278
        %6600 = vmatpush1.bf16.msra.mxu0 %v6277
        %6601 = vmatprep.subr.bf16.mxu0 %v6282
        %6602 = vmatpush1.bf16.msra.mxu0 %v6281
        %6603 = vmatprep.subr.bf16.mxu0 %v6286
        %6604 = vmatpush1.bf16.msra.mxu0 %v6285
        %6605 = vmatprep.subr.bf16.mxu0 %v6290
        %6606 = vmatpush1.bf16.msra.mxu0 %v6289
        %6607 = vmatprep.subr.bf16.mxu0 %v6294
        %6608 = vmatpush1.bf16.msra.mxu0 %v6293
        %6609 = vmatprep.subr.bf16.mxu0 %v6298
        %6610 = vmatpush1.bf16.msra.mxu0 %v6297
        %6611 = vmatprep.subr.bf16.mxu0 %v6302
        %6612 = vmatpush1.bf16.msra.mxu0 %v6301
        %6613 = vmatprep.subr.bf16.mxu0 %v6306
        %6614 = vmatpush1.bf16.msra.mxu0 %v6305
        %6615 = vmatprep.subr.bf16.mxu0 %v6310
        %6616 = vmatpush1.bf16.msra.mxu0 %v6309
        %6617 = vmatprep.subr.bf16.mxu0 %v6314
        %6618 = vmatpush1.bf16.msra.mxu0 %v6313
        %6619 = vmatprep.mubr.bf16.mxu0 %v5673
        %6620 = vmatmul.mubr.bf16.gmra.mrb[0].mxu0 %v5672
        %v6621 = vpop.f32.mrb[0].mxu0
        %v6622 = vadd.f32 %v6581, %v6621
        %v6623 = vpop.f32.mrb[0].mxu0
        %v6624 = vadd.f32 %v6583, %v6623
        %v6625 = vpop.f32.mrb[0].mxu0
        %v6626 = vpop.f32.mrb[0].mxu0
        %6627 = vdwg.mxu0
        %v6628 = vmax.f32 %v6540, 0.0
        %v6629 = vmax.f32 %v6542, 0.0
        %v6630 = vmax.f32 %v6622, 0.0
        %v6631 = vmax.f32 %v6624, 0.0
        %v6632 = vpack.c.bf16 %v6628, %v6628
        %v6633 = vpack.c.bf16 %v6629, %v6629
        %v6634 = vpack.c.bf16 %v6630, %v6630
        %v6635 = vpack.c.bf16 %v6631, %v6631
        %v6636 = vld [vmem:[%s9] sm:$0xff]
        %v6637 = vld [vmem:[%s9 + $0x8] sm:$0xff]
        %v6638 = vld [vmem:[%s9 + $0x10] sm:$0xff]
        %v6639 = vld [vmem:[%s9 + $0x18] sm:$0xff]
        %v6640 = vld [vmem:[%s9 + $0x20] sm:$0xff]
        %v6641 = vld [vmem:[%s9 + $0x28] sm:$0xff]
        %v6642 = vld [vmem:[%s9 + $0x30] sm:$0xff]
        %v6643 = vld [vmem:[%s9 + $0x38] sm:$0xff]
        %v6644 = vld [vmem:[%s9 + $0x40] sm:$0xff]
        %v6645 = vld [vmem:[%s9 + $0x48] sm:$0xff]
        %v6646 = vld [vmem:[%s9 + $0x50] sm:$0xff]
        %v6647 = vld [vmem:[%s9 + $0x58] sm:$0xff]
        %v6648 = vld [vmem:[%s9 + $0x60] sm:$0xff]
        %v6649 = vld [vmem:[%s9 + $0x68] sm:$0xff]
        %v6650 = vld [vmem:[%s9 + $0x70] sm:$0xff]
        %v6651 = vld [vmem:[%s9 + $0x78] sm:$0xff]
        %v6652 = vld [vmem:[%s9 + $0x80] sm:$0xff]
        %v6653 = vld [vmem:[%s9 + $0x88] sm:$0xff]
        %v6654 = vld [vmem:[%s9 + $0x90] sm:$0xff]
        %v6655 = vld [vmem:[%s9 + $0x98] sm:$0xff]
        %v6656 = vld [vmem:[%s9 + $0xa0] sm:$0xff]
        %v6657 = vld [vmem:[%s9 + $0xa8] sm:$0xff]
        %v6658 = vld [vmem:[%s9 + $0xb0] sm:$0xff]
        %v6659 = vld [vmem:[%s9 + $0xb8] sm:$0xff]
        %v6660 = vld [vmem:[%s9 + $0xc0] sm:$0xff]
        %v6661 = vld [vmem:[%s9 + $0xc8] sm:$0xff]
        %v6662 = vld [vmem:[%s9 + $0xd0] sm:$0xff]
        %v6663 = vld [vmem:[%s9 + $0xd8] sm:$0xff]
        %v6664 = vld [vmem:[%s9 + $0xe0] sm:$0xff]
        %v6665 = vld [vmem:[%s9 + $0xe8] sm:$0xff]
        %v6666 = vld [vmem:[%s9 + $0xf0] sm:$0xff]
        %v6667 = vld [vmem:[%s9 + $0xf8] sm:$0xff]
        %v6668 = vld [vmem:[%s9 + $0x100] sm:$0xff]
        %v6669 = vld [vmem:[%s9 + $0x108] sm:$0xff]
        %v6670 = vld [vmem:[%s9 + $0x110] sm:$0xff]
        %v6671 = vld [vmem:[%s9 + $0x118] sm:$0xff]
        %v6672 = vld [vmem:[%s9 + $0x120] sm:$0xff]
        %v6673 = vld [vmem:[%s9 + $0x128] sm:$0xff]
        %v6674 = vld [vmem:[%s9 + $0x130] sm:$0xff]
        %v6675 = vld [vmem:[%s9 + $0x138] sm:$0xff]
        %v6676 = vld [vmem:[%s9 + $0x140] sm:$0xff]
        %v6677 = vld [vmem:[%s9 + $0x148] sm:$0xff]
        %v6678 = vld [vmem:[%s9 + $0x150] sm:$0xff]
        %v6679 = vld [vmem:[%s9 + $0x158] sm:$0xff]
        %v6680 = vld [vmem:[%s9 + $0x160] sm:$0xff]
        %v6681 = vld [vmem:[%s9 + $0x168] sm:$0xff]
        %v6682 = vld [vmem:[%s9 + $0x170] sm:$0xff]
        %v6683 = vld [vmem:[%s9 + $0x178] sm:$0xff]
        %v6684 = vld [vmem:[%s9 + $0x180] sm:$0xff]
        %v6685 = vld [vmem:[%s9 + $0x188] sm:$0xff]
        %v6686 = vld [vmem:[%s9 + $0x190] sm:$0xff]
        %v6687 = vld [vmem:[%s9 + $0x198] sm:$0xff]
        %v6688 = vld [vmem:[%s9 + $0x1a0] sm:$0xff]
        %v6689 = vld [vmem:[%s9 + $0x1a8] sm:$0xff]
        %v6690 = vld [vmem:[%s9 + $0x1b0] sm:$0xff]
        %v6691 = vld [vmem:[%s9 + $0x1b8] sm:$0xff]
        %v6692 = vld [vmem:[%s9 + $0x1c0] sm:$0xff]
        %v6693 = vld [vmem:[%s9 + $0x1c8] sm:$0xff]
        %v6694 = vld [vmem:[%s9 + $0x1d0] sm:$0xff]
        %v6695 = vld [vmem:[%s9 + $0x1d8] sm:$0xff]
        %v6696 = vld [vmem:[%s9 + $0x1e0] sm:$0xff]
        %v6697 = vld [vmem:[%s9 + $0x1e8] sm:$0xff]
        %v6698 = vld [vmem:[%s9 + $0x1f0] sm:$0xff]
        %v6699 = vld [vmem:[%s9 + $0x1f8] sm:$0xff]
        %v6700 = vld [vmem:[%s10] sm:$0x3]
        %v6765 = vunpack.c.l.b16 %v6636
        %v6766 = vunpack.c.h.b16 %v6636
        %v6767 = vunpack.c.l.b16 %v6637
        %v6768 = vunpack.c.h.b16 %v6637
        %v6769 = vunpack.c.l.b16 %v6638
        %v6770 = vunpack.c.h.b16 %v6638
        %v6771 = vunpack.c.l.b16 %v6639
        %v6772 = vunpack.c.h.b16 %v6639
        %v6773 = vunpack.c.l.b16 %v6640
        %v6774 = vunpack.c.h.b16 %v6640
        %v6775 = vunpack.c.l.b16 %v6641
        %v6776 = vunpack.c.h.b16 %v6641
        %v6777 = vunpack.c.l.b16 %v6642
        %v6778 = vunpack.c.h.b16 %v6642
        %v6779 = vunpack.c.l.b16 %v6643
        %v6780 = vunpack.c.h.b16 %v6643
        %v6781 = vunpack.c.l.b16 %v6644
        %v6782 = vunpack.c.h.b16 %v6644
        %v6783 = vunpack.c.l.b16 %v6645
        %v6784 = vunpack.c.h.b16 %v6645
        %v6785 = vunpack.c.l.b16 %v6646
        %v6786 = vunpack.c.h.b16 %v6646
        %v6787 = vunpack.c.l.b16 %v6647
        %v6788 = vunpack.c.h.b16 %v6647
        %v6789 = vunpack.c.l.b16 %v6648
        %v6790 = vunpack.c.h.b16 %v6648
        %v6791 = vunpack.c.l.b16 %v6649
        %v6792 = vunpack.c.h.b16 %v6649
        %v6793 = vunpack.c.l.b16 %v6650
        %v6794 = vunpack.c.h.b16 %v6650
        %v6795 = vunpack.c.l.b16 %v6651
        %v6796 = vunpack.c.h.b16 %v6651
        %v6797 = vunpack.c.l.b16 %v6652
        %v6798 = vunpack.c.h.b16 %v6652
        %v6799 = vunpack.c.l.b16 %v6653
        %v6800 = vunpack.c.h.b16 %v6653
        %v6801 = vunpack.c.l.b16 %v6654
        %v6802 = vunpack.c.h.b16 %v6654
        %v6803 = vunpack.c.l.b16 %v6655
        %v6804 = vunpack.c.h.b16 %v6655
        %v6805 = vunpack.c.l.b16 %v6656
        %v6806 = vunpack.c.h.b16 %v6656
        %v6807 = vunpack.c.l.b16 %v6657
        %v6808 = vunpack.c.h.b16 %v6657
        %v6809 = vunpack.c.l.b16 %v6658
        %v6810 = vunpack.c.h.b16 %v6658
        %v6811 = vunpack.c.l.b16 %v6659
        %v6812 = vunpack.c.h.b16 %v6659
        %v6813 = vunpack.c.l.b16 %v6660
        %v6814 = vunpack.c.h.b16 %v6660
        %v6815 = vunpack.c.l.b16 %v6661
        %v6816 = vunpack.c.h.b16 %v6661
        %v6817 = vunpack.c.l.b16 %v6662
        %v6818 = vunpack.c.h.b16 %v6662
        %v6819 = vunpack.c.l.b16 %v6663
        %v6820 = vunpack.c.h.b16 %v6663
        %v6821 = vunpack.c.l.b16 %v6664
        %v6822 = vunpack.c.h.b16 %v6664
        %v6823 = vunpack.c.l.b16 %v6665
        %v6824 = vunpack.c.h.b16 %v6665
        %v6825 = vunpack.c.l.b16 %v6666
        %v6826 = vunpack.c.h.b16 %v6666
        %v6827 = vunpack.c.l.b16 %v6667
        %v6828 = vunpack.c.h.b16 %v6667
        %v6829 = vunpack.c.l.b16 %v6668
        %v6830 = vunpack.c.h.b16 %v6668
        %v6831 = vunpack.c.l.b16 %v6669
        %v6832 = vunpack.c.h.b16 %v6669
        %v6833 = vunpack.c.l.b16 %v6670
        %v6834 = vunpack.c.h.b16 %v6670
        %v6835 = vunpack.c.l.b16 %v6671
        %v6836 = vunpack.c.h.b16 %v6671
        %v6837 = vunpack.c.l.b16 %v6672
        %v6838 = vunpack.c.h.b16 %v6672
        %v6839 = vunpack.c.l.b16 %v6673
        %v6840 = vunpack.c.h.b16 %v6673
        %v6841 = vunpack.c.l.b16 %v6674
        %v6842 = vunpack.c.h.b16 %v6674
        %v6843 = vunpack.c.l.b16 %v6675
        %v6844 = vunpack.c.h.b16 %v6675
        %v6845 = vunpack.c.l.b16 %v6676
        %v6846 = vunpack.c.h.b16 %v6676
        %v6847 = vunpack.c.l.b16 %v6677
        %v6848 = vunpack.c.h.b16 %v6677
        %v6849 = vunpack.c.l.b16 %v6678
        %v6850 = vunpack.c.h.b16 %v6678
        %v6851 = vunpack.c.l.b16 %v6679
        %v6852 = vunpack.c.h.b16 %v6679
        %v6853 = vunpack.c.l.b16 %v6680
        %v6854 = vunpack.c.h.b16 %v6680
        %v6855 = vunpack.c.l.b16 %v6681
        %v6856 = vunpack.c.h.b16 %v6681
        %v6857 = vunpack.c.l.b16 %v6682
        %v6858 = vunpack.c.h.b16 %v6682
        %v6859 = vunpack.c.l.b16 %v6683
        %v6860 = vunpack.c.h.b16 %v6683
        %v6861 = vunpack.c.l.b16 %v6684
        %v6862 = vunpack.c.h.b16 %v6684
        %v6863 = vunpack.c.l.b16 %v6685
        %v6864 = vunpack.c.h.b16 %v6685
        %v6865 = vunpack.c.l.b16 %v6686
        %v6866 = vunpack.c.h.b16 %v6686
        %v6867 = vunpack.c.l.b16 %v6687
        %v6868 = vunpack.c.h.b16 %v6687
        %v6869 = vunpack.c.l.b16 %v6688
        %v6870 = vunpack.c.h.b16 %v6688
        %v6871 = vunpack.c.l.b16 %v6689
        %v6872 = vunpack.c.h.b16 %v6689
        %v6873 = vunpack.c.l.b16 %v6690
        %v6874 = vunpack.c.h.b16 %v6690
        %v6875 = vunpack.c.l.b16 %v6691
        %v6876 = vunpack.c.h.b16 %v6691
        %v6877 = vunpack.c.l.b16 %v6692
        %v6878 = vunpack.c.h.b16 %v6692
        %v6879 = vunpack.c.l.b16 %v6693
        %v6880 = vunpack.c.h.b16 %v6693
        %v6881 = vunpack.c.l.b16 %v6694
        %v6882 = vunpack.c.h.b16 %v6694
        %v6883 = vunpack.c.l.b16 %v6695
        %v6884 = vunpack.c.h.b16 %v6695
        %v6885 = vunpack.c.l.b16 %v6696
        %v6886 = vunpack.c.h.b16 %v6696
        %v6887 = vunpack.c.l.b16 %v6697
        %v6888 = vunpack.c.h.b16 %v6697
        %v6889 = vunpack.c.l.b16 %v6698
        %v6890 = vunpack.c.h.b16 %v6698
        %v6891 = vunpack.c.l.b16 %v6699
        %v6892 = vunpack.c.h.b16 %v6699
        %v6893 = vpack.c.b16 %v6767, %v6765
        %v6894 = vpack.c.b16 %v6768, %v6766
        %v6895 = vpack.c.b16 %v6771, %v6769
        %v6896 = vpack.c.b16 %v6772, %v6770
        %v6897 = vpack.c.b16 %v6775, %v6773
        %v6898 = vpack.c.b16 %v6776, %v6774
        %v6899 = vpack.c.b16 %v6779, %v6777
        %v6900 = vpack.c.b16 %v6780, %v6778
        %v6901 = vpack.c.b16 %v6783, %v6781
        %v6902 = vpack.c.b16 %v6784, %v6782
        %v6903 = vpack.c.b16 %v6787, %v6785
        %v6904 = vpack.c.b16 %v6788, %v6786
        %v6905 = vpack.c.b16 %v6791, %v6789
        %v6906 = vpack.c.b16 %v6792, %v6790
        %v6907 = vpack.c.b16 %v6795, %v6793
        %v6908 = vpack.c.b16 %v6796, %v6794
        %v6909 = vpack.c.b16 %v6799, %v6797
        %v6910 = vpack.c.b16 %v6800, %v6798
        %v6911 = vpack.c.b16 %v6803, %v6801
        %v6912 = vpack.c.b16 %v6804, %v6802
        %v6913 = vpack.c.b16 %v6807, %v6805
        %v6914 = vpack.c.b16 %v6808, %v6806
        %v6915 = vpack.c.b16 %v6811, %v6809
        %v6916 = vpack.c.b16 %v6812, %v6810
        %v6917 = vpack.c.b16 %v6815, %v6813
        %v6918 = vpack.c.b16 %v6816, %v6814
        %v6919 = vpack.c.b16 %v6819, %v6817
        %v6920 = vpack.c.b16 %v6820, %v6818
        %v6921 = vpack.c.b16 %v6823, %v6821
        %v6922 = vpack.c.b16 %v6824, %v6822
        %v6923 = vpack.c.b16 %v6827, %v6825
        %v6924 = vpack.c.b16 %v6828, %v6826
        %v6925 = vpack.c.b16 %v6831, %v6829
        %v6926 = vpack.c.b16 %v6832, %v6830
        %v6927 = vpack.c.b16 %v6835, %v6833
        %v6928 = vpack.c.b16 %v6836, %v6834
        %v6929 = vpack.c.b16 %v6839, %v6837
        %v6930 = vpack.c.b16 %v6840, %v6838
        %v6931 = vpack.c.b16 %v6843, %v6841
        %v6932 = vpack.c.b16 %v6844, %v6842
        %v6933 = vpack.c.b16 %v6847, %v6845
        %v6934 = vpack.c.b16 %v6848, %v6846
        %v6935 = vpack.c.b16 %v6851, %v6849
        %v6936 = vpack.c.b16 %v6852, %v6850
        %v6937 = vpack.c.b16 %v6855, %v6853
        %v6938 = vpack.c.b16 %v6856, %v6854
        %v6939 = vpack.c.b16 %v6859, %v6857
        %v6940 = vpack.c.b16 %v6860, %v6858
        %v6941 = vpack.c.b16 %v6863, %v6861
        %v6942 = vpack.c.b16 %v6864, %v6862
        %v6943 = vpack.c.b16 %v6867, %v6865
        %v6944 = vpack.c.b16 %v6868, %v6866
        %v6945 = vpack.c.b16 %v6871, %v6869
        %v6946 = vpack.c.b16 %v6872, %v6870
        %v6947 = vpack.c.b16 %v6875, %v6873
        %v6948 = vpack.c.b16 %v6876, %v6874
        %v6949 = vpack.c.b16 %v6879, %v6877
        %v6950 = vpack.c.b16 %v6880, %v6878
        %v6951 = vpack.c.b16 %v6883, %v6881
        %v6952 = vpack.c.b16 %v6884, %v6882
        %v6953 = vpack.c.b16 %v6887, %v6885
        %v6954 = vpack.c.b16 %v6888, %v6886
        %v6955 = vpack.c.b16 %v6891, %v6889
        %v6956 = vpack.c.b16 %v6892, %v6890
        %v7022 = vlaneseq
        %v7023 = vshrl.u32 %v7022, 7
        %v7024 = vsub.s32 0, %v7023
        %v7025 = vrot.slane %v6700, %v7024
        %v7026 = vlaneseq
        %v7027 = vshrl.u32 %v7026, 7
        %v7028 = vsub.s32 1, %v7027
        %v7029 = vrot.slane %v6700, %v7028
        %7032 = vmatprep.subr.bf16.mxu0 %v6894
        %7033 = vmatpush1.bf16.msra.mxu0 %v6893
        %7034 = vmatprep.subr.bf16.mxu0 %v6896
        %7035 = vmatpush1.bf16.msra.mxu0 %v6895
        %7036 = vmatprep.subr.bf16.mxu0 %v6898
        %7037 = vmatpush1.bf16.msra.mxu0 %v6897
        %7038 = vmatprep.subr.bf16.mxu0 %v6900
        %7039 = vmatpush1.bf16.msra.mxu0 %v6899
        %7040 = vmatprep.subr.bf16.mxu0 %v6902
        %7041 = vmatpush1.bf16.msra.mxu0 %v6901
        %7042 = vmatprep.subr.bf16.mxu0 %v6904
        %7043 = vmatpush1.bf16.msra.mxu0 %v6903
        %7044 = vmatprep.subr.bf16.mxu0 %v6906
        %7045 = vmatpush1.bf16.msra.mxu0 %v6905
        %7046 = vmatprep.subr.bf16.mxu0 %v6908
        %7047 = vmatpush1.bf16.msra.mxu0 %v6907
        %7048 = vmatprep.subr.bf16.mxu0 %v6910
        %7049 = vmatpush1.bf16.msra.mxu0 %v6909
        %7050 = vmatprep.subr.bf16.mxu0 %v6912
        %7051 = vmatpush1.bf16.msra.mxu0 %v6911
        %7052 = vmatprep.subr.bf16.mxu0 %v6914
        %7053 = vmatpush1.bf16.msra.mxu0 %v6913
        %7054 = vmatprep.subr.bf16.mxu0 %v6916
        %7055 = vmatpush1.bf16.msra.mxu0 %v6915
        %7056 = vmatprep.subr.bf16.mxu0 %v6918
        %7057 = vmatpush1.bf16.msra.mxu0 %v6917
        %7058 = vmatprep.subr.bf16.mxu0 %v6920
        %7059 = vmatpush1.bf16.msra.mxu0 %v6919
        %7060 = vmatprep.subr.bf16.mxu0 %v6922
        %7061 = vmatpush1.bf16.msra.mxu0 %v6921
        %7062 = vmatprep.subr.bf16.mxu0 %v6924
        %7063 = vmatpush1.bf16.msra.mxu0 %v6923
        %7064 = vmatprep.mubr.bf16.mxu0 %v6633
        %7065 = vmatmul.mubr.bf16.gmra.mrb[0].mxu0 %v6632
        %v7066 = vpop.f32.mrb[0].mxu0
        %v7067 = vadd.f32 %v7025, %v7066
        %v7068 = vpop.f32.mrb[0].mxu0
        %v7069 = vadd.f32 %v7029, %v7068
        %v7070 = vpop.f32.mrb[0].mxu0
        %v7071 = vpop.f32.mrb[0].mxu0
        %7072 = vdwg.mxu0
        %7073 = vmatprep.subr.bf16.mxu0 %v6926
        %7074 = vmatpush1.bf16.msra.mxu0 %v6925
        %7075 = vmatprep.subr.bf16.mxu0 %v6928
        %7076 = vmatpush1.bf16.msra.mxu0 %v6927
        %7077 = vmatprep.subr.bf16.mxu0 %v6930
        %7078 = vmatpush1.bf16.msra.mxu0 %v6929
        %7079 = vmatprep.subr.bf16.mxu0 %v6932
        %7080 = vmatpush1.bf16.msra.mxu0 %v6931
        %7081 = vmatprep.subr.bf16.mxu0 %v6934
        %7082 = vmatpush1.bf16.msra.mxu0 %v6933
        %7083 = vmatprep.subr.bf16.mxu0 %v6936
        %7084 = vmatpush1.bf16.msra.mxu0 %v6935
        %7085 = vmatprep.subr.bf16.mxu0 %v6938
        %7086 = vmatpush1.bf16.msra.mxu0 %v6937
        %7087 = vmatprep.subr.bf16.mxu0 %v6940
        %7088 = vmatpush1.bf16.msra.mxu0 %v6939
        %7089 = vmatprep.subr.bf16.mxu0 %v6942
        %7090 = vmatpush1.bf16.msra.mxu0 %v6941
        %7091 = vmatprep.subr.bf16.mxu0 %v6944
        %7092 = vmatpush1.bf16.msra.mxu0 %v6943
        %7093 = vmatprep.subr.bf16.mxu0 %v6946
        %7094 = vmatpush1.bf16.msra.mxu0 %v6945
        %7095 = vmatprep.subr.bf16.mxu0 %v6948
        %7096 = vmatpush1.bf16.msra.mxu0 %v6947
        %7097 = vmatprep.subr.bf16.mxu0 %v6950
        %7098 = vmatpush1.bf16.msra.mxu0 %v6949
        %7099 = vmatprep.subr.bf16.mxu0 %v6952
        %7100 = vmatpush1.bf16.msra.mxu0 %v6951
        %7101 = vmatprep.subr.bf16.mxu0 %v6954
        %7102 = vmatpush1.bf16.msra.mxu0 %v6953
        %7103 = vmatprep.subr.bf16.mxu0 %v6956
        %7104 = vmatpush1.bf16.msra.mxu0 %v6955
        %7105 = vmatprep.mubr.bf16.mxu0 %v6635
        %7106 = vmatmul.mubr.bf16.gmra.mrb[0].mxu0 %v6634
        %v7107 = vpop.f32.mrb[0].mxu0
        %v7108 = vadd.f32 %v7067, %v7107
        %v7109 = vpop.f32.mrb[0].mxu0
        %v7110 = vadd.f32 %v7069, %v7109
        %v7111 = vpop.f32.mrb[0].mxu0
        %v7112 = vpop.f32.mrb[0].mxu0
        %7113 = vdwg.mxu0
        %v7114 = vmax.f32 %v7108, 0.0
        %v7115 = vmax.f32 %v7110, 0.0
        %v7116 = vpack.c.bf16 %v7114, %v7114
        %v7117 = vpack.c.bf16 %v7115, %v7115
        %v7118 = vld [vmem:[%s11] sm:$0xf]
        %v7119 = vld [vmem:[%s11 + $0x4] sm:$0xf]
        %v7120 = vld [vmem:[%s11 + $0x8] sm:$0xf]
        %v7121 = vld [vmem:[%s11 + $0xc] sm:$0xf]
        %v7122 = vld [vmem:[%s11 + $0x10] sm:$0xf]
        %v7123 = vld [vmem:[%s11 + $0x14] sm:$0xf]
        %v7124 = vld [vmem:[%s11 + $0x18] sm:$0xf]
        %v7125 = vld [vmem:[%s11 + $0x1c] sm:$0xf]
        %v7126 = vld [vmem:[%s11 + $0x20] sm:$0xf]
        %v7127 = vld [vmem:[%s11 + $0x24] sm:$0xf]
        %v7128 = vld [vmem:[%s11 + $0x28] sm:$0xf]
        %v7129 = vld [vmem:[%s11 + $0x2c] sm:$0xf]
        %v7130 = vld [vmem:[%s11 + $0x30] sm:$0xf]
        %v7131 = vld [vmem:[%s11 + $0x34] sm:$0xf]
        %v7132 = vld [vmem:[%s11 + $0x38] sm:$0xf]
        %v7133 = vld [vmem:[%s11 + $0x3c] sm:$0xf]
        %v7134 = vld [vmem:[%s11 + $0x40] sm:$0xf]
        %v7135 = vld [vmem:[%s11 + $0x44] sm:$0xf]
        %v7136 = vld [vmem:[%s11 + $0x48] sm:$0xf]
        %v7137 = vld [vmem:[%s11 + $0x4c] sm:$0xf]
        %v7138 = vld [vmem:[%s11 + $0x50] sm:$0xf]
        %v7139 = vld [vmem:[%s11 + $0x54] sm:$0xf]
        %v7140 = vld [vmem:[%s11 + $0x58] sm:$0xf]
        %v7141 = vld [vmem:[%s11 + $0x5c] sm:$0xf]
        %v7142 = vld [vmem:[%s11 + $0x60] sm:$0xf]
        %v7143 = vld [vmem:[%s11 + $0x64] sm:$0xf]
        %v7144 = vld [vmem:[%s11 + $0x68] sm:$0xf]
        %v7145 = vld [vmem:[%s11 + $0x6c] sm:$0xf]
        %v7146 = vld [vmem:[%s11 + $0x70] sm:$0xf]
        %v7147 = vld [vmem:[%s11 + $0x74] sm:$0xf]
        %v7148 = vld [vmem:[%s11 + $0x78] sm:$0xf]
        %v7149 = vld [vmem:[%s11 + $0x7c] sm:$0xf]
        %v7150 = vld [vmem:[%s12] sm:$0x1]
        %v7183 = vunpack.c.l.b16 %v7118
        %v7184 = vunpack.c.l.b16 %v7119
        %v7185 = vunpack.c.l.b16 %v7120
        %v7186 = vunpack.c.l.b16 %v7121
        %v7187 = vunpack.c.l.b16 %v7122
        %v7188 = vunpack.c.l.b16 %v7123
        %v7189 = vunpack.c.l.b16 %v7124
        %v7190 = vunpack.c.l.b16 %v7125
        %v7191 = vunpack.c.l.b16 %v7126
        %v7192 = vunpack.c.l.b16 %v7127
        %v7193 = vunpack.c.l.b16 %v7128
        %v7194 = vunpack.c.l.b16 %v7129
        %v7195 = vunpack.c.l.b16 %v7130
        %v7196 = vunpack.c.l.b16 %v7131
        %v7197 = vunpack.c.l.b16 %v7132
        %v7198 = vunpack.c.l.b16 %v7133
        %v7199 = vunpack.c.l.b16 %v7134
        %v7200 = vunpack.c.l.b16 %v7135
        %v7201 = vunpack.c.l.b16 %v7136
        %v7202 = vunpack.c.l.b16 %v7137
        %v7203 = vunpack.c.l.b16 %v7138
        %v7204 = vunpack.c.l.b16 %v7139
        %v7205 = vunpack.c.l.b16 %v7140
        %v7206 = vunpack.c.l.b16 %v7141
        %v7207 = vunpack.c.l.b16 %v7142
        %v7208 = vunpack.c.l.b16 %v7143
        %v7209 = vunpack.c.l.b16 %v7144
        %v7210 = vunpack.c.l.b16 %v7145
        %v7211 = vunpack.c.l.b16 %v7146
        %v7212 = vunpack.c.l.b16 %v7147
        %v7213 = vunpack.c.l.b16 %v7148
        %v7214 = vunpack.c.l.b16 %v7149
        %v7215 = vpack.c.b16 %v7184, %v7183
        %v7216 = vpack.c.b16 %v7186, %v7185
        %v7217 = vpack.c.b16 %v7188, %v7187
        %v7218 = vpack.c.b16 %v7190, %v7189
        %v7219 = vpack.c.b16 %v7192, %v7191
        %v7220 = vpack.c.b16 %v7194, %v7193
        %v7221 = vpack.c.b16 %v7196, %v7195
        %v7222 = vpack.c.b16 %v7198, %v7197
        %v7223 = vpack.c.b16 %v7200, %v7199
        %v7224 = vpack.c.b16 %v7202, %v7201
        %v7225 = vpack.c.b16 %v7204, %v7203
        %v7226 = vpack.c.b16 %v7206, %v7205
        %v7227 = vpack.c.b16 %v7208, %v7207
        %v7228 = vpack.c.b16 %v7210, %v7209
        %v7229 = vpack.c.b16 %v7212, %v7211
        %v7230 = vpack.c.b16 %v7214, %v7213
        %7247 = vmatprep.subr.bf16.mxu0 0
        %7248 = vmatpush1.bf16.msra.mxu0 %v7215
        %7249 = vmatprep.subr.bf16.mxu0 0
        %7250 = vmatpush1.bf16.msra.mxu0 %v7216
        %7251 = vmatprep.subr.bf16.mxu0 0
        %7252 = vmatpush1.bf16.msra.mxu0 %v7217
        %7253 = vmatprep.subr.bf16.mxu0 0
        %7254 = vmatpush1.bf16.msra.mxu0 %v7218
        %7255 = vmatprep.subr.bf16.mxu0 0
        %7256 = vmatpush1.bf16.msra.mxu0 %v7219
        %7257 = vmatprep.subr.bf16.mxu0 0
        %7258 = vmatpush1.bf16.msra.mxu0 %v7220
        %7259 = vmatprep.subr.bf16.mxu0 0
        %7260 = vmatpush1.bf16.msra.mxu0 %v7221
        %7261 = vmatprep.subr.bf16.mxu0 0
        %7262 = vmatpush1.bf16.msra.mxu0 %v7222
        %7263 = vmatprep.subr.bf16.mxu0 0
        %7264 = vmatpush1.bf16.msra.mxu0 %v7223
        %7265 = vmatprep.subr.bf16.mxu0 0
        %7266 = vmatpush1.bf16.msra.mxu0 %v7224
        %7267 = vmatprep.subr.bf16.mxu0 0
        %7268 = vmatpush1.bf16.msra.mxu0 %v7225
        %7269 = vmatprep.subr.bf16.mxu0 0
        %7270 = vmatpush1.bf16.msra.mxu0 %v7226
        %7271 = vmatprep.subr.bf16.mxu0 0
        %7272 = vmatpush1.bf16.msra.mxu0 %v7227
        %7273 = vmatprep.subr.bf16.mxu0 0
        %7274 = vmatpush1.bf16.msra.mxu0 %v7228
        %7275 = vmatprep.subr.bf16.mxu0 0
        %7276 = vmatpush1.bf16.msra.mxu0 %v7229
        %7277 = vmatprep.subr.bf16.mxu0 0
        %7278 = vmatpush1.bf16.msra.mxu0 %v7230
        %7279 = vmatprep.mubr.bf16.mxu0 %v7117
        %7280 = vmatmul.mubr.bf16.gmra.mrb[0].mxu0 %v7116
        %v7281 = vpop.f32.mrb[0].mxu0
        %v7282 = vadd.f32 %v7150, %v7281
        %v7283 = vpop.f32.mrb[0].mxu0
        %v7284 = vpop.f32.mrb[0].mxu0
        %v7285 = vpop.f32.mrb[0].mxu0
        %7286 = vdwg.mxu0
        %vm7287 = vcmask 8192
        %7288 = vst.msk [vmem:[%s432] sm:$0x1] %vm7287, %v7282
        %s7289 = sand.u32 %s313, 1
        %s7290 = scalar_lea.sflag [#allocation14], %s7289
        %s7291 = sand.u32 %s313, 1
        %s7292 = scalar_lea.vmem [#allocation13], %s7291
        // Predicated region
        $region73: #{cnn_forward.1} parent=71 // pred_check
          %p7293 = pneg %p323
        $region74: #{cnn_forward.1} parent=71 // pred_check_branch
          %7295 = sbr.rel (%p7293) target = $region76
        $region75: #{cnn_forward.1} parent=71 // pred_region
          %s7297 = ssub.s32 16, 16
          %7298 = vsyncadd %s7290, %s7297
          %s7299 = smul.addr %s27, 16
          %s7300 = scalar_lea.hbm %s13, %s7299
          %s7302 = sshll.u32 %s7292, 4
          %s7303 = int_to_ptr.vmem [resolvable:$true] %s7302
          %7305 = dma.vmem_to_hbm [thread:$0]  %s7303, 16, %s7300, %s7290
        $region76: #{cnn_forward.1} parent=71 // pred_fallthru
          _
      $region72: #{cnn_forward.1} parent=5 // pred_fallthru
        _
      %p7306 = scmp.le.s32.totalorder 2, %s22
      // Predicated region
      $region77: #{cnn_forward.1} parent=5 // pred_check
        %p7307 = pneg %p7306
      $region78: #{cnn_forward.1} parent=5 // pred_check_branch
        %7309 = sbr.rel (%p7307) target = $region80
      $region79: #{cnn_forward.1} parent=5 // pred_region
        %s7310 = ssub.s32 %s22, 2
        // Predicated region
        $region81: #{cnn_forward.1} parent=79 // pred_check
          %p7311 = pneg %p329
        $region82: #{cnn_forward.1} parent=79 // pred_check_branch
          %7313 = sbr.rel (%p7311) target = $region84
        $region83: #{cnn_forward.1} parent=79 // pred_region
          %s7314 = sand.u32 %s314, 1
          %s7315 = scalar_lea.sflag [#allocation14], %s7314
          %s7316 = sand.u32 %s314, 1
          %s7317 = scalar_lea.vmem [#allocation13], %s7316
          %7318 = dma.done %s7315, 16
        $region84: #{cnn_forward.1} parent=79 // pred_fallthru
          _
      $region80: #{cnn_forward.1} parent=5 // pred_fallthru
        _
    $region6: #{cnn_forward.1} parent=1 // loop_footer
      %s26 = sadd.s32 1, %s22
    $region7: #{cnn_forward.1} parent=1 // loop_footer_branch
      %21 = sbr.rel target = $region3
    $region8: #{cnn_forward.1} parent=1 // loop_exit
      _
    %7319 = vsyncpa [#allocation14], 1
    %s7320 = scalar_lea.sflag [#allocation14], 1
    %7321 = vsyncpa %s7320, 1

</llo_original>
